<compile_context>
chip_gen: v7x
topology: tpu7x:2x2x1
jax: 0.10.0
libtpu: 0.0.40
codegen_flags: <defaults>
</compile_context>

<pallas_src>
import jax
import jax.numpy as jnp
from jax.experimental import pallas as pl
from jax.experimental.pallas import tpu as pltpu


def _round_up(v, m):
    return ((v + m - 1) // m) * m


def _layer(h, w_ref, b_ref):
    """Pointwise linear (BN scale pre-folded into W) + bias + ReLU."""
    y = jnp.dot(h.astype(jnp.bfloat16), w_ref[...],
                preferred_element_type=jnp.float32)
    return jnp.maximum(y + b_ref[...], 0.0)


def pointnet_kernel(
    x_ref,
    w1_ref, b1_ref, w2_ref, b2_ref, w3_ref, b3_ref,
    w4_ref, b4_ref, w5_ref, b5_ref, w6_ref, b6_ref,
    out_ref,
    acc_ref,
):
    nk = pl.program_id(1)
    bt, nt, cin = x_ref.shape

    x = x_ref[...].reshape(bt * nt, cin)        # (rows, 8) f32, zero-padded chans

    h = _layer(x, w1_ref, b1_ref)               # (rows, 64)
    h = _layer(h, w2_ref, b2_ref)               # (rows, 64)
    h = _layer(h, w3_ref, b3_ref)               # (rows, 64)
    h = _layer(h, w4_ref, b4_ref)               # (rows, 128)
    h = _layer(h, w5_ref, b5_ref)               # (rows, 1024)

    # Per-chunk max over points (f32), folded into the running-max accumulator.
    chunk_max = jnp.max(h.reshape(bt, nt, -1), axis=1)       # (bt, 1024)

    @pl.when(nk == 0)
    def _():
        # Post-ReLU activations are >= 0, so zero-init is exact for the max
        # (and point padding replicates real rows, so it never poisons it).
        acc_ref[...] = jnp.zeros_like(acc_ref)

    acc_ref[...] = jnp.maximum(acc_ref[...], chunk_max.astype(acc_ref.dtype))

    # Last point chunk: final Linear(1024, F) + BN + ReLU on the pooled rows.
    @pl.when(nk == pl.num_programs(1) - 1)
    def _():
        g = acc_ref[...].astype(jnp.bfloat16)
        y = jnp.dot(g, w6_ref[...], preferred_element_type=jnp.float32)
        out_ref[...] = jnp.maximum(y + b6_ref[...], 0.0)


def pointnet_forward(x, params, *, target_rows=2048, bt=None,
                     acc_dtype=jnp.bfloat16,
                     vmem_limit_bytes=48 * 1024 * 1024):
    """x: (B, N, 3) float32.  params: flat list of (W, scale, bias) per layer.

    target_rows: rows (bt*nt) per grid step.  2048 fits the v7x 48 MiB VMEM
    budget; on v5e/v6e larger values (with a raised vmem_limit_bytes) also work.
    acc_dtype: pooled-feature accumulator dtype (use jnp.float32 on v5e).
    """
    B, N, _ = x.shape
    F = params[15].shape[-1]
    Fp = _round_up(F, 128)                   # lane-dense output width

    # Batch tile: full batch when small (single lane-dense store, fewest grid
    # steps); otherwise 8 so the output block / accumulator are sublane-dense.
    # NOTE(v7x): with 2 TensorCores, keep Bp//bt >= 2 when B allows it.
    if bt is None:
        bt = B if B <= 8 else 8
    Bp = _round_up(B, bt)

    # Point tile: aim for ~target_rows rows per grid step; multiple of 8.
    nt = max(8, (target_rows // bt) // 8 * 8)
    nt = min(nt, _round_up(N, 8))
    Np = _round_up(N, nt)

    # Pad batch / points by replicating real rows: replicated points do not
    # change the max-pool and replicated batch rows are sliced away below.
    if Bp != B:
        x = jnp.concatenate(
            [x, jnp.broadcast_to(x[-1:, :, :], (Bp - B, N, 3))], axis=0)
    if Np != N:
        x = jnp.concatenate(
            [x, jnp.broadcast_to(x[:, -1:, :], (Bp, Np - N, 3))], axis=1)
    # Channel-pad 3 -> 8 with zeros (matched by zero rows in the padded W1) so
    # layer 1 is a plain MXU matmul with a uniform layout.
    x = jnp.pad(x, ((0, 0), (0, 0), (0, 5)))

    # Fold BN scale into the weight columns in f32, then cast to bf16.
    prepared = []
    for i in range(6):
        w, s, b = params[3 * i], params[3 * i + 1], params[3 * i + 2]
        w = w * s                                           # f32 fold
        if i == 0:
            w = jnp.pad(w, ((0, 8 - w.shape[0]), (0, 0)))   # (8, 64)
        if i == 5 and Fp != F:
            w = jnp.pad(w, ((0, 0), (0, Fp - F)))
            b = jnp.pad(b, ((0, 0), (0, Fp - F)))
        prepared += [w.astype(jnp.bfloat16), b]

    def const_spec(p):
        zeros = (0,) * p.ndim
        return pl.BlockSpec(p.shape, lambda bi, nk: zeros)

    in_specs = [pl.BlockSpec((bt, nt, 8), lambda bi, nk: (bi, nk, 0))]
    in_specs += [const_spec(p) for p in prepared]

    out = pl.pallas_call(
        pointnet_kernel,
        out_shape=jax.ShapeDtypeStruct((Bp, Fp), jnp.float32),
        grid=(Bp // bt, Np // nt),
        in_specs=in_specs,
        out_specs=pl.BlockSpec((bt, Fp), lambda bi, nk: (bi, 0)),
        scratch_shapes=[pltpu.VMEM((bt, 1024), acc_dtype)],
        compiler_params=pltpu.CompilerParams(
            dimension_semantics=("parallel", "arbitrary"),
            vmem_limit_bytes=vmem_limit_bytes),
    )(x, *prepared)
    return out[:B, :F]


def make_params(key, feat_len):
    """Deterministic synthetic parameters matching the PyTorch module shapes.

    Conv1d(cin, cout, 1) weight (cout, cin, 1) -> stored as (cin, cout).
    BatchNorm folded (inference): scale = gamma / sqrt(var + eps),
    bias = (conv_bias - running_mean) * scale + beta.
    """
    eps = 1e-5
    dims = [(3, 64), (64, 64), (64, 64), (64, 128), (128, 1024), (1024, feat_len)]
    params = []
    for (cin, cout) in dims:
        key, kw, kb, kg, kbe, km, kv = jax.random.split(key, 7)
        w = jax.random.normal(kw, (cin, cout), jnp.float32) * (1.0 / jnp.sqrt(cin))
        cb = jax.random.normal(kb, (cout,), jnp.float32) * 0.05
        gamma = 1.0 + 0.1 * jax.random.normal(kg, (cout,), jnp.float32)
        beta = 0.05 * jax.random.normal(kbe, (cout,), jnp.float32)
        mean = 0.05 * jax.random.normal(km, (cout,), jnp.float32)
        var = jnp.abs(jax.random.normal(kv, (cout,), jnp.float32)) * 0.1 + 1.0
        scale = gamma / jnp.sqrt(var + eps)
        bias = (cb - mean) * scale + beta
        params += [w, scale.reshape(1, cout), bias.reshape(1, cout)]
    return params


def pointnet_reference(x, params):
    """Pure-JAX reference with numerics matched to the kernel (BN scale folded
    into f32 weights before the bf16 cast, bf16 matmul operands, f32
    accumulation / bias / ReLU)."""
    B, N, _ = x.shape
    h = x.reshape(B * N, 3)
    for i in range(5):
        w, s, b = params[3 * i], params[3 * i + 1], params[3 * i + 2]
        wf = (w * s).astype(jnp.bfloat16)
        y = jnp.dot(h.astype(jnp.bfloat16), wf, preferred_element_type=jnp.float32)
        h = jnp.maximum(y + b, 0.0)
    g = h.reshape(B, N, -1).max(axis=1)
    w, s, b = params[15], params[16], params[17]
    wf = (w * s).astype(jnp.bfloat16)
    y = jnp.dot(g.astype(jnp.bfloat16), wf, preferred_element_type=jnp.float32)
    return jnp.maximum(y + b, 0.0)


if __name__ == "__main__":
    key = jax.random.PRNGKey(0)
    kx, kp = jax.random.split(key)

    B, N, feat_len = 4, 256, 32
    x = jax.random.normal(kx, (B, N, 3), jnp.float32)
    params = make_params(kp, feat_len)

    out = pointnet_forward(x, params)
    out = jax.block_until_ready(out)

    ref = pointnet_reference(x, params)
    assert out.shape == (B, feat_len)
    assert jnp.allclose(out, ref, atol=1e-2, rtol=1e-2), "mismatch vs reference"

    print("KERNEL_OK")
</pallas_src>

<mosaic_0001>
module attributes {stable_mosaic.version = 11 : i64} {
  func.func @pointnet_kernel(%arg0: i32, %arg1: i32, %arg2: memref<4x256x8xf32, #tpu.memory_space<vmem>>, %arg3: memref<8x64xbf16, #tpu.memory_space<vmem>>, %arg4: memref<1x64xf32, #tpu.memory_space<vmem>>, %arg5: memref<64x64xbf16, #tpu.memory_space<vmem>>, %arg6: memref<1x64xf32, #tpu.memory_space<vmem>>, %arg7: memref<64x64xbf16, #tpu.memory_space<vmem>>, %arg8: memref<1x64xf32, #tpu.memory_space<vmem>>, %arg9: memref<64x128xbf16, #tpu.memory_space<vmem>>, %arg10: memref<1x128xf32, #tpu.memory_space<vmem>>, %arg11: memref<128x1024xbf16, #tpu.memory_space<vmem>>, %arg12: memref<1x1024xf32, #tpu.memory_space<vmem>>, %arg13: memref<1024x128xbf16, #tpu.memory_space<vmem>>, %arg14: memref<1x128xf32, #tpu.memory_space<vmem>>, %arg15: memref<4x128xf32, #tpu.memory_space<vmem>>, %arg16: memref<4x1024xbf16, #tpu.memory_space<vmem>>) attributes {dimension_semantics = [#tpu.dimension_semantics<parallel>, #tpu.dimension_semantics<arbitrary>], iteration_bounds = array<i64: 1, 1>, scalar_prefetch = 0 : i64, scratch_operands = 1 : i64, tpu.core_type = #tpu.core_type<tc>, window_params = [{transform_indices = @transform_0, window_bounds = array<i64: 4, 256, 8>}, {pipeline_mode = #tpu.pipeline_mode<synchronous>, transform_indices = @transform_1, window_bounds = array<i64: 8, 64>}, {pipeline_mode = #tpu.pipeline_mode<synchronous>, transform_indices = @transform_2, window_bounds = array<i64: 1, 64>}, {pipeline_mode = #tpu.pipeline_mode<synchronous>, transform_indices = @transform_3, window_bounds = array<i64: 64, 64>}, {pipeline_mode = #tpu.pipeline_mode<synchronous>, transform_indices = @transform_4, window_bounds = array<i64: 1, 64>}, {pipeline_mode = #tpu.pipeline_mode<synchronous>, transform_indices = @transform_5, window_bounds = array<i64: 64, 64>}, {pipeline_mode = #tpu.pipeline_mode<synchronous>, transform_indices = @transform_6, window_bounds = array<i64: 1, 64>}, {pipeline_mode = #tpu.pipeline_mode<synchronous>, transform_indices = @transform_7, window_bounds = array<i64: 64, 128>}, {pipeline_mode = #tpu.pipeline_mode<synchronous>, transform_indices = @transform_8, window_bounds = array<i64: 1, 128>}, {pipeline_mode = #tpu.pipeline_mode<synchronous>, transform_indices = @transform_9, window_bounds = array<i64: 128, 1024>}, {pipeline_mode = #tpu.pipeline_mode<synchronous>, transform_indices = @transform_10, window_bounds = array<i64: 1, 1024>}, {pipeline_mode = #tpu.pipeline_mode<synchronous>, transform_indices = @transform_11, window_bounds = array<i64: 1024, 128>}, {pipeline_mode = #tpu.pipeline_mode<synchronous>, transform_indices = @transform_12, window_bounds = array<i64: 1, 128>}, {transform_indices = @transform_13, window_bounds = array<i64: 4, 128>}]} {
    %c0 = arith.constant 0 : index
    %c0_0 = arith.constant 0 : index
    %c0_1 = arith.constant 0 : index
    %0 = vector.load %arg2[%c0, %c0_0, %c0_1] : memref<4x256x8xf32, #tpu.memory_space<vmem>>, vector<4x256x8xf32>
    %1 = vector.shape_cast %0 : vector<4x256x8xf32> to vector<1024x8xf32>
    %2 = arith.truncf %1 : vector<1024x8xf32> to vector<1024x8xbf16>
    %c0_2 = arith.constant 0 : index
    %c0_3 = arith.constant 0 : index
    %3 = vector.load %arg3[%c0_2, %c0_3] : memref<8x64xbf16, #tpu.memory_space<vmem>>, vector<8x64xbf16>
    %cst = arith.constant dense<0.000000e+00> : vector<1024x64xf32>
    %4 = tpu.matmul %2, %3, %cst {dimension_numbers = #tpu.dot_dimension_numbers<[1], [0], [0], [1], [0, 0, 1, 1], [], []>} : vector<1024x8xbf16>, vector<8x64xbf16>, vector<1024x64xf32> -> vector<1024x64xf32>
    %c0_4 = arith.constant 0 : index
    %c0_5 = arith.constant 0 : index
    %5 = vector.load %arg4[%c0_4, %c0_5] : memref<1x64xf32, #tpu.memory_space<vmem>>, vector<1x64xf32>
    %6 = vector.broadcast %5 : vector<1x64xf32> to vector<1024x64xf32>
    %7 = arith.addf %4, %6 : vector<1024x64xf32>
    %cst_6 = arith.constant 0.000000e+00 : f32
    %8 = vector.broadcast %cst_6 : f32 to vector<1024x64xf32>
    %9 = arith.maximumf %7, %8 : vector<1024x64xf32>
    %10 = arith.truncf %9 : vector<1024x64xf32> to vector<1024x64xbf16>
    %c0_7 = arith.constant 0 : index
    %c0_8 = arith.constant 0 : index
    %11 = vector.load %arg5[%c0_7, %c0_8] : memref<64x64xbf16, #tpu.memory_space<vmem>>, vector<64x64xbf16>
    %cst_9 = arith.constant dense<0.000000e+00> : vector<1024x64xf32>
    %12 = tpu.matmul %10, %11, %cst_9 {dimension_numbers = #tpu.dot_dimension_numbers<[1], [0], [0], [1], [0, 0, 1, 1], [], []>} : vector<1024x64xbf16>, vector<64x64xbf16>, vector<1024x64xf32> -> vector<1024x64xf32>
    %c0_10 = arith.constant 0 : index
    %c0_11 = arith.constant 0 : index
    %13 = vector.load %arg6[%c0_10, %c0_11] : memref<1x64xf32, #tpu.memory_space<vmem>>, vector<1x64xf32>
    %14 = vector.broadcast %13 : vector<1x64xf32> to vector<1024x64xf32>
    %15 = arith.addf %12, %14 : vector<1024x64xf32>
    %cst_12 = arith.constant 0.000000e+00 : f32
    %16 = vector.broadcast %cst_12 : f32 to vector<1024x64xf32>
    %17 = arith.maximumf %15, %16 : vector<1024x64xf32>
    %18 = arith.truncf %17 : vector<1024x64xf32> to vector<1024x64xbf16>
    %c0_13 = arith.constant 0 : index
    %c0_14 = arith.constant 0 : index
    %19 = vector.load %arg7[%c0_13, %c0_14] : memref<64x64xbf16, #tpu.memory_space<vmem>>, vector<64x64xbf16>
    %cst_15 = arith.constant dense<0.000000e+00> : vector<1024x64xf32>
    %20 = tpu.matmul %18, %19, %cst_15 {dimension_numbers = #tpu.dot_dimension_numbers<[1], [0], [0], [1], [0, 0, 1, 1], [], []>} : vector<1024x64xbf16>, vector<64x64xbf16>, vector<1024x64xf32> -> vector<1024x64xf32>
    %c0_16 = arith.constant 0 : index
    %c0_17 = arith.constant 0 : index
    %21 = vector.load %arg8[%c0_16, %c0_17] : memref<1x64xf32, #tpu.memory_space<vmem>>, vector<1x64xf32>
    %22 = vector.broadcast %21 : vector<1x64xf32> to vector<1024x64xf32>
    %23 = arith.addf %20, %22 : vector<1024x64xf32>
    %cst_18 = arith.constant 0.000000e+00 : f32
    %24 = vector.broadcast %cst_18 : f32 to vector<1024x64xf32>
    %25 = arith.maximumf %23, %24 : vector<1024x64xf32>
    %26 = arith.truncf %25 : vector<1024x64xf32> to vector<1024x64xbf16>
    %c0_19 = arith.constant 0 : index
    %c0_20 = arith.constant 0 : index
    %27 = vector.load %arg9[%c0_19, %c0_20] : memref<64x128xbf16, #tpu.memory_space<vmem>>, vector<64x128xbf16>
    %cst_21 = arith.constant dense<0.000000e+00> : vector<1024x128xf32>
    %28 = tpu.matmul %26, %27, %cst_21 {dimension_numbers = #tpu.dot_dimension_numbers<[1], [0], [0], [1], [0, 0, 1, 1], [], []>} : vector<1024x64xbf16>, vector<64x128xbf16>, vector<1024x128xf32> -> vector<1024x128xf32>
    %c0_22 = arith.constant 0 : index
    %c0_23 = arith.constant 0 : index
    %29 = vector.load %arg10[%c0_22, %c0_23] : memref<1x128xf32, #tpu.memory_space<vmem>>, vector<1x128xf32>
    %30 = vector.broadcast %29 : vector<1x128xf32> to vector<1024x128xf32>
    %31 = arith.addf %28, %30 : vector<1024x128xf32>
    %cst_24 = arith.constant 0.000000e+00 : f32
    %32 = vector.broadcast %cst_24 : f32 to vector<1024x128xf32>
    %33 = arith.maximumf %31, %32 : vector<1024x128xf32>
    %34 = arith.truncf %33 : vector<1024x128xf32> to vector<1024x128xbf16>
    %c0_25 = arith.constant 0 : index
    %c0_26 = arith.constant 0 : index
    %35 = vector.load %arg11[%c0_25, %c0_26] : memref<128x1024xbf16, #tpu.memory_space<vmem>>, vector<128x1024xbf16>
    %cst_27 = arith.constant dense<0.000000e+00> : vector<1024x1024xf32>
    %36 = tpu.matmul %34, %35, %cst_27 {dimension_numbers = #tpu.dot_dimension_numbers<[1], [0], [0], [1], [0, 0, 1, 1], [], []>} : vector<1024x128xbf16>, vector<128x1024xbf16>, vector<1024x1024xf32> -> vector<1024x1024xf32>
    %c0_28 = arith.constant 0 : index
    %c0_29 = arith.constant 0 : index
    %37 = vector.load %arg12[%c0_28, %c0_29] : memref<1x1024xf32, #tpu.memory_space<vmem>>, vector<1x1024xf32>
    %38 = vector.broadcast %37 : vector<1x1024xf32> to vector<1024x1024xf32>
    %39 = arith.addf %36, %38 : vector<1024x1024xf32>
    %cst_30 = arith.constant 0.000000e+00 : f32
    %40 = vector.broadcast %cst_30 : f32 to vector<1024x1024xf32>
    %41 = arith.maximumf %39, %40 : vector<1024x1024xf32>
    %42 = vector.shape_cast %41 : vector<1024x1024xf32> to vector<4x256x1024xf32>
    %cst_31 = arith.constant dense<0xFF800000> : vector<4x1024xf32>
    %43 = vector.multi_reduction <maximumf>, %42, %cst_31 [1] : vector<4x256x1024xf32> to vector<4x1024xf32>
    %c0_i32 = arith.constant 0 : i32
    %44 = arith.cmpi eq, %arg1, %c0_i32 : i32
    %45 = arith.extui %44 : i1 to i32
    %c0_i32_32 = arith.constant 0 : i32
    %46 = arith.cmpi ne, %45, %c0_i32_32 : i32
    scf.if %46 {
      %cst_39 = arith.constant 0.000000e+00 : bf16
      %54 = vector.broadcast %cst_39 : bf16 to vector<4x1024xbf16>
      %c0_40 = arith.constant 0 : index
      %c0_41 = arith.constant 0 : index
      %55 = vector.load %arg16[%c0_40, %c0_41] : memref<4x1024xbf16, #tpu.memory_space<vmem>>, vector<4x1024xbf16>
      tpu.vector_store %arg16[%c0_40, %c0_41], %54 {strides = array<i32>} : memref<4x1024xbf16, #tpu.memory_space<vmem>>, vector<4x1024xbf16>,
    } else {
    }
    %c0_33 = arith.constant 0 : index
    %c0_34 = arith.constant 0 : index
    %47 = vector.load %arg16[%c0_33, %c0_34] : memref<4x1024xbf16, #tpu.memory_space<vmem>>, vector<4x1024xbf16>
    %48 = arith.truncf %43 : vector<4x1024xf32> to vector<4x1024xbf16>
    %49 = arith.maximumf %47, %48 : vector<4x1024xbf16>
    %c0_35 = arith.constant 0 : index
    %c0_36 = arith.constant 0 : index
    %50 = vector.load %arg16[%c0_35, %c0_36] : memref<4x1024xbf16, #tpu.memory_space<vmem>>, vector<4x1024xbf16>
    tpu.vector_store %arg16[%c0_35, %c0_36], %49 {strides = array<i32>} : memref<4x1024xbf16, #tpu.memory_space<vmem>>, vector<4x1024xbf16>,
    %c0_i32_37 = arith.constant 0 : i32
    %51 = arith.cmpi eq, %arg1, %c0_i32_37 : i32
    %52 = arith.extui %51 : i1 to i32
    %c0_i32_38 = arith.constant 0 : i32
    %53 = arith.cmpi ne, %52, %c0_i32_38 : i32
    scf.if %53 {
      %c0_39 = arith.constant 0 : index
      %c0_40 = arith.constant 0 : index
      %54 = vector.load %arg16[%c0_39, %c0_40] : memref<4x1024xbf16, #tpu.memory_space<vmem>>, vector<4x1024xbf16>
      %c0_41 = arith.constant 0 : index
      %c0_42 = arith.constant 0 : index
      %55 = vector.load %arg13[%c0_41, %c0_42] : memref<1024x128xbf16, #tpu.memory_space<vmem>>, vector<1024x128xbf16>
      %cst_43 = arith.constant dense<0.000000e+00> : vector<4x128xf32>
      %56 = tpu.matmul %54, %55, %cst_43 {dimension_numbers = #tpu.dot_dimension_numbers<[1], [0], [0], [1], [0, 0, 1, 1], [], []>} : vector<4x1024xbf16>, vector<1024x128xbf16>, vector<4x128xf32> -> vector<4x128xf32>
      %c0_44 = arith.constant 0 : index
      %c0_45 = arith.constant 0 : index
      %57 = vector.load %arg14[%c0_44, %c0_45] : memref<1x128xf32, #tpu.memory_space<vmem>>, vector<1x128xf32>
      %58 = vector.broadcast %57 : vector<1x128xf32> to vector<4x128xf32>
      %59 = arith.addf %56, %58 : vector<4x128xf32>
      %cst_46 = arith.constant 0.000000e+00 : f32
      %60 = vector.broadcast %cst_46 : f32 to vector<4x128xf32>
      %61 = arith.maximumf %59, %60 : vector<4x128xf32>
      %c0_47 = arith.constant 0 : index
      %c0_48 = arith.constant 0 : index
      %62 = vector.load %arg15[%c0_47, %c0_48] : memref<4x128xf32, #tpu.memory_space<vmem>>, vector<4x128xf32>
      tpu.vector_store %arg15[%c0_47, %c0_48], %61 {strides = array<i32>} : memref<4x128xf32, #tpu.memory_space<vmem>>, vector<4x128xf32>,
    } else {
    }
    return
  }
  func.func @transform_0(%arg0: i32, %arg1: i32) -> (i32, i32, i32) {
    %c0_i32 = arith.constant 0 : i32
    %c0_i32_0 = arith.constant 0 : i32
    return %arg0, %arg1, %c0_i32 : i32, i32, i32
  }
  func.func @transform_1(%arg0: i32, %arg1: i32) -> (i32, i32) {
    %c0_i32 = arith.constant 0 : i32
    %c0_i32_0 = arith.constant 0 : i32
    %c0_i32_1 = arith.constant 0 : i32
    return %c0_i32, %c0_i32_0 : i32, i32
  }
  func.func @transform_2(%arg0: i32, %arg1: i32) -> (i32, i32) {
    %c0_i32 = arith.constant 0 : i32
    %c0_i32_0 = arith.constant 0 : i32
    %c0_i32_1 = arith.constant 0 : i32
    return %c0_i32, %c0_i32_0 : i32, i32
  }
  func.func @transform_3(%arg0: i32, %arg1: i32) -> (i32, i32) {
    %c0_i32 = arith.constant 0 : i32
    %c0_i32_0 = arith.constant 0 : i32
    %c0_i32_1 = arith.constant 0 : i32
    return %c0_i32, %c0_i32_0 : i32, i32
  }
  func.func @transform_4(%arg0: i32, %arg1: i32) -> (i32, i32) {
    %c0_i32 = arith.constant 0 : i32
    %c0_i32_0 = arith.constant 0 : i32
    %c0_i32_1 = arith.constant 0 : i32
    return %c0_i32, %c0_i32_0 : i32, i32
  }
  func.func @transform_5(%arg0: i32, %arg1: i32) -> (i32, i32) {
    %c0_i32 = arith.constant 0 : i32
    %c0_i32_0 = arith.constant 0 : i32
    %c0_i32_1 = arith.constant 0 : i32
    return %c0_i32, %c0_i32_0 : i32, i32
  }
  func.func @transform_6(%arg0: i32, %arg1: i32) -> (i32, i32) {
    %c0_i32 = arith.constant 0 : i32
    %c0_i32_0 = arith.constant 0 : i32
    %c0_i32_1 = arith.constant 0 : i32
    return %c0_i32, %c0_i32_0 : i32, i32
  }
  func.func @transform_7(%arg0: i32, %arg1: i32) -> (i32, i32) {
    %c0_i32 = arith.constant 0 : i32
    %c0_i32_0 = arith.constant 0 : i32
    %c0_i32_1 = arith.constant 0 : i32
    return %c0_i32, %c0_i32_0 : i32, i32
  }
  func.func @transform_8(%arg0: i32, %arg1: i32) -> (i32, i32) {
    %c0_i32 = arith.constant 0 : i32
    %c0_i32_0 = arith.constant 0 : i32
    %c0_i32_1 = arith.constant 0 : i32
    return %c0_i32, %c0_i32_0 : i32, i32
  }
  func.func @transform_9(%arg0: i32, %arg1: i32) -> (i32, i32) {
    %c0_i32 = arith.constant 0 : i32
    %c0_i32_0 = arith.constant 0 : i32
    %c0_i32_1 = arith.constant 0 : i32
    return %c0_i32, %c0_i32_0 : i32, i32
  }
  func.func @transform_10(%arg0: i32, %arg1: i32) -> (i32, i32) {
    %c0_i32 = arith.constant 0 : i32
    %c0_i32_0 = arith.constant 0 : i32
    %c0_i32_1 = arith.constant 0 : i32
    return %c0_i32, %c0_i32_0 : i32, i32
  }
  func.func @transform_11(%arg0: i32, %arg1: i32) -> (i32, i32) {
    %c0_i32 = arith.constant 0 : i32
    %c0_i32_0 = arith.constant 0 : i32
    %c0_i32_1 = arith.constant 0 : i32
    return %c0_i32, %c0_i32_0 : i32, i32
  }
  func.func @transform_12(%arg0: i32, %arg1: i32) -> (i32, i32) {
    %c0_i32 = arith.constant 0 : i32
    %c0_i32_0 = arith.constant 0 : i32
    %c0_i32_1 = arith.constant 0 : i32
    return %c0_i32, %c0_i32_0 : i32, i32
  }
  func.func @transform_13(%arg0: i32, %arg1: i32) -> (i32, i32) {
    %c0_i32 = arith.constant 0 : i32
    %c0_i32_0 = arith.constant 0 : i32
    return %arg0, %c0_i32 : i32, i32
  }
}

</mosaic_0001>

<llo_original>
// kernel: tpu_custom_call.1
$region0: #{tpu_custom_call.1}
  #allocation0 [shape = 'u32[]', space=smem, size = 0x4, offset = 0x4, fixed_abs, tag = 'smem constant byte address 0x4 - core index']
  #allocation1 [shape = 'u32[144,128]{1,0:T(1,128)}', space=vmem, size = 0x12000, scoped, tag = 'internal scratch']
  #allocation2 [shape = 'bf16[4,1024]{1,0:T(4,128)(2,1)}', space=vmem, size = 0x2000, scoped, tag = 'scratch operand']
  %s0 = inlined_call_operand.vmem [shape: f32[4,256,8], index: 0, kind: input, shape index: {}]
  %s1 = inlined_call_operand.hbm [shape: bf16[8,64], index: 1, kind: input, shape index: {}]
  %s2 = inlined_call_operand.hbm [shape: f32[1,64], index: 2, kind: input, shape index: {}]
  %s3 = inlined_call_operand.vmem [shape: bf16[64,64], index: 3, kind: input, shape index: {}]
  %s4 = inlined_call_operand.vmem [shape: f32[1,64], index: 4, kind: input, shape index: {}]
  %s5 = inlined_call_operand.vmem [shape: bf16[64,64], index: 5, kind: input, shape index: {}]
  %s6 = inlined_call_operand.vmem [shape: f32[1,64], index: 6, kind: input, shape index: {}]
  %s7 = inlined_call_operand.hbm [shape: bf16[64,128], index: 7, kind: input, shape index: {}]
  %s8 = inlined_call_operand.vmem [shape: f32[1,128], index: 8, kind: input, shape index: {}]
  %s9 = inlined_call_operand.vmem [shape: bf16[128,1024], index: 9, kind: input, shape index: {}]
  %s10 = inlined_call_operand.vmem [shape: f32[1,1024], index: 10, kind: input, shape index: {}]
  %s11 = inlined_call_operand.vmem [shape: bf16[1024,128], index: 11, kind: input, shape index: {}]
  %s12 = inlined_call_operand.vmem [shape: f32[1,128], index: 12, kind: input, shape index: {}]
  %s13 = inlined_call_operand.hbm [shape: f32[4,128], index: 13, kind: output, shape index: {}]
  %s14 = sld [smem:[#allocation0]]
  $region82: #{tpu_custom_call.1} parent=0
    _
  %s16 = ssub.s32 1, %s14
  %s17 = scalar_select 0, %s16, %s14
  $region1: #{tpu_custom_call.1} parent=0
    #allocation3 [shape = 'u8[2048]{0}', space=vmem, size = 0x800, scoped, tag = 'input window, operand 1, single buffered']
    #allocation4 [shape = 's32[1]{0}', space=sflag, size = 0x4, scoped, tag = 'scoped memory for tpu_custom_call.1']
    #allocation5 [shape = 's32[1]{0}', space=sflag, size = 0x4, scoped, tag = 'scoped memory for tpu_custom_call.1']
    #allocation6 [shape = 'u8[512]{0}', space=vmem, size = 0x400, scoped, tag = 'input window, operand 2, single buffered']
    #allocation7 [shape = 's32[1]{0}', space=sflag, size = 0x4, scoped, tag = 'scoped memory for tpu_custom_call.1']
    #allocation8 [shape = 'u8[16384]{0}', space=vmem, size = 0x4000, scoped, tag = 'input window, operand 7, single buffered']
    #allocation9 [shape = 'u8[2048]{0}', space=vmem, size = 0x800, scoped, tag = 'output window, operand 0, single buffered']
    %18 = vsyncpa [#allocation4], 0
    %19 = vsyncpa [#allocation7], 0
    %20 = vsyncpa [#allocation5], 0
    // Predicated region
    $region2: #{tpu_custom_call.1} parent=1 // pred_check
      _
    $region3: #{tpu_custom_call.1} parent=1 // pred_check_branch
      %22 = sbr.rel (0) target = $region5
    $region4: #{tpu_custom_call.1} parent=1 // pred_region
      _
    $region5: #{tpu_custom_call.1} parent=1 // pred_fallthru
      _
    // Predicated region
    $region6: #{tpu_custom_call.1} parent=1 // pred_check
      _
    $region7: #{tpu_custom_call.1} parent=1 // pred_check_branch
      %24 = sbr.rel (0) target = $region9
    $region8: #{tpu_custom_call.1} parent=1 // pred_region
      %s26 = ssub.s32 64, 64
      %27 = vsyncadd [#allocation4], %s26
      %s29 = sshll.u32 [#allocation3], 4
      %s30 = int_to_ptr.vmem [resolvable:$true] %s29
      %32 = dma.hbm_to_vmem [thread:$0]  %s1, 64, %s30, [#allocation4]
    $region9: #{tpu_custom_call.1} parent=1 // pred_fallthru
      _
    // Predicated region
    $region10: #{tpu_custom_call.1} parent=1 // pred_check
      _
    $region11: #{tpu_custom_call.1} parent=1 // pred_check_branch
      %34 = sbr.rel (0) target = $region13
    $region12: #{tpu_custom_call.1} parent=1 // pred_region
      %s36 = ssub.s32 16, 16
      %37 = vsyncadd [#allocation7], %s36
      %s39 = sshll.u32 [#allocation6], 4
      %s40 = int_to_ptr.vmem [resolvable:$true] %s39
      %42 = dma.hbm_to_vmem [thread:$0]  %s2, 16, %s40, [#allocation7]
    $region13: #{tpu_custom_call.1} parent=1 // pred_fallthru
      _
    // Predicated region
    $region14: #{tpu_custom_call.1} parent=1 // pred_check
      _
    $region15: #{tpu_custom_call.1} parent=1 // pred_check_branch
      %44 = sbr.rel (0) target = $region17
    $region16: #{tpu_custom_call.1} parent=1 // pred_region
      _
    $region17: #{tpu_custom_call.1} parent=1 // pred_fallthru
      _
    // Predicated region
    $region18: #{tpu_custom_call.1} parent=1 // pred_check
      _
    $region19: #{tpu_custom_call.1} parent=1 // pred_check_branch
      %46 = sbr.rel (0) target = $region21
    $region20: #{tpu_custom_call.1} parent=1 // pred_region
      _
    $region21: #{tpu_custom_call.1} parent=1 // pred_fallthru
      _
    // Predicated region
    $region22: #{tpu_custom_call.1} parent=1 // pred_check
      _
    $region23: #{tpu_custom_call.1} parent=1 // pred_check_branch
      %48 = sbr.rel (0) target = $region25
    $region24: #{tpu_custom_call.1} parent=1 // pred_region
      _
    $region25: #{tpu_custom_call.1} parent=1 // pred_fallthru
      _
    // Predicated region
    $region26: #{tpu_custom_call.1} parent=1 // pred_check
      _
    $region27: #{tpu_custom_call.1} parent=1 // pred_check_branch
      %50 = sbr.rel (0) target = $region29
    $region28: #{tpu_custom_call.1} parent=1 // pred_region
      _
    $region29: #{tpu_custom_call.1} parent=1 // pred_fallthru
      _
    // Predicated region
    $region30: #{tpu_custom_call.1} parent=1 // pred_check
      _
    $region31: #{tpu_custom_call.1} parent=1 // pred_check_branch
      %52 = sbr.rel (0) target = $region33
    $region32: #{tpu_custom_call.1} parent=1 // pred_region
      %s54 = ssub.s32 512, 512
      %55 = vsyncadd [#allocation7], %s54
      %s56 = sshll.u32 [#allocation8], 4
      %s57 = int_to_ptr.vmem [resolvable:$true] %s56
      %62 = dma.hbm_to_vmem [thread:$0]  %s7, 512, %s57, [#allocation7], 64, 64, 4
    $region33: #{tpu_custom_call.1} parent=1 // pred_fallthru
      _
    // Predicated region
    $region34: #{tpu_custom_call.1} parent=1 // pred_check
      _
    $region35: #{tpu_custom_call.1} parent=1 // pred_check_branch
      %64 = sbr.rel (0) target = $region37
    $region36: #{tpu_custom_call.1} parent=1 // pred_region
      _
    $region37: #{tpu_custom_call.1} parent=1 // pred_fallthru
      _
    // Predicated region
    $region38: #{tpu_custom_call.1} parent=1 // pred_check
      _
    $region39: #{tpu_custom_call.1} parent=1 // pred_check_branch
      %66 = sbr.rel (0) target = $region41
    $region40: #{tpu_custom_call.1} parent=1 // pred_region
      _
    $region41: #{tpu_custom_call.1} parent=1 // pred_fallthru
      _
    // Predicated region
    $region42: #{tpu_custom_call.1} parent=1 // pred_check
      _
    $region43: #{tpu_custom_call.1} parent=1 // pred_check_branch
      %68 = sbr.rel (0) target = $region45
    $region44: #{tpu_custom_call.1} parent=1 // pred_region
      _
    $region45: #{tpu_custom_call.1} parent=1 // pred_fallthru
      _
    // Predicated region
    $region46: #{tpu_custom_call.1} parent=1 // pred_check
      _
    $region47: #{tpu_custom_call.1} parent=1 // pred_check_branch
      %70 = sbr.rel (0) target = $region49
    $region48: #{tpu_custom_call.1} parent=1 // pred_region
      _
    $region49: #{tpu_custom_call.1} parent=1 // pred_fallthru
      _
    // Predicated region
    $region50: #{tpu_custom_call.1} parent=1 // pred_check
      _
    $region51: #{tpu_custom_call.1} parent=1 // pred_check_branch
      %72 = sbr.rel (0) target = $region53
    $region52: #{tpu_custom_call.1} parent=1 // pred_region
      _
    $region53: #{tpu_custom_call.1} parent=1 // pred_fallthru
      _
    // Predicated region
    $region54: #{tpu_custom_call.1} parent=1 // pred_check
      _
    $region55: #{tpu_custom_call.1} parent=1 // pred_check_branch
      %74 = sbr.rel (0) target = $region57
    $region56: #{tpu_custom_call.1} parent=1 // pred_region
      %75 = dma.done [#allocation4], 64
    $region57: #{tpu_custom_call.1} parent=1 // pred_fallthru
      _
    // Predicated region
    $region58: #{tpu_custom_call.1} parent=1 // pred_check
      _
    $region59: #{tpu_custom_call.1} parent=1 // pred_check_branch
      %77 = sbr.rel (0) target = $region61
    $region60: #{tpu_custom_call.1} parent=1 // pred_region
      %78 = dma.done [#allocation7], 16
    $region61: #{tpu_custom_call.1} parent=1 // pred_fallthru
      _
    // Predicated region
    $region62: #{tpu_custom_call.1} parent=1 // pred_check
      _
    $region63: #{tpu_custom_call.1} parent=1 // pred_check_branch
      %80 = sbr.rel (0) target = $region65
    $region64: #{tpu_custom_call.1} parent=1 // pred_region
      %81 = dma.done [#allocation7], 512
    $region65: #{tpu_custom_call.1} parent=1 // pred_fallthru
      _
    %v83 = vld [vmem:[%s0] sm:$0xff]
    %v84 = vld [vmem:[%s0 + $0x8] sm:$0xff]
    %v85 = vld [vmem:[%s0 + $0x10] sm:$0xff]
    %v86 = vld [vmem:[%s0 + $0x18] sm:$0xff]
    %v87 = vld [vmem:[%s0 + $0x20] sm:$0xff]
    %v88 = vld [vmem:[%s0 + $0x28] sm:$0xff]
    %v89 = vld [vmem:[%s0 + $0x30] sm:$0xff]
    %v90 = vld [vmem:[%s0 + $0x38] sm:$0xff]
    %v91 = vld [vmem:[%s0 + $0x40] sm:$0xff]
    %v92 = vld [vmem:[%s0 + $0x48] sm:$0xff]
    %v93 = vld [vmem:[%s0 + $0x50] sm:$0xff]
    %v94 = vld [vmem:[%s0 + $0x58] sm:$0xff]
    %v95 = vld [vmem:[%s0 + $0x60] sm:$0xff]
    %v96 = vld [vmem:[%s0 + $0x68] sm:$0xff]
    %v97 = vld [vmem:[%s0 + $0x70] sm:$0xff]
    %v98 = vld [vmem:[%s0 + $0x78] sm:$0xff]
    %v99 = vld [vmem:[%s0 + $0x80] sm:$0xff]
    %v100 = vld [vmem:[%s0 + $0x88] sm:$0xff]
    %v101 = vld [vmem:[%s0 + $0x90] sm:$0xff]
    %v102 = vld [vmem:[%s0 + $0x98] sm:$0xff]
    %v103 = vld [vmem:[%s0 + $0xa0] sm:$0xff]
    %v104 = vld [vmem:[%s0 + $0xa8] sm:$0xff]
    %v105 = vld [vmem:[%s0 + $0xb0] sm:$0xff]
    %v106 = vld [vmem:[%s0 + $0xb8] sm:$0xff]
    %v107 = vld [vmem:[%s0 + $0xc0] sm:$0xff]
    %v108 = vld [vmem:[%s0 + $0xc8] sm:$0xff]
    %v109 = vld [vmem:[%s0 + $0xd0] sm:$0xff]
    %v110 = vld [vmem:[%s0 + $0xd8] sm:$0xff]
    %v111 = vld [vmem:[%s0 + $0xe0] sm:$0xff]
    %v112 = vld [vmem:[%s0 + $0xe8] sm:$0xff]
    %v113 = vld [vmem:[%s0 + $0xf0] sm:$0xff]
    %v114 = vld [vmem:[%s0 + $0xf8] sm:$0xff]
    %v115 = vld [vmem:[%s0 + $0x100] sm:$0xff]
    %v116 = vld [vmem:[%s0 + $0x108] sm:$0xff]
    %v117 = vld [vmem:[%s0 + $0x110] sm:$0xff]
    %v118 = vld [vmem:[%s0 + $0x118] sm:$0xff]
    %v119 = vld [vmem:[%s0 + $0x120] sm:$0xff]
    %v120 = vld [vmem:[%s0 + $0x128] sm:$0xff]
    %v121 = vld [vmem:[%s0 + $0x130] sm:$0xff]
    %v122 = vld [vmem:[%s0 + $0x138] sm:$0xff]
    %v123 = vld [vmem:[%s0 + $0x140] sm:$0xff]
    %v124 = vld [vmem:[%s0 + $0x148] sm:$0xff]
    %v125 = vld [vmem:[%s0 + $0x150] sm:$0xff]
    %v126 = vld [vmem:[%s0 + $0x158] sm:$0xff]
    %v127 = vld [vmem:[%s0 + $0x160] sm:$0xff]
    %v128 = vld [vmem:[%s0 + $0x168] sm:$0xff]
    %v129 = vld [vmem:[%s0 + $0x170] sm:$0xff]
    %v130 = vld [vmem:[%s0 + $0x178] sm:$0xff]
    %v131 = vld [vmem:[%s0 + $0x180] sm:$0xff]
    %v132 = vld [vmem:[%s0 + $0x188] sm:$0xff]
    %v133 = vld [vmem:[%s0 + $0x190] sm:$0xff]
    %v134 = vld [vmem:[%s0 + $0x198] sm:$0xff]
    %v135 = vld [vmem:[%s0 + $0x1a0] sm:$0xff]
    %v136 = vld [vmem:[%s0 + $0x1a8] sm:$0xff]
    %v137 = vld [vmem:[%s0 + $0x1b0] sm:$0xff]
    %v138 = vld [vmem:[%s0 + $0x1b8] sm:$0xff]
    %v139 = vld [vmem:[%s0 + $0x1c0] sm:$0xff]
    %v140 = vld [vmem:[%s0 + $0x1c8] sm:$0xff]
    %v141 = vld [vmem:[%s0 + $0x1d0] sm:$0xff]
    %v142 = vld [vmem:[%s0 + $0x1d8] sm:$0xff]
    %v143 = vld [vmem:[%s0 + $0x1e0] sm:$0xff]
    %v144 = vld [vmem:[%s0 + $0x1e8] sm:$0xff]
    %v145 = vld [vmem:[%s0 + $0x1f0] sm:$0xff]
    %v146 = vld [vmem:[%s0 + $0x1f8] sm:$0xff]
    %v147 = vld [vmem:[%s0 + $0x200] sm:$0xff]
    %v148 = vld [vmem:[%s0 + $0x208] sm:$0xff]
    %v149 = vld [vmem:[%s0 + $0x210] sm:$0xff]
    %v150 = vld [vmem:[%s0 + $0x218] sm:$0xff]
    %v151 = vld [vmem:[%s0 + $0x220] sm:$0xff]
    %v152 = vld [vmem:[%s0 + $0x228] sm:$0xff]
    %v153 = vld [vmem:[%s0 + $0x230] sm:$0xff]
    %v154 = vld [vmem:[%s0 + $0x238] sm:$0xff]
    %v155 = vld [vmem:[%s0 + $0x240] sm:$0xff]
    %v156 = vld [vmem:[%s0 + $0x248] sm:$0xff]
    %v157 = vld [vmem:[%s0 + $0x250] sm:$0xff]
    %v158 = vld [vmem:[%s0 + $0x258] sm:$0xff]
    %v159 = vld [vmem:[%s0 + $0x260] sm:$0xff]
    %v160 = vld [vmem:[%s0 + $0x268] sm:$0xff]
    %v161 = vld [vmem:[%s0 + $0x270] sm:$0xff]
    %v162 = vld [vmem:[%s0 + $0x278] sm:$0xff]
    %v163 = vld [vmem:[%s0 + $0x280] sm:$0xff]
    %v164 = vld [vmem:[%s0 + $0x288] sm:$0xff]
    %v165 = vld [vmem:[%s0 + $0x290] sm:$0xff]
    %v166 = vld [vmem:[%s0 + $0x298] sm:$0xff]
    %v167 = vld [vmem:[%s0 + $0x2a0] sm:$0xff]
    %v168 = vld [vmem:[%s0 + $0x2a8] sm:$0xff]
    %v169 = vld [vmem:[%s0 + $0x2b0] sm:$0xff]
    %v170 = vld [vmem:[%s0 + $0x2b8] sm:$0xff]
    %v171 = vld [vmem:[%s0 + $0x2c0] sm:$0xff]
    %v172 = vld [vmem:[%s0 + $0x2c8] sm:$0xff]
    %v173 = vld [vmem:[%s0 + $0x2d0] sm:$0xff]
    %v174 = vld [vmem:[%s0 + $0x2d8] sm:$0xff]
    %v175 = vld [vmem:[%s0 + $0x2e0] sm:$0xff]
    %v176 = vld [vmem:[%s0 + $0x2e8] sm:$0xff]
    %v177 = vld [vmem:[%s0 + $0x2f0] sm:$0xff]
    %v178 = vld [vmem:[%s0 + $0x2f8] sm:$0xff]
    %v179 = vld [vmem:[%s0 + $0x300] sm:$0xff]
    %v180 = vld [vmem:[%s0 + $0x308] sm:$0xff]
    %v181 = vld [vmem:[%s0 + $0x310] sm:$0xff]
    %v182 = vld [vmem:[%s0 + $0x318] sm:$0xff]
    %v183 = vld [vmem:[%s0 + $0x320] sm:$0xff]
    %v184 = vld [vmem:[%s0 + $0x328] sm:$0xff]
    %v185 = vld [vmem:[%s0 + $0x330] sm:$0xff]
    %v186 = vld [vmem:[%s0 + $0x338] sm:$0xff]
    %v187 = vld [vmem:[%s0 + $0x340] sm:$0xff]
    %v188 = vld [vmem:[%s0 + $0x348] sm:$0xff]
    %v189 = vld [vmem:[%s0 + $0x350] sm:$0xff]
    %v190 = vld [vmem:[%s0 + $0x358] sm:$0xff]
    %v191 = vld [vmem:[%s0 + $0x360] sm:$0xff]
    %v192 = vld [vmem:[%s0 + $0x368] sm:$0xff]
    %v193 = vld [vmem:[%s0 + $0x370] sm:$0xff]
    %v194 = vld [vmem:[%s0 + $0x378] sm:$0xff]
    %v195 = vld [vmem:[%s0 + $0x380] sm:$0xff]
    %v196 = vld [vmem:[%s0 + $0x388] sm:$0xff]
    %v197 = vld [vmem:[%s0 + $0x390] sm:$0xff]
    %v198 = vld [vmem:[%s0 + $0x398] sm:$0xff]
    %v199 = vld [vmem:[%s0 + $0x3a0] sm:$0xff]
    %v200 = vld [vmem:[%s0 + $0x3a8] sm:$0xff]
    %v201 = vld [vmem:[%s0 + $0x3b0] sm:$0xff]
    %v202 = vld [vmem:[%s0 + $0x3b8] sm:$0xff]
    %v203 = vld [vmem:[%s0 + $0x3c0] sm:$0xff]
    %v204 = vld [vmem:[%s0 + $0x3c8] sm:$0xff]
    %v205 = vld [vmem:[%s0 + $0x3d0] sm:$0xff]
    %v206 = vld [vmem:[%s0 + $0x3d8] sm:$0xff]
    %v207 = vld [vmem:[%s0 + $0x3e0] sm:$0xff]
    %v208 = vld [vmem:[%s0 + $0x3e8] sm:$0xff]
    %v209 = vld [vmem:[%s0 + $0x3f0] sm:$0xff]
    %v210 = vld [vmem:[%s0 + $0x3f8] sm:$0xff]
    %v211 = vpack.c.bf16 %v84, %v83
    %v212 = vpack.c.bf16 %v86, %v85
    %v213 = vpack.c.bf16 %v88, %v87
    %v214 = vpack.c.bf16 %v90, %v89
    %v215 = vpack.c.bf16 %v92, %v91
    %v216 = vpack.c.bf16 %v94, %v93
    %v217 = vpack.c.bf16 %v96, %v95
    %v218 = vpack.c.bf16 %v98, %v97
    %v219 = vpack.c.bf16 %v100, %v99
    %v220 = vpack.c.bf16 %v102, %v101
    %v221 = vpack.c.bf16 %v104, %v103
    %v222 = vpack.c.bf16 %v106, %v105
    %v223 = vpack.c.bf16 %v108, %v107
    %v224 = vpack.c.bf16 %v110, %v109
    %v225 = vpack.c.bf16 %v112, %v111
    %v226 = vpack.c.bf16 %v114, %v113
    %v227 = vpack.c.bf16 %v116, %v115
    %v228 = vpack.c.bf16 %v118, %v117
    %v229 = vpack.c.bf16 %v120, %v119
    %v230 = vpack.c.bf16 %v122, %v121
    %v231 = vpack.c.bf16 %v124, %v123
    %v232 = vpack.c.bf16 %v126, %v125
    %v233 = vpack.c.bf16 %v128, %v127
    %v234 = vpack.c.bf16 %v130, %v129
    %v235 = vpack.c.bf16 %v132, %v131
    %v236 = vpack.c.bf16 %v134, %v133
    %v237 = vpack.c.bf16 %v136, %v135
    %v238 = vpack.c.bf16 %v138, %v137
    %v239 = vpack.c.bf16 %v140, %v139
    %v240 = vpack.c.bf16 %v142, %v141
    %v241 = vpack.c.bf16 %v144, %v143
    %v242 = vpack.c.bf16 %v146, %v145
    %v243 = vpack.c.bf16 %v148, %v147
    %v244 = vpack.c.bf16 %v150, %v149
    %v245 = vpack.c.bf16 %v152, %v151
    %v246 = vpack.c.bf16 %v154, %v153
    %v247 = vpack.c.bf16 %v156, %v155
    %v248 = vpack.c.bf16 %v158, %v157
    %v249 = vpack.c.bf16 %v160, %v159
    %v250 = vpack.c.bf16 %v162, %v161
    %v251 = vpack.c.bf16 %v164, %v163
    %v252 = vpack.c.bf16 %v166, %v165
    %v253 = vpack.c.bf16 %v168, %v167
    %v254 = vpack.c.bf16 %v170, %v169
    %v255 = vpack.c.bf16 %v172, %v171
    %v256 = vpack.c.bf16 %v174, %v173
    %v257 = vpack.c.bf16 %v176, %v175
    %v258 = vpack.c.bf16 %v178, %v177
    %v259 = vpack.c.bf16 %v180, %v179
    %v260 = vpack.c.bf16 %v182, %v181
    %v261 = vpack.c.bf16 %v184, %v183
    %v262 = vpack.c.bf16 %v186, %v185
    %v263 = vpack.c.bf16 %v188, %v187
    %v264 = vpack.c.bf16 %v190, %v189
    %v265 = vpack.c.bf16 %v192, %v191
    %v266 = vpack.c.bf16 %v194, %v193
    %v267 = vpack.c.bf16 %v196, %v195
    %v268 = vpack.c.bf16 %v198, %v197
    %v269 = vpack.c.bf16 %v200, %v199
    %v270 = vpack.c.bf16 %v202, %v201
    %v271 = vpack.c.bf16 %v204, %v203
    %v272 = vpack.c.bf16 %v206, %v205
    %v273 = vpack.c.bf16 %v208, %v207
    %v274 = vpack.c.bf16 %v210, %v209
    %v275 = vld [vmem:[#allocation3] sm:$0xf]
    %v276 = vld [vmem:[#allocation6] sm:$0x1]
    %v278 = vlaneseq
    %v279 = vshrl.u32 %v278, 7
    %v280 = vsub.s32 0, %v279
    %v281 = vrot.slane %v276, %v280
    %vm283 = vcmask 64512
    %v285 = vsel %vm283, %v211, 0
    %v288 = vsel %vm283, %v212, 0
    %v291 = vsel %vm283, %v213, 0
    %v294 = vsel %vm283, %v214, 0
    %v297 = vsel %vm283, %v215, 0
    %v300 = vsel %vm283, %v216, 0
    %v303 = vsel %vm283, %v217, 0
    %v306 = vsel %vm283, %v218, 0
    %v309 = vsel %vm283, %v219, 0
    %v312 = vsel %vm283, %v220, 0
    %v315 = vsel %vm283, %v221, 0
    %v318 = vsel %vm283, %v222, 0
    %v321 = vsel %vm283, %v223, 0
    %v324 = vsel %vm283, %v224, 0
    %v327 = vsel %vm283, %v225, 0
    %v330 = vsel %vm283, %v226, 0
    %v333 = vsel %vm283, %v227, 0
    %v336 = vsel %vm283, %v228, 0
    %v339 = vsel %vm283, %v229, 0
    %v342 = vsel %vm283, %v230, 0
    %v345 = vsel %vm283, %v231, 0
    %v348 = vsel %vm283, %v232, 0
    %v351 = vsel %vm283, %v233, 0
    %v354 = vsel %vm283, %v234, 0
    %v357 = vsel %vm283, %v235, 0
    %v360 = vsel %vm283, %v236, 0
    %v363 = vsel %vm283, %v237, 0
    %v366 = vsel %vm283, %v238, 0
    %v369 = vsel %vm283, %v239, 0
    %v372 = vsel %vm283, %v240, 0
    %v375 = vsel %vm283, %v241, 0
    %v378 = vsel %vm283, %v242, 0
    %v381 = vsel %vm283, %v243, 0
    %v384 = vsel %vm283, %v244, 0
    %v387 = vsel %vm283, %v245, 0
    %v390 = vsel %vm283, %v246, 0
    %v393 = vsel %vm283, %v247, 0
    %v396 = vsel %vm283, %v248, 0
    %v399 = vsel %vm283, %v249, 0
    %v402 = vsel %vm283, %v250, 0
    %v405 = vsel %vm283, %v251, 0
    %v408 = vsel %vm283, %v252, 0
    %v411 = vsel %vm283, %v253, 0
    %v414 = vsel %vm283, %v254, 0
    %v417 = vsel %vm283, %v255, 0
    %v420 = vsel %vm283, %v256, 0
    %v423 = vsel %vm283, %v257, 0
    %v426 = vsel %vm283, %v258, 0
    %v429 = vsel %vm283, %v259, 0
    %v432 = vsel %vm283, %v260, 0
    %v435 = vsel %vm283, %v261, 0
    %v438 = vsel %vm283, %v262, 0
    %v441 = vsel %vm283, %v263, 0
    %v444 = vsel %vm283, %v264, 0
    %v447 = vsel %vm283, %v265, 0
    %v450 = vsel %vm283, %v266, 0
    %v453 = vsel %vm283, %v267, 0
    %v456 = vsel %vm283, %v268, 0
    %v459 = vsel %vm283, %v269, 0
    %v462 = vsel %vm283, %v270, 0
    %v465 = vsel %vm283, %v271, 0
    %v468 = vsel %vm283, %v272, 0
    %v471 = vsel %vm283, %v273, 0
    %v474 = vsel %vm283, %v274, 0
    %vm476 = vcmask 1043456
    %v478 = vsel %vm476, %v275, 0
    %480 = vmatprep.subr.bf16.mxu0 0
    %481 = vmatpush1.bf16.msra.mxu0 %v478
    %482 = vmatprep.subr.bf16.mxu0 0
    %483 = vmatpush1.bf16.msra.mxu0 0
    %484 = vmatprep.subr.bf16.mxu0 0
    %485 = vmatpush1.bf16.msra.mxu0 0
    %486 = vmatprep.subr.bf16.mxu0 0
    %487 = vmatpush1.bf16.msra.mxu0 0
    %488 = vmatprep.subr.bf16.mxu0 0
    %489 = vmatpush1.bf16.msra.mxu0 0
    %490 = vmatprep.subr.bf16.mxu0 0
    %491 = vmatpush1.bf16.msra.mxu0 0
    %492 = vmatprep.subr.bf16.mxu0 0
    %493 = vmatpush1.bf16.msra.mxu0 0
    %494 = vmatprep.subr.bf16.mxu0 0
    %495 = vmatpush1.bf16.msra.mxu0 0
    %496 = vmatprep.subr.bf16.mxu0 0
    %497 = vmatpush1.bf16.msra.mxu0 0
    %498 = vmatprep.subr.bf16.mxu0 0
    %499 = vmatpush1.bf16.msra.mxu0 0
    %500 = vmatprep.subr.bf16.mxu0 0
    %501 = vmatpush1.bf16.msra.mxu0 0
    %502 = vmatprep.subr.bf16.mxu0 0
    %503 = vmatpush1.bf16.msra.mxu0 0
    %504 = vmatprep.subr.bf16.mxu0 0
    %505 = vmatpush1.bf16.msra.mxu0 0
    %506 = vmatprep.subr.bf16.mxu0 0
    %507 = vmatpush1.bf16.msra.mxu0 0
    %508 = vmatprep.subr.bf16.mxu0 0
    %509 = vmatpush1.bf16.msra.mxu0 0
    %510 = vmatprep.subr.bf16.mxu0 0
    %511 = vmatpush1.bf16.msra.mxu0 0
    %512 = vmatprep.mubr.bf16.mxu0 0
    %513 = vmatmul.mubr.bf16.gmra.mrb[0].mxu0 %v285
    %v514 = vpop.f32.mrb[0].mxu0
    %v515 = vadd.f32 %v281, %v514
    %v516 = vpop.f32.mrb[0].mxu0
    %v517 = vpop.f32.mrb[0].mxu0
    %v518 = vadd.f32 %v281, %v517
    %v519 = vpop.f32.mrb[0].mxu0
    %520 = vmatprep.mubr.bf16.mxu0 0
    %521 = vmatmul.mubr.bf16.gmra.mrb[0].mxu0 %v288
    %v522 = vpop.f32.mrb[0].mxu0
    %v523 = vadd.f32 %v281, %v522
    %v524 = vpop.f32.mrb[0].mxu0
    %v525 = vpop.f32.mrb[0].mxu0
    %v526 = vadd.f32 %v281, %v525
    %v527 = vpop.f32.mrb[0].mxu0
    %528 = vmatprep.mubr.bf16.mxu0 0
    %529 = vmatmul.mubr.bf16.gmra.mrb[0].mxu0 %v291
    %v530 = vpop.f32.mrb[0].mxu0
    %v531 = vadd.f32 %v281, %v530
    %v532 = vpop.f32.mrb[0].mxu0
    %v533 = vpop.f32.mrb[0].mxu0
    %v534 = vadd.f32 %v281, %v533
    %v535 = vpop.f32.mrb[0].mxu0
    %536 = vmatprep.mubr.bf16.mxu0 0
    %537 = vmatmul.mubr.bf16.gmra.mrb[0].mxu0 %v294
    %v538 = vpop.f32.mrb[0].mxu0
    %v539 = vadd.f32 %v281, %v538
    %v540 = vpop.f32.mrb[0].mxu0
    %v541 = vpop.f32.mrb[0].mxu0
    %v542 = vadd.f32 %v281, %v541
    %v543 = vpop.f32.mrb[0].mxu0
    %544 = vmatprep.mubr.bf16.mxu0 0
    %545 = vmatmul.mubr.bf16.gmra.mrb[0].mxu0 %v297
    %v546 = vpop.f32.mrb[0].mxu0
    %v547 = vadd.f32 %v281, %v546
    %v548 = vpop.f32.mrb[0].mxu0
    %v549 = vpop.f32.mrb[0].mxu0
    %v550 = vadd.f32 %v281, %v549
    %v551 = vpop.f32.mrb[0].mxu0
    %552 = vmatprep.mubr.bf16.mxu0 0
    %553 = vmatmul.mubr.bf16.gmra.mrb[0].mxu0 %v300
    %v554 = vpop.f32.mrb[0].mxu0
    %v555 = vadd.f32 %v281, %v554
    %v556 = vpop.f32.mrb[0].mxu0
    %v557 = vpop.f32.mrb[0].mxu0
    %v558 = vadd.f32 %v281, %v557
    %v559 = vpop.f32.mrb[0].mxu0
    %560 = vmatprep.mubr.bf16.mxu0 0
    %561 = vmatmul.mubr.bf16.gmra.mrb[0].mxu0 %v303
    %v562 = vpop.f32.mrb[0].mxu0
    %v563 = vadd.f32 %v281, %v562
    %v564 = vpop.f32.mrb[0].mxu0
    %v565 = vpop.f32.mrb[0].mxu0
    %v566 = vadd.f32 %v281, %v565
    %v567 = vpop.f32.mrb[0].mxu0
    %568 = vmatprep.mubr.bf16.mxu0 0
    %569 = vmatmul.mubr.bf16.gmra.mrb[0].mxu0 %v306
    %v570 = vpop.f32.mrb[0].mxu0
    %v571 = vadd.f32 %v281, %v570
    %v572 = vpop.f32.mrb[0].mxu0
    %v573 = vpop.f32.mrb[0].mxu0
    %v574 = vadd.f32 %v281, %v573
    %v575 = vpop.f32.mrb[0].mxu0
    %576 = vmatprep.mubr.bf16.mxu0 0
    %577 = vmatmul.mubr.bf16.gmra.mrb[0].mxu0 %v309
    %v578 = vpop.f32.mrb[0].mxu0
    %v579 = vadd.f32 %v281, %v578
    %v580 = vpop.f32.mrb[0].mxu0
    %v581 = vpop.f32.mrb[0].mxu0
    %v582 = vadd.f32 %v281, %v581
    %v583 = vpop.f32.mrb[0].mxu0
    %584 = vmatprep.mubr.bf16.mxu0 0
    %585 = vmatmul.mubr.bf16.gmra.mrb[0].mxu0 %v312
    %v586 = vpop.f32.mrb[0].mxu0
    %v587 = vadd.f32 %v281, %v586
    %v588 = vpop.f32.mrb[0].mxu0
    %v589 = vpop.f32.mrb[0].mxu0
    %v590 = vadd.f32 %v281, %v589
    %v591 = vpop.f32.mrb[0].mxu0
    %592 = vmatprep.mubr.bf16.mxu0 0
    %593 = vmatmul.mubr.bf16.gmra.mrb[0].mxu0 %v315
    %v594 = vpop.f32.mrb[0].mxu0
    %v595 = vadd.f32 %v281, %v594
    %v596 = vpop.f32.mrb[0].mxu0
    %v597 = vpop.f32.mrb[0].mxu0
    %v598 = vadd.f32 %v281, %v597
    %v599 = vpop.f32.mrb[0].mxu0
    %600 = vmatprep.mubr.bf16.mxu0 0
    %601 = vmatmul.mubr.bf16.gmra.mrb[0].mxu0 %v318
    %v602 = vpop.f32.mrb[0].mxu0
    %v603 = vadd.f32 %v281, %v602
    %v604 = vpop.f32.mrb[0].mxu0
    %v605 = vpop.f32.mrb[0].mxu0
    %v606 = vadd.f32 %v281, %v605
    %v607 = vpop.f32.mrb[0].mxu0
    %608 = vmatprep.mubr.bf16.mxu0 0
    %609 = vmatmul.mubr.bf16.gmra.mrb[0].mxu0 %v321
    %v610 = vpop.f32.mrb[0].mxu0
    %v611 = vadd.f32 %v281, %v610
    %v612 = vpop.f32.mrb[0].mxu0
    %v613 = vpop.f32.mrb[0].mxu0
    %v614 = vadd.f32 %v281, %v613
    %v615 = vpop.f32.mrb[0].mxu0
    %616 = vmatprep.mubr.bf16.mxu0 0
    %617 = vmatmul.mubr.bf16.gmra.mrb[0].mxu0 %v324
    %v618 = vpop.f32.mrb[0].mxu0
    %v619 = vadd.f32 %v281, %v618
    %v620 = vpop.f32.mrb[0].mxu0
    %v621 = vpop.f32.mrb[0].mxu0
    %v622 = vadd.f32 %v281, %v621
    %v623 = vpop.f32.mrb[0].mxu0
    %624 = vmatprep.mubr.bf16.mxu0 0
    %625 = vmatmul.mubr.bf16.gmra.mrb[0].mxu0 %v327
    %v626 = vpop.f32.mrb[0].mxu0
    %v627 = vadd.f32 %v281, %v626
    %v628 = vpop.f32.mrb[0].mxu0
    %v629 = vpop.f32.mrb[0].mxu0
    %v630 = vadd.f32 %v281, %v629
    %v631 = vpop.f32.mrb[0].mxu0
    %632 = vmatprep.mubr.bf16.mxu0 0
    %633 = vmatmul.mubr.bf16.gmra.mrb[0].mxu0 %v330
    %v634 = vpop.f32.mrb[0].mxu0
    %v635 = vadd.f32 %v281, %v634
    %v636 = vpop.f32.mrb[0].mxu0
    %v637 = vpop.f32.mrb[0].mxu0
    %v638 = vadd.f32 %v281, %v637
    %v639 = vpop.f32.mrb[0].mxu0
    %640 = vmatprep.mubr.bf16.mxu0 0
    %641 = vmatmul.mubr.bf16.gmra.mrb[0].mxu0 %v333
    %v642 = vpop.f32.mrb[0].mxu0
    %v643 = vadd.f32 %v281, %v642
    %v644 = vpop.f32.mrb[0].mxu0
    %v645 = vpop.f32.mrb[0].mxu0
    %v646 = vadd.f32 %v281, %v645
    %v647 = vpop.f32.mrb[0].mxu0
    %648 = vmatprep.mubr.bf16.mxu0 0
    %649 = vmatmul.mubr.bf16.gmra.mrb[0].mxu0 %v336
    %v650 = vpop.f32.mrb[0].mxu0
    %v651 = vadd.f32 %v281, %v650
    %v652 = vpop.f32.mrb[0].mxu0
    %v653 = vpop.f32.mrb[0].mxu0
    %v654 = vadd.f32 %v281, %v653
    %v655 = vpop.f32.mrb[0].mxu0
    %656 = vmatprep.mubr.bf16.mxu0 0
    %657 = vmatmul.mubr.bf16.gmra.mrb[0].mxu0 %v339
    %v658 = vpop.f32.mrb[0].mxu0
    %v659 = vadd.f32 %v281, %v658
    %v660 = vpop.f32.mrb[0].mxu0
    %v661 = vpop.f32.mrb[0].mxu0
    %v662 = vadd.f32 %v281, %v661
    %v663 = vpop.f32.mrb[0].mxu0
    %664 = vmatprep.mubr.bf16.mxu0 0
    %665 = vmatmul.mubr.bf16.gmra.mrb[0].mxu0 %v342
    %v666 = vpop.f32.mrb[0].mxu0
    %v667 = vadd.f32 %v281, %v666
    %v668 = vpop.f32.mrb[0].mxu0
    %v669 = vpop.f32.mrb[0].mxu0
    %v670 = vadd.f32 %v281, %v669
    %v671 = vpop.f32.mrb[0].mxu0
    %672 = vmatprep.mubr.bf16.mxu0 0
    %673 = vmatmul.mubr.bf16.gmra.mrb[0].mxu0 %v345
    %v674 = vpop.f32.mrb[0].mxu0
    %v675 = vadd.f32 %v281, %v674
    %v676 = vpop.f32.mrb[0].mxu0
    %v677 = vpop.f32.mrb[0].mxu0
    %v678 = vadd.f32 %v281, %v677
    %v679 = vpop.f32.mrb[0].mxu0
    %680 = vmatprep.mubr.bf16.mxu0 0
    %681 = vmatmul.mubr.bf16.gmra.mrb[0].mxu0 %v348
    %v682 = vpop.f32.mrb[0].mxu0
    %v683 = vadd.f32 %v281, %v682
    %v684 = vpop.f32.mrb[0].mxu0
    %v685 = vpop.f32.mrb[0].mxu0
    %v686 = vadd.f32 %v281, %v685
    %v687 = vpop.f32.mrb[0].mxu0
    %688 = vmatprep.mubr.bf16.mxu0 0
    %689 = vmatmul.mubr.bf16.gmra.mrb[0].mxu0 %v351
    %v690 = vpop.f32.mrb[0].mxu0
    %v691 = vadd.f32 %v281, %v690
    %v692 = vpop.f32.mrb[0].mxu0
    %v693 = vpop.f32.mrb[0].mxu0
    %v694 = vadd.f32 %v281, %v693
    %v695 = vpop.f32.mrb[0].mxu0
    %696 = vmatprep.mubr.bf16.mxu0 0
    %697 = vmatmul.mubr.bf16.gmra.mrb[0].mxu0 %v354
    %v698 = vpop.f32.mrb[0].mxu0
    %v699 = vadd.f32 %v281, %v698
    %v700 = vpop.f32.mrb[0].mxu0
    %v701 = vpop.f32.mrb[0].mxu0
    %v702 = vadd.f32 %v281, %v701
    %v703 = vpop.f32.mrb[0].mxu0
    %704 = vmatprep.mubr.bf16.mxu0 0
    %705 = vmatmul.mubr.bf16.gmra.mrb[0].mxu0 %v357
    %v706 = vpop.f32.mrb[0].mxu0
    %v707 = vadd.f32 %v281, %v706
    %v708 = vpop.f32.mrb[0].mxu0
    %v709 = vpop.f32.mrb[0].mxu0
    %v710 = vadd.f32 %v281, %v709
    %v711 = vpop.f32.mrb[0].mxu0
    %712 = vmatprep.mubr.bf16.mxu0 0
    %713 = vmatmul.mubr.bf16.gmra.mrb[0].mxu0 %v360
    %v714 = vpop.f32.mrb[0].mxu0
    %v715 = vadd.f32 %v281, %v714
    %v716 = vpop.f32.mrb[0].mxu0
    %v717 = vpop.f32.mrb[0].mxu0
    %v718 = vadd.f32 %v281, %v717
    %v719 = vpop.f32.mrb[0].mxu0
    %720 = vmatprep.mubr.bf16.mxu0 0
    %721 = vmatmul.mubr.bf16.gmra.mrb[0].mxu0 %v363
    %v722 = vpop.f32.mrb[0].mxu0
    %v723 = vadd.f32 %v281, %v722
    %v724 = vpop.f32.mrb[0].mxu0
    %v725 = vpop.f32.mrb[0].mxu0
    %v726 = vadd.f32 %v281, %v725
    %v727 = vpop.f32.mrb[0].mxu0
    %728 = vmatprep.mubr.bf16.mxu0 0
    %729 = vmatmul.mubr.bf16.gmra.mrb[0].mxu0 %v366
    %v730 = vpop.f32.mrb[0].mxu0
    %v731 = vadd.f32 %v281, %v730
    %v732 = vpop.f32.mrb[0].mxu0
    %v733 = vpop.f32.mrb[0].mxu0
    %v734 = vadd.f32 %v281, %v733
    %v735 = vpop.f32.mrb[0].mxu0
    %736 = vmatprep.mubr.bf16.mxu0 0
    %737 = vmatmul.mubr.bf16.gmra.mrb[0].mxu0 %v369
    %v738 = vpop.f32.mrb[0].mxu0
    %v739 = vadd.f32 %v281, %v738
    %v740 = vpop.f32.mrb[0].mxu0
    %v741 = vpop.f32.mrb[0].mxu0
    %v742 = vadd.f32 %v281, %v741
    %v743 = vpop.f32.mrb[0].mxu0
    %744 = vmatprep.mubr.bf16.mxu0 0
    %745 = vmatmul.mubr.bf16.gmra.mrb[0].mxu0 %v372
    %v746 = vpop.f32.mrb[0].mxu0
    %v747 = vadd.f32 %v281, %v746
    %v748 = vpop.f32.mrb[0].mxu0
    %v749 = vpop.f32.mrb[0].mxu0
    %v750 = vadd.f32 %v281, %v749
    %v751 = vpop.f32.mrb[0].mxu0
    %752 = vmatprep.mubr.bf16.mxu0 0
    %753 = vmatmul.mubr.bf16.gmra.mrb[0].mxu0 %v375
    %v754 = vpop.f32.mrb[0].mxu0
    %v755 = vadd.f32 %v281, %v754
    %v756 = vpop.f32.mrb[0].mxu0
    %v757 = vpop.f32.mrb[0].mxu0
    %v758 = vadd.f32 %v281, %v757
    %v759 = vpop.f32.mrb[0].mxu0
    %760 = vmatprep.mubr.bf16.mxu0 0
    %761 = vmatmul.mubr.bf16.gmra.mrb[0].mxu0 %v378
    %v762 = vpop.f32.mrb[0].mxu0
    %v763 = vadd.f32 %v281, %v762
    %v764 = vpop.f32.mrb[0].mxu0
    %v765 = vpop.f32.mrb[0].mxu0
    %v766 = vadd.f32 %v281, %v765
    %v767 = vpop.f32.mrb[0].mxu0
    %768 = vmatprep.mubr.bf16.mxu0 0
    %769 = vmatmul.mubr.bf16.gmra.mrb[0].mxu0 %v381
    %v770 = vpop.f32.mrb[0].mxu0
    %v771 = vadd.f32 %v281, %v770
    %v772 = vpop.f32.mrb[0].mxu0
    %v773 = vpop.f32.mrb[0].mxu0
    %v774 = vadd.f32 %v281, %v773
    %v775 = vpop.f32.mrb[0].mxu0
    %776 = vmatprep.mubr.bf16.mxu0 0
    %777 = vmatmul.mubr.bf16.gmra.mrb[0].mxu0 %v384
    %v778 = vpop.f32.mrb[0].mxu0
    %v779 = vadd.f32 %v281, %v778
    %v780 = vpop.f32.mrb[0].mxu0
    %v781 = vpop.f32.mrb[0].mxu0
    %v782 = vadd.f32 %v281, %v781
    %v783 = vpop.f32.mrb[0].mxu0
    %784 = vmatprep.mubr.bf16.mxu0 0
    %785 = vmatmul.mubr.bf16.gmra.mrb[0].mxu0 %v387
    %v786 = vpop.f32.mrb[0].mxu0
    %v787 = vadd.f32 %v281, %v786
    %v788 = vpop.f32.mrb[0].mxu0
    %v789 = vpop.f32.mrb[0].mxu0
    %v790 = vadd.f32 %v281, %v789
    %v791 = vpop.f32.mrb[0].mxu0
    %792 = vmatprep.mubr.bf16.mxu0 0
    %793 = vmatmul.mubr.bf16.gmra.mrb[0].mxu0 %v390
    %v794 = vpop.f32.mrb[0].mxu0
    %v795 = vadd.f32 %v281, %v794
    %v796 = vpop.f32.mrb[0].mxu0
    %v797 = vpop.f32.mrb[0].mxu0
    %v798 = vadd.f32 %v281, %v797
    %v799 = vpop.f32.mrb[0].mxu0
    %800 = vmatprep.mubr.bf16.mxu0 0
    %801 = vmatmul.mubr.bf16.gmra.mrb[0].mxu0 %v393
    %v802 = vpop.f32.mrb[0].mxu0
    %v803 = vadd.f32 %v281, %v802
    %v804 = vpop.f32.mrb[0].mxu0
    %v805 = vpop.f32.mrb[0].mxu0
    %v806 = vadd.f32 %v281, %v805
    %v807 = vpop.f32.mrb[0].mxu0
    %808 = vmatprep.mubr.bf16.mxu0 0
    %809 = vmatmul.mubr.bf16.gmra.mrb[0].mxu0 %v396
    %v810 = vpop.f32.mrb[0].mxu0
    %v811 = vadd.f32 %v281, %v810
    %v812 = vpop.f32.mrb[0].mxu0
    %v813 = vpop.f32.mrb[0].mxu0
    %v814 = vadd.f32 %v281, %v813
    %v815 = vpop.f32.mrb[0].mxu0
    %816 = vmatprep.mubr.bf16.mxu0 0
    %817 = vmatmul.mubr.bf16.gmra.mrb[0].mxu0 %v399
    %v818 = vpop.f32.mrb[0].mxu0
    %v819 = vadd.f32 %v281, %v818
    %v820 = vpop.f32.mrb[0].mxu0
    %v821 = vpop.f32.mrb[0].mxu0
    %v822 = vadd.f32 %v281, %v821
    %v823 = vpop.f32.mrb[0].mxu0
    %824 = vmatprep.mubr.bf16.mxu0 0
    %825 = vmatmul.mubr.bf16.gmra.mrb[0].mxu0 %v402
    %v826 = vpop.f32.mrb[0].mxu0
    %v827 = vadd.f32 %v281, %v826
    %v828 = vpop.f32.mrb[0].mxu0
    %v829 = vpop.f32.mrb[0].mxu0
    %v830 = vadd.f32 %v281, %v829
    %v831 = vpop.f32.mrb[0].mxu0
    %832 = vmatprep.mubr.bf16.mxu0 0
    %833 = vmatmul.mubr.bf16.gmra.mrb[0].mxu0 %v405
    %v834 = vpop.f32.mrb[0].mxu0
    %v835 = vadd.f32 %v281, %v834
    %v836 = vpop.f32.mrb[0].mxu0
    %v837 = vpop.f32.mrb[0].mxu0
    %v838 = vadd.f32 %v281, %v837
    %v839 = vpop.f32.mrb[0].mxu0
    %840 = vmatprep.mubr.bf16.mxu0 0
    %841 = vmatmul.mubr.bf16.gmra.mrb[0].mxu0 %v408
    %v842 = vpop.f32.mrb[0].mxu0
    %v843 = vadd.f32 %v281, %v842
    %v844 = vpop.f32.mrb[0].mxu0
    %v845 = vpop.f32.mrb[0].mxu0
    %v846 = vadd.f32 %v281, %v845
    %v847 = vpop.f32.mrb[0].mxu0
    %848 = vmatprep.mubr.bf16.mxu0 0
    %849 = vmatmul.mubr.bf16.gmra.mrb[0].mxu0 %v411
    %v850 = vpop.f32.mrb[0].mxu0
    %v851 = vadd.f32 %v281, %v850
    %v852 = vpop.f32.mrb[0].mxu0
    %v853 = vpop.f32.mrb[0].mxu0
    %v854 = vadd.f32 %v281, %v853
    %v855 = vpop.f32.mrb[0].mxu0
    %856 = vmatprep.mubr.bf16.mxu0 0
    %857 = vmatmul.mubr.bf16.gmra.mrb[0].mxu0 %v414
    %v858 = vpop.f32.mrb[0].mxu0
    %v859 = vadd.f32 %v281, %v858
    %v860 = vpop.f32.mrb[0].mxu0
    %v861 = vpop.f32.mrb[0].mxu0
    %v862 = vadd.f32 %v281, %v861
    %v863 = vpop.f32.mrb[0].mxu0
    %864 = vmatprep.mubr.bf16.mxu0 0
    %865 = vmatmul.mubr.bf16.gmra.mrb[0].mxu0 %v417
    %v866 = vpop.f32.mrb[0].mxu0
    %v867 = vadd.f32 %v281, %v866
    %v868 = vpop.f32.mrb[0].mxu0
    %v869 = vpop.f32.mrb[0].mxu0
    %v870 = vadd.f32 %v281, %v869
    %v871 = vpop.f32.mrb[0].mxu0
    %872 = vmatprep.mubr.bf16.mxu0 0
    %873 = vmatmul.mubr.bf16.gmra.mrb[0].mxu0 %v420
    %v874 = vpop.f32.mrb[0].mxu0
    %v875 = vadd.f32 %v281, %v874
    %v876 = vpop.f32.mrb[0].mxu0
    %v877 = vpop.f32.mrb[0].mxu0
    %v878 = vadd.f32 %v281, %v877
    %v879 = vpop.f32.mrb[0].mxu0
    %880 = vmatprep.mubr.bf16.mxu0 0
    %881 = vmatmul.mubr.bf16.gmra.mrb[0].mxu0 %v423
    %v882 = vpop.f32.mrb[0].mxu0
    %v883 = vadd.f32 %v281, %v882
    %v884 = vpop.f32.mrb[0].mxu0
    %v885 = vpop.f32.mrb[0].mxu0
    %v886 = vadd.f32 %v281, %v885
    %v887 = vpop.f32.mrb[0].mxu0
    %888 = vmatprep.mubr.bf16.mxu0 0
    %889 = vmatmul.mubr.bf16.gmra.mrb[0].mxu0 %v426
    %v890 = vpop.f32.mrb[0].mxu0
    %v891 = vadd.f32 %v281, %v890
    %v892 = vpop.f32.mrb[0].mxu0
    %v893 = vpop.f32.mrb[0].mxu0
    %v894 = vadd.f32 %v281, %v893
    %v895 = vpop.f32.mrb[0].mxu0
    %896 = vmatprep.mubr.bf16.mxu0 0
    %897 = vmatmul.mubr.bf16.gmra.mrb[0].mxu0 %v429
    %v898 = vpop.f32.mrb[0].mxu0
    %v899 = vadd.f32 %v281, %v898
    %v900 = vpop.f32.mrb[0].mxu0
    %v901 = vpop.f32.mrb[0].mxu0
    %v902 = vadd.f32 %v281, %v901
    %v903 = vpop.f32.mrb[0].mxu0
    %904 = vmatprep.mubr.bf16.mxu0 0
    %905 = vmatmul.mubr.bf16.gmra.mrb[0].mxu0 %v432
    %v906 = vpop.f32.mrb[0].mxu0
    %v907 = vadd.f32 %v281, %v906
    %v908 = vpop.f32.mrb[0].mxu0
    %v909 = vpop.f32.mrb[0].mxu0
    %v910 = vadd.f32 %v281, %v909
    %v911 = vpop.f32.mrb[0].mxu0
    %912 = vmatprep.mubr.bf16.mxu0 0
    %913 = vmatmul.mubr.bf16.gmra.mrb[0].mxu0 %v435
    %v914 = vpop.f32.mrb[0].mxu0
    %v915 = vadd.f32 %v281, %v914
    %v916 = vpop.f32.mrb[0].mxu0
    %v917 = vpop.f32.mrb[0].mxu0
    %v918 = vadd.f32 %v281, %v917
    %v919 = vpop.f32.mrb[0].mxu0
    %920 = vmatprep.mubr.bf16.mxu0 0
    %921 = vmatmul.mubr.bf16.gmra.mrb[0].mxu0 %v438
    %v922 = vpop.f32.mrb[0].mxu0
    %v923 = vadd.f32 %v281, %v922
    %v924 = vpop.f32.mrb[0].mxu0
    %v925 = vpop.f32.mrb[0].mxu0
    %v926 = vadd.f32 %v281, %v925
    %v927 = vpop.f32.mrb[0].mxu0
    %928 = vmatprep.mubr.bf16.mxu0 0
    %929 = vmatmul.mubr.bf16.gmra.mrb[0].mxu0 %v441
    %v930 = vpop.f32.mrb[0].mxu0
    %v931 = vadd.f32 %v281, %v930
    %v932 = vpop.f32.mrb[0].mxu0
    %v933 = vpop.f32.mrb[0].mxu0
    %v934 = vadd.f32 %v281, %v933
    %v935 = vpop.f32.mrb[0].mxu0
    %936 = vmatprep.mubr.bf16.mxu0 0
    %937 = vmatmul.mubr.bf16.gmra.mrb[0].mxu0 %v444
    %v938 = vpop.f32.mrb[0].mxu0
    %v939 = vadd.f32 %v281, %v938
    %v940 = vpop.f32.mrb[0].mxu0
    %v941 = vpop.f32.mrb[0].mxu0
    %v942 = vadd.f32 %v281, %v941
    %v943 = vpop.f32.mrb[0].mxu0
    %944 = vmatprep.mubr.bf16.mxu0 0
    %945 = vmatmul.mubr.bf16.gmra.mrb[0].mxu0 %v447
    %v946 = vpop.f32.mrb[0].mxu0
    %v947 = vadd.f32 %v281, %v946
    %v948 = vpop.f32.mrb[0].mxu0
    %v949 = vpop.f32.mrb[0].mxu0
    %v950 = vadd.f32 %v281, %v949
    %v951 = vpop.f32.mrb[0].mxu0
    %952 = vmatprep.mubr.bf16.mxu0 0
    %953 = vmatmul.mubr.bf16.gmra.mrb[0].mxu0 %v450
    %v954 = vpop.f32.mrb[0].mxu0
    %v955 = vadd.f32 %v281, %v954
    %v956 = vpop.f32.mrb[0].mxu0
    %v957 = vpop.f32.mrb[0].mxu0
    %v958 = vadd.f32 %v281, %v957
    %v959 = vpop.f32.mrb[0].mxu0
    %960 = vmatprep.mubr.bf16.mxu0 0
    %961 = vmatmul.mubr.bf16.gmra.mrb[0].mxu0 %v453
    %v962 = vpop.f32.mrb[0].mxu0
    %v963 = vadd.f32 %v281, %v962
    %v964 = vpop.f32.mrb[0].mxu0
    %v965 = vpop.f32.mrb[0].mxu0
    %v966 = vadd.f32 %v281, %v965
    %v967 = vpop.f32.mrb[0].mxu0
    %968 = vmatprep.mubr.bf16.mxu0 0
    %969 = vmatmul.mubr.bf16.gmra.mrb[0].mxu0 %v456
    %v970 = vpop.f32.mrb[0].mxu0
    %v971 = vadd.f32 %v281, %v970
    %v972 = vpop.f32.mrb[0].mxu0
    %v973 = vpop.f32.mrb[0].mxu0
    %v974 = vadd.f32 %v281, %v973
    %v975 = vpop.f32.mrb[0].mxu0
    %976 = vmatprep.mubr.bf16.mxu0 0
    %977 = vmatmul.mubr.bf16.gmra.mrb[0].mxu0 %v459
    %v978 = vpop.f32.mrb[0].mxu0
    %v979 = vadd.f32 %v281, %v978
    %v980 = vpop.f32.mrb[0].mxu0
    %v981 = vpop.f32.mrb[0].mxu0
    %v982 = vadd.f32 %v281, %v981
    %v983 = vpop.f32.mrb[0].mxu0
    %984 = vmatprep.mubr.bf16.mxu0 0
    %985 = vmatmul.mubr.bf16.gmra.mrb[0].mxu0 %v462
    %v986 = vpop.f32.mrb[0].mxu0
    %v987 = vadd.f32 %v281, %v986
    %v988 = vpop.f32.mrb[0].mxu0
    %v989 = vpop.f32.mrb[0].mxu0
    %v990 = vadd.f32 %v281, %v989
    %v991 = vpop.f32.mrb[0].mxu0
    %992 = vmatprep.mubr.bf16.mxu0 0
    %993 = vmatmul.mubr.bf16.gmra.mrb[0].mxu0 %v465
    %v994 = vpop.f32.mrb[0].mxu0
    %v995 = vadd.f32 %v281, %v994
    %v996 = vpop.f32.mrb[0].mxu0
    %v997 = vpop.f32.mrb[0].mxu0
    %v998 = vadd.f32 %v281, %v997
    %v999 = vpop.f32.mrb[0].mxu0
    %1000 = vmatprep.mubr.bf16.mxu0 0
    %1001 = vmatmul.mubr.bf16.gmra.mrb[0].mxu0 %v468
    %v1002 = vpop.f32.mrb[0].mxu0
    %v1003 = vadd.f32 %v281, %v1002
    %v1004 = vpop.f32.mrb[0].mxu0
    %v1005 = vpop.f32.mrb[0].mxu0
    %v1006 = vadd.f32 %v281, %v1005
    %v1007 = vpop.f32.mrb[0].mxu0
    %1008 = vmatprep.mubr.bf16.mxu0 0
    %1009 = vmatmul.mubr.bf16.gmra.mrb[0].mxu0 %v471
    %v1010 = vpop.f32.mrb[0].mxu0
    %v1011 = vadd.f32 %v281, %v1010
    %v1012 = vpop.f32.mrb[0].mxu0
    %v1013 = vpop.f32.mrb[0].mxu0
    %v1014 = vadd.f32 %v281, %v1013
    %v1015 = vpop.f32.mrb[0].mxu0
    %1016 = vmatprep.mubr.bf16.mxu0 0
    %1017 = vmatmul.mubr.bf16.gmra.mrb[0].mxu0 %v474
    %v1018 = vpop.f32.mrb[0].mxu0
    %v1019 = vadd.f32 %v281, %v1018
    %v1020 = vpop.f32.mrb[0].mxu0
    %v1021 = vpop.f32.mrb[0].mxu0
    %v1022 = vadd.f32 %v281, %v1021
    %v1023 = vpop.f32.mrb[0].mxu0
    %1024 = vdwg.mxu0
    %v1025 = vmax.f32 %v515, 0.0
    %v1026 = vmax.f32 %v518, 0.0
    %v1027 = vmax.f32 %v523, 0.0
    %v1028 = vmax.f32 %v526, 0.0
    %v1029 = vmax.f32 %v531, 0.0
    %v1030 = vmax.f32 %v534, 0.0
    %v1031 = vmax.f32 %v539, 0.0
    %v1032 = vmax.f32 %v542, 0.0
    %v1033 = vmax.f32 %v547, 0.0
    %v1034 = vmax.f32 %v550, 0.0
    %v1035 = vmax.f32 %v555, 0.0
    %v1036 = vmax.f32 %v558, 0.0
    %v1037 = vmax.f32 %v563, 0.0
    %v1038 = vmax.f32 %v566, 0.0
    %v1039 = vmax.f32 %v571, 0.0
    %v1040 = vmax.f32 %v574, 0.0
    %v1041 = vmax.f32 %v579, 0.0
    %v1042 = vmax.f32 %v582, 0.0
    %v1043 = vmax.f32 %v587, 0.0
    %v1044 = vmax.f32 %v590, 0.0
    %v1045 = vmax.f32 %v595, 0.0
    %v1046 = vmax.f32 %v598, 0.0
    %v1047 = vmax.f32 %v603, 0.0
    %v1048 = vmax.f32 %v606, 0.0
    %v1049 = vmax.f32 %v611, 0.0
    %v1050 = vmax.f32 %v614, 0.0
    %v1051 = vmax.f32 %v619, 0.0
    %v1052 = vmax.f32 %v622, 0.0
    %v1053 = vmax.f32 %v627, 0.0
    %v1054 = vmax.f32 %v630, 0.0
    %v1055 = vmax.f32 %v635, 0.0
    %v1056 = vmax.f32 %v638, 0.0
    %v1057 = vmax.f32 %v643, 0.0
    %v1058 = vmax.f32 %v646, 0.0
    %v1059 = vmax.f32 %v651, 0.0
    %v1060 = vmax.f32 %v654, 0.0
    %v1061 = vmax.f32 %v659, 0.0
    %v1062 = vmax.f32 %v662, 0.0
    %v1063 = vmax.f32 %v667, 0.0
    %v1064 = vmax.f32 %v670, 0.0
    %v1065 = vmax.f32 %v675, 0.0
    %v1066 = vmax.f32 %v678, 0.0
    %v1067 = vmax.f32 %v683, 0.0
    %v1068 = vmax.f32 %v686, 0.0
    %v1069 = vmax.f32 %v691, 0.0
    %v1070 = vmax.f32 %v694, 0.0
    %v1071 = vmax.f32 %v699, 0.0
    %v1072 = vmax.f32 %v702, 0.0
    %v1073 = vmax.f32 %v707, 0.0
    %v1074 = vmax.f32 %v710, 0.0
    %v1075 = vmax.f32 %v715, 0.0
    %v1076 = vmax.f32 %v718, 0.0
    %v1077 = vmax.f32 %v723, 0.0
    %v1078 = vmax.f32 %v726, 0.0
    %v1079 = vmax.f32 %v731, 0.0
    %v1080 = vmax.f32 %v734, 0.0
    %v1081 = vmax.f32 %v739, 0.0
    %v1082 = vmax.f32 %v742, 0.0
    %v1083 = vmax.f32 %v747, 0.0
    %v1084 = vmax.f32 %v750, 0.0
    %v1085 = vmax.f32 %v755, 0.0
    %v1086 = vmax.f32 %v758, 0.0
    %v1087 = vmax.f32 %v763, 0.0
    %v1088 = vmax.f32 %v766, 0.0
    %v1089 = vmax.f32 %v771, 0.0
    %v1090 = vmax.f32 %v774, 0.0
    %v1091 = vmax.f32 %v779, 0.0
    %v1092 = vmax.f32 %v782, 0.0
    %v1093 = vmax.f32 %v787, 0.0
    %v1094 = vmax.f32 %v790, 0.0
    %v1095 = vmax.f32 %v795, 0.0
    %v1096 = vmax.f32 %v798, 0.0
    %v1097 = vmax.f32 %v803, 0.0
    %v1098 = vmax.f32 %v806, 0.0
    %v1099 = vmax.f32 %v811, 0.0
    %v1100 = vmax.f32 %v814, 0.0
    %v1101 = vmax.f32 %v819, 0.0
    %v1102 = vmax.f32 %v822, 0.0
    %v1103 = vmax.f32 %v827, 0.0
    %v1104 = vmax.f32 %v830, 0.0
    %v1105 = vmax.f32 %v835, 0.0
    %v1106 = vmax.f32 %v838, 0.0
    %v1107 = vmax.f32 %v843, 0.0
    %v1108 = vmax.f32 %v846, 0.0
    %v1109 = vmax.f32 %v851, 0.0
    %v1110 = vmax.f32 %v854, 0.0
    %v1111 = vmax.f32 %v859, 0.0
    %v1112 = vmax.f32 %v862, 0.0
    %v1113 = vmax.f32 %v867, 0.0
    %v1114 = vmax.f32 %v870, 0.0
    %v1115 = vmax.f32 %v875, 0.0
    %v1116 = vmax.f32 %v878, 0.0
    %v1117 = vmax.f32 %v883, 0.0
    %v1118 = vmax.f32 %v886, 0.0
    %v1119 = vmax.f32 %v891, 0.0
    %v1120 = vmax.f32 %v894, 0.0
    %v1121 = vmax.f32 %v899, 0.0
    %v1122 = vmax.f32 %v902, 0.0
    %v1123 = vmax.f32 %v907, 0.0
    %v1124 = vmax.f32 %v910, 0.0
    %v1125 = vmax.f32 %v915, 0.0
    %v1126 = vmax.f32 %v918, 0.0
    %v1127 = vmax.f32 %v923, 0.0
    %v1128 = vmax.f32 %v926, 0.0
    %v1129 = vmax.f32 %v931, 0.0
    %v1130 = vmax.f32 %v934, 0.0
    %v1131 = vmax.f32 %v939, 0.0
    %v1132 = vmax.f32 %v942, 0.0
    %v1133 = vmax.f32 %v947, 0.0
    %v1134 = vmax.f32 %v950, 0.0
    %v1135 = vmax.f32 %v955, 0.0
    %v1136 = vmax.f32 %v958, 0.0
    %v1137 = vmax.f32 %v963, 0.0
    %v1138 = vmax.f32 %v966, 0.0
    %v1139 = vmax.f32 %v971, 0.0
    %v1140 = vmax.f32 %v974, 0.0
    %v1141 = vmax.f32 %v979, 0.0
    %v1142 = vmax.f32 %v982, 0.0
    %v1143 = vmax.f32 %v987, 0.0
    %v1144 = vmax.f32 %v990, 0.0
    %v1145 = vmax.f32 %v995, 0.0
    %v1146 = vmax.f32 %v998, 0.0
    %v1147 = vmax.f32 %v1003, 0.0
    %v1148 = vmax.f32 %v1006, 0.0
    %v1149 = vmax.f32 %v1011, 0.0
    %v1150 = vmax.f32 %v1014, 0.0
    %v1151 = vmax.f32 %v1019, 0.0
    %v1152 = vmax.f32 %v1022, 0.0
    %v1153 = vpack.c.bf16 %v1026, %v1025
    %v1154 = vpack.c.bf16 %v1028, %v1027
    %v1155 = vpack.c.bf16 %v1030, %v1029
    %v1156 = vpack.c.bf16 %v1032, %v1031
    %v1157 = vpack.c.bf16 %v1034, %v1033
    %v1158 = vpack.c.bf16 %v1036, %v1035
    %v1159 = vpack.c.bf16 %v1038, %v1037
    %v1160 = vpack.c.bf16 %v1040, %v1039
    %v1161 = vpack.c.bf16 %v1042, %v1041
    %v1162 = vpack.c.bf16 %v1044, %v1043
    %v1163 = vpack.c.bf16 %v1046, %v1045
    %v1164 = vpack.c.bf16 %v1048, %v1047
    %v1165 = vpack.c.bf16 %v1050, %v1049
    %v1166 = vpack.c.bf16 %v1052, %v1051
    %v1167 = vpack.c.bf16 %v1054, %v1053
    %v1168 = vpack.c.bf16 %v1056, %v1055
    %v1169 = vpack.c.bf16 %v1058, %v1057
    %v1170 = vpack.c.bf16 %v1060, %v1059
    %v1171 = vpack.c.bf16 %v1062, %v1061
    %v1172 = vpack.c.bf16 %v1064, %v1063
    %v1173 = vpack.c.bf16 %v1066, %v1065
    %v1174 = vpack.c.bf16 %v1068, %v1067
    %v1175 = vpack.c.bf16 %v1070, %v1069
    %v1176 = vpack.c.bf16 %v1072, %v1071
    %v1177 = vpack.c.bf16 %v1074, %v1073
    %v1178 = vpack.c.bf16 %v1076, %v1075
    %v1179 = vpack.c.bf16 %v1078, %v1077
    %v1180 = vpack.c.bf16 %v1080, %v1079
    %v1181 = vpack.c.bf16 %v1082, %v1081
    %v1182 = vpack.c.bf16 %v1084, %v1083
    %v1183 = vpack.c.bf16 %v1086, %v1085
    %v1184 = vpack.c.bf16 %v1088, %v1087
    %v1185 = vpack.c.bf16 %v1090, %v1089
    %v1186 = vpack.c.bf16 %v1092, %v1091
    %v1187 = vpack.c.bf16 %v1094, %v1093
    %v1188 = vpack.c.bf16 %v1096, %v1095
    %v1189 = vpack.c.bf16 %v1098, %v1097
    %v1190 = vpack.c.bf16 %v1100, %v1099
    %v1191 = vpack.c.bf16 %v1102, %v1101
    %v1192 = vpack.c.bf16 %v1104, %v1103
    %v1193 = vpack.c.bf16 %v1106, %v1105
    %v1194 = vpack.c.bf16 %v1108, %v1107
    %v1195 = vpack.c.bf16 %v1110, %v1109
    %v1196 = vpack.c.bf16 %v1112, %v1111
    %v1197 = vpack.c.bf16 %v1114, %v1113
    %v1198 = vpack.c.bf16 %v1116, %v1115
    %v1199 = vpack.c.bf16 %v1118, %v1117
    %v1200 = vpack.c.bf16 %v1120, %v1119
    %v1201 = vpack.c.bf16 %v1122, %v1121
    %v1202 = vpack.c.bf16 %v1124, %v1123
    %v1203 = vpack.c.bf16 %v1126, %v1125
    %v1204 = vpack.c.bf16 %v1128, %v1127
    %v1205 = vpack.c.bf16 %v1130, %v1129
    %v1206 = vpack.c.bf16 %v1132, %v1131
    %v1207 = vpack.c.bf16 %v1134, %v1133
    %v1208 = vpack.c.bf16 %v1136, %v1135
    %v1209 = vpack.c.bf16 %v1138, %v1137
    %v1210 = vpack.c.bf16 %v1140, %v1139
    %v1211 = vpack.c.bf16 %v1142, %v1141
    %v1212 = vpack.c.bf16 %v1144, %v1143
    %v1213 = vpack.c.bf16 %v1146, %v1145
    %v1214 = vpack.c.bf16 %v1148, %v1147
    %v1215 = vpack.c.bf16 %v1150, %v1149
    %v1216 = vpack.c.bf16 %v1152, %v1151
    %v1217 = vld [vmem:[%s3] sm:$0xf]
    %v1218 = vld [vmem:[%s3 + $0x4] sm:$0xf]
    %v1219 = vld [vmem:[%s3 + $0x8] sm:$0xf]
    %v1220 = vld [vmem:[%s3 + $0xc] sm:$0xf]
    %v1221 = vld [vmem:[%s3 + $0x10] sm:$0xf]
    %v1222 = vld [vmem:[%s3 + $0x14] sm:$0xf]
    %v1223 = vld [vmem:[%s3 + $0x18] sm:$0xf]
    %v1224 = vld [vmem:[%s3 + $0x1c] sm:$0xf]
    %v1225 = vld [vmem:[%s4] sm:$0x1]
    %v1227 = vlaneseq
    %v1228 = vshrl.u32 %v1227, 7
    %v1229 = vsub.s32 0, %v1228
    %v1230 = vrot.slane %v1225, %v1229
    %v1240 = vunpack.c.l.b16 %v1217
    %v1241 = vunpack.c.l.b16 %v1218
    %v1242 = vunpack.c.l.b16 %v1219
    %v1243 = vunpack.c.l.b16 %v1220
    %v1244 = vunpack.c.l.b16 %v1221
    %v1245 = vunpack.c.l.b16 %v1222
    %v1246 = vunpack.c.l.b16 %v1223
    %v1247 = vunpack.c.l.b16 %v1224
    %v1248 = vpack.c.b16 %v1241, %v1240
    %v1249 = vpack.c.b16 %v1243, %v1242
    %v1250 = vpack.c.b16 %v1245, %v1244
    %v1251 = vpack.c.b16 %v1247, %v1246
    %vm1256 = vcmask 523264
    %v1258 = vsel %vm1256, %v1153, 0
    %v1261 = vsel %vm1256, %v1154, 0
    %v1264 = vsel %vm1256, %v1155, 0
    %v1267 = vsel %vm1256, %v1156, 0
    %v1270 = vsel %vm1256, %v1157, 0
    %v1273 = vsel %vm1256, %v1158, 0
    %v1276 = vsel %vm1256, %v1159, 0
    %v1279 = vsel %vm1256, %v1160, 0
    %v1282 = vsel %vm1256, %v1161, 0
    %v1285 = vsel %vm1256, %v1162, 0
    %v1288 = vsel %vm1256, %v1163, 0
    %v1291 = vsel %vm1256, %v1164, 0
    %v1294 = vsel %vm1256, %v1165, 0
    %v1297 = vsel %vm1256, %v1166, 0
    %v1300 = vsel %vm1256, %v1167, 0
    %v1303 = vsel %vm1256, %v1168, 0
    %v1306 = vsel %vm1256, %v1169, 0
    %v1309 = vsel %vm1256, %v1170, 0
    %v1312 = vsel %vm1256, %v1171, 0
    %v1315 = vsel %vm1256, %v1172, 0
    %v1318 = vsel %vm1256, %v1173, 0
    %v1321 = vsel %vm1256, %v1174, 0
    %v1324 = vsel %vm1256, %v1175, 0
    %v1327 = vsel %vm1256, %v1176, 0
    %v1330 = vsel %vm1256, %v1177, 0
    %v1333 = vsel %vm1256, %v1178, 0
    %v1336 = vsel %vm1256, %v1179, 0
    %v1339 = vsel %vm1256, %v1180, 0
    %v1342 = vsel %vm1256, %v1181, 0
    %v1345 = vsel %vm1256, %v1182, 0
    %v1348 = vsel %vm1256, %v1183, 0
    %v1351 = vsel %vm1256, %v1184, 0
    %v1354 = vsel %vm1256, %v1185, 0
    %v1357 = vsel %vm1256, %v1186, 0
    %v1360 = vsel %vm1256, %v1187, 0
    %v1363 = vsel %vm1256, %v1188, 0
    %v1366 = vsel %vm1256, %v1189, 0
    %v1369 = vsel %vm1256, %v1190, 0
    %v1372 = vsel %vm1256, %v1191, 0
    %v1375 = vsel %vm1256, %v1192, 0
    %v1378 = vsel %vm1256, %v1193, 0
    %v1381 = vsel %vm1256, %v1194, 0
    %v1384 = vsel %vm1256, %v1195, 0
    %v1387 = vsel %vm1256, %v1196, 0
    %v1390 = vsel %vm1256, %v1197, 0
    %v1393 = vsel %vm1256, %v1198, 0
    %v1396 = vsel %vm1256, %v1199, 0
    %v1399 = vsel %vm1256, %v1200, 0
    %v1402 = vsel %vm1256, %v1201, 0
    %v1405 = vsel %vm1256, %v1202, 0
    %v1408 = vsel %vm1256, %v1203, 0
    %v1411 = vsel %vm1256, %v1204, 0
    %v1414 = vsel %vm1256, %v1205, 0
    %v1417 = vsel %vm1256, %v1206, 0
    %v1420 = vsel %vm1256, %v1207, 0
    %v1423 = vsel %vm1256, %v1208, 0
    %v1426 = vsel %vm1256, %v1209, 0
    %v1429 = vsel %vm1256, %v1210, 0
    %v1432 = vsel %vm1256, %v1211, 0
    %v1435 = vsel %vm1256, %v1212, 0
    %v1438 = vsel %vm1256, %v1213, 0
    %v1441 = vsel %vm1256, %v1214, 0
    %v1444 = vsel %vm1256, %v1215, 0
    %v1447 = vsel %vm1256, %v1216, 0
    %1449 = vmatprep.subr.bf16.mxu0 0
    %1450 = vmatpush1.bf16.msra.mxu0 %v1248
    %1451 = vmatprep.subr.bf16.mxu0 0
    %1452 = vmatpush1.bf16.msra.mxu0 %v1249
    %1453 = vmatprep.subr.bf16.mxu0 0
    %1454 = vmatpush1.bf16.msra.mxu0 %v1250
    %1455 = vmatprep.subr.bf16.mxu0 0
    %1456 = vmatpush1.bf16.msra.mxu0 %v1251
    %1457 = vmatprep.subr.bf16.mxu0 0
    %1458 = vmatpush1.bf16.msra.mxu0 0
    %1459 = vmatprep.subr.bf16.mxu0 0
    %1460 = vmatpush1.bf16.msra.mxu0 0
    %1461 = vmatprep.subr.bf16.mxu0 0
    %1462 = vmatpush1.bf16.msra.mxu0 0
    %1463 = vmatprep.subr.bf16.mxu0 0
    %1464 = vmatpush1.bf16.msra.mxu0 0
    %1465 = vmatprep.subr.bf16.mxu0 0
    %1466 = vmatpush1.bf16.msra.mxu0 0
    %1467 = vmatprep.subr.bf16.mxu0 0
    %1468 = vmatpush1.bf16.msra.mxu0 0
    %1469 = vmatprep.subr.bf16.mxu0 0
    %1470 = vmatpush1.bf16.msra.mxu0 0
    %1471 = vmatprep.subr.bf16.mxu0 0
    %1472 = vmatpush1.bf16.msra.mxu0 0
    %1473 = vmatprep.subr.bf16.mxu0 0
    %1474 = vmatpush1.bf16.msra.mxu0 0
    %1475 = vmatprep.subr.bf16.mxu0 0
    %1476 = vmatpush1.bf16.msra.mxu0 0
    %1477 = vmatprep.subr.bf16.mxu0 0
    %1478 = vmatpush1.bf16.msra.mxu0 0
    %1479 = vmatprep.subr.bf16.mxu0 0
    %1480 = vmatpush1.bf16.msra.mxu0 0
    %1481 = vmatprep.mubr.bf16.mxu0 0
    %1482 = vmatmul.mubr.bf16.gmra.mrb[0].mxu0 %v1258
    %v1483 = vpop.f32.mrb[0].mxu0
    %v1484 = vadd.f32 %v1230, %v1483
    %v1485 = vpop.f32.mrb[0].mxu0
    %v1486 = vpop.f32.mrb[0].mxu0
    %v1487 = vadd.f32 %v1230, %v1486
    %v1488 = vpop.f32.mrb[0].mxu0
    %1489 = vmatprep.mubr.bf16.mxu0 0
    %1490 = vmatmul.mubr.bf16.gmra.mrb[0].mxu0 %v1261
    %v1491 = vpop.f32.mrb[0].mxu0
    %v1492 = vadd.f32 %v1230, %v1491
    %v1493 = vpop.f32.mrb[0].mxu0
    %v1494 = vpop.f32.mrb[0].mxu0
    %v1495 = vadd.f32 %v1230, %v1494
    %v1496 = vpop.f32.mrb[0].mxu0
    %1497 = vmatprep.mubr.bf16.mxu0 0
    %1498 = vmatmul.mubr.bf16.gmra.mrb[0].mxu0 %v1264
    %v1499 = vpop.f32.mrb[0].mxu0
    %v1500 = vadd.f32 %v1230, %v1499
    %v1501 = vpop.f32.mrb[0].mxu0
    %v1502 = vpop.f32.mrb[0].mxu0
    %v1503 = vadd.f32 %v1230, %v1502
    %v1504 = vpop.f32.mrb[0].mxu0
    %1505 = vmatprep.mubr.bf16.mxu0 0
    %1506 = vmatmul.mubr.bf16.gmra.mrb[0].mxu0 %v1267
    %v1507 = vpop.f32.mrb[0].mxu0
    %v1508 = vadd.f32 %v1230, %v1507
    %v1509 = vpop.f32.mrb[0].mxu0
    %v1510 = vpop.f32.mrb[0].mxu0
    %v1511 = vadd.f32 %v1230, %v1510
    %v1512 = vpop.f32.mrb[0].mxu0
    %1513 = vmatprep.mubr.bf16.mxu0 0
    %1514 = vmatmul.mubr.bf16.gmra.mrb[0].mxu0 %v1270
    %v1515 = vpop.f32.mrb[0].mxu0
    %v1516 = vadd.f32 %v1230, %v1515
    %v1517 = vpop.f32.mrb[0].mxu0
    %v1518 = vpop.f32.mrb[0].mxu0
    %v1519 = vadd.f32 %v1230, %v1518
    %v1520 = vpop.f32.mrb[0].mxu0
    %1521 = vmatprep.mubr.bf16.mxu0 0
    %1522 = vmatmul.mubr.bf16.gmra.mrb[0].mxu0 %v1273
    %v1523 = vpop.f32.mrb[0].mxu0
    %v1524 = vadd.f32 %v1230, %v1523
    %v1525 = vpop.f32.mrb[0].mxu0
    %v1526 = vpop.f32.mrb[0].mxu0
    %v1527 = vadd.f32 %v1230, %v1526
    %v1528 = vpop.f32.mrb[0].mxu0
    %1529 = vmatprep.mubr.bf16.mxu0 0
    %1530 = vmatmul.mubr.bf16.gmra.mrb[0].mxu0 %v1276
    %v1531 = vpop.f32.mrb[0].mxu0
    %v1532 = vadd.f32 %v1230, %v1531
    %v1533 = vpop.f32.mrb[0].mxu0
    %v1534 = vpop.f32.mrb[0].mxu0
    %v1535 = vadd.f32 %v1230, %v1534
    %v1536 = vpop.f32.mrb[0].mxu0
    %1537 = vmatprep.mubr.bf16.mxu0 0
    %1538 = vmatmul.mubr.bf16.gmra.mrb[0].mxu0 %v1279
    %v1539 = vpop.f32.mrb[0].mxu0
    %v1540 = vadd.f32 %v1230, %v1539
    %v1541 = vpop.f32.mrb[0].mxu0
    %v1542 = vpop.f32.mrb[0].mxu0
    %v1543 = vadd.f32 %v1230, %v1542
    %v1544 = vpop.f32.mrb[0].mxu0
    %1545 = vmatprep.mubr.bf16.mxu0 0
    %1546 = vmatmul.mubr.bf16.gmra.mrb[0].mxu0 %v1282
    %v1547 = vpop.f32.mrb[0].mxu0
    %v1548 = vadd.f32 %v1230, %v1547
    %v1549 = vpop.f32.mrb[0].mxu0
    %v1550 = vpop.f32.mrb[0].mxu0
    %v1551 = vadd.f32 %v1230, %v1550
    %v1552 = vpop.f32.mrb[0].mxu0
    %1553 = vmatprep.mubr.bf16.mxu0 0
    %1554 = vmatmul.mubr.bf16.gmra.mrb[0].mxu0 %v1285
    %v1555 = vpop.f32.mrb[0].mxu0
    %v1556 = vadd.f32 %v1230, %v1555
    %v1557 = vpop.f32.mrb[0].mxu0
    %v1558 = vpop.f32.mrb[0].mxu0
    %v1559 = vadd.f32 %v1230, %v1558
    %v1560 = vpop.f32.mrb[0].mxu0
    %1561 = vmatprep.mubr.bf16.mxu0 0
    %1562 = vmatmul.mubr.bf16.gmra.mrb[0].mxu0 %v1288
    %v1563 = vpop.f32.mrb[0].mxu0
    %v1564 = vadd.f32 %v1230, %v1563
    %v1565 = vpop.f32.mrb[0].mxu0
    %v1566 = vpop.f32.mrb[0].mxu0
    %v1567 = vadd.f32 %v1230, %v1566
    %v1568 = vpop.f32.mrb[0].mxu0
    %1569 = vmatprep.mubr.bf16.mxu0 0
    %1570 = vmatmul.mubr.bf16.gmra.mrb[0].mxu0 %v1291
    %v1571 = vpop.f32.mrb[0].mxu0
    %v1572 = vadd.f32 %v1230, %v1571
    %v1573 = vpop.f32.mrb[0].mxu0
    %v1574 = vpop.f32.mrb[0].mxu0
    %v1575 = vadd.f32 %v1230, %v1574
    %v1576 = vpop.f32.mrb[0].mxu0
    %1577 = vmatprep.mubr.bf16.mxu0 0
    %1578 = vmatmul.mubr.bf16.gmra.mrb[0].mxu0 %v1294
    %v1579 = vpop.f32.mrb[0].mxu0
    %v1580 = vadd.f32 %v1230, %v1579
    %v1581 = vpop.f32.mrb[0].mxu0
    %v1582 = vpop.f32.mrb[0].mxu0
    %v1583 = vadd.f32 %v1230, %v1582
    %v1584 = vpop.f32.mrb[0].mxu0
    %1585 = vmatprep.mubr.bf16.mxu0 0
    %1586 = vmatmul.mubr.bf16.gmra.mrb[0].mxu0 %v1297
    %v1587 = vpop.f32.mrb[0].mxu0
    %v1588 = vadd.f32 %v1230, %v1587
    %v1589 = vpop.f32.mrb[0].mxu0
    %v1590 = vpop.f32.mrb[0].mxu0
    %v1591 = vadd.f32 %v1230, %v1590
    %v1592 = vpop.f32.mrb[0].mxu0
    %1593 = vmatprep.mubr.bf16.mxu0 0
    %1594 = vmatmul.mubr.bf16.gmra.mrb[0].mxu0 %v1300
    %v1595 = vpop.f32.mrb[0].mxu0
    %v1596 = vadd.f32 %v1230, %v1595
    %v1597 = vpop.f32.mrb[0].mxu0
    %v1598 = vpop.f32.mrb[0].mxu0
    %v1599 = vadd.f32 %v1230, %v1598
    %v1600 = vpop.f32.mrb[0].mxu0
    %1601 = vmatprep.mubr.bf16.mxu0 0
    %1602 = vmatmul.mubr.bf16.gmra.mrb[0].mxu0 %v1303
    %v1603 = vpop.f32.mrb[0].mxu0
    %v1604 = vadd.f32 %v1230, %v1603
    %v1605 = vpop.f32.mrb[0].mxu0
    %v1606 = vpop.f32.mrb[0].mxu0
    %v1607 = vadd.f32 %v1230, %v1606
    %v1608 = vpop.f32.mrb[0].mxu0
    %1609 = vmatprep.mubr.bf16.mxu0 0
    %1610 = vmatmul.mubr.bf16.gmra.mrb[0].mxu0 %v1306
    %v1611 = vpop.f32.mrb[0].mxu0
    %v1612 = vadd.f32 %v1230, %v1611
    %v1613 = vpop.f32.mrb[0].mxu0
    %v1614 = vpop.f32.mrb[0].mxu0
    %v1615 = vadd.f32 %v1230, %v1614
    %v1616 = vpop.f32.mrb[0].mxu0
    %1617 = vmatprep.mubr.bf16.mxu0 0
    %1618 = vmatmul.mubr.bf16.gmra.mrb[0].mxu0 %v1309
    %v1619 = vpop.f32.mrb[0].mxu0
    %v1620 = vadd.f32 %v1230, %v1619
    %v1621 = vpop.f32.mrb[0].mxu0
    %v1622 = vpop.f32.mrb[0].mxu0
    %v1623 = vadd.f32 %v1230, %v1622
    %v1624 = vpop.f32.mrb[0].mxu0
    %1625 = vmatprep.mubr.bf16.mxu0 0
    %1626 = vmatmul.mubr.bf16.gmra.mrb[0].mxu0 %v1312
    %v1627 = vpop.f32.mrb[0].mxu0
    %v1628 = vadd.f32 %v1230, %v1627
    %v1629 = vpop.f32.mrb[0].mxu0
    %v1630 = vpop.f32.mrb[0].mxu0
    %v1631 = vadd.f32 %v1230, %v1630
    %v1632 = vpop.f32.mrb[0].mxu0
    %1633 = vmatprep.mubr.bf16.mxu0 0
    %1634 = vmatmul.mubr.bf16.gmra.mrb[0].mxu0 %v1315
    %v1635 = vpop.f32.mrb[0].mxu0
    %v1636 = vadd.f32 %v1230, %v1635
    %v1637 = vpop.f32.mrb[0].mxu0
    %v1638 = vpop.f32.mrb[0].mxu0
    %v1639 = vadd.f32 %v1230, %v1638
    %v1640 = vpop.f32.mrb[0].mxu0
    %1641 = vmatprep.mubr.bf16.mxu0 0
    %1642 = vmatmul.mubr.bf16.gmra.mrb[0].mxu0 %v1318
    %v1643 = vpop.f32.mrb[0].mxu0
    %v1644 = vadd.f32 %v1230, %v1643
    %v1645 = vpop.f32.mrb[0].mxu0
    %v1646 = vpop.f32.mrb[0].mxu0
    %v1647 = vadd.f32 %v1230, %v1646
    %v1648 = vpop.f32.mrb[0].mxu0
    %1649 = vmatprep.mubr.bf16.mxu0 0
    %1650 = vmatmul.mubr.bf16.gmra.mrb[0].mxu0 %v1321
    %v1651 = vpop.f32.mrb[0].mxu0
    %v1652 = vadd.f32 %v1230, %v1651
    %v1653 = vpop.f32.mrb[0].mxu0
    %v1654 = vpop.f32.mrb[0].mxu0
    %v1655 = vadd.f32 %v1230, %v1654
    %v1656 = vpop.f32.mrb[0].mxu0
    %1657 = vmatprep.mubr.bf16.mxu0 0
    %1658 = vmatmul.mubr.bf16.gmra.mrb[0].mxu0 %v1324
    %v1659 = vpop.f32.mrb[0].mxu0
    %v1660 = vadd.f32 %v1230, %v1659
    %v1661 = vpop.f32.mrb[0].mxu0
    %v1662 = vpop.f32.mrb[0].mxu0
    %v1663 = vadd.f32 %v1230, %v1662
    %v1664 = vpop.f32.mrb[0].mxu0
    %1665 = vmatprep.mubr.bf16.mxu0 0
    %1666 = vmatmul.mubr.bf16.gmra.mrb[0].mxu0 %v1327
    %v1667 = vpop.f32.mrb[0].mxu0
    %v1668 = vadd.f32 %v1230, %v1667
    %v1669 = vpop.f32.mrb[0].mxu0
    %v1670 = vpop.f32.mrb[0].mxu0
    %v1671 = vadd.f32 %v1230, %v1670
    %v1672 = vpop.f32.mrb[0].mxu0
    %1673 = vmatprep.mubr.bf16.mxu0 0
    %1674 = vmatmul.mubr.bf16.gmra.mrb[0].mxu0 %v1330
    %v1675 = vpop.f32.mrb[0].mxu0
    %v1676 = vadd.f32 %v1230, %v1675
    %v1677 = vpop.f32.mrb[0].mxu0
    %v1678 = vpop.f32.mrb[0].mxu0
    %v1679 = vadd.f32 %v1230, %v1678
    %v1680 = vpop.f32.mrb[0].mxu0
    %1681 = vmatprep.mubr.bf16.mxu0 0
    %1682 = vmatmul.mubr.bf16.gmra.mrb[0].mxu0 %v1333
    %v1683 = vpop.f32.mrb[0].mxu0
    %v1684 = vadd.f32 %v1230, %v1683
    %v1685 = vpop.f32.mrb[0].mxu0
    %v1686 = vpop.f32.mrb[0].mxu0
    %v1687 = vadd.f32 %v1230, %v1686
    %v1688 = vpop.f32.mrb[0].mxu0
    %1689 = vmatprep.mubr.bf16.mxu0 0
    %1690 = vmatmul.mubr.bf16.gmra.mrb[0].mxu0 %v1336
    %v1691 = vpop.f32.mrb[0].mxu0
    %v1692 = vadd.f32 %v1230, %v1691
    %v1693 = vpop.f32.mrb[0].mxu0
    %v1694 = vpop.f32.mrb[0].mxu0
    %v1695 = vadd.f32 %v1230, %v1694
    %v1696 = vpop.f32.mrb[0].mxu0
    %1697 = vmatprep.mubr.bf16.mxu0 0
    %1698 = vmatmul.mubr.bf16.gmra.mrb[0].mxu0 %v1339
    %v1699 = vpop.f32.mrb[0].mxu0
    %v1700 = vadd.f32 %v1230, %v1699
    %v1701 = vpop.f32.mrb[0].mxu0
    %v1702 = vpop.f32.mrb[0].mxu0
    %v1703 = vadd.f32 %v1230, %v1702
    %v1704 = vpop.f32.mrb[0].mxu0
    %1705 = vmatprep.mubr.bf16.mxu0 0
    %1706 = vmatmul.mubr.bf16.gmra.mrb[0].mxu0 %v1342
    %v1707 = vpop.f32.mrb[0].mxu0
    %v1708 = vadd.f32 %v1230, %v1707
    %v1709 = vpop.f32.mrb[0].mxu0
    %v1710 = vpop.f32.mrb[0].mxu0
    %v1711 = vadd.f32 %v1230, %v1710
    %v1712 = vpop.f32.mrb[0].mxu0
    %1713 = vmatprep.mubr.bf16.mxu0 0
    %1714 = vmatmul.mubr.bf16.gmra.mrb[0].mxu0 %v1345
    %v1715 = vpop.f32.mrb[0].mxu0
    %v1716 = vadd.f32 %v1230, %v1715
    %v1717 = vpop.f32.mrb[0].mxu0
    %v1718 = vpop.f32.mrb[0].mxu0
    %v1719 = vadd.f32 %v1230, %v1718
    %v1720 = vpop.f32.mrb[0].mxu0
    %1721 = vmatprep.mubr.bf16.mxu0 0
    %1722 = vmatmul.mubr.bf16.gmra.mrb[0].mxu0 %v1348
    %v1723 = vpop.f32.mrb[0].mxu0
    %v1724 = vadd.f32 %v1230, %v1723
    %v1725 = vpop.f32.mrb[0].mxu0
    %v1726 = vpop.f32.mrb[0].mxu0
    %v1727 = vadd.f32 %v1230, %v1726
    %v1728 = vpop.f32.mrb[0].mxu0
    %1729 = vmatprep.mubr.bf16.mxu0 0
    %1730 = vmatmul.mubr.bf16.gmra.mrb[0].mxu0 %v1351
    %v1731 = vpop.f32.mrb[0].mxu0
    %v1732 = vadd.f32 %v1230, %v1731
    %v1733 = vpop.f32.mrb[0].mxu0
    %v1734 = vpop.f32.mrb[0].mxu0
    %v1735 = vadd.f32 %v1230, %v1734
    %v1736 = vpop.f32.mrb[0].mxu0
    %1737 = vmatprep.mubr.bf16.mxu0 0
    %1738 = vmatmul.mubr.bf16.gmra.mrb[0].mxu0 %v1354
    %v1739 = vpop.f32.mrb[0].mxu0
    %v1740 = vadd.f32 %v1230, %v1739
    %v1741 = vpop.f32.mrb[0].mxu0
    %v1742 = vpop.f32.mrb[0].mxu0
    %v1743 = vadd.f32 %v1230, %v1742
    %v1744 = vpop.f32.mrb[0].mxu0
    %1745 = vmatprep.mubr.bf16.mxu0 0
    %1746 = vmatmul.mubr.bf16.gmra.mrb[0].mxu0 %v1357
    %v1747 = vpop.f32.mrb[0].mxu0
    %v1748 = vadd.f32 %v1230, %v1747
    %v1749 = vpop.f32.mrb[0].mxu0
    %v1750 = vpop.f32.mrb[0].mxu0
    %v1751 = vadd.f32 %v1230, %v1750
    %v1752 = vpop.f32.mrb[0].mxu0
    %1753 = vmatprep.mubr.bf16.mxu0 0
    %1754 = vmatmul.mubr.bf16.gmra.mrb[0].mxu0 %v1360
    %v1755 = vpop.f32.mrb[0].mxu0
    %v1756 = vadd.f32 %v1230, %v1755
    %v1757 = vpop.f32.mrb[0].mxu0
    %v1758 = vpop.f32.mrb[0].mxu0
    %v1759 = vadd.f32 %v1230, %v1758
    %v1760 = vpop.f32.mrb[0].mxu0
    %1761 = vmatprep.mubr.bf16.mxu0 0
    %1762 = vmatmul.mubr.bf16.gmra.mrb[0].mxu0 %v1363
    %v1763 = vpop.f32.mrb[0].mxu0
    %v1764 = vadd.f32 %v1230, %v1763
    %v1765 = vpop.f32.mrb[0].mxu0
    %v1766 = vpop.f32.mrb[0].mxu0
    %v1767 = vadd.f32 %v1230, %v1766
    %v1768 = vpop.f32.mrb[0].mxu0
    %1769 = vmatprep.mubr.bf16.mxu0 0
    %1770 = vmatmul.mubr.bf16.gmra.mrb[0].mxu0 %v1366
    %v1771 = vpop.f32.mrb[0].mxu0
    %v1772 = vadd.f32 %v1230, %v1771
    %v1773 = vpop.f32.mrb[0].mxu0
    %v1774 = vpop.f32.mrb[0].mxu0
    %v1775 = vadd.f32 %v1230, %v1774
    %v1776 = vpop.f32.mrb[0].mxu0
    %1777 = vmatprep.mubr.bf16.mxu0 0
    %1778 = vmatmul.mubr.bf16.gmra.mrb[0].mxu0 %v1369
    %v1779 = vpop.f32.mrb[0].mxu0
    %v1780 = vadd.f32 %v1230, %v1779
    %v1781 = vpop.f32.mrb[0].mxu0
    %v1782 = vpop.f32.mrb[0].mxu0
    %v1783 = vadd.f32 %v1230, %v1782
    %v1784 = vpop.f32.mrb[0].mxu0
    %1785 = vmatprep.mubr.bf16.mxu0 0
    %1786 = vmatmul.mubr.bf16.gmra.mrb[0].mxu0 %v1372
    %v1787 = vpop.f32.mrb[0].mxu0
    %v1788 = vadd.f32 %v1230, %v1787
    %v1789 = vpop.f32.mrb[0].mxu0
    %v1790 = vpop.f32.mrb[0].mxu0
    %v1791 = vadd.f32 %v1230, %v1790
    %v1792 = vpop.f32.mrb[0].mxu0
    %1793 = vmatprep.mubr.bf16.mxu0 0
    %1794 = vmatmul.mubr.bf16.gmra.mrb[0].mxu0 %v1375
    %v1795 = vpop.f32.mrb[0].mxu0
    %v1796 = vadd.f32 %v1230, %v1795
    %v1797 = vpop.f32.mrb[0].mxu0
    %v1798 = vpop.f32.mrb[0].mxu0
    %v1799 = vadd.f32 %v1230, %v1798
    %v1800 = vpop.f32.mrb[0].mxu0
    %1801 = vmatprep.mubr.bf16.mxu0 0
    %1802 = vmatmul.mubr.bf16.gmra.mrb[0].mxu0 %v1378
    %v1803 = vpop.f32.mrb[0].mxu0
    %v1804 = vadd.f32 %v1230, %v1803
    %v1805 = vpop.f32.mrb[0].mxu0
    %v1806 = vpop.f32.mrb[0].mxu0
    %v1807 = vadd.f32 %v1230, %v1806
    %v1808 = vpop.f32.mrb[0].mxu0
    %1809 = vmatprep.mubr.bf16.mxu0 0
    %1810 = vmatmul.mubr.bf16.gmra.mrb[0].mxu0 %v1381
    %v1811 = vpop.f32.mrb[0].mxu0
    %v1812 = vadd.f32 %v1230, %v1811
    %v1813 = vpop.f32.mrb[0].mxu0
    %v1814 = vpop.f32.mrb[0].mxu0
    %v1815 = vadd.f32 %v1230, %v1814
    %v1816 = vpop.f32.mrb[0].mxu0
    %1817 = vmatprep.mubr.bf16.mxu0 0
    %1818 = vmatmul.mubr.bf16.gmra.mrb[0].mxu0 %v1384
    %v1819 = vpop.f32.mrb[0].mxu0
    %v1820 = vadd.f32 %v1230, %v1819
    %v1821 = vpop.f32.mrb[0].mxu0
    %v1822 = vpop.f32.mrb[0].mxu0
    %v1823 = vadd.f32 %v1230, %v1822
    %v1824 = vpop.f32.mrb[0].mxu0
    %1825 = vmatprep.mubr.bf16.mxu0 0
    %1826 = vmatmul.mubr.bf16.gmra.mrb[0].mxu0 %v1387
    %v1827 = vpop.f32.mrb[0].mxu0
    %v1828 = vadd.f32 %v1230, %v1827
    %v1829 = vpop.f32.mrb[0].mxu0
    %v1830 = vpop.f32.mrb[0].mxu0
    %v1831 = vadd.f32 %v1230, %v1830
    %v1832 = vpop.f32.mrb[0].mxu0
    %1833 = vmatprep.mubr.bf16.mxu0 0
    %1834 = vmatmul.mubr.bf16.gmra.mrb[0].mxu0 %v1390
    %v1835 = vpop.f32.mrb[0].mxu0
    %v1836 = vadd.f32 %v1230, %v1835
    %v1837 = vpop.f32.mrb[0].mxu0
    %v1838 = vpop.f32.mrb[0].mxu0
    %v1839 = vadd.f32 %v1230, %v1838
    %v1840 = vpop.f32.mrb[0].mxu0
    %1841 = vmatprep.mubr.bf16.mxu0 0
    %1842 = vmatmul.mubr.bf16.gmra.mrb[0].mxu0 %v1393
    %v1843 = vpop.f32.mrb[0].mxu0
    %v1844 = vadd.f32 %v1230, %v1843
    %v1845 = vpop.f32.mrb[0].mxu0
    %v1846 = vpop.f32.mrb[0].mxu0
    %v1847 = vadd.f32 %v1230, %v1846
    %v1848 = vpop.f32.mrb[0].mxu0
    %1849 = vmatprep.mubr.bf16.mxu0 0
    %1850 = vmatmul.mubr.bf16.gmra.mrb[0].mxu0 %v1396
    %v1851 = vpop.f32.mrb[0].mxu0
    %v1852 = vadd.f32 %v1230, %v1851
    %v1853 = vpop.f32.mrb[0].mxu0
    %v1854 = vpop.f32.mrb[0].mxu0
    %v1855 = vadd.f32 %v1230, %v1854
    %v1856 = vpop.f32.mrb[0].mxu0
    %1857 = vmatprep.mubr.bf16.mxu0 0
    %1858 = vmatmul.mubr.bf16.gmra.mrb[0].mxu0 %v1399
    %v1859 = vpop.f32.mrb[0].mxu0
    %v1860 = vadd.f32 %v1230, %v1859
    %v1861 = vpop.f32.mrb[0].mxu0
    %v1862 = vpop.f32.mrb[0].mxu0
    %v1863 = vadd.f32 %v1230, %v1862
    %v1864 = vpop.f32.mrb[0].mxu0
    %1865 = vmatprep.mubr.bf16.mxu0 0
    %1866 = vmatmul.mubr.bf16.gmra.mrb[0].mxu0 %v1402
    %v1867 = vpop.f32.mrb[0].mxu0
    %v1868 = vadd.f32 %v1230, %v1867
    %v1869 = vpop.f32.mrb[0].mxu0
    %v1870 = vpop.f32.mrb[0].mxu0
    %v1871 = vadd.f32 %v1230, %v1870
    %v1872 = vpop.f32.mrb[0].mxu0
    %1873 = vmatprep.mubr.bf16.mxu0 0
    %1874 = vmatmul.mubr.bf16.gmra.mrb[0].mxu0 %v1405
    %v1875 = vpop.f32.mrb[0].mxu0
    %v1876 = vadd.f32 %v1230, %v1875
    %v1877 = vpop.f32.mrb[0].mxu0
    %v1878 = vpop.f32.mrb[0].mxu0
    %v1879 = vadd.f32 %v1230, %v1878
    %v1880 = vpop.f32.mrb[0].mxu0
    %1881 = vmatprep.mubr.bf16.mxu0 0
    %1882 = vmatmul.mubr.bf16.gmra.mrb[0].mxu0 %v1408
    %v1883 = vpop.f32.mrb[0].mxu0
    %v1884 = vadd.f32 %v1230, %v1883
    %v1885 = vpop.f32.mrb[0].mxu0
    %v1886 = vpop.f32.mrb[0].mxu0
    %v1887 = vadd.f32 %v1230, %v1886
    %v1888 = vpop.f32.mrb[0].mxu0
    %1889 = vmatprep.mubr.bf16.mxu0 0
    %1890 = vmatmul.mubr.bf16.gmra.mrb[0].mxu0 %v1411
    %v1891 = vpop.f32.mrb[0].mxu0
    %v1892 = vadd.f32 %v1230, %v1891
    %v1893 = vpop.f32.mrb[0].mxu0
    %v1894 = vpop.f32.mrb[0].mxu0
    %v1895 = vadd.f32 %v1230, %v1894
    %v1896 = vpop.f32.mrb[0].mxu0
    %1897 = vmatprep.mubr.bf16.mxu0 0
    %1898 = vmatmul.mubr.bf16.gmra.mrb[0].mxu0 %v1414
    %v1899 = vpop.f32.mrb[0].mxu0
    %v1900 = vadd.f32 %v1230, %v1899
    %v1901 = vpop.f32.mrb[0].mxu0
    %v1902 = vpop.f32.mrb[0].mxu0
    %v1903 = vadd.f32 %v1230, %v1902
    %v1904 = vpop.f32.mrb[0].mxu0
    %1905 = vmatprep.mubr.bf16.mxu0 0
    %1906 = vmatmul.mubr.bf16.gmra.mrb[0].mxu0 %v1417
    %v1907 = vpop.f32.mrb[0].mxu0
    %v1908 = vadd.f32 %v1230, %v1907
    %v1909 = vpop.f32.mrb[0].mxu0
    %v1910 = vpop.f32.mrb[0].mxu0
    %v1911 = vadd.f32 %v1230, %v1910
    %v1912 = vpop.f32.mrb[0].mxu0
    %1913 = vmatprep.mubr.bf16.mxu0 0
    %1914 = vmatmul.mubr.bf16.gmra.mrb[0].mxu0 %v1420
    %v1915 = vpop.f32.mrb[0].mxu0
    %v1916 = vadd.f32 %v1230, %v1915
    %v1917 = vpop.f32.mrb[0].mxu0
    %v1918 = vpop.f32.mrb[0].mxu0
    %v1919 = vadd.f32 %v1230, %v1918
    %v1920 = vpop.f32.mrb[0].mxu0
    %1921 = vmatprep.mubr.bf16.mxu0 0
    %1922 = vmatmul.mubr.bf16.gmra.mrb[0].mxu0 %v1423
    %v1923 = vpop.f32.mrb[0].mxu0
    %v1924 = vadd.f32 %v1230, %v1923
    %v1925 = vpop.f32.mrb[0].mxu0
    %v1926 = vpop.f32.mrb[0].mxu0
    %v1927 = vadd.f32 %v1230, %v1926
    %v1928 = vpop.f32.mrb[0].mxu0
    %1929 = vmatprep.mubr.bf16.mxu0 0
    %1930 = vmatmul.mubr.bf16.gmra.mrb[0].mxu0 %v1426
    %v1931 = vpop.f32.mrb[0].mxu0
    %v1932 = vadd.f32 %v1230, %v1931
    %v1933 = vpop.f32.mrb[0].mxu0
    %v1934 = vpop.f32.mrb[0].mxu0
    %v1935 = vadd.f32 %v1230, %v1934
    %v1936 = vpop.f32.mrb[0].mxu0
    %1937 = vmatprep.mubr.bf16.mxu0 0
    %1938 = vmatmul.mubr.bf16.gmra.mrb[0].mxu0 %v1429
    %v1939 = vpop.f32.mrb[0].mxu0
    %v1940 = vadd.f32 %v1230, %v1939
    %v1941 = vpop.f32.mrb[0].mxu0
    %v1942 = vpop.f32.mrb[0].mxu0
    %v1943 = vadd.f32 %v1230, %v1942
    %v1944 = vpop.f32.mrb[0].mxu0
    %1945 = vmatprep.mubr.bf16.mxu0 0
    %1946 = vmatmul.mubr.bf16.gmra.mrb[0].mxu0 %v1432
    %v1947 = vpop.f32.mrb[0].mxu0
    %v1948 = vadd.f32 %v1230, %v1947
    %v1949 = vpop.f32.mrb[0].mxu0
    %v1950 = vpop.f32.mrb[0].mxu0
    %v1951 = vadd.f32 %v1230, %v1950
    %v1952 = vpop.f32.mrb[0].mxu0
    %1953 = vmatprep.mubr.bf16.mxu0 0
    %1954 = vmatmul.mubr.bf16.gmra.mrb[0].mxu0 %v1435
    %v1955 = vpop.f32.mrb[0].mxu0
    %v1956 = vadd.f32 %v1230, %v1955
    %v1957 = vpop.f32.mrb[0].mxu0
    %v1958 = vpop.f32.mrb[0].mxu0
    %v1959 = vadd.f32 %v1230, %v1958
    %v1960 = vpop.f32.mrb[0].mxu0
    %1961 = vmatprep.mubr.bf16.mxu0 0
    %1962 = vmatmul.mubr.bf16.gmra.mrb[0].mxu0 %v1438
    %v1963 = vpop.f32.mrb[0].mxu0
    %v1964 = vadd.f32 %v1230, %v1963
    %v1965 = vpop.f32.mrb[0].mxu0
    %v1966 = vpop.f32.mrb[0].mxu0
    %v1967 = vadd.f32 %v1230, %v1966
    %v1968 = vpop.f32.mrb[0].mxu0
    %1969 = vmatprep.mubr.bf16.mxu0 0
    %1970 = vmatmul.mubr.bf16.gmra.mrb[0].mxu0 %v1441
    %v1971 = vpop.f32.mrb[0].mxu0
    %v1972 = vadd.f32 %v1230, %v1971
    %v1973 = vpop.f32.mrb[0].mxu0
    %v1974 = vpop.f32.mrb[0].mxu0
    %v1975 = vadd.f32 %v1230, %v1974
    %v1976 = vpop.f32.mrb[0].mxu0
    %1977 = vmatprep.mubr.bf16.mxu0 0
    %1978 = vmatmul.mubr.bf16.gmra.mrb[0].mxu0 %v1444
    %v1979 = vpop.f32.mrb[0].mxu0
    %v1980 = vadd.f32 %v1230, %v1979
    %v1981 = vpop.f32.mrb[0].mxu0
    %v1982 = vpop.f32.mrb[0].mxu0
    %v1983 = vadd.f32 %v1230, %v1982
    %v1984 = vpop.f32.mrb[0].mxu0
    %1985 = vmatprep.mubr.bf16.mxu0 0
    %1986 = vmatmul.mubr.bf16.gmra.mrb[0].mxu0 %v1447
    %v1987 = vpop.f32.mrb[0].mxu0
    %v1988 = vadd.f32 %v1230, %v1987
    %v1989 = vpop.f32.mrb[0].mxu0
    %v1990 = vpop.f32.mrb[0].mxu0
    %v1991 = vadd.f32 %v1230, %v1990
    %v1992 = vpop.f32.mrb[0].mxu0
    %1993 = vdwg.mxu0
    %v1994 = vmax.f32 %v1484, 0.0
    %v1995 = vmax.f32 %v1487, 0.0
    %v1996 = vmax.f32 %v1492, 0.0
    %v1997 = vmax.f32 %v1495, 0.0
    %v1998 = vmax.f32 %v1500, 0.0
    %v1999 = vmax.f32 %v1503, 0.0
    %v2000 = vmax.f32 %v1508, 0.0
    %v2001 = vmax.f32 %v1511, 0.0
    %v2002 = vmax.f32 %v1516, 0.0
    %v2003 = vmax.f32 %v1519, 0.0
    %v2004 = vmax.f32 %v1524, 0.0
    %v2005 = vmax.f32 %v1527, 0.0
    %v2006 = vmax.f32 %v1532, 0.0
    %v2007 = vmax.f32 %v1535, 0.0
    %v2008 = vmax.f32 %v1540, 0.0
    %v2009 = vmax.f32 %v1543, 0.0
    %v2010 = vmax.f32 %v1548, 0.0
    %v2011 = vmax.f32 %v1551, 0.0
    %v2012 = vmax.f32 %v1556, 0.0
    %v2013 = vmax.f32 %v1559, 0.0
    %v2014 = vmax.f32 %v1564, 0.0
    %v2015 = vmax.f32 %v1567, 0.0
    %v2016 = vmax.f32 %v1572, 0.0
    %v2017 = vmax.f32 %v1575, 0.0
    %v2018 = vmax.f32 %v1580, 0.0
    %v2019 = vmax.f32 %v1583, 0.0
    %v2020 = vmax.f32 %v1588, 0.0
    %v2021 = vmax.f32 %v1591, 0.0
    %v2022 = vmax.f32 %v1596, 0.0
    %v2023 = vmax.f32 %v1599, 0.0
    %v2024 = vmax.f32 %v1604, 0.0
    %v2025 = vmax.f32 %v1607, 0.0
    %v2026 = vmax.f32 %v1612, 0.0
    %v2027 = vmax.f32 %v1615, 0.0
    %v2028 = vmax.f32 %v1620, 0.0
    %v2029 = vmax.f32 %v1623, 0.0
    %v2030 = vmax.f32 %v1628, 0.0
    %v2031 = vmax.f32 %v1631, 0.0
    %v2032 = vmax.f32 %v1636, 0.0
    %v2033 = vmax.f32 %v1639, 0.0
    %v2034 = vmax.f32 %v1644, 0.0
    %v2035 = vmax.f32 %v1647, 0.0
    %v2036 = vmax.f32 %v1652, 0.0
    %v2037 = vmax.f32 %v1655, 0.0
    %v2038 = vmax.f32 %v1660, 0.0
    %v2039 = vmax.f32 %v1663, 0.0
    %v2040 = vmax.f32 %v1668, 0.0
    %v2041 = vmax.f32 %v1671, 0.0
    %v2042 = vmax.f32 %v1676, 0.0
    %v2043 = vmax.f32 %v1679, 0.0
    %v2044 = vmax.f32 %v1684, 0.0
    %v2045 = vmax.f32 %v1687, 0.0
    %v2046 = vmax.f32 %v1692, 0.0
    %v2047 = vmax.f32 %v1695, 0.0
    %v2048 = vmax.f32 %v1700, 0.0
    %v2049 = vmax.f32 %v1703, 0.0
    %v2050 = vmax.f32 %v1708, 0.0
    %v2051 = vmax.f32 %v1711, 0.0
    %v2052 = vmax.f32 %v1716, 0.0
    %v2053 = vmax.f32 %v1719, 0.0
    %v2054 = vmax.f32 %v1724, 0.0
    %v2055 = vmax.f32 %v1727, 0.0
    %v2056 = vmax.f32 %v1732, 0.0
    %v2057 = vmax.f32 %v1735, 0.0
    %v2058 = vmax.f32 %v1740, 0.0
    %v2059 = vmax.f32 %v1743, 0.0
    %v2060 = vmax.f32 %v1748, 0.0
    %v2061 = vmax.f32 %v1751, 0.0
    %v2062 = vmax.f32 %v1756, 0.0
    %v2063 = vmax.f32 %v1759, 0.0
    %v2064 = vmax.f32 %v1764, 0.0
    %v2065 = vmax.f32 %v1767, 0.0
    %v2066 = vmax.f32 %v1772, 0.0
    %v2067 = vmax.f32 %v1775, 0.0
    %v2068 = vmax.f32 %v1780, 0.0
    %v2069 = vmax.f32 %v1783, 0.0
    %v2070 = vmax.f32 %v1788, 0.0
    %v2071 = vmax.f32 %v1791, 0.0
    %v2072 = vmax.f32 %v1796, 0.0
    %v2073 = vmax.f32 %v1799, 0.0
    %v2074 = vmax.f32 %v1804, 0.0
    %v2075 = vmax.f32 %v1807, 0.0
    %v2076 = vmax.f32 %v1812, 0.0
    %v2077 = vmax.f32 %v1815, 0.0
    %v2078 = vmax.f32 %v1820, 0.0
    %v2079 = vmax.f32 %v1823, 0.0
    %v2080 = vmax.f32 %v1828, 0.0
    %v2081 = vmax.f32 %v1831, 0.0
    %v2082 = vmax.f32 %v1836, 0.0
    %v2083 = vmax.f32 %v1839, 0.0
    %v2084 = vmax.f32 %v1844, 0.0
    %v2085 = vmax.f32 %v1847, 0.0
    %v2086 = vmax.f32 %v1852, 0.0
    %v2087 = vmax.f32 %v1855, 0.0
    %v2088 = vmax.f32 %v1860, 0.0
    %v2089 = vmax.f32 %v1863, 0.0
    %v2090 = vmax.f32 %v1868, 0.0
    %v2091 = vmax.f32 %v1871, 0.0
    %v2092 = vmax.f32 %v1876, 0.0
    %v2093 = vmax.f32 %v1879, 0.0
    %v2094 = vmax.f32 %v1884, 0.0
    %v2095 = vmax.f32 %v1887, 0.0
    %v2096 = vmax.f32 %v1892, 0.0
    %v2097 = vmax.f32 %v1895, 0.0
    %v2098 = vmax.f32 %v1900, 0.0
    %v2099 = vmax.f32 %v1903, 0.0
    %v2100 = vmax.f32 %v1908, 0.0
    %v2101 = vmax.f32 %v1911, 0.0
    %v2102 = vmax.f32 %v1916, 0.0
    %v2103 = vmax.f32 %v1919, 0.0
    %v2104 = vmax.f32 %v1924, 0.0
    %v2105 = vmax.f32 %v1927, 0.0
    %v2106 = vmax.f32 %v1932, 0.0
    %v2107 = vmax.f32 %v1935, 0.0
    %v2108 = vmax.f32 %v1940, 0.0
    %v2109 = vmax.f32 %v1943, 0.0
    %v2110 = vmax.f32 %v1948, 0.0
    %v2111 = vmax.f32 %v1951, 0.0
    %v2112 = vmax.f32 %v1956, 0.0
    %v2113 = vmax.f32 %v1959, 0.0
    %v2114 = vmax.f32 %v1964, 0.0
    %v2115 = vmax.f32 %v1967, 0.0
    %v2116 = vmax.f32 %v1972, 0.0
    %v2117 = vmax.f32 %v1975, 0.0
    %v2118 = vmax.f32 %v1980, 0.0
    %v2119 = vmax.f32 %v1983, 0.0
    %v2120 = vmax.f32 %v1988, 0.0
    %v2121 = vmax.f32 %v1991, 0.0
    %v2122 = vpack.c.bf16 %v1995, %v1994
    %v2123 = vpack.c.bf16 %v1997, %v1996
    %v2124 = vpack.c.bf16 %v1999, %v1998
    %v2125 = vpack.c.bf16 %v2001, %v2000
    %v2126 = vpack.c.bf16 %v2003, %v2002
    %v2127 = vpack.c.bf16 %v2005, %v2004
    %v2128 = vpack.c.bf16 %v2007, %v2006
    %v2129 = vpack.c.bf16 %v2009, %v2008
    %v2130 = vpack.c.bf16 %v2011, %v2010
    %v2131 = vpack.c.bf16 %v2013, %v2012
    %v2132 = vpack.c.bf16 %v2015, %v2014
    %v2133 = vpack.c.bf16 %v2017, %v2016
    %v2134 = vpack.c.bf16 %v2019, %v2018
    %v2135 = vpack.c.bf16 %v2021, %v2020
    %v2136 = vpack.c.bf16 %v2023, %v2022
    %v2137 = vpack.c.bf16 %v2025, %v2024
    %v2138 = vpack.c.bf16 %v2027, %v2026
    %v2139 = vpack.c.bf16 %v2029, %v2028
    %v2140 = vpack.c.bf16 %v2031, %v2030
    %v2141 = vpack.c.bf16 %v2033, %v2032
    %v2142 = vpack.c.bf16 %v2035, %v2034
    %v2143 = vpack.c.bf16 %v2037, %v2036
    %v2144 = vpack.c.bf16 %v2039, %v2038
    %v2145 = vpack.c.bf16 %v2041, %v2040
    %v2146 = vpack.c.bf16 %v2043, %v2042
    %v2147 = vpack.c.bf16 %v2045, %v2044
    %v2148 = vpack.c.bf16 %v2047, %v2046
    %v2149 = vpack.c.bf16 %v2049, %v2048
    %v2150 = vpack.c.bf16 %v2051, %v2050
    %v2151 = vpack.c.bf16 %v2053, %v2052
    %v2152 = vpack.c.bf16 %v2055, %v2054
    %v2153 = vpack.c.bf16 %v2057, %v2056
    %v2154 = vpack.c.bf16 %v2059, %v2058
    %v2155 = vpack.c.bf16 %v2061, %v2060
    %v2156 = vpack.c.bf16 %v2063, %v2062
    %v2157 = vpack.c.bf16 %v2065, %v2064
    %v2158 = vpack.c.bf16 %v2067, %v2066
    %v2159 = vpack.c.bf16 %v2069, %v2068
    %v2160 = vpack.c.bf16 %v2071, %v2070
    %v2161 = vpack.c.bf16 %v2073, %v2072
    %v2162 = vpack.c.bf16 %v2075, %v2074
    %v2163 = vpack.c.bf16 %v2077, %v2076
    %v2164 = vpack.c.bf16 %v2079, %v2078
    %v2165 = vpack.c.bf16 %v2081, %v2080
    %v2166 = vpack.c.bf16 %v2083, %v2082
    %v2167 = vpack.c.bf16 %v2085, %v2084
    %v2168 = vpack.c.bf16 %v2087, %v2086
    %v2169 = vpack.c.bf16 %v2089, %v2088
    %v2170 = vpack.c.bf16 %v2091, %v2090
    %v2171 = vpack.c.bf16 %v2093, %v2092
    %v2172 = vpack.c.bf16 %v2095, %v2094
    %v2173 = vpack.c.bf16 %v2097, %v2096
    %v2174 = vpack.c.bf16 %v2099, %v2098
    %v2175 = vpack.c.bf16 %v2101, %v2100
    %v2176 = vpack.c.bf16 %v2103, %v2102
    %v2177 = vpack.c.bf16 %v2105, %v2104
    %v2178 = vpack.c.bf16 %v2107, %v2106
    %v2179 = vpack.c.bf16 %v2109, %v2108
    %v2180 = vpack.c.bf16 %v2111, %v2110
    %v2181 = vpack.c.bf16 %v2113, %v2112
    %v2182 = vpack.c.bf16 %v2115, %v2114
    %v2183 = vpack.c.bf16 %v2117, %v2116
    %v2184 = vpack.c.bf16 %v2119, %v2118
    %v2185 = vpack.c.bf16 %v2121, %v2120
    %v2186 = vld [vmem:[%s5] sm:$0xf]
    %v2187 = vld [vmem:[%s5 + $0x4] sm:$0xf]
    %v2188 = vld [vmem:[%s5 + $0x8] sm:$0xf]
    %v2189 = vld [vmem:[%s5 + $0xc] sm:$0xf]
    %v2190 = vld [vmem:[%s5 + $0x10] sm:$0xf]
    %v2191 = vld [vmem:[%s5 + $0x14] sm:$0xf]
    %v2192 = vld [vmem:[%s5 + $0x18] sm:$0xf]
    %v2193 = vld [vmem:[%s5 + $0x1c] sm:$0xf]
    %v2194 = vld [vmem:[%s6] sm:$0x1]
    %v2196 = vlaneseq
    %v2197 = vshrl.u32 %v2196, 7
    %v2198 = vsub.s32 0, %v2197
    %v2199 = vrot.slane %v2194, %v2198
    %v2209 = vunpack.c.l.b16 %v2186
    %v2210 = vunpack.c.l.b16 %v2187
    %v2211 = vunpack.c.l.b16 %v2188
    %v2212 = vunpack.c.l.b16 %v2189
    %v2213 = vunpack.c.l.b16 %v2190
    %v2214 = vunpack.c.l.b16 %v2191
    %v2215 = vunpack.c.l.b16 %v2192
    %v2216 = vunpack.c.l.b16 %v2193
    %v2217 = vpack.c.b16 %v2210, %v2209
    %v2218 = vpack.c.b16 %v2212, %v2211
    %v2219 = vpack.c.b16 %v2214, %v2213
    %v2220 = vpack.c.b16 %v2216, %v2215
    %v2226 = vsel %vm1256, %v2122, 0
    %v2229 = vsel %vm1256, %v2123, 0
    %v2232 = vsel %vm1256, %v2124, 0
    %v2235 = vsel %vm1256, %v2125, 0
    %v2238 = vsel %vm1256, %v2126, 0
    %v2241 = vsel %vm1256, %v2127, 0
    %v2244 = vsel %vm1256, %v2128, 0
    %v2247 = vsel %vm1256, %v2129, 0
    %v2250 = vsel %vm1256, %v2130, 0
    %v2253 = vsel %vm1256, %v2131, 0
    %v2256 = vsel %vm1256, %v2132, 0
    %v2259 = vsel %vm1256, %v2133, 0
    %v2262 = vsel %vm1256, %v2134, 0
    %v2265 = vsel %vm1256, %v2135, 0
    %v2268 = vsel %vm1256, %v2136, 0
    %v2271 = vsel %vm1256, %v2137, 0
    %v2274 = vsel %vm1256, %v2138, 0
    %v2277 = vsel %vm1256, %v2139, 0
    %v2280 = vsel %vm1256, %v2140, 0
    %v2283 = vsel %vm1256, %v2141, 0
    %v2286 = vsel %vm1256, %v2142, 0
    %v2289 = vsel %vm1256, %v2143, 0
    %v2292 = vsel %vm1256, %v2144, 0
    %v2295 = vsel %vm1256, %v2145, 0
    %v2298 = vsel %vm1256, %v2146, 0
    %v2301 = vsel %vm1256, %v2147, 0
    %v2304 = vsel %vm1256, %v2148, 0
    %v2307 = vsel %vm1256, %v2149, 0
    %v2310 = vsel %vm1256, %v2150, 0
    %v2313 = vsel %vm1256, %v2151, 0
    %v2316 = vsel %vm1256, %v2152, 0
    %v2319 = vsel %vm1256, %v2153, 0
    %v2322 = vsel %vm1256, %v2154, 0
    %v2325 = vsel %vm1256, %v2155, 0
    %v2328 = vsel %vm1256, %v2156, 0
    %v2331 = vsel %vm1256, %v2157, 0
    %v2334 = vsel %vm1256, %v2158, 0
    %v2337 = vsel %vm1256, %v2159, 0
    %v2340 = vsel %vm1256, %v2160, 0
    %v2343 = vsel %vm1256, %v2161, 0
    %v2346 = vsel %vm1256, %v2162, 0
    %v2349 = vsel %vm1256, %v2163, 0
    %v2352 = vsel %vm1256, %v2164, 0
    %v2355 = vsel %vm1256, %v2165, 0
    %v2358 = vsel %vm1256, %v2166, 0
    %v2361 = vsel %vm1256, %v2167, 0
    %v2364 = vsel %vm1256, %v2168, 0
    %v2367 = vsel %vm1256, %v2169, 0
    %v2370 = vsel %vm1256, %v2170, 0
    %v2373 = vsel %vm1256, %v2171, 0
    %v2376 = vsel %vm1256, %v2172, 0
    %v2379 = vsel %vm1256, %v2173, 0
    %v2382 = vsel %vm1256, %v2174, 0
    %v2385 = vsel %vm1256, %v2175, 0
    %v2388 = vsel %vm1256, %v2176, 0
    %v2391 = vsel %vm1256, %v2177, 0
    %v2394 = vsel %vm1256, %v2178, 0
    %v2397 = vsel %vm1256, %v2179, 0
    %v2400 = vsel %vm1256, %v2180, 0
    %v2403 = vsel %vm1256, %v2181, 0
    %v2406 = vsel %vm1256, %v2182, 0
    %v2409 = vsel %vm1256, %v2183, 0
    %v2412 = vsel %vm1256, %v2184, 0
    %v2415 = vsel %vm1256, %v2185, 0
    %2417 = vmatprep.subr.bf16.mxu0 0
    %2418 = vmatpush1.bf16.msra.mxu0 %v2217
    %2419 = vmatprep.subr.bf16.mxu0 0
    %2420 = vmatpush1.bf16.msra.mxu0 %v2218
    %2421 = vmatprep.subr.bf16.mxu0 0
    %2422 = vmatpush1.bf16.msra.mxu0 %v2219
    %2423 = vmatprep.subr.bf16.mxu0 0
    %2424 = vmatpush1.bf16.msra.mxu0 %v2220
    %2425 = vmatprep.subr.bf16.mxu0 0
    %2426 = vmatpush1.bf16.msra.mxu0 0
    %2427 = vmatprep.subr.bf16.mxu0 0
    %2428 = vmatpush1.bf16.msra.mxu0 0
    %2429 = vmatprep.subr.bf16.mxu0 0
    %2430 = vmatpush1.bf16.msra.mxu0 0
    %2431 = vmatprep.subr.bf16.mxu0 0
    %2432 = vmatpush1.bf16.msra.mxu0 0
    %2433 = vmatprep.subr.bf16.mxu0 0
    %2434 = vmatpush1.bf16.msra.mxu0 0
    %2435 = vmatprep.subr.bf16.mxu0 0
    %2436 = vmatpush1.bf16.msra.mxu0 0
    %2437 = vmatprep.subr.bf16.mxu0 0
    %2438 = vmatpush1.bf16.msra.mxu0 0
    %2439 = vmatprep.subr.bf16.mxu0 0
    %2440 = vmatpush1.bf16.msra.mxu0 0
    %2441 = vmatprep.subr.bf16.mxu0 0
    %2442 = vmatpush1.bf16.msra.mxu0 0
    %2443 = vmatprep.subr.bf16.mxu0 0
    %2444 = vmatpush1.bf16.msra.mxu0 0
    %2445 = vmatprep.subr.bf16.mxu0 0
    %2446 = vmatpush1.bf16.msra.mxu0 0
    %2447 = vmatprep.subr.bf16.mxu0 0
    %2448 = vmatpush1.bf16.msra.mxu0 0
    %2449 = vmatprep.mubr.bf16.mxu0 0
    %2450 = vmatmul.mubr.bf16.gmra.mrb[0].mxu0 %v2226
    %v2451 = vpop.f32.mrb[0].mxu0
    %v2452 = vadd.f32 %v2199, %v2451
    %v2453 = vpop.f32.mrb[0].mxu0
    %v2454 = vpop.f32.mrb[0].mxu0
    %v2455 = vadd.f32 %v2199, %v2454
    %v2456 = vpop.f32.mrb[0].mxu0
    %2457 = vmatprep.mubr.bf16.mxu0 0
    %2458 = vmatmul.mubr.bf16.gmra.mrb[0].mxu0 %v2229
    %v2459 = vpop.f32.mrb[0].mxu0
    %v2460 = vadd.f32 %v2199, %v2459
    %v2461 = vpop.f32.mrb[0].mxu0
    %v2462 = vpop.f32.mrb[0].mxu0
    %v2463 = vadd.f32 %v2199, %v2462
    %v2464 = vpop.f32.mrb[0].mxu0
    %2465 = vmatprep.mubr.bf16.mxu0 0
    %2466 = vmatmul.mubr.bf16.gmra.mrb[0].mxu0 %v2232
    %v2467 = vpop.f32.mrb[0].mxu0
    %v2468 = vadd.f32 %v2199, %v2467
    %v2469 = vpop.f32.mrb[0].mxu0
    %v2470 = vpop.f32.mrb[0].mxu0
    %v2471 = vadd.f32 %v2199, %v2470
    %v2472 = vpop.f32.mrb[0].mxu0
    %2473 = vmatprep.mubr.bf16.mxu0 0
    %2474 = vmatmul.mubr.bf16.gmra.mrb[0].mxu0 %v2235
    %v2475 = vpop.f32.mrb[0].mxu0
    %v2476 = vadd.f32 %v2199, %v2475
    %v2477 = vpop.f32.mrb[0].mxu0
    %v2478 = vpop.f32.mrb[0].mxu0
    %v2479 = vadd.f32 %v2199, %v2478
    %v2480 = vpop.f32.mrb[0].mxu0
    %2481 = vmatprep.mubr.bf16.mxu0 0
    %2482 = vmatmul.mubr.bf16.gmra.mrb[0].mxu0 %v2238
    %v2483 = vpop.f32.mrb[0].mxu0
    %v2484 = vadd.f32 %v2199, %v2483
    %v2485 = vpop.f32.mrb[0].mxu0
    %v2486 = vpop.f32.mrb[0].mxu0
    %v2487 = vadd.f32 %v2199, %v2486
    %v2488 = vpop.f32.mrb[0].mxu0
    %2489 = vmatprep.mubr.bf16.mxu0 0
    %2490 = vmatmul.mubr.bf16.gmra.mrb[0].mxu0 %v2241
    %v2491 = vpop.f32.mrb[0].mxu0
    %v2492 = vadd.f32 %v2199, %v2491
    %v2493 = vpop.f32.mrb[0].mxu0
    %v2494 = vpop.f32.mrb[0].mxu0
    %v2495 = vadd.f32 %v2199, %v2494
    %v2496 = vpop.f32.mrb[0].mxu0
    %2497 = vmatprep.mubr.bf16.mxu0 0
    %2498 = vmatmul.mubr.bf16.gmra.mrb[0].mxu0 %v2244
    %v2499 = vpop.f32.mrb[0].mxu0
    %v2500 = vadd.f32 %v2199, %v2499
    %v2501 = vpop.f32.mrb[0].mxu0
    %v2502 = vpop.f32.mrb[0].mxu0
    %v2503 = vadd.f32 %v2199, %v2502
    %v2504 = vpop.f32.mrb[0].mxu0
    %2505 = vmatprep.mubr.bf16.mxu0 0
    %2506 = vmatmul.mubr.bf16.gmra.mrb[0].mxu0 %v2247
    %v2507 = vpop.f32.mrb[0].mxu0
    %v2508 = vadd.f32 %v2199, %v2507
    %v2509 = vpop.f32.mrb[0].mxu0
    %v2510 = vpop.f32.mrb[0].mxu0
    %v2511 = vadd.f32 %v2199, %v2510
    %v2512 = vpop.f32.mrb[0].mxu0
    %2513 = vmatprep.mubr.bf16.mxu0 0
    %2514 = vmatmul.mubr.bf16.gmra.mrb[0].mxu0 %v2250
    %v2515 = vpop.f32.mrb[0].mxu0
    %v2516 = vadd.f32 %v2199, %v2515
    %v2517 = vpop.f32.mrb[0].mxu0
    %v2518 = vpop.f32.mrb[0].mxu0
    %v2519 = vadd.f32 %v2199, %v2518
    %v2520 = vpop.f32.mrb[0].mxu0
    %2521 = vmatprep.mubr.bf16.mxu0 0
    %2522 = vmatmul.mubr.bf16.gmra.mrb[0].mxu0 %v2253
    %v2523 = vpop.f32.mrb[0].mxu0
    %v2524 = vadd.f32 %v2199, %v2523
    %v2525 = vpop.f32.mrb[0].mxu0
    %v2526 = vpop.f32.mrb[0].mxu0
    %v2527 = vadd.f32 %v2199, %v2526
    %v2528 = vpop.f32.mrb[0].mxu0
    %2529 = vmatprep.mubr.bf16.mxu0 0
    %2530 = vmatmul.mubr.bf16.gmra.mrb[0].mxu0 %v2256
    %v2531 = vpop.f32.mrb[0].mxu0
    %v2532 = vadd.f32 %v2199, %v2531
    %v2533 = vpop.f32.mrb[0].mxu0
    %v2534 = vpop.f32.mrb[0].mxu0
    %v2535 = vadd.f32 %v2199, %v2534
    %v2536 = vpop.f32.mrb[0].mxu0
    %2537 = vmatprep.mubr.bf16.mxu0 0
    %2538 = vmatmul.mubr.bf16.gmra.mrb[0].mxu0 %v2259
    %v2539 = vpop.f32.mrb[0].mxu0
    %v2540 = vadd.f32 %v2199, %v2539
    %v2541 = vpop.f32.mrb[0].mxu0
    %v2542 = vpop.f32.mrb[0].mxu0
    %v2543 = vadd.f32 %v2199, %v2542
    %v2544 = vpop.f32.mrb[0].mxu0
    %2545 = vmatprep.mubr.bf16.mxu0 0
    %2546 = vmatmul.mubr.bf16.gmra.mrb[0].mxu0 %v2262
    %v2547 = vpop.f32.mrb[0].mxu0
    %v2548 = vadd.f32 %v2199, %v2547
    %v2549 = vpop.f32.mrb[0].mxu0
    %v2550 = vpop.f32.mrb[0].mxu0
    %v2551 = vadd.f32 %v2199, %v2550
    %v2552 = vpop.f32.mrb[0].mxu0
    %2553 = vmatprep.mubr.bf16.mxu0 0
    %2554 = vmatmul.mubr.bf16.gmra.mrb[0].mxu0 %v2265
    %v2555 = vpop.f32.mrb[0].mxu0
    %v2556 = vadd.f32 %v2199, %v2555
    %v2557 = vpop.f32.mrb[0].mxu0
    %v2558 = vpop.f32.mrb[0].mxu0
    %v2559 = vadd.f32 %v2199, %v2558
    %v2560 = vpop.f32.mrb[0].mxu0
    %2561 = vmatprep.mubr.bf16.mxu0 0
    %2562 = vmatmul.mubr.bf16.gmra.mrb[0].mxu0 %v2268
    %v2563 = vpop.f32.mrb[0].mxu0
    %v2564 = vadd.f32 %v2199, %v2563
    %v2565 = vpop.f32.mrb[0].mxu0
    %v2566 = vpop.f32.mrb[0].mxu0
    %v2567 = vadd.f32 %v2199, %v2566
    %v2568 = vpop.f32.mrb[0].mxu0
    %2569 = vmatprep.mubr.bf16.mxu0 0
    %2570 = vmatmul.mubr.bf16.gmra.mrb[0].mxu0 %v2271
    %v2571 = vpop.f32.mrb[0].mxu0
    %v2572 = vadd.f32 %v2199, %v2571
    %v2573 = vpop.f32.mrb[0].mxu0
    %v2574 = vpop.f32.mrb[0].mxu0
    %v2575 = vadd.f32 %v2199, %v2574
    %v2576 = vpop.f32.mrb[0].mxu0
    %2577 = vmatprep.mubr.bf16.mxu0 0
    %2578 = vmatmul.mubr.bf16.gmra.mrb[0].mxu0 %v2274
    %v2579 = vpop.f32.mrb[0].mxu0
    %v2580 = vadd.f32 %v2199, %v2579
    %v2581 = vpop.f32.mrb[0].mxu0
    %v2582 = vpop.f32.mrb[0].mxu0
    %v2583 = vadd.f32 %v2199, %v2582
    %v2584 = vpop.f32.mrb[0].mxu0
    %2585 = vmatprep.mubr.bf16.mxu0 0
    %2586 = vmatmul.mubr.bf16.gmra.mrb[0].mxu0 %v2277
    %v2587 = vpop.f32.mrb[0].mxu0
    %v2588 = vadd.f32 %v2199, %v2587
    %v2589 = vpop.f32.mrb[0].mxu0
    %v2590 = vpop.f32.mrb[0].mxu0
    %v2591 = vadd.f32 %v2199, %v2590
    %v2592 = vpop.f32.mrb[0].mxu0
    %2593 = vmatprep.mubr.bf16.mxu0 0
    %2594 = vmatmul.mubr.bf16.gmra.mrb[0].mxu0 %v2280
    %v2595 = vpop.f32.mrb[0].mxu0
    %v2596 = vadd.f32 %v2199, %v2595
    %v2597 = vpop.f32.mrb[0].mxu0
    %v2598 = vpop.f32.mrb[0].mxu0
    %v2599 = vadd.f32 %v2199, %v2598
    %v2600 = vpop.f32.mrb[0].mxu0
    %2601 = vmatprep.mubr.bf16.mxu0 0
    %2602 = vmatmul.mubr.bf16.gmra.mrb[0].mxu0 %v2283
    %v2603 = vpop.f32.mrb[0].mxu0
    %v2604 = vadd.f32 %v2199, %v2603
    %v2605 = vpop.f32.mrb[0].mxu0
    %v2606 = vpop.f32.mrb[0].mxu0
    %v2607 = vadd.f32 %v2199, %v2606
    %v2608 = vpop.f32.mrb[0].mxu0
    %2609 = vmatprep.mubr.bf16.mxu0 0
    %2610 = vmatmul.mubr.bf16.gmra.mrb[0].mxu0 %v2286
    %v2611 = vpop.f32.mrb[0].mxu0
    %v2612 = vadd.f32 %v2199, %v2611
    %v2613 = vpop.f32.mrb[0].mxu0
    %v2614 = vpop.f32.mrb[0].mxu0
    %v2615 = vadd.f32 %v2199, %v2614
    %v2616 = vpop.f32.mrb[0].mxu0
    %2617 = vmatprep.mubr.bf16.mxu0 0
    %2618 = vmatmul.mubr.bf16.gmra.mrb[0].mxu0 %v2289
    %v2619 = vpop.f32.mrb[0].mxu0
    %v2620 = vadd.f32 %v2199, %v2619
    %v2621 = vpop.f32.mrb[0].mxu0
    %v2622 = vpop.f32.mrb[0].mxu0
    %v2623 = vadd.f32 %v2199, %v2622
    %v2624 = vpop.f32.mrb[0].mxu0
    %2625 = vmatprep.mubr.bf16.mxu0 0
    %2626 = vmatmul.mubr.bf16.gmra.mrb[0].mxu0 %v2292
    %v2627 = vpop.f32.mrb[0].mxu0
    %v2628 = vadd.f32 %v2199, %v2627
    %v2629 = vpop.f32.mrb[0].mxu0
    %v2630 = vpop.f32.mrb[0].mxu0
    %v2631 = vadd.f32 %v2199, %v2630
    %v2632 = vpop.f32.mrb[0].mxu0
    %2633 = vmatprep.mubr.bf16.mxu0 0
    %2634 = vmatmul.mubr.bf16.gmra.mrb[0].mxu0 %v2295
    %v2635 = vpop.f32.mrb[0].mxu0
    %v2636 = vadd.f32 %v2199, %v2635
    %v2637 = vpop.f32.mrb[0].mxu0
    %v2638 = vpop.f32.mrb[0].mxu0
    %v2639 = vadd.f32 %v2199, %v2638
    %v2640 = vpop.f32.mrb[0].mxu0
    %2641 = vmatprep.mubr.bf16.mxu0 0
    %2642 = vmatmul.mubr.bf16.gmra.mrb[0].mxu0 %v2298
    %v2643 = vpop.f32.mrb[0].mxu0
    %v2644 = vadd.f32 %v2199, %v2643
    %v2645 = vpop.f32.mrb[0].mxu0
    %v2646 = vpop.f32.mrb[0].mxu0
    %v2647 = vadd.f32 %v2199, %v2646
    %v2648 = vpop.f32.mrb[0].mxu0
    %2649 = vmatprep.mubr.bf16.mxu0 0
    %2650 = vmatmul.mubr.bf16.gmra.mrb[0].mxu0 %v2301
    %v2651 = vpop.f32.mrb[0].mxu0
    %v2652 = vadd.f32 %v2199, %v2651
    %v2653 = vpop.f32.mrb[0].mxu0
    %v2654 = vpop.f32.mrb[0].mxu0
    %v2655 = vadd.f32 %v2199, %v2654
    %v2656 = vpop.f32.mrb[0].mxu0
    %2657 = vmatprep.mubr.bf16.mxu0 0
    %2658 = vmatmul.mubr.bf16.gmra.mrb[0].mxu0 %v2304
    %v2659 = vpop.f32.mrb[0].mxu0
    %v2660 = vadd.f32 %v2199, %v2659
    %v2661 = vpop.f32.mrb[0].mxu0
    %v2662 = vpop.f32.mrb[0].mxu0
    %v2663 = vadd.f32 %v2199, %v2662
    %v2664 = vpop.f32.mrb[0].mxu0
    %2665 = vmatprep.mubr.bf16.mxu0 0
    %2666 = vmatmul.mubr.bf16.gmra.mrb[0].mxu0 %v2307
    %v2667 = vpop.f32.mrb[0].mxu0
    %v2668 = vadd.f32 %v2199, %v2667
    %v2669 = vpop.f32.mrb[0].mxu0
    %v2670 = vpop.f32.mrb[0].mxu0
    %v2671 = vadd.f32 %v2199, %v2670
    %v2672 = vpop.f32.mrb[0].mxu0
    %2673 = vmatprep.mubr.bf16.mxu0 0
    %2674 = vmatmul.mubr.bf16.gmra.mrb[0].mxu0 %v2310
    %v2675 = vpop.f32.mrb[0].mxu0
    %v2676 = vadd.f32 %v2199, %v2675
    %v2677 = vpop.f32.mrb[0].mxu0
    %v2678 = vpop.f32.mrb[0].mxu0
    %v2679 = vadd.f32 %v2199, %v2678
    %v2680 = vpop.f32.mrb[0].mxu0
    %2681 = vmatprep.mubr.bf16.mxu0 0
    %2682 = vmatmul.mubr.bf16.gmra.mrb[0].mxu0 %v2313
    %v2683 = vpop.f32.mrb[0].mxu0
    %v2684 = vadd.f32 %v2199, %v2683
    %v2685 = vpop.f32.mrb[0].mxu0
    %v2686 = vpop.f32.mrb[0].mxu0
    %v2687 = vadd.f32 %v2199, %v2686
    %v2688 = vpop.f32.mrb[0].mxu0
    %2689 = vmatprep.mubr.bf16.mxu0 0
    %2690 = vmatmul.mubr.bf16.gmra.mrb[0].mxu0 %v2316
    %v2691 = vpop.f32.mrb[0].mxu0
    %v2692 = vadd.f32 %v2199, %v2691
    %v2693 = vpop.f32.mrb[0].mxu0
    %v2694 = vpop.f32.mrb[0].mxu0
    %v2695 = vadd.f32 %v2199, %v2694
    %v2696 = vpop.f32.mrb[0].mxu0
    %2697 = vmatprep.mubr.bf16.mxu0 0
    %2698 = vmatmul.mubr.bf16.gmra.mrb[0].mxu0 %v2319
    %v2699 = vpop.f32.mrb[0].mxu0
    %v2700 = vadd.f32 %v2199, %v2699
    %v2701 = vpop.f32.mrb[0].mxu0
    %v2702 = vpop.f32.mrb[0].mxu0
    %v2703 = vadd.f32 %v2199, %v2702
    %v2704 = vpop.f32.mrb[0].mxu0
    %2705 = vmatprep.mubr.bf16.mxu0 0
    %2706 = vmatmul.mubr.bf16.gmra.mrb[0].mxu0 %v2322
    %v2707 = vpop.f32.mrb[0].mxu0
    %v2708 = vadd.f32 %v2199, %v2707
    %v2709 = vpop.f32.mrb[0].mxu0
    %v2710 = vpop.f32.mrb[0].mxu0
    %v2711 = vadd.f32 %v2199, %v2710
    %v2712 = vpop.f32.mrb[0].mxu0
    %2713 = vmatprep.mubr.bf16.mxu0 0
    %2714 = vmatmul.mubr.bf16.gmra.mrb[0].mxu0 %v2325
    %v2715 = vpop.f32.mrb[0].mxu0
    %v2716 = vadd.f32 %v2199, %v2715
    %v2717 = vpop.f32.mrb[0].mxu0
    %v2718 = vpop.f32.mrb[0].mxu0
    %v2719 = vadd.f32 %v2199, %v2718
    %v2720 = vpop.f32.mrb[0].mxu0
    %2721 = vmatprep.mubr.bf16.mxu0 0
    %2722 = vmatmul.mubr.bf16.gmra.mrb[0].mxu0 %v2328
    %v2723 = vpop.f32.mrb[0].mxu0
    %v2724 = vadd.f32 %v2199, %v2723
    %v2725 = vpop.f32.mrb[0].mxu0
    %v2726 = vpop.f32.mrb[0].mxu0
    %v2727 = vadd.f32 %v2199, %v2726
    %v2728 = vpop.f32.mrb[0].mxu0
    %2729 = vmatprep.mubr.bf16.mxu0 0
    %2730 = vmatmul.mubr.bf16.gmra.mrb[0].mxu0 %v2331
    %v2731 = vpop.f32.mrb[0].mxu0
    %v2732 = vadd.f32 %v2199, %v2731
    %v2733 = vpop.f32.mrb[0].mxu0
    %v2734 = vpop.f32.mrb[0].mxu0
    %v2735 = vadd.f32 %v2199, %v2734
    %v2736 = vpop.f32.mrb[0].mxu0
    %2737 = vmatprep.mubr.bf16.mxu0 0
    %2738 = vmatmul.mubr.bf16.gmra.mrb[0].mxu0 %v2334
    %v2739 = vpop.f32.mrb[0].mxu0
    %v2740 = vadd.f32 %v2199, %v2739
    %v2741 = vpop.f32.mrb[0].mxu0
    %v2742 = vpop.f32.mrb[0].mxu0
    %v2743 = vadd.f32 %v2199, %v2742
    %v2744 = vpop.f32.mrb[0].mxu0
    %2745 = vmatprep.mubr.bf16.mxu0 0
    %2746 = vmatmul.mubr.bf16.gmra.mrb[0].mxu0 %v2337
    %v2747 = vpop.f32.mrb[0].mxu0
    %v2748 = vadd.f32 %v2199, %v2747
    %v2749 = vpop.f32.mrb[0].mxu0
    %v2750 = vpop.f32.mrb[0].mxu0
    %v2751 = vadd.f32 %v2199, %v2750
    %v2752 = vpop.f32.mrb[0].mxu0
    %2753 = vmatprep.mubr.bf16.mxu0 0
    %2754 = vmatmul.mubr.bf16.gmra.mrb[0].mxu0 %v2340
    %v2755 = vpop.f32.mrb[0].mxu0
    %v2756 = vadd.f32 %v2199, %v2755
    %v2757 = vpop.f32.mrb[0].mxu0
    %v2758 = vpop.f32.mrb[0].mxu0
    %v2759 = vadd.f32 %v2199, %v2758
    %v2760 = vpop.f32.mrb[0].mxu0
    %2761 = vmatprep.mubr.bf16.mxu0 0
    %2762 = vmatmul.mubr.bf16.gmra.mrb[0].mxu0 %v2343
    %v2763 = vpop.f32.mrb[0].mxu0
    %v2764 = vadd.f32 %v2199, %v2763
    %v2765 = vpop.f32.mrb[0].mxu0
    %v2766 = vpop.f32.mrb[0].mxu0
    %v2767 = vadd.f32 %v2199, %v2766
    %v2768 = vpop.f32.mrb[0].mxu0
    %2769 = vmatprep.mubr.bf16.mxu0 0
    %2770 = vmatmul.mubr.bf16.gmra.mrb[0].mxu0 %v2346
    %v2771 = vpop.f32.mrb[0].mxu0
    %v2772 = vadd.f32 %v2199, %v2771
    %v2773 = vpop.f32.mrb[0].mxu0
    %v2774 = vpop.f32.mrb[0].mxu0
    %v2775 = vadd.f32 %v2199, %v2774
    %v2776 = vpop.f32.mrb[0].mxu0
    %2777 = vmatprep.mubr.bf16.mxu0 0
    %2778 = vmatmul.mubr.bf16.gmra.mrb[0].mxu0 %v2349
    %v2779 = vpop.f32.mrb[0].mxu0
    %v2780 = vadd.f32 %v2199, %v2779
    %v2781 = vpop.f32.mrb[0].mxu0
    %v2782 = vpop.f32.mrb[0].mxu0
    %v2783 = vadd.f32 %v2199, %v2782
    %v2784 = vpop.f32.mrb[0].mxu0
    %2785 = vmatprep.mubr.bf16.mxu0 0
    %2786 = vmatmul.mubr.bf16.gmra.mrb[0].mxu0 %v2352
    %v2787 = vpop.f32.mrb[0].mxu0
    %v2788 = vadd.f32 %v2199, %v2787
    %v2789 = vpop.f32.mrb[0].mxu0
    %v2790 = vpop.f32.mrb[0].mxu0
    %v2791 = vadd.f32 %v2199, %v2790
    %v2792 = vpop.f32.mrb[0].mxu0
    %2793 = vmatprep.mubr.bf16.mxu0 0
    %2794 = vmatmul.mubr.bf16.gmra.mrb[0].mxu0 %v2355
    %v2795 = vpop.f32.mrb[0].mxu0
    %v2796 = vadd.f32 %v2199, %v2795
    %v2797 = vpop.f32.mrb[0].mxu0
    %v2798 = vpop.f32.mrb[0].mxu0
    %v2799 = vadd.f32 %v2199, %v2798
    %v2800 = vpop.f32.mrb[0].mxu0
    %2801 = vmatprep.mubr.bf16.mxu0 0
    %2802 = vmatmul.mubr.bf16.gmra.mrb[0].mxu0 %v2358
    %v2803 = vpop.f32.mrb[0].mxu0
    %v2804 = vadd.f32 %v2199, %v2803
    %v2805 = vpop.f32.mrb[0].mxu0
    %v2806 = vpop.f32.mrb[0].mxu0
    %v2807 = vadd.f32 %v2199, %v2806
    %v2808 = vpop.f32.mrb[0].mxu0
    %2809 = vmatprep.mubr.bf16.mxu0 0
    %2810 = vmatmul.mubr.bf16.gmra.mrb[0].mxu0 %v2361
    %v2811 = vpop.f32.mrb[0].mxu0
    %v2812 = vadd.f32 %v2199, %v2811
    %v2813 = vpop.f32.mrb[0].mxu0
    %v2814 = vpop.f32.mrb[0].mxu0
    %v2815 = vadd.f32 %v2199, %v2814
    %v2816 = vpop.f32.mrb[0].mxu0
    %2817 = vmatprep.mubr.bf16.mxu0 0
    %2818 = vmatmul.mubr.bf16.gmra.mrb[0].mxu0 %v2364
    %v2819 = vpop.f32.mrb[0].mxu0
    %v2820 = vadd.f32 %v2199, %v2819
    %v2821 = vpop.f32.mrb[0].mxu0
    %v2822 = vpop.f32.mrb[0].mxu0
    %v2823 = vadd.f32 %v2199, %v2822
    %v2824 = vpop.f32.mrb[0].mxu0
    %2825 = vmatprep.mubr.bf16.mxu0 0
    %2826 = vmatmul.mubr.bf16.gmra.mrb[0].mxu0 %v2367
    %v2827 = vpop.f32.mrb[0].mxu0
    %v2828 = vadd.f32 %v2199, %v2827
    %v2829 = vpop.f32.mrb[0].mxu0
    %v2830 = vpop.f32.mrb[0].mxu0
    %v2831 = vadd.f32 %v2199, %v2830
    %v2832 = vpop.f32.mrb[0].mxu0
    %2833 = vmatprep.mubr.bf16.mxu0 0
    %2834 = vmatmul.mubr.bf16.gmra.mrb[0].mxu0 %v2370
    %v2835 = vpop.f32.mrb[0].mxu0
    %v2836 = vadd.f32 %v2199, %v2835
    %v2837 = vpop.f32.mrb[0].mxu0
    %v2838 = vpop.f32.mrb[0].mxu0
    %v2839 = vadd.f32 %v2199, %v2838
    %v2840 = vpop.f32.mrb[0].mxu0
    %2841 = vmatprep.mubr.bf16.mxu0 0
    %2842 = vmatmul.mubr.bf16.gmra.mrb[0].mxu0 %v2373
    %v2843 = vpop.f32.mrb[0].mxu0
    %v2844 = vadd.f32 %v2199, %v2843
    %v2845 = vpop.f32.mrb[0].mxu0
    %v2846 = vpop.f32.mrb[0].mxu0
    %v2847 = vadd.f32 %v2199, %v2846
    %v2848 = vpop.f32.mrb[0].mxu0
    %2849 = vmatprep.mubr.bf16.mxu0 0
    %2850 = vmatmul.mubr.bf16.gmra.mrb[0].mxu0 %v2376
    %v2851 = vpop.f32.mrb[0].mxu0
    %v2852 = vadd.f32 %v2199, %v2851
    %v2853 = vpop.f32.mrb[0].mxu0
    %v2854 = vpop.f32.mrb[0].mxu0
    %v2855 = vadd.f32 %v2199, %v2854
    %v2856 = vpop.f32.mrb[0].mxu0
    %2857 = vmatprep.mubr.bf16.mxu0 0
    %2858 = vmatmul.mubr.bf16.gmra.mrb[0].mxu0 %v2379
    %v2859 = vpop.f32.mrb[0].mxu0
    %v2860 = vadd.f32 %v2199, %v2859
    %v2861 = vpop.f32.mrb[0].mxu0
    %v2862 = vpop.f32.mrb[0].mxu0
    %v2863 = vadd.f32 %v2199, %v2862
    %v2864 = vpop.f32.mrb[0].mxu0
    %2865 = vmatprep.mubr.bf16.mxu0 0
    %2866 = vmatmul.mubr.bf16.gmra.mrb[0].mxu0 %v2382
    %v2867 = vpop.f32.mrb[0].mxu0
    %v2868 = vadd.f32 %v2199, %v2867
    %v2869 = vpop.f32.mrb[0].mxu0
    %v2870 = vpop.f32.mrb[0].mxu0
    %v2871 = vadd.f32 %v2199, %v2870
    %v2872 = vpop.f32.mrb[0].mxu0
    %2873 = vmatprep.mubr.bf16.mxu0 0
    %2874 = vmatmul.mubr.bf16.gmra.mrb[0].mxu0 %v2385
    %v2875 = vpop.f32.mrb[0].mxu0
    %v2876 = vadd.f32 %v2199, %v2875
    %v2877 = vpop.f32.mrb[0].mxu0
    %v2878 = vpop.f32.mrb[0].mxu0
    %v2879 = vadd.f32 %v2199, %v2878
    %v2880 = vpop.f32.mrb[0].mxu0
    %2881 = vmatprep.mubr.bf16.mxu0 0
    %2882 = vmatmul.mubr.bf16.gmra.mrb[0].mxu0 %v2388
    %v2883 = vpop.f32.mrb[0].mxu0
    %v2884 = vadd.f32 %v2199, %v2883
    %v2885 = vpop.f32.mrb[0].mxu0
    %v2886 = vpop.f32.mrb[0].mxu0
    %v2887 = vadd.f32 %v2199, %v2886
    %v2888 = vpop.f32.mrb[0].mxu0
    %2889 = vmatprep.mubr.bf16.mxu0 0
    %2890 = vmatmul.mubr.bf16.gmra.mrb[0].mxu0 %v2391
    %v2891 = vpop.f32.mrb[0].mxu0
    %v2892 = vadd.f32 %v2199, %v2891
    %v2893 = vpop.f32.mrb[0].mxu0
    %v2894 = vpop.f32.mrb[0].mxu0
    %v2895 = vadd.f32 %v2199, %v2894
    %v2896 = vpop.f32.mrb[0].mxu0
    %2897 = vmatprep.mubr.bf16.mxu0 0
    %2898 = vmatmul.mubr.bf16.gmra.mrb[0].mxu0 %v2394
    %v2899 = vpop.f32.mrb[0].mxu0
    %v2900 = vadd.f32 %v2199, %v2899
    %v2901 = vpop.f32.mrb[0].mxu0
    %v2902 = vpop.f32.mrb[0].mxu0
    %v2903 = vadd.f32 %v2199, %v2902
    %v2904 = vpop.f32.mrb[0].mxu0
    %2905 = vmatprep.mubr.bf16.mxu0 0
    %2906 = vmatmul.mubr.bf16.gmra.mrb[0].mxu0 %v2397
    %v2907 = vpop.f32.mrb[0].mxu0
    %v2908 = vadd.f32 %v2199, %v2907
    %v2909 = vpop.f32.mrb[0].mxu0
    %v2910 = vpop.f32.mrb[0].mxu0
    %v2911 = vadd.f32 %v2199, %v2910
    %v2912 = vpop.f32.mrb[0].mxu0
    %2913 = vmatprep.mubr.bf16.mxu0 0
    %2914 = vmatmul.mubr.bf16.gmra.mrb[0].mxu0 %v2400
    %v2915 = vpop.f32.mrb[0].mxu0
    %v2916 = vadd.f32 %v2199, %v2915
    %v2917 = vpop.f32.mrb[0].mxu0
    %v2918 = vpop.f32.mrb[0].mxu0
    %v2919 = vadd.f32 %v2199, %v2918
    %v2920 = vpop.f32.mrb[0].mxu0
    %2921 = vmatprep.mubr.bf16.mxu0 0
    %2922 = vmatmul.mubr.bf16.gmra.mrb[0].mxu0 %v2403
    %v2923 = vpop.f32.mrb[0].mxu0
    %v2924 = vadd.f32 %v2199, %v2923
    %v2925 = vpop.f32.mrb[0].mxu0
    %v2926 = vpop.f32.mrb[0].mxu0
    %v2927 = vadd.f32 %v2199, %v2926
    %v2928 = vpop.f32.mrb[0].mxu0
    %2929 = vmatprep.mubr.bf16.mxu0 0
    %2930 = vmatmul.mubr.bf16.gmra.mrb[0].mxu0 %v2406
    %v2931 = vpop.f32.mrb[0].mxu0
    %v2932 = vadd.f32 %v2199, %v2931
    %v2933 = vpop.f32.mrb[0].mxu0
    %v2934 = vpop.f32.mrb[0].mxu0
    %v2935 = vadd.f32 %v2199, %v2934
    %v2936 = vpop.f32.mrb[0].mxu0
    %2937 = vmatprep.mubr.bf16.mxu0 0
    %2938 = vmatmul.mubr.bf16.gmra.mrb[0].mxu0 %v2409
    %v2939 = vpop.f32.mrb[0].mxu0
    %v2940 = vadd.f32 %v2199, %v2939
    %v2941 = vpop.f32.mrb[0].mxu0
    %v2942 = vpop.f32.mrb[0].mxu0
    %v2943 = vadd.f32 %v2199, %v2942
    %v2944 = vpop.f32.mrb[0].mxu0
    %2945 = vmatprep.mubr.bf16.mxu0 0
    %2946 = vmatmul.mubr.bf16.gmra.mrb[0].mxu0 %v2412
    %v2947 = vpop.f32.mrb[0].mxu0
    %v2948 = vadd.f32 %v2199, %v2947
    %v2949 = vpop.f32.mrb[0].mxu0
    %v2950 = vpop.f32.mrb[0].mxu0
    %v2951 = vadd.f32 %v2199, %v2950
    %v2952 = vpop.f32.mrb[0].mxu0
    %2953 = vmatprep.mubr.bf16.mxu0 0
    %2954 = vmatmul.mubr.bf16.gmra.mrb[0].mxu0 %v2415
    %v2955 = vpop.f32.mrb[0].mxu0
    %v2956 = vadd.f32 %v2199, %v2955
    %v2957 = vpop.f32.mrb[0].mxu0
    %v2958 = vpop.f32.mrb[0].mxu0
    %v2959 = vadd.f32 %v2199, %v2958
    %v2960 = vpop.f32.mrb[0].mxu0
    %2961 = vdwg.mxu0
    %v2962 = vmax.f32 %v2452, 0.0
    %v2963 = vmax.f32 %v2455, 0.0
    %v2964 = vmax.f32 %v2460, 0.0
    %v2965 = vmax.f32 %v2463, 0.0
    %v2966 = vmax.f32 %v2468, 0.0
    %v2967 = vmax.f32 %v2471, 0.0
    %v2968 = vmax.f32 %v2476, 0.0
    %v2969 = vmax.f32 %v2479, 0.0
    %v2970 = vmax.f32 %v2484, 0.0
    %v2971 = vmax.f32 %v2487, 0.0
    %v2972 = vmax.f32 %v2492, 0.0
    %v2973 = vmax.f32 %v2495, 0.0
    %v2974 = vmax.f32 %v2500, 0.0
    %v2975 = vmax.f32 %v2503, 0.0
    %v2976 = vmax.f32 %v2508, 0.0
    %v2977 = vmax.f32 %v2511, 0.0
    %v2978 = vmax.f32 %v2516, 0.0
    %v2979 = vmax.f32 %v2519, 0.0
    %v2980 = vmax.f32 %v2524, 0.0
    %v2981 = vmax.f32 %v2527, 0.0
    %v2982 = vmax.f32 %v2532, 0.0
    %v2983 = vmax.f32 %v2535, 0.0
    %v2984 = vmax.f32 %v2540, 0.0
    %v2985 = vmax.f32 %v2543, 0.0
    %v2986 = vmax.f32 %v2548, 0.0
    %v2987 = vmax.f32 %v2551, 0.0
    %v2988 = vmax.f32 %v2556, 0.0
    %v2989 = vmax.f32 %v2559, 0.0
    %v2990 = vmax.f32 %v2564, 0.0
    %v2991 = vmax.f32 %v2567, 0.0
    %v2992 = vmax.f32 %v2572, 0.0
    %v2993 = vmax.f32 %v2575, 0.0
    %v2994 = vmax.f32 %v2580, 0.0
    %v2995 = vmax.f32 %v2583, 0.0
    %v2996 = vmax.f32 %v2588, 0.0
    %v2997 = vmax.f32 %v2591, 0.0
    %v2998 = vmax.f32 %v2596, 0.0
    %v2999 = vmax.f32 %v2599, 0.0
    %v3000 = vmax.f32 %v2604, 0.0
    %v3001 = vmax.f32 %v2607, 0.0
    %v3002 = vmax.f32 %v2612, 0.0
    %v3003 = vmax.f32 %v2615, 0.0
    %v3004 = vmax.f32 %v2620, 0.0
    %v3005 = vmax.f32 %v2623, 0.0
    %v3006 = vmax.f32 %v2628, 0.0
    %v3007 = vmax.f32 %v2631, 0.0
    %v3008 = vmax.f32 %v2636, 0.0
    %v3009 = vmax.f32 %v2639, 0.0
    %v3010 = vmax.f32 %v2644, 0.0
    %v3011 = vmax.f32 %v2647, 0.0
    %v3012 = vmax.f32 %v2652, 0.0
    %v3013 = vmax.f32 %v2655, 0.0
    %v3014 = vmax.f32 %v2660, 0.0
    %v3015 = vmax.f32 %v2663, 0.0
    %v3016 = vmax.f32 %v2668, 0.0
    %v3017 = vmax.f32 %v2671, 0.0
    %v3018 = vmax.f32 %v2676, 0.0
    %v3019 = vmax.f32 %v2679, 0.0
    %v3020 = vmax.f32 %v2684, 0.0
    %v3021 = vmax.f32 %v2687, 0.0
    %v3022 = vmax.f32 %v2692, 0.0
    %v3023 = vmax.f32 %v2695, 0.0
    %v3024 = vmax.f32 %v2700, 0.0
    %v3025 = vmax.f32 %v2703, 0.0
    %v3026 = vmax.f32 %v2708, 0.0
    %v3027 = vmax.f32 %v2711, 0.0
    %v3028 = vmax.f32 %v2716, 0.0
    %v3029 = vmax.f32 %v2719, 0.0
    %v3030 = vmax.f32 %v2724, 0.0
    %v3031 = vmax.f32 %v2727, 0.0
    %v3032 = vmax.f32 %v2732, 0.0
    %v3033 = vmax.f32 %v2735, 0.0
    %v3034 = vmax.f32 %v2740, 0.0
    %v3035 = vmax.f32 %v2743, 0.0
    %v3036 = vmax.f32 %v2748, 0.0
    %v3037 = vmax.f32 %v2751, 0.0
    %v3038 = vmax.f32 %v2756, 0.0
    %v3039 = vmax.f32 %v2759, 0.0
    %v3040 = vmax.f32 %v2764, 0.0
    %v3041 = vmax.f32 %v2767, 0.0
    %v3042 = vmax.f32 %v2772, 0.0
    %v3043 = vmax.f32 %v2775, 0.0
    %v3044 = vmax.f32 %v2780, 0.0
    %v3045 = vmax.f32 %v2783, 0.0
    %v3046 = vmax.f32 %v2788, 0.0
    %v3047 = vmax.f32 %v2791, 0.0
    %v3048 = vmax.f32 %v2796, 0.0
    %v3049 = vmax.f32 %v2799, 0.0
    %v3050 = vmax.f32 %v2804, 0.0
    %v3051 = vmax.f32 %v2807, 0.0
    %v3052 = vmax.f32 %v2812, 0.0
    %v3053 = vmax.f32 %v2815, 0.0
    %v3054 = vmax.f32 %v2820, 0.0
    %v3055 = vmax.f32 %v2823, 0.0
    %v3056 = vmax.f32 %v2828, 0.0
    %v3057 = vmax.f32 %v2831, 0.0
    %v3058 = vmax.f32 %v2836, 0.0
    %v3059 = vmax.f32 %v2839, 0.0
    %v3060 = vmax.f32 %v2844, 0.0
    %v3061 = vmax.f32 %v2847, 0.0
    %v3062 = vmax.f32 %v2852, 0.0
    %v3063 = vmax.f32 %v2855, 0.0
    %v3064 = vmax.f32 %v2860, 0.0
    %v3065 = vmax.f32 %v2863, 0.0
    %v3066 = vmax.f32 %v2868, 0.0
    %v3067 = vmax.f32 %v2871, 0.0
    %v3068 = vmax.f32 %v2876, 0.0
    %v3069 = vmax.f32 %v2879, 0.0
    %v3070 = vmax.f32 %v2884, 0.0
    %v3071 = vmax.f32 %v2887, 0.0
    %v3072 = vmax.f32 %v2892, 0.0
    %v3073 = vmax.f32 %v2895, 0.0
    %v3074 = vmax.f32 %v2900, 0.0
    %v3075 = vmax.f32 %v2903, 0.0
    %v3076 = vmax.f32 %v2908, 0.0
    %v3077 = vmax.f32 %v2911, 0.0
    %v3078 = vmax.f32 %v2916, 0.0
    %v3079 = vmax.f32 %v2919, 0.0
    %v3080 = vmax.f32 %v2924, 0.0
    %v3081 = vmax.f32 %v2927, 0.0
    %v3082 = vmax.f32 %v2932, 0.0
    %v3083 = vmax.f32 %v2935, 0.0
    %v3084 = vmax.f32 %v2940, 0.0
    %v3085 = vmax.f32 %v2943, 0.0
    %v3086 = vmax.f32 %v2948, 0.0
    %v3087 = vmax.f32 %v2951, 0.0
    %v3088 = vmax.f32 %v2956, 0.0
    %v3089 = vmax.f32 %v2959, 0.0
    %v3090 = vpack.c.bf16 %v2963, %v2962
    %v3091 = vpack.c.bf16 %v2965, %v2964
    %v3092 = vpack.c.bf16 %v2967, %v2966
    %v3093 = vpack.c.bf16 %v2969, %v2968
    %v3094 = vpack.c.bf16 %v2971, %v2970
    %v3095 = vpack.c.bf16 %v2973, %v2972
    %v3096 = vpack.c.bf16 %v2975, %v2974
    %v3097 = vpack.c.bf16 %v2977, %v2976
    %v3098 = vpack.c.bf16 %v2979, %v2978
    %v3099 = vpack.c.bf16 %v2981, %v2980
    %v3100 = vpack.c.bf16 %v2983, %v2982
    %v3101 = vpack.c.bf16 %v2985, %v2984
    %v3102 = vpack.c.bf16 %v2987, %v2986
    %v3103 = vpack.c.bf16 %v2989, %v2988
    %v3104 = vpack.c.bf16 %v2991, %v2990
    %v3105 = vpack.c.bf16 %v2993, %v2992
    %v3106 = vpack.c.bf16 %v2995, %v2994
    %v3107 = vpack.c.bf16 %v2997, %v2996
    %v3108 = vpack.c.bf16 %v2999, %v2998
    %v3109 = vpack.c.bf16 %v3001, %v3000
    %v3110 = vpack.c.bf16 %v3003, %v3002
    %v3111 = vpack.c.bf16 %v3005, %v3004
    %v3112 = vpack.c.bf16 %v3007, %v3006
    %v3113 = vpack.c.bf16 %v3009, %v3008
    %v3114 = vpack.c.bf16 %v3011, %v3010
    %v3115 = vpack.c.bf16 %v3013, %v3012
    %v3116 = vpack.c.bf16 %v3015, %v3014
    %v3117 = vpack.c.bf16 %v3017, %v3016
    %v3118 = vpack.c.bf16 %v3019, %v3018
    %v3119 = vpack.c.bf16 %v3021, %v3020
    %v3120 = vpack.c.bf16 %v3023, %v3022
    %v3121 = vpack.c.bf16 %v3025, %v3024
    %v3122 = vpack.c.bf16 %v3027, %v3026
    %v3123 = vpack.c.bf16 %v3029, %v3028
    %v3124 = vpack.c.bf16 %v3031, %v3030
    %v3125 = vpack.c.bf16 %v3033, %v3032
    %v3126 = vpack.c.bf16 %v3035, %v3034
    %v3127 = vpack.c.bf16 %v3037, %v3036
    %v3128 = vpack.c.bf16 %v3039, %v3038
    %v3129 = vpack.c.bf16 %v3041, %v3040
    %v3130 = vpack.c.bf16 %v3043, %v3042
    %v3131 = vpack.c.bf16 %v3045, %v3044
    %v3132 = vpack.c.bf16 %v3047, %v3046
    %v3133 = vpack.c.bf16 %v3049, %v3048
    %v3134 = vpack.c.bf16 %v3051, %v3050
    %v3135 = vpack.c.bf16 %v3053, %v3052
    %v3136 = vpack.c.bf16 %v3055, %v3054
    %v3137 = vpack.c.bf16 %v3057, %v3056
    %v3138 = vpack.c.bf16 %v3059, %v3058
    %v3139 = vpack.c.bf16 %v3061, %v3060
    %v3140 = vpack.c.bf16 %v3063, %v3062
    %v3141 = vpack.c.bf16 %v3065, %v3064
    %v3142 = vpack.c.bf16 %v3067, %v3066
    %v3143 = vpack.c.bf16 %v3069, %v3068
    %v3144 = vpack.c.bf16 %v3071, %v3070
    %v3145 = vpack.c.bf16 %v3073, %v3072
    %v3146 = vpack.c.bf16 %v3075, %v3074
    %v3147 = vpack.c.bf16 %v3077, %v3076
    %v3148 = vpack.c.bf16 %v3079, %v3078
    %v3149 = vpack.c.bf16 %v3081, %v3080
    %v3150 = vpack.c.bf16 %v3083, %v3082
    %v3151 = vpack.c.bf16 %v3085, %v3084
    %v3152 = vpack.c.bf16 %v3087, %v3086
    %v3153 = vpack.c.bf16 %v3089, %v3088
    %v3154 = vld [vmem:[#allocation8] sm:$0xf]
    %v3155 = vld [vmem:[#allocation8 + $0x4] sm:$0xf]
    %v3156 = vld [vmem:[#allocation8 + $0x8] sm:$0xf]
    %v3157 = vld [vmem:[#allocation8 + $0xc] sm:$0xf]
    %v3158 = vld [vmem:[#allocation8 + $0x10] sm:$0xf]
    %v3159 = vld [vmem:[#allocation8 + $0x14] sm:$0xf]
    %v3160 = vld [vmem:[#allocation8 + $0x18] sm:$0xf]
    %v3161 = vld [vmem:[#allocation8 + $0x1c] sm:$0xf]
    %v3162 = vld [vmem:[%s8] sm:$0x1]
    %v3164 = vlaneseq
    %v3165 = vshrl.u32 %v3164, 7
    %v3166 = vsub.s32 0, %v3165
    %v3167 = vrot.slane %v3162, %v3166
    %v3177 = vunpack.c.l.b16 %v3154
    %v3178 = vunpack.c.l.b16 %v3155
    %v3179 = vunpack.c.l.b16 %v3156
    %v3180 = vunpack.c.l.b16 %v3157
    %v3181 = vunpack.c.l.b16 %v3158
    %v3182 = vunpack.c.l.b16 %v3159
    %v3183 = vunpack.c.l.b16 %v3160
    %v3184 = vunpack.c.l.b16 %v3161
    %v3185 = vpack.c.b16 %v3178, %v3177
    %v3186 = vpack.c.b16 %v3180, %v3179
    %v3187 = vpack.c.b16 %v3182, %v3181
    %v3188 = vpack.c.b16 %v3184, %v3183
    %v3194 = vsel %vm1256, %v3090, 0
    %v3197 = vsel %vm1256, %v3091, 0
    %v3200 = vsel %vm1256, %v3092, 0
    %v3203 = vsel %vm1256, %v3093, 0
    %v3206 = vsel %vm1256, %v3094, 0
    %v3209 = vsel %vm1256, %v3095, 0
    %v3212 = vsel %vm1256, %v3096, 0
    %v3215 = vsel %vm1256, %v3097, 0
    %v3218 = vsel %vm1256, %v3098, 0
    %v3221 = vsel %vm1256, %v3099, 0
    %v3224 = vsel %vm1256, %v3100, 0
    %v3227 = vsel %vm1256, %v3101, 0
    %v3230 = vsel %vm1256, %v3102, 0
    %v3233 = vsel %vm1256, %v3103, 0
    %v3236 = vsel %vm1256, %v3104, 0
    %v3239 = vsel %vm1256, %v3105, 0
    %v3242 = vsel %vm1256, %v3106, 0
    %v3245 = vsel %vm1256, %v3107, 0
    %v3248 = vsel %vm1256, %v3108, 0
    %v3251 = vsel %vm1256, %v3109, 0
    %v3254 = vsel %vm1256, %v3110, 0
    %v3257 = vsel %vm1256, %v3111, 0
    %v3260 = vsel %vm1256, %v3112, 0
    %v3263 = vsel %vm1256, %v3113, 0
    %v3266 = vsel %vm1256, %v3114, 0
    %v3269 = vsel %vm1256, %v3115, 0
    %v3272 = vsel %vm1256, %v3116, 0
    %v3275 = vsel %vm1256, %v3117, 0
    %v3278 = vsel %vm1256, %v3118, 0
    %v3281 = vsel %vm1256, %v3119, 0
    %v3284 = vsel %vm1256, %v3120, 0
    %v3287 = vsel %vm1256, %v3121, 0
    %v3290 = vsel %vm1256, %v3122, 0
    %v3293 = vsel %vm1256, %v3123, 0
    %v3296 = vsel %vm1256, %v3124, 0
    %v3299 = vsel %vm1256, %v3125, 0
    %v3302 = vsel %vm1256, %v3126, 0
    %v3305 = vsel %vm1256, %v3127, 0
    %v3308 = vsel %vm1256, %v3128, 0
    %v3311 = vsel %vm1256, %v3129, 0
    %v3314 = vsel %vm1256, %v3130, 0
    %v3317 = vsel %vm1256, %v3131, 0
    %v3320 = vsel %vm1256, %v3132, 0
    %v3323 = vsel %vm1256, %v3133, 0
    %v3326 = vsel %vm1256, %v3134, 0
    %v3329 = vsel %vm1256, %v3135, 0
    %v3332 = vsel %vm1256, %v3136, 0
    %v3335 = vsel %vm1256, %v3137, 0
    %v3338 = vsel %vm1256, %v3138, 0
    %v3341 = vsel %vm1256, %v3139, 0
    %v3344 = vsel %vm1256, %v3140, 0
    %v3347 = vsel %vm1256, %v3141, 0
    %v3350 = vsel %vm1256, %v3142, 0
    %v3353 = vsel %vm1256, %v3143, 0
    %v3356 = vsel %vm1256, %v3144, 0
    %v3359 = vsel %vm1256, %v3145, 0
    %v3362 = vsel %vm1256, %v3146, 0
    %v3365 = vsel %vm1256, %v3147, 0
    %v3368 = vsel %vm1256, %v3148, 0
    %v3371 = vsel %vm1256, %v3149, 0
    %v3374 = vsel %vm1256, %v3150, 0
    %v3377 = vsel %vm1256, %v3151, 0
    %v3380 = vsel %vm1256, %v3152, 0
    %v3383 = vsel %vm1256, %v3153, 0
    %3385 = vmatprep.subr.bf16.mxu0 0
    %3386 = vmatpush1.bf16.msra.mxu0 %v3185
    %3387 = vmatprep.subr.bf16.mxu0 0
    %3388 = vmatpush1.bf16.msra.mxu0 %v3186
    %3389 = vmatprep.subr.bf16.mxu0 0
    %3390 = vmatpush1.bf16.msra.mxu0 %v3187
    %3391 = vmatprep.subr.bf16.mxu0 0
    %3392 = vmatpush1.bf16.msra.mxu0 %v3188
    %3393 = vmatprep.subr.bf16.mxu0 0
    %3394 = vmatpush1.bf16.msra.mxu0 0
    %3395 = vmatprep.subr.bf16.mxu0 0
    %3396 = vmatpush1.bf16.msra.mxu0 0
    %3397 = vmatprep.subr.bf16.mxu0 0
    %3398 = vmatpush1.bf16.msra.mxu0 0
    %3399 = vmatprep.subr.bf16.mxu0 0
    %3400 = vmatpush1.bf16.msra.mxu0 0
    %3401 = vmatprep.subr.bf16.mxu0 0
    %3402 = vmatpush1.bf16.msra.mxu0 0
    %3403 = vmatprep.subr.bf16.mxu0 0
    %3404 = vmatpush1.bf16.msra.mxu0 0
    %3405 = vmatprep.subr.bf16.mxu0 0
    %3406 = vmatpush1.bf16.msra.mxu0 0
    %3407 = vmatprep.subr.bf16.mxu0 0
    %3408 = vmatpush1.bf16.msra.mxu0 0
    %3409 = vmatprep.subr.bf16.mxu0 0
    %3410 = vmatpush1.bf16.msra.mxu0 0
    %3411 = vmatprep.subr.bf16.mxu0 0
    %3412 = vmatpush1.bf16.msra.mxu0 0
    %3413 = vmatprep.subr.bf16.mxu0 0
    %3414 = vmatpush1.bf16.msra.mxu0 0
    %3415 = vmatprep.subr.bf16.mxu0 0
    %3416 = vmatpush1.bf16.msra.mxu0 0
    %3417 = vmatprep.mubr.bf16.mxu0 0
    %3418 = vmatmul.mubr.bf16.gmra.mrb[0].mxu0 %v3194
    %v3419 = vpop.f32.mrb[0].mxu0
    %v3420 = vadd.f32 %v3167, %v3419
    %v3421 = vpop.f32.mrb[0].mxu0
    %v3422 = vpop.f32.mrb[0].mxu0
    %v3423 = vadd.f32 %v3167, %v3422
    %v3424 = vpop.f32.mrb[0].mxu0
    %3425 = vmatprep.mubr.bf16.mxu0 0
    %3426 = vmatmul.mubr.bf16.gmra.mrb[0].mxu0 %v3197
    %v3427 = vpop.f32.mrb[0].mxu0
    %v3428 = vadd.f32 %v3167, %v3427
    %v3429 = vpop.f32.mrb[0].mxu0
    %v3430 = vpop.f32.mrb[0].mxu0
    %v3431 = vadd.f32 %v3167, %v3430
    %v3432 = vpop.f32.mrb[0].mxu0
    %3433 = vmatprep.mubr.bf16.mxu0 0
    %3434 = vmatmul.mubr.bf16.gmra.mrb[0].mxu0 %v3200
    %v3435 = vpop.f32.mrb[0].mxu0
    %v3436 = vadd.f32 %v3167, %v3435
    %v3437 = vpop.f32.mrb[0].mxu0
    %v3438 = vpop.f32.mrb[0].mxu0
    %v3439 = vadd.f32 %v3167, %v3438
    %v3440 = vpop.f32.mrb[0].mxu0
    %3441 = vmatprep.mubr.bf16.mxu0 0
    %3442 = vmatmul.mubr.bf16.gmra.mrb[0].mxu0 %v3203
    %v3443 = vpop.f32.mrb[0].mxu0
    %v3444 = vadd.f32 %v3167, %v3443
    %v3445 = vpop.f32.mrb[0].mxu0
    %v3446 = vpop.f32.mrb[0].mxu0
    %v3447 = vadd.f32 %v3167, %v3446
    %v3448 = vpop.f32.mrb[0].mxu0
    %3449 = vmatprep.mubr.bf16.mxu0 0
    %3450 = vmatmul.mubr.bf16.gmra.mrb[0].mxu0 %v3206
    %v3451 = vpop.f32.mrb[0].mxu0
    %v3452 = vadd.f32 %v3167, %v3451
    %v3453 = vpop.f32.mrb[0].mxu0
    %v3454 = vpop.f32.mrb[0].mxu0
    %v3455 = vadd.f32 %v3167, %v3454
    %v3456 = vpop.f32.mrb[0].mxu0
    %3457 = vmatprep.mubr.bf16.mxu0 0
    %3458 = vmatmul.mubr.bf16.gmra.mrb[0].mxu0 %v3209
    %v3459 = vpop.f32.mrb[0].mxu0
    %v3460 = vadd.f32 %v3167, %v3459
    %v3461 = vpop.f32.mrb[0].mxu0
    %v3462 = vpop.f32.mrb[0].mxu0
    %v3463 = vadd.f32 %v3167, %v3462
    %v3464 = vpop.f32.mrb[0].mxu0
    %3465 = vmatprep.mubr.bf16.mxu0 0
    %3466 = vmatmul.mubr.bf16.gmra.mrb[0].mxu0 %v3212
    %v3467 = vpop.f32.mrb[0].mxu0
    %v3468 = vadd.f32 %v3167, %v3467
    %v3469 = vpop.f32.mrb[0].mxu0
    %v3470 = vpop.f32.mrb[0].mxu0
    %v3471 = vadd.f32 %v3167, %v3470
    %v3472 = vpop.f32.mrb[0].mxu0
    %3473 = vmatprep.mubr.bf16.mxu0 0
    %3474 = vmatmul.mubr.bf16.gmra.mrb[0].mxu0 %v3215
    %v3475 = vpop.f32.mrb[0].mxu0
    %v3476 = vadd.f32 %v3167, %v3475
    %v3477 = vpop.f32.mrb[0].mxu0
    %v3478 = vpop.f32.mrb[0].mxu0
    %v3479 = vadd.f32 %v3167, %v3478
    %v3480 = vpop.f32.mrb[0].mxu0
    %3481 = vmatprep.mubr.bf16.mxu0 0
    %3482 = vmatmul.mubr.bf16.gmra.mrb[0].mxu0 %v3218
    %v3483 = vpop.f32.mrb[0].mxu0
    %v3484 = vadd.f32 %v3167, %v3483
    %v3485 = vpop.f32.mrb[0].mxu0
    %v3486 = vpop.f32.mrb[0].mxu0
    %v3487 = vadd.f32 %v3167, %v3486
    %v3488 = vpop.f32.mrb[0].mxu0
    %3489 = vmatprep.mubr.bf16.mxu0 0
    %3490 = vmatmul.mubr.bf16.gmra.mrb[0].mxu0 %v3221
    %v3491 = vpop.f32.mrb[0].mxu0
    %v3492 = vadd.f32 %v3167, %v3491
    %v3493 = vpop.f32.mrb[0].mxu0
    %v3494 = vpop.f32.mrb[0].mxu0
    %v3495 = vadd.f32 %v3167, %v3494
    %v3496 = vpop.f32.mrb[0].mxu0
    %3497 = vmatprep.mubr.bf16.mxu0 0
    %3498 = vmatmul.mubr.bf16.gmra.mrb[0].mxu0 %v3224
    %v3499 = vpop.f32.mrb[0].mxu0
    %v3500 = vadd.f32 %v3167, %v3499
    %v3501 = vpop.f32.mrb[0].mxu0
    %v3502 = vpop.f32.mrb[0].mxu0
    %v3503 = vadd.f32 %v3167, %v3502
    %v3504 = vpop.f32.mrb[0].mxu0
    %3505 = vmatprep.mubr.bf16.mxu0 0
    %3506 = vmatmul.mubr.bf16.gmra.mrb[0].mxu0 %v3227
    %v3507 = vpop.f32.mrb[0].mxu0
    %v3508 = vadd.f32 %v3167, %v3507
    %v3509 = vpop.f32.mrb[0].mxu0
    %v3510 = vpop.f32.mrb[0].mxu0
    %v3511 = vadd.f32 %v3167, %v3510
    %v3512 = vpop.f32.mrb[0].mxu0
    %3513 = vmatprep.mubr.bf16.mxu0 0
    %3514 = vmatmul.mubr.bf16.gmra.mrb[0].mxu0 %v3230
    %v3515 = vpop.f32.mrb[0].mxu0
    %v3516 = vadd.f32 %v3167, %v3515
    %v3517 = vpop.f32.mrb[0].mxu0
    %v3518 = vpop.f32.mrb[0].mxu0
    %v3519 = vadd.f32 %v3167, %v3518
    %v3520 = vpop.f32.mrb[0].mxu0
    %3521 = vmatprep.mubr.bf16.mxu0 0
    %3522 = vmatmul.mubr.bf16.gmra.mrb[0].mxu0 %v3233
    %v3523 = vpop.f32.mrb[0].mxu0
    %v3524 = vadd.f32 %v3167, %v3523
    %v3525 = vpop.f32.mrb[0].mxu0
    %v3526 = vpop.f32.mrb[0].mxu0
    %v3527 = vadd.f32 %v3167, %v3526
    %v3528 = vpop.f32.mrb[0].mxu0
    %3529 = vmatprep.mubr.bf16.mxu0 0
    %3530 = vmatmul.mubr.bf16.gmra.mrb[0].mxu0 %v3236
    %v3531 = vpop.f32.mrb[0].mxu0
    %v3532 = vadd.f32 %v3167, %v3531
    %v3533 = vpop.f32.mrb[0].mxu0
    %v3534 = vpop.f32.mrb[0].mxu0
    %v3535 = vadd.f32 %v3167, %v3534
    %v3536 = vpop.f32.mrb[0].mxu0
    %3537 = vmatprep.mubr.bf16.mxu0 0
    %3538 = vmatmul.mubr.bf16.gmra.mrb[0].mxu0 %v3239
    %v3539 = vpop.f32.mrb[0].mxu0
    %v3540 = vadd.f32 %v3167, %v3539
    %v3541 = vpop.f32.mrb[0].mxu0
    %v3542 = vpop.f32.mrb[0].mxu0
    %v3543 = vadd.f32 %v3167, %v3542
    %v3544 = vpop.f32.mrb[0].mxu0
    %3545 = vmatprep.mubr.bf16.mxu0 0
    %3546 = vmatmul.mubr.bf16.gmra.mrb[0].mxu0 %v3242
    %v3547 = vpop.f32.mrb[0].mxu0
    %v3548 = vadd.f32 %v3167, %v3547
    %v3549 = vpop.f32.mrb[0].mxu0
    %v3550 = vpop.f32.mrb[0].mxu0
    %v3551 = vadd.f32 %v3167, %v3550
    %v3552 = vpop.f32.mrb[0].mxu0
    %3553 = vmatprep.mubr.bf16.mxu0 0
    %3554 = vmatmul.mubr.bf16.gmra.mrb[0].mxu0 %v3245
    %v3555 = vpop.f32.mrb[0].mxu0
    %v3556 = vadd.f32 %v3167, %v3555
    %v3557 = vpop.f32.mrb[0].mxu0
    %v3558 = vpop.f32.mrb[0].mxu0
    %v3559 = vadd.f32 %v3167, %v3558
    %v3560 = vpop.f32.mrb[0].mxu0
    %3561 = vmatprep.mubr.bf16.mxu0 0
    %3562 = vmatmul.mubr.bf16.gmra.mrb[0].mxu0 %v3248
    %v3563 = vpop.f32.mrb[0].mxu0
    %v3564 = vadd.f32 %v3167, %v3563
    %v3565 = vpop.f32.mrb[0].mxu0
    %v3566 = vpop.f32.mrb[0].mxu0
    %v3567 = vadd.f32 %v3167, %v3566
    %v3568 = vpop.f32.mrb[0].mxu0
    %3569 = vmatprep.mubr.bf16.mxu0 0
    %3570 = vmatmul.mubr.bf16.gmra.mrb[0].mxu0 %v3251
    %v3571 = vpop.f32.mrb[0].mxu0
    %v3572 = vadd.f32 %v3167, %v3571
    %v3573 = vpop.f32.mrb[0].mxu0
    %v3574 = vpop.f32.mrb[0].mxu0
    %v3575 = vadd.f32 %v3167, %v3574
    %v3576 = vpop.f32.mrb[0].mxu0
    %3577 = vmatprep.mubr.bf16.mxu0 0
    %3578 = vmatmul.mubr.bf16.gmra.mrb[0].mxu0 %v3254
    %v3579 = vpop.f32.mrb[0].mxu0
    %v3580 = vadd.f32 %v3167, %v3579
    %v3581 = vpop.f32.mrb[0].mxu0
    %v3582 = vpop.f32.mrb[0].mxu0
    %v3583 = vadd.f32 %v3167, %v3582
    %v3584 = vpop.f32.mrb[0].mxu0
    %3585 = vmatprep.mubr.bf16.mxu0 0
    %3586 = vmatmul.mubr.bf16.gmra.mrb[0].mxu0 %v3257
    %v3587 = vpop.f32.mrb[0].mxu0
    %v3588 = vadd.f32 %v3167, %v3587
    %v3589 = vpop.f32.mrb[0].mxu0
    %v3590 = vpop.f32.mrb[0].mxu0
    %v3591 = vadd.f32 %v3167, %v3590
    %v3592 = vpop.f32.mrb[0].mxu0
    %3593 = vmatprep.mubr.bf16.mxu0 0
    %3594 = vmatmul.mubr.bf16.gmra.mrb[0].mxu0 %v3260
    %v3595 = vpop.f32.mrb[0].mxu0
    %v3596 = vadd.f32 %v3167, %v3595
    %v3597 = vpop.f32.mrb[0].mxu0
    %v3598 = vpop.f32.mrb[0].mxu0
    %v3599 = vadd.f32 %v3167, %v3598
    %v3600 = vpop.f32.mrb[0].mxu0
    %3601 = vmatprep.mubr.bf16.mxu0 0
    %3602 = vmatmul.mubr.bf16.gmra.mrb[0].mxu0 %v3263
    %v3603 = vpop.f32.mrb[0].mxu0
    %v3604 = vadd.f32 %v3167, %v3603
    %v3605 = vpop.f32.mrb[0].mxu0
    %v3606 = vpop.f32.mrb[0].mxu0
    %v3607 = vadd.f32 %v3167, %v3606
    %v3608 = vpop.f32.mrb[0].mxu0
    %3609 = vmatprep.mubr.bf16.mxu0 0
    %3610 = vmatmul.mubr.bf16.gmra.mrb[0].mxu0 %v3266
    %v3611 = vpop.f32.mrb[0].mxu0
    %v3612 = vadd.f32 %v3167, %v3611
    %v3613 = vpop.f32.mrb[0].mxu0
    %v3614 = vpop.f32.mrb[0].mxu0
    %v3615 = vadd.f32 %v3167, %v3614
    %v3616 = vpop.f32.mrb[0].mxu0
    %3617 = vmatprep.mubr.bf16.mxu0 0
    %3618 = vmatmul.mubr.bf16.gmra.mrb[0].mxu0 %v3269
    %v3619 = vpop.f32.mrb[0].mxu0
    %v3620 = vadd.f32 %v3167, %v3619
    %v3621 = vpop.f32.mrb[0].mxu0
    %v3622 = vpop.f32.mrb[0].mxu0
    %v3623 = vadd.f32 %v3167, %v3622
    %v3624 = vpop.f32.mrb[0].mxu0
    %3625 = vmatprep.mubr.bf16.mxu0 0
    %3626 = vmatmul.mubr.bf16.gmra.mrb[0].mxu0 %v3272
    %v3627 = vpop.f32.mrb[0].mxu0
    %v3628 = vadd.f32 %v3167, %v3627
    %v3629 = vpop.f32.mrb[0].mxu0
    %v3630 = vpop.f32.mrb[0].mxu0
    %v3631 = vadd.f32 %v3167, %v3630
    %v3632 = vpop.f32.mrb[0].mxu0
    %3633 = vmatprep.mubr.bf16.mxu0 0
    %3634 = vmatmul.mubr.bf16.gmra.mrb[0].mxu0 %v3275
    %v3635 = vpop.f32.mrb[0].mxu0
    %v3636 = vadd.f32 %v3167, %v3635
    %v3637 = vpop.f32.mrb[0].mxu0
    %v3638 = vpop.f32.mrb[0].mxu0
    %v3639 = vadd.f32 %v3167, %v3638
    %v3640 = vpop.f32.mrb[0].mxu0
    %3641 = vmatprep.mubr.bf16.mxu0 0
    %3642 = vmatmul.mubr.bf16.gmra.mrb[0].mxu0 %v3278
    %v3643 = vpop.f32.mrb[0].mxu0
    %v3644 = vadd.f32 %v3167, %v3643
    %v3645 = vpop.f32.mrb[0].mxu0
    %v3646 = vpop.f32.mrb[0].mxu0
    %v3647 = vadd.f32 %v3167, %v3646
    %v3648 = vpop.f32.mrb[0].mxu0
    %3649 = vmatprep.mubr.bf16.mxu0 0
    %3650 = vmatmul.mubr.bf16.gmra.mrb[0].mxu0 %v3281
    %v3651 = vpop.f32.mrb[0].mxu0
    %v3652 = vadd.f32 %v3167, %v3651
    %v3653 = vpop.f32.mrb[0].mxu0
    %v3654 = vpop.f32.mrb[0].mxu0
    %v3655 = vadd.f32 %v3167, %v3654
    %v3656 = vpop.f32.mrb[0].mxu0
    %3657 = vmatprep.mubr.bf16.mxu0 0
    %3658 = vmatmul.mubr.bf16.gmra.mrb[0].mxu0 %v3284
    %v3659 = vpop.f32.mrb[0].mxu0
    %v3660 = vadd.f32 %v3167, %v3659
    %v3661 = vpop.f32.mrb[0].mxu0
    %v3662 = vpop.f32.mrb[0].mxu0
    %v3663 = vadd.f32 %v3167, %v3662
    %v3664 = vpop.f32.mrb[0].mxu0
    %3665 = vmatprep.mubr.bf16.mxu0 0
    %3666 = vmatmul.mubr.bf16.gmra.mrb[0].mxu0 %v3287
    %v3667 = vpop.f32.mrb[0].mxu0
    %v3668 = vadd.f32 %v3167, %v3667
    %v3669 = vpop.f32.mrb[0].mxu0
    %v3670 = vpop.f32.mrb[0].mxu0
    %v3671 = vadd.f32 %v3167, %v3670
    %v3672 = vpop.f32.mrb[0].mxu0
    %3673 = vmatprep.mubr.bf16.mxu0 0
    %3674 = vmatmul.mubr.bf16.gmra.mrb[0].mxu0 %v3290
    %v3675 = vpop.f32.mrb[0].mxu0
    %v3676 = vadd.f32 %v3167, %v3675
    %v3677 = vpop.f32.mrb[0].mxu0
    %v3678 = vpop.f32.mrb[0].mxu0
    %v3679 = vadd.f32 %v3167, %v3678
    %v3680 = vpop.f32.mrb[0].mxu0
    %3681 = vmatprep.mubr.bf16.mxu0 0
    %3682 = vmatmul.mubr.bf16.gmra.mrb[0].mxu0 %v3293
    %v3683 = vpop.f32.mrb[0].mxu0
    %v3684 = vadd.f32 %v3167, %v3683
    %v3685 = vpop.f32.mrb[0].mxu0
    %v3686 = vpop.f32.mrb[0].mxu0
    %v3687 = vadd.f32 %v3167, %v3686
    %v3688 = vpop.f32.mrb[0].mxu0
    %3689 = vmatprep.mubr.bf16.mxu0 0
    %3690 = vmatmul.mubr.bf16.gmra.mrb[0].mxu0 %v3296
    %v3691 = vpop.f32.mrb[0].mxu0
    %v3692 = vadd.f32 %v3167, %v3691
    %v3693 = vpop.f32.mrb[0].mxu0
    %v3694 = vpop.f32.mrb[0].mxu0
    %v3695 = vadd.f32 %v3167, %v3694
    %v3696 = vpop.f32.mrb[0].mxu0
    %3697 = vmatprep.mubr.bf16.mxu0 0
    %3698 = vmatmul.mubr.bf16.gmra.mrb[0].mxu0 %v3299
    %v3699 = vpop.f32.mrb[0].mxu0
    %v3700 = vadd.f32 %v3167, %v3699
    %v3701 = vpop.f32.mrb[0].mxu0
    %v3702 = vpop.f32.mrb[0].mxu0
    %v3703 = vadd.f32 %v3167, %v3702
    %v3704 = vpop.f32.mrb[0].mxu0
    %3705 = vmatprep.mubr.bf16.mxu0 0
    %3706 = vmatmul.mubr.bf16.gmra.mrb[0].mxu0 %v3302
    %v3707 = vpop.f32.mrb[0].mxu0
    %v3708 = vadd.f32 %v3167, %v3707
    %v3709 = vpop.f32.mrb[0].mxu0
    %v3710 = vpop.f32.mrb[0].mxu0
    %v3711 = vadd.f32 %v3167, %v3710
    %v3712 = vpop.f32.mrb[0].mxu0
    %3713 = vmatprep.mubr.bf16.mxu0 0
    %3714 = vmatmul.mubr.bf16.gmra.mrb[0].mxu0 %v3305
    %v3715 = vpop.f32.mrb[0].mxu0
    %v3716 = vadd.f32 %v3167, %v3715
    %v3717 = vpop.f32.mrb[0].mxu0
    %v3718 = vpop.f32.mrb[0].mxu0
    %v3719 = vadd.f32 %v3167, %v3718
    %v3720 = vpop.f32.mrb[0].mxu0
    %3721 = vmatprep.mubr.bf16.mxu0 0
    %3722 = vmatmul.mubr.bf16.gmra.mrb[0].mxu0 %v3308
    %v3723 = vpop.f32.mrb[0].mxu0
    %v3724 = vadd.f32 %v3167, %v3723
    %v3725 = vpop.f32.mrb[0].mxu0
    %v3726 = vpop.f32.mrb[0].mxu0
    %v3727 = vadd.f32 %v3167, %v3726
    %v3728 = vpop.f32.mrb[0].mxu0
    %3729 = vmatprep.mubr.bf16.mxu0 0
    %3730 = vmatmul.mubr.bf16.gmra.mrb[0].mxu0 %v3311
    %v3731 = vpop.f32.mrb[0].mxu0
    %v3732 = vadd.f32 %v3167, %v3731
    %v3733 = vpop.f32.mrb[0].mxu0
    %v3734 = vpop.f32.mrb[0].mxu0
    %v3735 = vadd.f32 %v3167, %v3734
    %v3736 = vpop.f32.mrb[0].mxu0
    %3737 = vmatprep.mubr.bf16.mxu0 0
    %3738 = vmatmul.mubr.bf16.gmra.mrb[0].mxu0 %v3314
    %v3739 = vpop.f32.mrb[0].mxu0
    %v3740 = vadd.f32 %v3167, %v3739
    %v3741 = vpop.f32.mrb[0].mxu0
    %v3742 = vpop.f32.mrb[0].mxu0
    %v3743 = vadd.f32 %v3167, %v3742
    %v3744 = vpop.f32.mrb[0].mxu0
    %3745 = vmatprep.mubr.bf16.mxu0 0
    %3746 = vmatmul.mubr.bf16.gmra.mrb[0].mxu0 %v3317
    %v3747 = vpop.f32.mrb[0].mxu0
    %v3748 = vadd.f32 %v3167, %v3747
    %v3749 = vpop.f32.mrb[0].mxu0
    %v3750 = vpop.f32.mrb[0].mxu0
    %v3751 = vadd.f32 %v3167, %v3750
    %v3752 = vpop.f32.mrb[0].mxu0
    %3753 = vmatprep.mubr.bf16.mxu0 0
    %3754 = vmatmul.mubr.bf16.gmra.mrb[0].mxu0 %v3320
    %v3755 = vpop.f32.mrb[0].mxu0
    %v3756 = vadd.f32 %v3167, %v3755
    %v3757 = vpop.f32.mrb[0].mxu0
    %v3758 = vpop.f32.mrb[0].mxu0
    %v3759 = vadd.f32 %v3167, %v3758
    %v3760 = vpop.f32.mrb[0].mxu0
    %3761 = vmatprep.mubr.bf16.mxu0 0
    %3762 = vmatmul.mubr.bf16.gmra.mrb[0].mxu0 %v3323
    %v3763 = vpop.f32.mrb[0].mxu0
    %v3764 = vadd.f32 %v3167, %v3763
    %v3765 = vpop.f32.mrb[0].mxu0
    %v3766 = vpop.f32.mrb[0].mxu0
    %v3767 = vadd.f32 %v3167, %v3766
    %v3768 = vpop.f32.mrb[0].mxu0
    %3769 = vmatprep.mubr.bf16.mxu0 0
    %3770 = vmatmul.mubr.bf16.gmra.mrb[0].mxu0 %v3326
    %v3771 = vpop.f32.mrb[0].mxu0
    %v3772 = vadd.f32 %v3167, %v3771
    %v3773 = vpop.f32.mrb[0].mxu0
    %v3774 = vpop.f32.mrb[0].mxu0
    %v3775 = vadd.f32 %v3167, %v3774
    %v3776 = vpop.f32.mrb[0].mxu0
    %3777 = vmatprep.mubr.bf16.mxu0 0
    %3778 = vmatmul.mubr.bf16.gmra.mrb[0].mxu0 %v3329
    %v3779 = vpop.f32.mrb[0].mxu0
    %v3780 = vadd.f32 %v3167, %v3779
    %v3781 = vpop.f32.mrb[0].mxu0
    %v3782 = vpop.f32.mrb[0].mxu0
    %v3783 = vadd.f32 %v3167, %v3782
    %v3784 = vpop.f32.mrb[0].mxu0
    %3785 = vmatprep.mubr.bf16.mxu0 0
    %3786 = vmatmul.mubr.bf16.gmra.mrb[0].mxu0 %v3332
    %v3787 = vpop.f32.mrb[0].mxu0
    %v3788 = vadd.f32 %v3167, %v3787
    %v3789 = vpop.f32.mrb[0].mxu0
    %v3790 = vpop.f32.mrb[0].mxu0
    %v3791 = vadd.f32 %v3167, %v3790
    %v3792 = vpop.f32.mrb[0].mxu0
    %3793 = vmatprep.mubr.bf16.mxu0 0
    %3794 = vmatmul.mubr.bf16.gmra.mrb[0].mxu0 %v3335
    %v3795 = vpop.f32.mrb[0].mxu0
    %v3796 = vadd.f32 %v3167, %v3795
    %v3797 = vpop.f32.mrb[0].mxu0
    %v3798 = vpop.f32.mrb[0].mxu0
    %v3799 = vadd.f32 %v3167, %v3798
    %v3800 = vpop.f32.mrb[0].mxu0
    %3801 = vmatprep.mubr.bf16.mxu0 0
    %3802 = vmatmul.mubr.bf16.gmra.mrb[0].mxu0 %v3338
    %v3803 = vpop.f32.mrb[0].mxu0
    %v3804 = vadd.f32 %v3167, %v3803
    %v3805 = vpop.f32.mrb[0].mxu0
    %v3806 = vpop.f32.mrb[0].mxu0
    %v3807 = vadd.f32 %v3167, %v3806
    %v3808 = vpop.f32.mrb[0].mxu0
    %3809 = vmatprep.mubr.bf16.mxu0 0
    %3810 = vmatmul.mubr.bf16.gmra.mrb[0].mxu0 %v3341
    %v3811 = vpop.f32.mrb[0].mxu0
    %v3812 = vadd.f32 %v3167, %v3811
    %v3813 = vpop.f32.mrb[0].mxu0
    %v3814 = vpop.f32.mrb[0].mxu0
    %v3815 = vadd.f32 %v3167, %v3814
    %v3816 = vpop.f32.mrb[0].mxu0
    %3817 = vmatprep.mubr.bf16.mxu0 0
    %3818 = vmatmul.mubr.bf16.gmra.mrb[0].mxu0 %v3344
    %v3819 = vpop.f32.mrb[0].mxu0
    %v3820 = vadd.f32 %v3167, %v3819
    %v3821 = vpop.f32.mrb[0].mxu0
    %v3822 = vpop.f32.mrb[0].mxu0
    %v3823 = vadd.f32 %v3167, %v3822
    %v3824 = vpop.f32.mrb[0].mxu0
    %3825 = vmatprep.mubr.bf16.mxu0 0
    %3826 = vmatmul.mubr.bf16.gmra.mrb[0].mxu0 %v3347
    %v3827 = vpop.f32.mrb[0].mxu0
    %v3828 = vadd.f32 %v3167, %v3827
    %v3829 = vpop.f32.mrb[0].mxu0
    %v3830 = vpop.f32.mrb[0].mxu0
    %v3831 = vadd.f32 %v3167, %v3830
    %v3832 = vpop.f32.mrb[0].mxu0
    %3833 = vmatprep.mubr.bf16.mxu0 0
    %3834 = vmatmul.mubr.bf16.gmra.mrb[0].mxu0 %v3350
    %v3835 = vpop.f32.mrb[0].mxu0
    %v3836 = vadd.f32 %v3167, %v3835
    %v3837 = vpop.f32.mrb[0].mxu0
    %v3838 = vpop.f32.mrb[0].mxu0
    %v3839 = vadd.f32 %v3167, %v3838
    %v3840 = vpop.f32.mrb[0].mxu0
    %3841 = vmatprep.mubr.bf16.mxu0 0
    %3842 = vmatmul.mubr.bf16.gmra.mrb[0].mxu0 %v3353
    %v3843 = vpop.f32.mrb[0].mxu0
    %v3844 = vadd.f32 %v3167, %v3843
    %v3845 = vpop.f32.mrb[0].mxu0
    %v3846 = vpop.f32.mrb[0].mxu0
    %v3847 = vadd.f32 %v3167, %v3846
    %v3848 = vpop.f32.mrb[0].mxu0
    %3849 = vmatprep.mubr.bf16.mxu0 0
    %3850 = vmatmul.mubr.bf16.gmra.mrb[0].mxu0 %v3356
    %v3851 = vpop.f32.mrb[0].mxu0
    %v3852 = vadd.f32 %v3167, %v3851
    %v3853 = vpop.f32.mrb[0].mxu0
    %v3854 = vpop.f32.mrb[0].mxu0
    %v3855 = vadd.f32 %v3167, %v3854
    %v3856 = vpop.f32.mrb[0].mxu0
    %3857 = vmatprep.mubr.bf16.mxu0 0
    %3858 = vmatmul.mubr.bf16.gmra.mrb[0].mxu0 %v3359
    %v3859 = vpop.f32.mrb[0].mxu0
    %v3860 = vadd.f32 %v3167, %v3859
    %v3861 = vpop.f32.mrb[0].mxu0
    %v3862 = vpop.f32.mrb[0].mxu0
    %v3863 = vadd.f32 %v3167, %v3862
    %v3864 = vpop.f32.mrb[0].mxu0
    %3865 = vmatprep.mubr.bf16.mxu0 0
    %3866 = vmatmul.mubr.bf16.gmra.mrb[0].mxu0 %v3362
    %v3867 = vpop.f32.mrb[0].mxu0
    %v3868 = vadd.f32 %v3167, %v3867
    %v3869 = vpop.f32.mrb[0].mxu0
    %v3870 = vpop.f32.mrb[0].mxu0
    %v3871 = vadd.f32 %v3167, %v3870
    %v3872 = vpop.f32.mrb[0].mxu0
    %3873 = vmatprep.mubr.bf16.mxu0 0
    %3874 = vmatmul.mubr.bf16.gmra.mrb[0].mxu0 %v3365
    %v3875 = vpop.f32.mrb[0].mxu0
    %v3876 = vadd.f32 %v3167, %v3875
    %v3877 = vpop.f32.mrb[0].mxu0
    %v3878 = vpop.f32.mrb[0].mxu0
    %v3879 = vadd.f32 %v3167, %v3878
    %v3880 = vpop.f32.mrb[0].mxu0
    %3881 = vmatprep.mubr.bf16.mxu0 0
    %3882 = vmatmul.mubr.bf16.gmra.mrb[0].mxu0 %v3368
    %v3883 = vpop.f32.mrb[0].mxu0
    %v3884 = vadd.f32 %v3167, %v3883
    %v3885 = vpop.f32.mrb[0].mxu0
    %v3886 = vpop.f32.mrb[0].mxu0
    %v3887 = vadd.f32 %v3167, %v3886
    %v3888 = vpop.f32.mrb[0].mxu0
    %3889 = vmatprep.mubr.bf16.mxu0 0
    %3890 = vmatmul.mubr.bf16.gmra.mrb[0].mxu0 %v3371
    %v3891 = vpop.f32.mrb[0].mxu0
    %v3892 = vadd.f32 %v3167, %v3891
    %v3893 = vpop.f32.mrb[0].mxu0
    %v3894 = vpop.f32.mrb[0].mxu0
    %v3895 = vadd.f32 %v3167, %v3894
    %v3896 = vpop.f32.mrb[0].mxu0
    %3897 = vmatprep.mubr.bf16.mxu0 0
    %3898 = vmatmul.mubr.bf16.gmra.mrb[0].mxu0 %v3374
    %v3899 = vpop.f32.mrb[0].mxu0
    %v3900 = vadd.f32 %v3167, %v3899
    %v3901 = vpop.f32.mrb[0].mxu0
    %v3902 = vpop.f32.mrb[0].mxu0
    %v3903 = vadd.f32 %v3167, %v3902
    %v3904 = vpop.f32.mrb[0].mxu0
    %3905 = vmatprep.mubr.bf16.mxu0 0
    %3906 = vmatmul.mubr.bf16.gmra.mrb[0].mxu0 %v3377
    %v3907 = vpop.f32.mrb[0].mxu0
    %v3908 = vadd.f32 %v3167, %v3907
    %v3909 = vpop.f32.mrb[0].mxu0
    %v3910 = vpop.f32.mrb[0].mxu0
    %v3911 = vadd.f32 %v3167, %v3910
    %v3912 = vpop.f32.mrb[0].mxu0
    %3913 = vmatprep.mubr.bf16.mxu0 0
    %3914 = vmatmul.mubr.bf16.gmra.mrb[0].mxu0 %v3380
    %v3915 = vpop.f32.mrb[0].mxu0
    %v3916 = vadd.f32 %v3167, %v3915
    %v3917 = vpop.f32.mrb[0].mxu0
    %v3918 = vpop.f32.mrb[0].mxu0
    %v3919 = vadd.f32 %v3167, %v3918
    %v3920 = vpop.f32.mrb[0].mxu0
    %3921 = vmatprep.mubr.bf16.mxu0 0
    %3922 = vmatmul.mubr.bf16.gmra.mrb[0].mxu0 %v3383
    %v3923 = vpop.f32.mrb[0].mxu0
    %v3924 = vadd.f32 %v3167, %v3923
    %v3925 = vpop.f32.mrb[0].mxu0
    %v3926 = vpop.f32.mrb[0].mxu0
    %v3927 = vadd.f32 %v3167, %v3926
    %v3928 = vpop.f32.mrb[0].mxu0
    %3929 = vdwg.mxu0
    %v3930 = vmax.f32 %v3420, 0.0
    %v3931 = vmax.f32 %v3423, 0.0
    %v3932 = vmax.f32 %v3428, 0.0
    %v3933 = vmax.f32 %v3431, 0.0
    %v3934 = vmax.f32 %v3436, 0.0
    %v3935 = vmax.f32 %v3439, 0.0
    %v3936 = vmax.f32 %v3444, 0.0
    %v3937 = vmax.f32 %v3447, 0.0
    %v3938 = vmax.f32 %v3452, 0.0
    %v3939 = vmax.f32 %v3455, 0.0
    %v3940 = vmax.f32 %v3460, 0.0
    %v3941 = vmax.f32 %v3463, 0.0
    %v3942 = vmax.f32 %v3468, 0.0
    %v3943 = vmax.f32 %v3471, 0.0
    %v3944 = vmax.f32 %v3476, 0.0
    %v3945 = vmax.f32 %v3479, 0.0
    %v3946 = vmax.f32 %v3484, 0.0
    %v3947 = vmax.f32 %v3487, 0.0
    %v3948 = vmax.f32 %v3492, 0.0
    %v3949 = vmax.f32 %v3495, 0.0
    %v3950 = vmax.f32 %v3500, 0.0
    %v3951 = vmax.f32 %v3503, 0.0
    %v3952 = vmax.f32 %v3508, 0.0
    %v3953 = vmax.f32 %v3511, 0.0
    %v3954 = vmax.f32 %v3516, 0.0
    %v3955 = vmax.f32 %v3519, 0.0
    %v3956 = vmax.f32 %v3524, 0.0
    %v3957 = vmax.f32 %v3527, 0.0
    %v3958 = vmax.f32 %v3532, 0.0
    %v3959 = vmax.f32 %v3535, 0.0
    %v3960 = vmax.f32 %v3540, 0.0
    %v3961 = vmax.f32 %v3543, 0.0
    %v3962 = vmax.f32 %v3548, 0.0
    %v3963 = vmax.f32 %v3551, 0.0
    %v3964 = vmax.f32 %v3556, 0.0
    %v3965 = vmax.f32 %v3559, 0.0
    %v3966 = vmax.f32 %v3564, 0.0
    %v3967 = vmax.f32 %v3567, 0.0
    %v3968 = vmax.f32 %v3572, 0.0
    %v3969 = vmax.f32 %v3575, 0.0
    %v3970 = vmax.f32 %v3580, 0.0
    %v3971 = vmax.f32 %v3583, 0.0
    %v3972 = vmax.f32 %v3588, 0.0
    %v3973 = vmax.f32 %v3591, 0.0
    %v3974 = vmax.f32 %v3596, 0.0
    %v3975 = vmax.f32 %v3599, 0.0
    %v3976 = vmax.f32 %v3604, 0.0
    %v3977 = vmax.f32 %v3607, 0.0
    %v3978 = vmax.f32 %v3612, 0.0
    %v3979 = vmax.f32 %v3615, 0.0
    %v3980 = vmax.f32 %v3620, 0.0
    %v3981 = vmax.f32 %v3623, 0.0
    %v3982 = vmax.f32 %v3628, 0.0
    %v3983 = vmax.f32 %v3631, 0.0
    %v3984 = vmax.f32 %v3636, 0.0
    %v3985 = vmax.f32 %v3639, 0.0
    %v3986 = vmax.f32 %v3644, 0.0
    %v3987 = vmax.f32 %v3647, 0.0
    %v3988 = vmax.f32 %v3652, 0.0
    %v3989 = vmax.f32 %v3655, 0.0
    %v3990 = vmax.f32 %v3660, 0.0
    %v3991 = vmax.f32 %v3663, 0.0
    %v3992 = vmax.f32 %v3668, 0.0
    %v3993 = vmax.f32 %v3671, 0.0
    %v3994 = vmax.f32 %v3676, 0.0
    %v3995 = vmax.f32 %v3679, 0.0
    %v3996 = vmax.f32 %v3684, 0.0
    %v3997 = vmax.f32 %v3687, 0.0
    %v3998 = vmax.f32 %v3692, 0.0
    %v3999 = vmax.f32 %v3695, 0.0
    %v4000 = vmax.f32 %v3700, 0.0
    %v4001 = vmax.f32 %v3703, 0.0
    %v4002 = vmax.f32 %v3708, 0.0
    %v4003 = vmax.f32 %v3711, 0.0
    %v4004 = vmax.f32 %v3716, 0.0
    %v4005 = vmax.f32 %v3719, 0.0
    %v4006 = vmax.f32 %v3724, 0.0
    %v4007 = vmax.f32 %v3727, 0.0
    %v4008 = vmax.f32 %v3732, 0.0
    %v4009 = vmax.f32 %v3735, 0.0
    %v4010 = vmax.f32 %v3740, 0.0
    %v4011 = vmax.f32 %v3743, 0.0
    %v4012 = vmax.f32 %v3748, 0.0
    %v4013 = vmax.f32 %v3751, 0.0
    %v4014 = vmax.f32 %v3756, 0.0
    %v4015 = vmax.f32 %v3759, 0.0
    %v4016 = vmax.f32 %v3764, 0.0
    %v4017 = vmax.f32 %v3767, 0.0
    %v4018 = vmax.f32 %v3772, 0.0
    %v4019 = vmax.f32 %v3775, 0.0
    %v4020 = vmax.f32 %v3780, 0.0
    %v4021 = vmax.f32 %v3783, 0.0
    %v4022 = vmax.f32 %v3788, 0.0
    %v4023 = vmax.f32 %v3791, 0.0
    %v4024 = vmax.f32 %v3796, 0.0
    %v4025 = vmax.f32 %v3799, 0.0
    %v4026 = vmax.f32 %v3804, 0.0
    %v4027 = vmax.f32 %v3807, 0.0
    %v4028 = vmax.f32 %v3812, 0.0
    %v4029 = vmax.f32 %v3815, 0.0
    %v4030 = vmax.f32 %v3820, 0.0
    %v4031 = vmax.f32 %v3823, 0.0
    %v4032 = vmax.f32 %v3828, 0.0
    %v4033 = vmax.f32 %v3831, 0.0
    %v4034 = vmax.f32 %v3836, 0.0
    %v4035 = vmax.f32 %v3839, 0.0
    %v4036 = vmax.f32 %v3844, 0.0
    %v4037 = vmax.f32 %v3847, 0.0
    %v4038 = vmax.f32 %v3852, 0.0
    %v4039 = vmax.f32 %v3855, 0.0
    %v4040 = vmax.f32 %v3860, 0.0
    %v4041 = vmax.f32 %v3863, 0.0
    %v4042 = vmax.f32 %v3868, 0.0
    %v4043 = vmax.f32 %v3871, 0.0
    %v4044 = vmax.f32 %v3876, 0.0
    %v4045 = vmax.f32 %v3879, 0.0
    %v4046 = vmax.f32 %v3884, 0.0
    %v4047 = vmax.f32 %v3887, 0.0
    %v4048 = vmax.f32 %v3892, 0.0
    %v4049 = vmax.f32 %v3895, 0.0
    %v4050 = vmax.f32 %v3900, 0.0
    %v4051 = vmax.f32 %v3903, 0.0
    %v4052 = vmax.f32 %v3908, 0.0
    %v4053 = vmax.f32 %v3911, 0.0
    %v4054 = vmax.f32 %v3916, 0.0
    %v4055 = vmax.f32 %v3919, 0.0
    %v4056 = vmax.f32 %v3924, 0.0
    %v4057 = vmax.f32 %v3927, 0.0
    %v4058 = vpack.c.bf16 %v3931, %v3930
    %v4059 = vpack.c.bf16 %v3933, %v3932
    %v4060 = vpack.c.bf16 %v3935, %v3934
    %v4061 = vpack.c.bf16 %v3937, %v3936
    %v4062 = vpack.c.bf16 %v3939, %v3938
    %v4063 = vpack.c.bf16 %v3941, %v3940
    %v4064 = vpack.c.bf16 %v3943, %v3942
    %v4065 = vpack.c.bf16 %v3945, %v3944
    %v4066 = vpack.c.bf16 %v3947, %v3946
    %v4067 = vpack.c.bf16 %v3949, %v3948
    %v4068 = vpack.c.bf16 %v3951, %v3950
    %v4069 = vpack.c.bf16 %v3953, %v3952
    %v4070 = vpack.c.bf16 %v3955, %v3954
    %v4071 = vpack.c.bf16 %v3957, %v3956
    %v4072 = vpack.c.bf16 %v3959, %v3958
    %v4073 = vpack.c.bf16 %v3961, %v3960
    %v4074 = vpack.c.bf16 %v3963, %v3962
    %v4075 = vpack.c.bf16 %v3965, %v3964
    %v4076 = vpack.c.bf16 %v3967, %v3966
    %v4077 = vpack.c.bf16 %v3969, %v3968
    %v4078 = vpack.c.bf16 %v3971, %v3970
    %v4079 = vpack.c.bf16 %v3973, %v3972
    %v4080 = vpack.c.bf16 %v3975, %v3974
    %v4081 = vpack.c.bf16 %v3977, %v3976
    %v4082 = vpack.c.bf16 %v3979, %v3978
    %v4083 = vpack.c.bf16 %v3981, %v3980
    %v4084 = vpack.c.bf16 %v3983, %v3982
    %v4085 = vpack.c.bf16 %v3985, %v3984
    %v4086 = vpack.c.bf16 %v3987, %v3986
    %v4087 = vpack.c.bf16 %v3989, %v3988
    %v4088 = vpack.c.bf16 %v3991, %v3990
    %v4089 = vpack.c.bf16 %v3993, %v3992
    %v4090 = vpack.c.bf16 %v3995, %v3994
    %v4091 = vpack.c.bf16 %v3997, %v3996
    %v4092 = vpack.c.bf16 %v3999, %v3998
    %v4093 = vpack.c.bf16 %v4001, %v4000
    %v4094 = vpack.c.bf16 %v4003, %v4002
    %v4095 = vpack.c.bf16 %v4005, %v4004
    %v4096 = vpack.c.bf16 %v4007, %v4006
    %v4097 = vpack.c.bf16 %v4009, %v4008
    %v4098 = vpack.c.bf16 %v4011, %v4010
    %v4099 = vpack.c.bf16 %v4013, %v4012
    %v4100 = vpack.c.bf16 %v4015, %v4014
    %v4101 = vpack.c.bf16 %v4017, %v4016
    %v4102 = vpack.c.bf16 %v4019, %v4018
    %v4103 = vpack.c.bf16 %v4021, %v4020
    %v4104 = vpack.c.bf16 %v4023, %v4022
    %v4105 = vpack.c.bf16 %v4025, %v4024
    %v4106 = vpack.c.bf16 %v4027, %v4026
    %v4107 = vpack.c.bf16 %v4029, %v4028
    %v4108 = vpack.c.bf16 %v4031, %v4030
    %v4109 = vpack.c.bf16 %v4033, %v4032
    %v4110 = vpack.c.bf16 %v4035, %v4034
    %v4111 = vpack.c.bf16 %v4037, %v4036
    %v4112 = vpack.c.bf16 %v4039, %v4038
    %v4113 = vpack.c.bf16 %v4041, %v4040
    %v4114 = vpack.c.bf16 %v4043, %v4042
    %v4115 = vpack.c.bf16 %v4045, %v4044
    %v4116 = vpack.c.bf16 %v4047, %v4046
    %v4117 = vpack.c.bf16 %v4049, %v4048
    %v4118 = vpack.c.bf16 %v4051, %v4050
    %v4119 = vpack.c.bf16 %v4053, %v4052
    %v4120 = vpack.c.bf16 %v4055, %v4054
    %v4121 = vpack.c.bf16 %v4057, %v4056
    %v4122 = vld [vmem:[%s9] sm:$0xff]
    %v4123 = vld [vmem:[%s9 + $0x8] sm:$0xff]
    %v4124 = vld [vmem:[%s9 + $0x10] sm:$0xff]
    %v4125 = vld [vmem:[%s9 + $0x18] sm:$0xff]
    %v4126 = vld [vmem:[%s9 + $0x20] sm:$0xff]
    %v4127 = vld [vmem:[%s9 + $0x28] sm:$0xff]
    %v4128 = vld [vmem:[%s9 + $0x30] sm:$0xff]
    %v4129 = vld [vmem:[%s9 + $0x38] sm:$0xff]
    %v4130 = vld [vmem:[%s9 + $0x40] sm:$0xff]
    %v4131 = vld [vmem:[%s9 + $0x48] sm:$0xff]
    %v4132 = vld [vmem:[%s9 + $0x50] sm:$0xff]
    %v4133 = vld [vmem:[%s9 + $0x58] sm:$0xff]
    %v4134 = vld [vmem:[%s9 + $0x60] sm:$0xff]
    %v4135 = vld [vmem:[%s9 + $0x68] sm:$0xff]
    %v4136 = vld [vmem:[%s9 + $0x70] sm:$0xff]
    %v4137 = vld [vmem:[%s9 + $0x78] sm:$0xff]
    %v4138 = vld [vmem:[%s9 + $0x80] sm:$0xff]
    %v4139 = vld [vmem:[%s9 + $0x88] sm:$0xff]
    %v4140 = vld [vmem:[%s9 + $0x90] sm:$0xff]
    %v4141 = vld [vmem:[%s9 + $0x98] sm:$0xff]
    %v4142 = vld [vmem:[%s9 + $0xa0] sm:$0xff]
    %v4143 = vld [vmem:[%s9 + $0xa8] sm:$0xff]
    %v4144 = vld [vmem:[%s9 + $0xb0] sm:$0xff]
    %v4145 = vld [vmem:[%s9 + $0xb8] sm:$0xff]
    %v4146 = vld [vmem:[%s9 + $0xc0] sm:$0xff]
    %v4147 = vld [vmem:[%s9 + $0xc8] sm:$0xff]
    %v4148 = vld [vmem:[%s9 + $0xd0] sm:$0xff]
    %v4149 = vld [vmem:[%s9 + $0xd8] sm:$0xff]
    %v4150 = vld [vmem:[%s9 + $0xe0] sm:$0xff]
    %v4151 = vld [vmem:[%s9 + $0xe8] sm:$0xff]
    %v4152 = vld [vmem:[%s9 + $0xf0] sm:$0xff]
    %v4153 = vld [vmem:[%s9 + $0xf8] sm:$0xff]
    %v4154 = vld [vmem:[%s9 + $0x100] sm:$0xff]
    %v4155 = vld [vmem:[%s9 + $0x108] sm:$0xff]
    %v4156 = vld [vmem:[%s9 + $0x110] sm:$0xff]
    %v4157 = vld [vmem:[%s9 + $0x118] sm:$0xff]
    %v4158 = vld [vmem:[%s9 + $0x120] sm:$0xff]
    %v4159 = vld [vmem:[%s9 + $0x128] sm:$0xff]
    %v4160 = vld [vmem:[%s9 + $0x130] sm:$0xff]
    %v4161 = vld [vmem:[%s9 + $0x138] sm:$0xff]
    %v4162 = vld [vmem:[%s9 + $0x140] sm:$0xff]
    %v4163 = vld [vmem:[%s9 + $0x148] sm:$0xff]
    %v4164 = vld [vmem:[%s9 + $0x150] sm:$0xff]
    %v4165 = vld [vmem:[%s9 + $0x158] sm:$0xff]
    %v4166 = vld [vmem:[%s9 + $0x160] sm:$0xff]
    %v4167 = vld [vmem:[%s9 + $0x168] sm:$0xff]
    %v4168 = vld [vmem:[%s9 + $0x170] sm:$0xff]
    %v4169 = vld [vmem:[%s9 + $0x178] sm:$0xff]
    %v4170 = vld [vmem:[%s9 + $0x180] sm:$0xff]
    %v4171 = vld [vmem:[%s9 + $0x188] sm:$0xff]
    %v4172 = vld [vmem:[%s9 + $0x190] sm:$0xff]
    %v4173 = vld [vmem:[%s9 + $0x198] sm:$0xff]
    %v4174 = vld [vmem:[%s9 + $0x1a0] sm:$0xff]
    %v4175 = vld [vmem:[%s9 + $0x1a8] sm:$0xff]
    %v4176 = vld [vmem:[%s9 + $0x1b0] sm:$0xff]
    %v4177 = vld [vmem:[%s9 + $0x1b8] sm:$0xff]
    %v4178 = vld [vmem:[%s9 + $0x1c0] sm:$0xff]
    %v4179 = vld [vmem:[%s9 + $0x1c8] sm:$0xff]
    %v4180 = vld [vmem:[%s9 + $0x1d0] sm:$0xff]
    %v4181 = vld [vmem:[%s9 + $0x1d8] sm:$0xff]
    %v4182 = vld [vmem:[%s9 + $0x1e0] sm:$0xff]
    %v4183 = vld [vmem:[%s9 + $0x1e8] sm:$0xff]
    %v4184 = vld [vmem:[%s9 + $0x1f0] sm:$0xff]
    %v4185 = vld [vmem:[%s9 + $0x1f8] sm:$0xff]
    %v4186 = vld [vmem:[%s10] sm:$0xff]
    %v4188 = vlaneseq
    %v4189 = vshrl.u32 %v4188, 7
    %v4190 = vsub.s32 0, %v4189
    %v4191 = vrot.slane %v4186, %v4190
    %v4192 = vlaneseq
    %v4193 = vshrl.u32 %v4192, 7
    %v4194 = vsub.s32 1, %v4193
    %v4195 = vrot.slane %v4186, %v4194
    %v4196 = vlaneseq
    %v4197 = vshrl.u32 %v4196, 7
    %v4198 = vsub.s32 2, %v4197
    %v4199 = vrot.slane %v4186, %v4198
    %v4200 = vlaneseq
    %v4201 = vshrl.u32 %v4200, 7
    %v4202 = vsub.s32 3, %v4201
    %v4203 = vrot.slane %v4186, %v4202
    %v4204 = vlaneseq
    %v4205 = vshrl.u32 %v4204, 7
    %v4206 = vsub.s32 4, %v4205
    %v4207 = vrot.slane %v4186, %v4206
    %v4208 = vlaneseq
    %v4209 = vshrl.u32 %v4208, 7
    %v4210 = vsub.s32 5, %v4209
    %v4211 = vrot.slane %v4186, %v4210
    %v4212 = vlaneseq
    %v4213 = vshrl.u32 %v4212, 7
    %v4214 = vsub.s32 6, %v4213
    %v4215 = vrot.slane %v4186, %v4214
    %v4216 = vlaneseq
    %v4217 = vshrl.u32 %v4216, 7
    %v4218 = vsub.s32 7, %v4217
    %v4219 = vrot.slane %v4186, %v4218
    %v4292 = vunpack.c.l.b16 %v4122
    %v4293 = vunpack.c.h.b16 %v4122
    %v4294 = vunpack.c.l.b16 %v4123
    %v4295 = vunpack.c.h.b16 %v4123
    %v4296 = vunpack.c.l.b16 %v4124
    %v4297 = vunpack.c.h.b16 %v4124
    %v4298 = vunpack.c.l.b16 %v4125
    %v4299 = vunpack.c.h.b16 %v4125
    %v4300 = vunpack.c.l.b16 %v4126
    %v4301 = vunpack.c.h.b16 %v4126
    %v4302 = vunpack.c.l.b16 %v4127
    %v4303 = vunpack.c.h.b16 %v4127
    %v4304 = vunpack.c.l.b16 %v4128
    %v4305 = vunpack.c.h.b16 %v4128
    %v4306 = vunpack.c.l.b16 %v4129
    %v4307 = vunpack.c.h.b16 %v4129
    %v4308 = vunpack.c.l.b16 %v4130
    %v4309 = vunpack.c.h.b16 %v4130
    %v4310 = vunpack.c.l.b16 %v4131
    %v4311 = vunpack.c.h.b16 %v4131
    %v4312 = vunpack.c.l.b16 %v4132
    %v4313 = vunpack.c.h.b16 %v4132
    %v4314 = vunpack.c.l.b16 %v4133
    %v4315 = vunpack.c.h.b16 %v4133
    %v4316 = vunpack.c.l.b16 %v4134
    %v4317 = vunpack.c.h.b16 %v4134
    %v4318 = vunpack.c.l.b16 %v4135
    %v4319 = vunpack.c.h.b16 %v4135
    %v4320 = vunpack.c.l.b16 %v4136
    %v4321 = vunpack.c.h.b16 %v4136
    %v4322 = vunpack.c.l.b16 %v4137
    %v4323 = vunpack.c.h.b16 %v4137
    %v4324 = vunpack.c.l.b16 %v4138
    %v4325 = vunpack.c.h.b16 %v4138
    %v4326 = vunpack.c.l.b16 %v4139
    %v4327 = vunpack.c.h.b16 %v4139
    %v4328 = vunpack.c.l.b16 %v4140
    %v4329 = vunpack.c.h.b16 %v4140
    %v4330 = vunpack.c.l.b16 %v4141
    %v4331 = vunpack.c.h.b16 %v4141
    %v4332 = vunpack.c.l.b16 %v4142
    %v4333 = vunpack.c.h.b16 %v4142
    %v4334 = vunpack.c.l.b16 %v4143
    %v4335 = vunpack.c.h.b16 %v4143
    %v4336 = vunpack.c.l.b16 %v4144
    %v4337 = vunpack.c.h.b16 %v4144
    %v4338 = vunpack.c.l.b16 %v4145
    %v4339 = vunpack.c.h.b16 %v4145
    %v4340 = vunpack.c.l.b16 %v4146
    %v4341 = vunpack.c.h.b16 %v4146
    %v4342 = vunpack.c.l.b16 %v4147
    %v4343 = vunpack.c.h.b16 %v4147
    %v4344 = vunpack.c.l.b16 %v4148
    %v4345 = vunpack.c.h.b16 %v4148
    %v4346 = vunpack.c.l.b16 %v4149
    %v4347 = vunpack.c.h.b16 %v4149
    %v4348 = vunpack.c.l.b16 %v4150
    %v4349 = vunpack.c.h.b16 %v4150
    %v4350 = vunpack.c.l.b16 %v4151
    %v4351 = vunpack.c.h.b16 %v4151
    %v4352 = vunpack.c.l.b16 %v4152
    %v4353 = vunpack.c.h.b16 %v4152
    %v4354 = vunpack.c.l.b16 %v4153
    %v4355 = vunpack.c.h.b16 %v4153
    %v4356 = vunpack.c.l.b16 %v4154
    %v4357 = vunpack.c.h.b16 %v4154
    %v4358 = vunpack.c.l.b16 %v4155
    %v4359 = vunpack.c.h.b16 %v4155
    %v4360 = vunpack.c.l.b16 %v4156
    %v4361 = vunpack.c.h.b16 %v4156
    %v4362 = vunpack.c.l.b16 %v4157
    %v4363 = vunpack.c.h.b16 %v4157
    %v4364 = vunpack.c.l.b16 %v4158
    %v4365 = vunpack.c.h.b16 %v4158
    %v4366 = vunpack.c.l.b16 %v4159
    %v4367 = vunpack.c.h.b16 %v4159
    %v4368 = vunpack.c.l.b16 %v4160
    %v4369 = vunpack.c.h.b16 %v4160
    %v4370 = vunpack.c.l.b16 %v4161
    %v4371 = vunpack.c.h.b16 %v4161
    %v4372 = vunpack.c.l.b16 %v4162
    %v4373 = vunpack.c.h.b16 %v4162
    %v4374 = vunpack.c.l.b16 %v4163
    %v4375 = vunpack.c.h.b16 %v4163
    %v4376 = vunpack.c.l.b16 %v4164
    %v4377 = vunpack.c.h.b16 %v4164
    %v4378 = vunpack.c.l.b16 %v4165
    %v4379 = vunpack.c.h.b16 %v4165
    %v4380 = vunpack.c.l.b16 %v4166
    %v4381 = vunpack.c.h.b16 %v4166
    %v4382 = vunpack.c.l.b16 %v4167
    %v4383 = vunpack.c.h.b16 %v4167
    %v4384 = vunpack.c.l.b16 %v4168
    %v4385 = vunpack.c.h.b16 %v4168
    %v4386 = vunpack.c.l.b16 %v4169
    %v4387 = vunpack.c.h.b16 %v4169
    %v4388 = vunpack.c.l.b16 %v4170
    %v4389 = vunpack.c.h.b16 %v4170
    %v4390 = vunpack.c.l.b16 %v4171
    %v4391 = vunpack.c.h.b16 %v4171
    %v4392 = vunpack.c.l.b16 %v4172
    %v4393 = vunpack.c.h.b16 %v4172
    %v4394 = vunpack.c.l.b16 %v4173
    %v4395 = vunpack.c.h.b16 %v4173
    %v4396 = vunpack.c.l.b16 %v4174
    %v4397 = vunpack.c.h.b16 %v4174
    %v4398 = vunpack.c.l.b16 %v4175
    %v4399 = vunpack.c.h.b16 %v4175
    %v4400 = vunpack.c.l.b16 %v4176
    %v4401 = vunpack.c.h.b16 %v4176
    %v4402 = vunpack.c.l.b16 %v4177
    %v4403 = vunpack.c.h.b16 %v4177
    %v4404 = vunpack.c.l.b16 %v4178
    %v4405 = vunpack.c.h.b16 %v4178
    %v4406 = vunpack.c.l.b16 %v4179
    %v4407 = vunpack.c.h.b16 %v4179
    %v4408 = vunpack.c.l.b16 %v4180
    %v4409 = vunpack.c.h.b16 %v4180
    %v4410 = vunpack.c.l.b16 %v4181
    %v4411 = vunpack.c.h.b16 %v4181
    %v4412 = vunpack.c.l.b16 %v4182
    %v4413 = vunpack.c.h.b16 %v4182
    %v4414 = vunpack.c.l.b16 %v4183
    %v4415 = vunpack.c.h.b16 %v4183
    %v4416 = vunpack.c.l.b16 %v4184
    %v4417 = vunpack.c.h.b16 %v4184
    %v4418 = vunpack.c.l.b16 %v4185
    %v4419 = vunpack.c.h.b16 %v4185
    %v4420 = vpack.c.b16 %v4300, %v4292
    %v4421 = vpack.c.b16 %v4301, %v4293
    %v4422 = vpack.c.b16 %v4302, %v4294
    %v4423 = vpack.c.b16 %v4303, %v4295
    %v4424 = vpack.c.b16 %v4304, %v4296
    %v4425 = vpack.c.b16 %v4305, %v4297
    %v4426 = vpack.c.b16 %v4306, %v4298
    %v4427 = vpack.c.b16 %v4307, %v4299
    %v4428 = vpack.c.b16 %v4316, %v4308
    %v4429 = vpack.c.b16 %v4317, %v4309
    %v4430 = vpack.c.b16 %v4318, %v4310
    %v4431 = vpack.c.b16 %v4319, %v4311
    %v4432 = vpack.c.b16 %v4320, %v4312
    %v4433 = vpack.c.b16 %v4321, %v4313
    %v4434 = vpack.c.b16 %v4322, %v4314
    %v4435 = vpack.c.b16 %v4323, %v4315
    %v4436 = vpack.c.b16 %v4332, %v4324
    %v4437 = vpack.c.b16 %v4333, %v4325
    %v4438 = vpack.c.b16 %v4334, %v4326
    %v4439 = vpack.c.b16 %v4335, %v4327
    %v4440 = vpack.c.b16 %v4336, %v4328
    %v4441 = vpack.c.b16 %v4337, %v4329
    %v4442 = vpack.c.b16 %v4338, %v4330
    %v4443 = vpack.c.b16 %v4339, %v4331
    %v4444 = vpack.c.b16 %v4348, %v4340
    %v4445 = vpack.c.b16 %v4349, %v4341
    %v4446 = vpack.c.b16 %v4350, %v4342
    %v4447 = vpack.c.b16 %v4351, %v4343
    %v4448 = vpack.c.b16 %v4352, %v4344
    %v4449 = vpack.c.b16 %v4353, %v4345
    %v4450 = vpack.c.b16 %v4354, %v4346
    %v4451 = vpack.c.b16 %v4355, %v4347
    %v4452 = vpack.c.b16 %v4364, %v4356
    %v4453 = vpack.c.b16 %v4365, %v4357
    %v4454 = vpack.c.b16 %v4366, %v4358
    %v4455 = vpack.c.b16 %v4367, %v4359
    %v4456 = vpack.c.b16 %v4368, %v4360
    %v4457 = vpack.c.b16 %v4369, %v4361
    %v4458 = vpack.c.b16 %v4370, %v4362
    %v4459 = vpack.c.b16 %v4371, %v4363
    %v4460 = vpack.c.b16 %v4380, %v4372
    %v4461 = vpack.c.b16 %v4381, %v4373
    %v4462 = vpack.c.b16 %v4382, %v4374
    %v4463 = vpack.c.b16 %v4383, %v4375
    %v4464 = vpack.c.b16 %v4384, %v4376
    %v4465 = vpack.c.b16 %v4385, %v4377
    %v4466 = vpack.c.b16 %v4386, %v4378
    %v4467 = vpack.c.b16 %v4387, %v4379
    %v4468 = vpack.c.b16 %v4396, %v4388
    %v4469 = vpack.c.b16 %v4397, %v4389
    %v4470 = vpack.c.b16 %v4398, %v4390
    %v4471 = vpack.c.b16 %v4399, %v4391
    %v4472 = vpack.c.b16 %v4400, %v4392
    %v4473 = vpack.c.b16 %v4401, %v4393
    %v4474 = vpack.c.b16 %v4402, %v4394
    %v4475 = vpack.c.b16 %v4403, %v4395
    %v4476 = vpack.c.b16 %v4412, %v4404
    %v4477 = vpack.c.b16 %v4413, %v4405
    %v4478 = vpack.c.b16 %v4414, %v4406
    %v4479 = vpack.c.b16 %v4415, %v4407
    %v4480 = vpack.c.b16 %v4416, %v4408
    %v4481 = vpack.c.b16 %v4417, %v4409
    %v4482 = vpack.c.b16 %v4418, %v4410
    %v4483 = vpack.c.b16 %v4419, %v4411
    %4548 = vmatprep.subr.bf16.mxu0 %v4421
    %4549 = vmatpush1.bf16.msra.mxu0 %v4420
    %4550 = vmatprep.subr.bf16.mxu0 %v4429
    %4551 = vmatpush1.bf16.msra.mxu0 %v4428
    %4552 = vmatprep.subr.bf16.mxu0 %v4437
    %4553 = vmatpush1.bf16.msra.mxu0 %v4436
    %4554 = vmatprep.subr.bf16.mxu0 %v4445
    %4555 = vmatpush1.bf16.msra.mxu0 %v4444
    %4556 = vmatprep.subr.bf16.mxu0 %v4453
    %4557 = vmatpush1.bf16.msra.mxu0 %v4452
    %4558 = vmatprep.subr.bf16.mxu0 %v4461
    %4559 = vmatpush1.bf16.msra.mxu0 %v4460
    %4560 = vmatprep.subr.bf16.mxu0 %v4469
    %4561 = vmatpush1.bf16.msra.mxu0 %v4468
    %4562 = vmatprep.subr.bf16.mxu0 %v4477
    %4563 = vmatpush1.bf16.msra.mxu0 %v4476
    %4564 = vmatprep.subr.bf16.mxu0 0
    %4565 = vmatpush1.bf16.msra.mxu0 0
    %4566 = vmatprep.subr.bf16.mxu0 0
    %4567 = vmatpush1.bf16.msra.mxu0 0
    %4568 = vmatprep.subr.bf16.mxu0 0
    %4569 = vmatpush1.bf16.msra.mxu0 0
    %4570 = vmatprep.subr.bf16.mxu0 0
    %4571 = vmatpush1.bf16.msra.mxu0 0
    %4572 = vmatprep.subr.bf16.mxu0 0
    %4573 = vmatpush1.bf16.msra.mxu0 0
    %4574 = vmatprep.subr.bf16.mxu0 0
    %4575 = vmatpush1.bf16.msra.mxu0 0
    %4576 = vmatprep.subr.bf16.mxu0 0
    %4577 = vmatpush1.bf16.msra.mxu0 0
    %4578 = vmatprep.subr.bf16.mxu0 0
    %4579 = vmatpush1.bf16.msra.mxu0 0
    %4580 = vmatprep.mubr.bf16.mxu0 0
    %4581 = vmatmul.mubr.bf16.gmra.mrb[0].mxu0 %v4058
    %v4582 = vpop.f32.mrb[0].mxu0
    %v4583 = vadd.f32 %v4191, %v4582
    %v4584 = vpop.f32.mrb[0].mxu0
    %v4585 = vadd.f32 %v4195, %v4584
    %v4586 = vpop.f32.mrb[0].mxu0
    %v4587 = vadd.f32 %v4191, %v4586
    %v4588 = vpop.f32.mrb[0].mxu0
    %v4589 = vadd.f32 %v4195, %v4588
    %4590 = vmatprep.mubr.bf16.mxu0 0
    %4591 = vmatmul.mubr.bf16.gmra.mrb[0].mxu0 %v4059
    %v4592 = vpop.f32.mrb[0].mxu0
    %v4593 = vadd.f32 %v4191, %v4592
    %v4594 = vpop.f32.mrb[0].mxu0
    %v4595 = vadd.f32 %v4195, %v4594
    %v4596 = vpop.f32.mrb[0].mxu0
    %v4597 = vadd.f32 %v4191, %v4596
    %v4598 = vpop.f32.mrb[0].mxu0
    %v4599 = vadd.f32 %v4195, %v4598
    %4600 = vmatprep.mubr.bf16.mxu0 0
    %4601 = vmatmul.mubr.bf16.gmra.mrb[0].mxu0 %v4060
    %v4602 = vpop.f32.mrb[0].mxu0
    %v4603 = vadd.f32 %v4191, %v4602
    %v4604 = vpop.f32.mrb[0].mxu0
    %v4605 = vadd.f32 %v4195, %v4604
    %v4606 = vpop.f32.mrb[0].mxu0
    %v4607 = vadd.f32 %v4191, %v4606
    %v4608 = vpop.f32.mrb[0].mxu0
    %v4609 = vadd.f32 %v4195, %v4608
    %4610 = vmatprep.mubr.bf16.mxu0 0
    %4611 = vmatmul.mubr.bf16.gmra.mrb[0].mxu0 %v4061
    %v4612 = vpop.f32.mrb[0].mxu0
    %v4613 = vadd.f32 %v4191, %v4612
    %v4614 = vpop.f32.mrb[0].mxu0
    %v4615 = vadd.f32 %v4195, %v4614
    %v4616 = vpop.f32.mrb[0].mxu0
    %v4617 = vadd.f32 %v4191, %v4616
    %v4618 = vpop.f32.mrb[0].mxu0
    %v4619 = vadd.f32 %v4195, %v4618
    %4620 = vmatprep.mubr.bf16.mxu0 0
    %4621 = vmatmul.mubr.bf16.gmra.mrb[0].mxu0 %v4062
    %v4622 = vpop.f32.mrb[0].mxu0
    %v4623 = vadd.f32 %v4191, %v4622
    %v4624 = vpop.f32.mrb[0].mxu0
    %v4625 = vadd.f32 %v4195, %v4624
    %v4626 = vpop.f32.mrb[0].mxu0
    %v4627 = vadd.f32 %v4191, %v4626
    %v4628 = vpop.f32.mrb[0].mxu0
    %v4629 = vadd.f32 %v4195, %v4628
    %4630 = vmatprep.mubr.bf16.mxu0 0
    %4631 = vmatmul.mubr.bf16.gmra.mrb[0].mxu0 %v4063
    %v4632 = vpop.f32.mrb[0].mxu0
    %v4633 = vadd.f32 %v4191, %v4632
    %v4634 = vpop.f32.mrb[0].mxu0
    %v4635 = vadd.f32 %v4195, %v4634
    %v4636 = vpop.f32.mrb[0].mxu0
    %v4637 = vadd.f32 %v4191, %v4636
    %v4638 = vpop.f32.mrb[0].mxu0
    %v4639 = vadd.f32 %v4195, %v4638
    %4640 = vmatprep.mubr.bf16.mxu0 0
    %4641 = vmatmul.mubr.bf16.gmra.mrb[0].mxu0 %v4064
    %v4642 = vpop.f32.mrb[0].mxu0
    %v4643 = vadd.f32 %v4191, %v4642
    %v4644 = vpop.f32.mrb[0].mxu0
    %v4645 = vadd.f32 %v4195, %v4644
    %v4646 = vpop.f32.mrb[0].mxu0
    %v4647 = vadd.f32 %v4191, %v4646
    %v4648 = vpop.f32.mrb[0].mxu0
    %v4649 = vadd.f32 %v4195, %v4648
    %4650 = vmatprep.mubr.bf16.mxu0 0
    %4651 = vmatmul.mubr.bf16.gmra.mrb[0].mxu0 %v4065
    %v4652 = vpop.f32.mrb[0].mxu0
    %v4653 = vadd.f32 %v4191, %v4652
    %v4654 = vpop.f32.mrb[0].mxu0
    %v4655 = vadd.f32 %v4195, %v4654
    %v4656 = vpop.f32.mrb[0].mxu0
    %v4657 = vadd.f32 %v4191, %v4656
    %v4658 = vpop.f32.mrb[0].mxu0
    %v4659 = vadd.f32 %v4195, %v4658
    %4660 = vmatprep.mubr.bf16.mxu0 0
    %4661 = vmatmul.mubr.bf16.gmra.mrb[0].mxu0 %v4066
    %v4662 = vpop.f32.mrb[0].mxu0
    %v4663 = vadd.f32 %v4191, %v4662
    %v4664 = vpop.f32.mrb[0].mxu0
    %v4665 = vadd.f32 %v4195, %v4664
    %v4666 = vpop.f32.mrb[0].mxu0
    %v4667 = vadd.f32 %v4191, %v4666
    %v4668 = vpop.f32.mrb[0].mxu0
    %v4669 = vadd.f32 %v4195, %v4668
    %4670 = vmatprep.mubr.bf16.mxu0 0
    %4671 = vmatmul.mubr.bf16.gmra.mrb[0].mxu0 %v4067
    %v4672 = vpop.f32.mrb[0].mxu0
    %v4673 = vadd.f32 %v4191, %v4672
    %v4674 = vpop.f32.mrb[0].mxu0
    %v4675 = vadd.f32 %v4195, %v4674
    %v4676 = vpop.f32.mrb[0].mxu0
    %v4677 = vadd.f32 %v4191, %v4676
    %v4678 = vpop.f32.mrb[0].mxu0
    %v4679 = vadd.f32 %v4195, %v4678
    %4680 = vmatprep.mubr.bf16.mxu0 0
    %4681 = vmatmul.mubr.bf16.gmra.mrb[0].mxu0 %v4068
    %v4682 = vpop.f32.mrb[0].mxu0
    %v4683 = vadd.f32 %v4191, %v4682
    %v4684 = vpop.f32.mrb[0].mxu0
    %v4685 = vadd.f32 %v4195, %v4684
    %v4686 = vpop.f32.mrb[0].mxu0
    %v4687 = vadd.f32 %v4191, %v4686
    %v4688 = vpop.f32.mrb[0].mxu0
    %v4689 = vadd.f32 %v4195, %v4688
    %4690 = vmatprep.mubr.bf16.mxu0 0
    %4691 = vmatmul.mubr.bf16.gmra.mrb[0].mxu0 %v4069
    %v4692 = vpop.f32.mrb[0].mxu0
    %v4693 = vadd.f32 %v4191, %v4692
    %v4694 = vpop.f32.mrb[0].mxu0
    %v4695 = vadd.f32 %v4195, %v4694
    %v4696 = vpop.f32.mrb[0].mxu0
    %v4697 = vadd.f32 %v4191, %v4696
    %v4698 = vpop.f32.mrb[0].mxu0
    %v4699 = vadd.f32 %v4195, %v4698
    %4700 = vmatprep.mubr.bf16.mxu0 0
    %4701 = vmatmul.mubr.bf16.gmra.mrb[0].mxu0 %v4070
    %v4702 = vpop.f32.mrb[0].mxu0
    %v4703 = vadd.f32 %v4191, %v4702
    %v4704 = vpop.f32.mrb[0].mxu0
    %v4705 = vadd.f32 %v4195, %v4704
    %v4706 = vpop.f32.mrb[0].mxu0
    %v4707 = vadd.f32 %v4191, %v4706
    %v4708 = vpop.f32.mrb[0].mxu0
    %v4709 = vadd.f32 %v4195, %v4708
    %4710 = vmatprep.mubr.bf16.mxu0 0
    %4711 = vmatmul.mubr.bf16.gmra.mrb[0].mxu0 %v4071
    %v4712 = vpop.f32.mrb[0].mxu0
    %v4713 = vadd.f32 %v4191, %v4712
    %v4714 = vpop.f32.mrb[0].mxu0
    %v4715 = vadd.f32 %v4195, %v4714
    %v4716 = vpop.f32.mrb[0].mxu0
    %v4717 = vadd.f32 %v4191, %v4716
    %v4718 = vpop.f32.mrb[0].mxu0
    %v4719 = vadd.f32 %v4195, %v4718
    %4720 = vmatprep.mubr.bf16.mxu0 0
    %4721 = vmatmul.mubr.bf16.gmra.mrb[0].mxu0 %v4072
    %v4722 = vpop.f32.mrb[0].mxu0
    %v4723 = vadd.f32 %v4191, %v4722
    %v4724 = vpop.f32.mrb[0].mxu0
    %v4725 = vadd.f32 %v4195, %v4724
    %v4726 = vpop.f32.mrb[0].mxu0
    %v4727 = vadd.f32 %v4191, %v4726
    %v4728 = vpop.f32.mrb[0].mxu0
    %v4729 = vadd.f32 %v4195, %v4728
    %4730 = vmatprep.mubr.bf16.mxu0 0
    %4731 = vmatmul.mubr.bf16.gmra.mrb[0].mxu0 %v4073
    %v4732 = vpop.f32.mrb[0].mxu0
    %v4733 = vadd.f32 %v4191, %v4732
    %v4734 = vpop.f32.mrb[0].mxu0
    %v4735 = vadd.f32 %v4195, %v4734
    %v4736 = vpop.f32.mrb[0].mxu0
    %v4737 = vadd.f32 %v4191, %v4736
    %v4738 = vpop.f32.mrb[0].mxu0
    %v4739 = vadd.f32 %v4195, %v4738
    %4740 = vmatprep.mubr.bf16.mxu0 0
    %4741 = vmatmul.mubr.bf16.gmra.mrb[0].mxu0 %v4074
    %v4742 = vpop.f32.mrb[0].mxu0
    %v4743 = vadd.f32 %v4191, %v4742
    %v4744 = vpop.f32.mrb[0].mxu0
    %v4745 = vadd.f32 %v4195, %v4744
    %v4746 = vpop.f32.mrb[0].mxu0
    %v4747 = vadd.f32 %v4191, %v4746
    %v4748 = vpop.f32.mrb[0].mxu0
    %v4749 = vadd.f32 %v4195, %v4748
    %4750 = vmatprep.mubr.bf16.mxu0 0
    %4751 = vmatmul.mubr.bf16.gmra.mrb[0].mxu0 %v4075
    %v4752 = vpop.f32.mrb[0].mxu0
    %v4753 = vadd.f32 %v4191, %v4752
    %v4754 = vpop.f32.mrb[0].mxu0
    %v4755 = vadd.f32 %v4195, %v4754
    %v4756 = vpop.f32.mrb[0].mxu0
    %v4757 = vadd.f32 %v4191, %v4756
    %v4758 = vpop.f32.mrb[0].mxu0
    %v4759 = vadd.f32 %v4195, %v4758
    %4760 = vmatprep.mubr.bf16.mxu0 0
    %4761 = vmatmul.mubr.bf16.gmra.mrb[0].mxu0 %v4076
    %v4762 = vpop.f32.mrb[0].mxu0
    %v4763 = vadd.f32 %v4191, %v4762
    %v4764 = vpop.f32.mrb[0].mxu0
    %v4765 = vadd.f32 %v4195, %v4764
    %v4766 = vpop.f32.mrb[0].mxu0
    %v4767 = vadd.f32 %v4191, %v4766
    %v4768 = vpop.f32.mrb[0].mxu0
    %v4769 = vadd.f32 %v4195, %v4768
    %4770 = vmatprep.mubr.bf16.mxu0 0
    %4771 = vmatmul.mubr.bf16.gmra.mrb[0].mxu0 %v4077
    %v4772 = vpop.f32.mrb[0].mxu0
    %v4773 = vadd.f32 %v4191, %v4772
    %v4774 = vpop.f32.mrb[0].mxu0
    %v4775 = vadd.f32 %v4195, %v4774
    %v4776 = vpop.f32.mrb[0].mxu0
    %v4777 = vadd.f32 %v4191, %v4776
    %v4778 = vpop.f32.mrb[0].mxu0
    %v4779 = vadd.f32 %v4195, %v4778
    %4780 = vmatprep.mubr.bf16.mxu0 0
    %4781 = vmatmul.mubr.bf16.gmra.mrb[0].mxu0 %v4078
    %v4782 = vpop.f32.mrb[0].mxu0
    %v4783 = vadd.f32 %v4191, %v4782
    %v4784 = vpop.f32.mrb[0].mxu0
    %v4785 = vadd.f32 %v4195, %v4784
    %v4786 = vpop.f32.mrb[0].mxu0
    %v4787 = vadd.f32 %v4191, %v4786
    %v4788 = vpop.f32.mrb[0].mxu0
    %v4789 = vadd.f32 %v4195, %v4788
    %4790 = vmatprep.mubr.bf16.mxu0 0
    %4791 = vmatmul.mubr.bf16.gmra.mrb[0].mxu0 %v4079
    %v4792 = vpop.f32.mrb[0].mxu0
    %v4793 = vadd.f32 %v4191, %v4792
    %v4794 = vpop.f32.mrb[0].mxu0
    %v4795 = vadd.f32 %v4195, %v4794
    %v4796 = vpop.f32.mrb[0].mxu0
    %v4797 = vadd.f32 %v4191, %v4796
    %v4798 = vpop.f32.mrb[0].mxu0
    %v4799 = vadd.f32 %v4195, %v4798
    %4800 = vmatprep.mubr.bf16.mxu0 0
    %4801 = vmatmul.mubr.bf16.gmra.mrb[0].mxu0 %v4080
    %v4802 = vpop.f32.mrb[0].mxu0
    %v4803 = vadd.f32 %v4191, %v4802
    %v4804 = vpop.f32.mrb[0].mxu0
    %v4805 = vadd.f32 %v4195, %v4804
    %v4806 = vpop.f32.mrb[0].mxu0
    %v4807 = vadd.f32 %v4191, %v4806
    %v4808 = vpop.f32.mrb[0].mxu0
    %v4809 = vadd.f32 %v4195, %v4808
    %4810 = vmatprep.mubr.bf16.mxu0 0
    %4811 = vmatmul.mubr.bf16.gmra.mrb[0].mxu0 %v4081
    %v4812 = vpop.f32.mrb[0].mxu0
    %v4813 = vadd.f32 %v4191, %v4812
    %v4814 = vpop.f32.mrb[0].mxu0
    %v4815 = vadd.f32 %v4195, %v4814
    %v4816 = vpop.f32.mrb[0].mxu0
    %v4817 = vadd.f32 %v4191, %v4816
    %v4818 = vpop.f32.mrb[0].mxu0
    %v4819 = vadd.f32 %v4195, %v4818
    %4820 = vmatprep.mubr.bf16.mxu0 0
    %4821 = vmatmul.mubr.bf16.gmra.mrb[0].mxu0 %v4082
    %v4822 = vpop.f32.mrb[0].mxu0
    %v4823 = vadd.f32 %v4191, %v4822
    %v4824 = vpop.f32.mrb[0].mxu0
    %v4825 = vadd.f32 %v4195, %v4824
    %v4826 = vpop.f32.mrb[0].mxu0
    %v4827 = vadd.f32 %v4191, %v4826
    %v4828 = vpop.f32.mrb[0].mxu0
    %v4829 = vadd.f32 %v4195, %v4828
    %4830 = vmatprep.mubr.bf16.mxu0 0
    %4831 = vmatmul.mubr.bf16.gmra.mrb[0].mxu0 %v4083
    %v4832 = vpop.f32.mrb[0].mxu0
    %v4833 = vadd.f32 %v4191, %v4832
    %v4834 = vpop.f32.mrb[0].mxu0
    %v4835 = vadd.f32 %v4195, %v4834
    %v4836 = vpop.f32.mrb[0].mxu0
    %v4837 = vadd.f32 %v4191, %v4836
    %v4838 = vpop.f32.mrb[0].mxu0
    %v4839 = vadd.f32 %v4195, %v4838
    %4840 = vmatprep.mubr.bf16.mxu0 0
    %4841 = vmatmul.mubr.bf16.gmra.mrb[0].mxu0 %v4084
    %v4842 = vpop.f32.mrb[0].mxu0
    %v4843 = vadd.f32 %v4191, %v4842
    %v4844 = vpop.f32.mrb[0].mxu0
    %v4845 = vadd.f32 %v4195, %v4844
    %v4846 = vpop.f32.mrb[0].mxu0
    %v4847 = vadd.f32 %v4191, %v4846
    %v4848 = vpop.f32.mrb[0].mxu0
    %v4849 = vadd.f32 %v4195, %v4848
    %4850 = vmatprep.mubr.bf16.mxu0 0
    %4851 = vmatmul.mubr.bf16.gmra.mrb[0].mxu0 %v4085
    %v4852 = vpop.f32.mrb[0].mxu0
    %v4853 = vadd.f32 %v4191, %v4852
    %v4854 = vpop.f32.mrb[0].mxu0
    %v4855 = vadd.f32 %v4195, %v4854
    %v4856 = vpop.f32.mrb[0].mxu0
    %v4857 = vadd.f32 %v4191, %v4856
    %v4858 = vpop.f32.mrb[0].mxu0
    %v4859 = vadd.f32 %v4195, %v4858
    %4860 = vmatprep.mubr.bf16.mxu0 0
    %4861 = vmatmul.mubr.bf16.gmra.mrb[0].mxu0 %v4086
    %v4862 = vpop.f32.mrb[0].mxu0
    %v4863 = vadd.f32 %v4191, %v4862
    %v4864 = vpop.f32.mrb[0].mxu0
    %v4865 = vadd.f32 %v4195, %v4864
    %v4866 = vpop.f32.mrb[0].mxu0
    %v4867 = vadd.f32 %v4191, %v4866
    %v4868 = vpop.f32.mrb[0].mxu0
    %v4869 = vadd.f32 %v4195, %v4868
    %4870 = vmatprep.mubr.bf16.mxu0 0
    %4871 = vmatmul.mubr.bf16.gmra.mrb[0].mxu0 %v4087
    %v4872 = vpop.f32.mrb[0].mxu0
    %v4873 = vadd.f32 %v4191, %v4872
    %v4874 = vpop.f32.mrb[0].mxu0
    %v4875 = vadd.f32 %v4195, %v4874
    %v4876 = vpop.f32.mrb[0].mxu0
    %v4877 = vadd.f32 %v4191, %v4876
    %v4878 = vpop.f32.mrb[0].mxu0
    %v4879 = vadd.f32 %v4195, %v4878
    %4880 = vmatprep.mubr.bf16.mxu0 0
    %4881 = vmatmul.mubr.bf16.gmra.mrb[0].mxu0 %v4088
    %v4882 = vpop.f32.mrb[0].mxu0
    %v4883 = vadd.f32 %v4191, %v4882
    %v4884 = vpop.f32.mrb[0].mxu0
    %v4885 = vadd.f32 %v4195, %v4884
    %v4886 = vpop.f32.mrb[0].mxu0
    %v4887 = vadd.f32 %v4191, %v4886
    %v4888 = vpop.f32.mrb[0].mxu0
    %v4889 = vadd.f32 %v4195, %v4888
    %4890 = vmatprep.mubr.bf16.mxu0 0
    %4891 = vmatmul.mubr.bf16.gmra.mrb[0].mxu0 %v4089
    %v4892 = vpop.f32.mrb[0].mxu0
    %v4893 = vadd.f32 %v4191, %v4892
    %v4894 = vpop.f32.mrb[0].mxu0
    %v4895 = vadd.f32 %v4195, %v4894
    %v4896 = vpop.f32.mrb[0].mxu0
    %v4897 = vadd.f32 %v4191, %v4896
    %v4898 = vpop.f32.mrb[0].mxu0
    %v4899 = vadd.f32 %v4195, %v4898
    %4900 = vmatprep.mubr.bf16.mxu0 0
    %4901 = vmatmul.mubr.bf16.gmra.mrb[0].mxu0 %v4090
    %v4902 = vpop.f32.mrb[0].mxu0
    %v4903 = vadd.f32 %v4191, %v4902
    %v4904 = vpop.f32.mrb[0].mxu0
    %v4905 = vadd.f32 %v4195, %v4904
    %v4906 = vpop.f32.mrb[0].mxu0
    %v4907 = vadd.f32 %v4191, %v4906
    %v4908 = vpop.f32.mrb[0].mxu0
    %v4909 = vadd.f32 %v4195, %v4908
    %4910 = vmatprep.mubr.bf16.mxu0 0
    %4911 = vmatmul.mubr.bf16.gmra.mrb[0].mxu0 %v4091
    %v4912 = vpop.f32.mrb[0].mxu0
    %v4913 = vadd.f32 %v4191, %v4912
    %v4914 = vpop.f32.mrb[0].mxu0
    %v4915 = vadd.f32 %v4195, %v4914
    %v4916 = vpop.f32.mrb[0].mxu0
    %v4917 = vadd.f32 %v4191, %v4916
    %v4918 = vpop.f32.mrb[0].mxu0
    %v4919 = vadd.f32 %v4195, %v4918
    %4920 = vmatprep.mubr.bf16.mxu0 0
    %4921 = vmatmul.mubr.bf16.gmra.mrb[0].mxu0 %v4092
    %v4922 = vpop.f32.mrb[0].mxu0
    %v4923 = vadd.f32 %v4191, %v4922
    %v4924 = vpop.f32.mrb[0].mxu0
    %v4925 = vadd.f32 %v4195, %v4924
    %v4926 = vpop.f32.mrb[0].mxu0
    %v4927 = vadd.f32 %v4191, %v4926
    %v4928 = vpop.f32.mrb[0].mxu0
    %v4929 = vadd.f32 %v4195, %v4928
    %4930 = vmatprep.mubr.bf16.mxu0 0
    %4931 = vmatmul.mubr.bf16.gmra.mrb[0].mxu0 %v4093
    %v4932 = vpop.f32.mrb[0].mxu0
    %v4933 = vadd.f32 %v4191, %v4932
    %v4934 = vpop.f32.mrb[0].mxu0
    %v4935 = vadd.f32 %v4195, %v4934
    %v4936 = vpop.f32.mrb[0].mxu0
    %v4937 = vadd.f32 %v4191, %v4936
    %v4938 = vpop.f32.mrb[0].mxu0
    %v4939 = vadd.f32 %v4195, %v4938
    %4940 = vmatprep.mubr.bf16.mxu0 0
    %4941 = vmatmul.mubr.bf16.gmra.mrb[0].mxu0 %v4094
    %v4942 = vpop.f32.mrb[0].mxu0
    %v4943 = vadd.f32 %v4191, %v4942
    %v4944 = vpop.f32.mrb[0].mxu0
    %v4945 = vadd.f32 %v4195, %v4944
    %v4946 = vpop.f32.mrb[0].mxu0
    %v4947 = vadd.f32 %v4191, %v4946
    %v4948 = vpop.f32.mrb[0].mxu0
    %v4949 = vadd.f32 %v4195, %v4948
    %4950 = vmatprep.mubr.bf16.mxu0 0
    %4951 = vmatmul.mubr.bf16.gmra.mrb[0].mxu0 %v4095
    %v4952 = vpop.f32.mrb[0].mxu0
    %v4953 = vadd.f32 %v4191, %v4952
    %v4954 = vpop.f32.mrb[0].mxu0
    %v4955 = vadd.f32 %v4195, %v4954
    %v4956 = vpop.f32.mrb[0].mxu0
    %v4957 = vadd.f32 %v4191, %v4956
    %v4958 = vpop.f32.mrb[0].mxu0
    %v4959 = vadd.f32 %v4195, %v4958
    %4960 = vmatprep.mubr.bf16.mxu0 0
    %4961 = vmatmul.mubr.bf16.gmra.mrb[0].mxu0 %v4096
    %v4962 = vpop.f32.mrb[0].mxu0
    %v4963 = vadd.f32 %v4191, %v4962
    %v4964 = vpop.f32.mrb[0].mxu0
    %v4965 = vadd.f32 %v4195, %v4964
    %v4966 = vpop.f32.mrb[0].mxu0
    %v4967 = vadd.f32 %v4191, %v4966
    %v4968 = vpop.f32.mrb[0].mxu0
    %v4969 = vadd.f32 %v4195, %v4968
    %4970 = vmatprep.mubr.bf16.mxu0 0
    %4971 = vmatmul.mubr.bf16.gmra.mrb[0].mxu0 %v4097
    %v4972 = vpop.f32.mrb[0].mxu0
    %v4973 = vadd.f32 %v4191, %v4972
    %v4974 = vpop.f32.mrb[0].mxu0
    %v4975 = vadd.f32 %v4195, %v4974
    %v4976 = vpop.f32.mrb[0].mxu0
    %v4977 = vadd.f32 %v4191, %v4976
    %v4978 = vpop.f32.mrb[0].mxu0
    %v4979 = vadd.f32 %v4195, %v4978
    %4980 = vmatprep.mubr.bf16.mxu0 0
    %4981 = vmatmul.mubr.bf16.gmra.mrb[0].mxu0 %v4098
    %v4982 = vpop.f32.mrb[0].mxu0
    %v4983 = vadd.f32 %v4191, %v4982
    %v4984 = vpop.f32.mrb[0].mxu0
    %v4985 = vadd.f32 %v4195, %v4984
    %v4986 = vpop.f32.mrb[0].mxu0
    %v4987 = vadd.f32 %v4191, %v4986
    %v4988 = vpop.f32.mrb[0].mxu0
    %v4989 = vadd.f32 %v4195, %v4988
    %4990 = vmatprep.mubr.bf16.mxu0 0
    %4991 = vmatmul.mubr.bf16.gmra.mrb[0].mxu0 %v4099
    %v4992 = vpop.f32.mrb[0].mxu0
    %v4993 = vadd.f32 %v4191, %v4992
    %v4994 = vpop.f32.mrb[0].mxu0
    %v4995 = vadd.f32 %v4195, %v4994
    %v4996 = vpop.f32.mrb[0].mxu0
    %v4997 = vadd.f32 %v4191, %v4996
    %v4998 = vpop.f32.mrb[0].mxu0
    %v4999 = vadd.f32 %v4195, %v4998
    %5000 = vmatprep.mubr.bf16.mxu0 0
    %5001 = vmatmul.mubr.bf16.gmra.mrb[0].mxu0 %v4100
    %v5002 = vpop.f32.mrb[0].mxu0
    %v5003 = vadd.f32 %v4191, %v5002
    %v5004 = vpop.f32.mrb[0].mxu0
    %v5005 = vadd.f32 %v4195, %v5004
    %v5006 = vpop.f32.mrb[0].mxu0
    %v5007 = vadd.f32 %v4191, %v5006
    %v5008 = vpop.f32.mrb[0].mxu0
    %v5009 = vadd.f32 %v4195, %v5008
    %5010 = vmatprep.mubr.bf16.mxu0 0
    %5011 = vmatmul.mubr.bf16.gmra.mrb[0].mxu0 %v4101
    %v5012 = vpop.f32.mrb[0].mxu0
    %v5013 = vadd.f32 %v4191, %v5012
    %v5014 = vpop.f32.mrb[0].mxu0
    %v5015 = vadd.f32 %v4195, %v5014
    %v5016 = vpop.f32.mrb[0].mxu0
    %v5017 = vadd.f32 %v4191, %v5016
    %v5018 = vpop.f32.mrb[0].mxu0
    %v5019 = vadd.f32 %v4195, %v5018
    %5020 = vmatprep.mubr.bf16.mxu0 0
    %5021 = vmatmul.mubr.bf16.gmra.mrb[0].mxu0 %v4102
    %v5022 = vpop.f32.mrb[0].mxu0
    %v5023 = vadd.f32 %v4191, %v5022
    %v5024 = vpop.f32.mrb[0].mxu0
    %v5025 = vadd.f32 %v4195, %v5024
    %v5026 = vpop.f32.mrb[0].mxu0
    %v5027 = vadd.f32 %v4191, %v5026
    %v5028 = vpop.f32.mrb[0].mxu0
    %v5029 = vadd.f32 %v4195, %v5028
    %5030 = vmatprep.mubr.bf16.mxu0 0
    %5031 = vmatmul.mubr.bf16.gmra.mrb[0].mxu0 %v4103
    %v5032 = vpop.f32.mrb[0].mxu0
    %v5033 = vadd.f32 %v4191, %v5032
    %v5034 = vpop.f32.mrb[0].mxu0
    %v5035 = vadd.f32 %v4195, %v5034
    %v5036 = vpop.f32.mrb[0].mxu0
    %v5037 = vadd.f32 %v4191, %v5036
    %v5038 = vpop.f32.mrb[0].mxu0
    %v5039 = vadd.f32 %v4195, %v5038
    %5040 = vmatprep.mubr.bf16.mxu0 0
    %5041 = vmatmul.mubr.bf16.gmra.mrb[0].mxu0 %v4104
    %v5042 = vpop.f32.mrb[0].mxu0
    %v5043 = vadd.f32 %v4191, %v5042
    %v5044 = vpop.f32.mrb[0].mxu0
    %v5045 = vadd.f32 %v4195, %v5044
    %v5046 = vpop.f32.mrb[0].mxu0
    %v5047 = vadd.f32 %v4191, %v5046
    %v5048 = vpop.f32.mrb[0].mxu0
    %v5049 = vadd.f32 %v4195, %v5048
    %5050 = vmatprep.mubr.bf16.mxu0 0
    %5051 = vmatmul.mubr.bf16.gmra.mrb[0].mxu0 %v4105
    %v5052 = vpop.f32.mrb[0].mxu0
    %v5053 = vadd.f32 %v4191, %v5052
    %v5054 = vpop.f32.mrb[0].mxu0
    %v5055 = vadd.f32 %v4195, %v5054
    %v5056 = vpop.f32.mrb[0].mxu0
    %v5057 = vadd.f32 %v4191, %v5056
    %v5058 = vpop.f32.mrb[0].mxu0
    %v5059 = vadd.f32 %v4195, %v5058
    %5060 = vmatprep.mubr.bf16.mxu0 0
    %5061 = vmatmul.mubr.bf16.gmra.mrb[0].mxu0 %v4106
    %v5062 = vpop.f32.mrb[0].mxu0
    %v5063 = vadd.f32 %v4191, %v5062
    %v5064 = vpop.f32.mrb[0].mxu0
    %v5065 = vadd.f32 %v4195, %v5064
    %v5066 = vpop.f32.mrb[0].mxu0
    %v5067 = vadd.f32 %v4191, %v5066
    %v5068 = vpop.f32.mrb[0].mxu0
    %v5069 = vadd.f32 %v4195, %v5068
    %5070 = vmatprep.mubr.bf16.mxu0 0
    %5071 = vmatmul.mubr.bf16.gmra.mrb[0].mxu0 %v4107
    %v5072 = vpop.f32.mrb[0].mxu0
    %v5073 = vadd.f32 %v4191, %v5072
    %v5074 = vpop.f32.mrb[0].mxu0
    %v5075 = vadd.f32 %v4195, %v5074
    %v5076 = vpop.f32.mrb[0].mxu0
    %v5077 = vadd.f32 %v4191, %v5076
    %v5078 = vpop.f32.mrb[0].mxu0
    %v5079 = vadd.f32 %v4195, %v5078
    %5080 = vmatprep.mubr.bf16.mxu0 0
    %5081 = vmatmul.mubr.bf16.gmra.mrb[0].mxu0 %v4108
    %v5082 = vpop.f32.mrb[0].mxu0
    %v5083 = vadd.f32 %v4191, %v5082
    %v5084 = vpop.f32.mrb[0].mxu0
    %v5085 = vadd.f32 %v4195, %v5084
    %v5086 = vpop.f32.mrb[0].mxu0
    %v5087 = vadd.f32 %v4191, %v5086
    %v5088 = vpop.f32.mrb[0].mxu0
    %v5089 = vadd.f32 %v4195, %v5088
    %5090 = vmatprep.mubr.bf16.mxu0 0
    %5091 = vmatmul.mubr.bf16.gmra.mrb[0].mxu0 %v4109
    %v5092 = vpop.f32.mrb[0].mxu0
    %v5093 = vadd.f32 %v4191, %v5092
    %v5094 = vpop.f32.mrb[0].mxu0
    %v5095 = vadd.f32 %v4195, %v5094
    %v5096 = vpop.f32.mrb[0].mxu0
    %v5097 = vadd.f32 %v4191, %v5096
    %v5098 = vpop.f32.mrb[0].mxu0
    %v5099 = vadd.f32 %v4195, %v5098
    %5100 = vmatprep.mubr.bf16.mxu0 0
    %5101 = vmatmul.mubr.bf16.gmra.mrb[0].mxu0 %v4110
    %v5102 = vpop.f32.mrb[0].mxu0
    %v5103 = vadd.f32 %v4191, %v5102
    %v5104 = vpop.f32.mrb[0].mxu0
    %v5105 = vadd.f32 %v4195, %v5104
    %v5106 = vpop.f32.mrb[0].mxu0
    %v5107 = vadd.f32 %v4191, %v5106
    %v5108 = vpop.f32.mrb[0].mxu0
    %v5109 = vadd.f32 %v4195, %v5108
    %5110 = vmatprep.mubr.bf16.mxu0 0
    %5111 = vmatmul.mubr.bf16.gmra.mrb[0].mxu0 %v4111
    %v5112 = vpop.f32.mrb[0].mxu0
    %v5113 = vadd.f32 %v4191, %v5112
    %v5114 = vpop.f32.mrb[0].mxu0
    %v5115 = vadd.f32 %v4195, %v5114
    %v5116 = vpop.f32.mrb[0].mxu0
    %v5117 = vadd.f32 %v4191, %v5116
    %v5118 = vpop.f32.mrb[0].mxu0
    %v5119 = vadd.f32 %v4195, %v5118
    %5120 = vmatprep.mubr.bf16.mxu0 0
    %5121 = vmatmul.mubr.bf16.gmra.mrb[0].mxu0 %v4112
    %v5122 = vpop.f32.mrb[0].mxu0
    %v5123 = vadd.f32 %v4191, %v5122
    %v5124 = vpop.f32.mrb[0].mxu0
    %v5125 = vadd.f32 %v4195, %v5124
    %v5126 = vpop.f32.mrb[0].mxu0
    %v5127 = vadd.f32 %v4191, %v5126
    %v5128 = vpop.f32.mrb[0].mxu0
    %v5129 = vadd.f32 %v4195, %v5128
    %5130 = vmatprep.mubr.bf16.mxu0 0
    %5131 = vmatmul.mubr.bf16.gmra.mrb[0].mxu0 %v4113
    %v5132 = vpop.f32.mrb[0].mxu0
    %v5133 = vadd.f32 %v4191, %v5132
    %v5134 = vpop.f32.mrb[0].mxu0
    %v5135 = vadd.f32 %v4195, %v5134
    %v5136 = vpop.f32.mrb[0].mxu0
    %v5137 = vadd.f32 %v4191, %v5136
    %v5138 = vpop.f32.mrb[0].mxu0
    %v5139 = vadd.f32 %v4195, %v5138
    %5140 = vmatprep.mubr.bf16.mxu0 0
    %5141 = vmatmul.mubr.bf16.gmra.mrb[0].mxu0 %v4114
    %v5142 = vpop.f32.mrb[0].mxu0
    %v5143 = vadd.f32 %v4191, %v5142
    %v5144 = vpop.f32.mrb[0].mxu0
    %v5145 = vadd.f32 %v4195, %v5144
    %v5146 = vpop.f32.mrb[0].mxu0
    %v5147 = vadd.f32 %v4191, %v5146
    %v5148 = vpop.f32.mrb[0].mxu0
    %v5149 = vadd.f32 %v4195, %v5148
    %5150 = vmatprep.mubr.bf16.mxu0 0
    %5151 = vmatmul.mubr.bf16.gmra.mrb[0].mxu0 %v4115
    %v5152 = vpop.f32.mrb[0].mxu0
    %v5153 = vadd.f32 %v4191, %v5152
    %v5154 = vpop.f32.mrb[0].mxu0
    %v5155 = vadd.f32 %v4195, %v5154
    %v5156 = vpop.f32.mrb[0].mxu0
    %v5157 = vadd.f32 %v4191, %v5156
    %v5158 = vpop.f32.mrb[0].mxu0
    %v5159 = vadd.f32 %v4195, %v5158
    %5160 = vmatprep.mubr.bf16.mxu0 0
    %5161 = vmatmul.mubr.bf16.gmra.mrb[0].mxu0 %v4116
    %v5162 = vpop.f32.mrb[0].mxu0
    %v5163 = vadd.f32 %v4191, %v5162
    %v5164 = vpop.f32.mrb[0].mxu0
    %v5165 = vadd.f32 %v4195, %v5164
    %v5166 = vpop.f32.mrb[0].mxu0
    %v5167 = vadd.f32 %v4191, %v5166
    %v5168 = vpop.f32.mrb[0].mxu0
    %v5169 = vadd.f32 %v4195, %v5168
    %5170 = vmatprep.mubr.bf16.mxu0 0
    %5171 = vmatmul.mubr.bf16.gmra.mrb[0].mxu0 %v4117
    %v5172 = vpop.f32.mrb[0].mxu0
    %v5173 = vadd.f32 %v4191, %v5172
    %v5174 = vpop.f32.mrb[0].mxu0
    %v5175 = vadd.f32 %v4195, %v5174
    %v5176 = vpop.f32.mrb[0].mxu0
    %v5177 = vadd.f32 %v4191, %v5176
    %v5178 = vpop.f32.mrb[0].mxu0
    %v5179 = vadd.f32 %v4195, %v5178
    %5180 = vmatprep.mubr.bf16.mxu0 0
    %5181 = vmatmul.mubr.bf16.gmra.mrb[0].mxu0 %v4118
    %v5182 = vpop.f32.mrb[0].mxu0
    %v5183 = vadd.f32 %v4191, %v5182
    %v5184 = vpop.f32.mrb[0].mxu0
    %v5185 = vadd.f32 %v4195, %v5184
    %v5186 = vpop.f32.mrb[0].mxu0
    %v5187 = vadd.f32 %v4191, %v5186
    %v5188 = vpop.f32.mrb[0].mxu0
    %v5189 = vadd.f32 %v4195, %v5188
    %5190 = vmatprep.mubr.bf16.mxu0 0
    %5191 = vmatmul.mubr.bf16.gmra.mrb[0].mxu0 %v4119
    %v5192 = vpop.f32.mrb[0].mxu0
    %v5193 = vadd.f32 %v4191, %v5192
    %v5194 = vpop.f32.mrb[0].mxu0
    %v5195 = vadd.f32 %v4195, %v5194
    %v5196 = vpop.f32.mrb[0].mxu0
    %v5197 = vadd.f32 %v4191, %v5196
    %v5198 = vpop.f32.mrb[0].mxu0
    %v5199 = vadd.f32 %v4195, %v5198
    %5200 = vmatprep.mubr.bf16.mxu0 0
    %5201 = vmatmul.mubr.bf16.gmra.mrb[0].mxu0 %v4120
    %v5202 = vpop.f32.mrb[0].mxu0
    %v5203 = vadd.f32 %v4191, %v5202
    %v5204 = vpop.f32.mrb[0].mxu0
    %v5205 = vadd.f32 %v4195, %v5204
    %v5206 = vpop.f32.mrb[0].mxu0
    %v5207 = vadd.f32 %v4191, %v5206
    %v5208 = vpop.f32.mrb[0].mxu0
    %v5209 = vadd.f32 %v4195, %v5208
    %5210 = vmatprep.mubr.bf16.mxu0 0
    %5211 = vmatmul.mubr.bf16.gmra.mrb[0].mxu0 %v4121
    %v5212 = vpop.f32.mrb[0].mxu0
    %v5213 = vadd.f32 %v4191, %v5212
    %v5214 = vpop.f32.mrb[0].mxu0
    %v5215 = vadd.f32 %v4195, %v5214
    %v5216 = vpop.f32.mrb[0].mxu0
    %v5217 = vadd.f32 %v4191, %v5216
    %v5218 = vpop.f32.mrb[0].mxu0
    %v5219 = vadd.f32 %v4195, %v5218
    %5220 = vdwg.mxu0
    %5221 = vmatprep.subr.bf16.mxu0 %v4423
    %5222 = vmatpush1.bf16.msra.mxu0 %v4422
    %5223 = vmatprep.subr.bf16.mxu0 %v4431
    %5224 = vmatpush1.bf16.msra.mxu0 %v4430
    %5225 = vmatprep.subr.bf16.mxu0 %v4439
    %5226 = vmatpush1.bf16.msra.mxu0 %v4438
    %5227 = vmatprep.subr.bf16.mxu0 %v4447
    %5228 = vmatpush1.bf16.msra.mxu0 %v4446
    %5229 = vmatprep.subr.bf16.mxu0 %v4455
    %5230 = vmatpush1.bf16.msra.mxu0 %v4454
    %5231 = vmatprep.subr.bf16.mxu0 %v4463
    %5232 = vmatpush1.bf16.msra.mxu0 %v4462
    %5233 = vmatprep.subr.bf16.mxu0 %v4471
    %5234 = vmatpush1.bf16.msra.mxu0 %v4470
    %5235 = vmatprep.subr.bf16.mxu0 %v4479
    %5236 = vmatpush1.bf16.msra.mxu0 %v4478
    %5237 = vmatprep.subr.bf16.mxu0 0
    %5238 = vmatpush1.bf16.msra.mxu0 0
    %5239 = vmatprep.subr.bf16.mxu0 0
    %5240 = vmatpush1.bf16.msra.mxu0 0
    %5241 = vmatprep.subr.bf16.mxu0 0
    %5242 = vmatpush1.bf16.msra.mxu0 0
    %5243 = vmatprep.subr.bf16.mxu0 0
    %5244 = vmatpush1.bf16.msra.mxu0 0
    %5245 = vmatprep.subr.bf16.mxu0 0
    %5246 = vmatpush1.bf16.msra.mxu0 0
    %5247 = vmatprep.subr.bf16.mxu0 0
    %5248 = vmatpush1.bf16.msra.mxu0 0
    %5249 = vmatprep.subr.bf16.mxu0 0
    %5250 = vmatpush1.bf16.msra.mxu0 0
    %5251 = vmatprep.subr.bf16.mxu0 0
    %5252 = vmatpush1.bf16.msra.mxu0 0
    %5253 = vmatprep.mubr.bf16.mxu0 0
    %5254 = vmatmul.mubr.bf16.gmra.mrb[0].mxu0 %v4058
    %v5255 = vpop.f32.mrb[0].mxu0
    %v5256 = vadd.f32 %v4199, %v5255
    %v5257 = vpop.f32.mrb[0].mxu0
    %v5258 = vadd.f32 %v4203, %v5257
    %v5259 = vpop.f32.mrb[0].mxu0
    %v5260 = vadd.f32 %v4199, %v5259
    %v5261 = vpop.f32.mrb[0].mxu0
    %v5262 = vadd.f32 %v4203, %v5261
    %5263 = vmatprep.mubr.bf16.mxu0 0
    %5264 = vmatmul.mubr.bf16.gmra.mrb[0].mxu0 %v4059
    %v5265 = vpop.f32.mrb[0].mxu0
    %v5266 = vadd.f32 %v4199, %v5265
    %v5267 = vpop.f32.mrb[0].mxu0
    %v5268 = vadd.f32 %v4203, %v5267
    %v5269 = vpop.f32.mrb[0].mxu0
    %v5270 = vadd.f32 %v4199, %v5269
    %v5271 = vpop.f32.mrb[0].mxu0
    %v5272 = vadd.f32 %v4203, %v5271
    %5273 = vmatprep.mubr.bf16.mxu0 0
    %5274 = vmatmul.mubr.bf16.gmra.mrb[0].mxu0 %v4060
    %v5275 = vpop.f32.mrb[0].mxu0
    %v5276 = vadd.f32 %v4199, %v5275
    %v5277 = vpop.f32.mrb[0].mxu0
    %v5278 = vadd.f32 %v4203, %v5277
    %v5279 = vpop.f32.mrb[0].mxu0
    %v5280 = vadd.f32 %v4199, %v5279
    %v5281 = vpop.f32.mrb[0].mxu0
    %v5282 = vadd.f32 %v4203, %v5281
    %5283 = vmatprep.mubr.bf16.mxu0 0
    %5284 = vmatmul.mubr.bf16.gmra.mrb[0].mxu0 %v4061
    %v5285 = vpop.f32.mrb[0].mxu0
    %v5286 = vadd.f32 %v4199, %v5285
    %v5287 = vpop.f32.mrb[0].mxu0
    %v5288 = vadd.f32 %v4203, %v5287
    %v5289 = vpop.f32.mrb[0].mxu0
    %v5290 = vadd.f32 %v4199, %v5289
    %v5291 = vpop.f32.mrb[0].mxu0
    %v5292 = vadd.f32 %v4203, %v5291
    %5293 = vmatprep.mubr.bf16.mxu0 0
    %5294 = vmatmul.mubr.bf16.gmra.mrb[0].mxu0 %v4062
    %v5295 = vpop.f32.mrb[0].mxu0
    %v5296 = vadd.f32 %v4199, %v5295
    %v5297 = vpop.f32.mrb[0].mxu0
    %v5298 = vadd.f32 %v4203, %v5297
    %v5299 = vpop.f32.mrb[0].mxu0
    %v5300 = vadd.f32 %v4199, %v5299
    %v5301 = vpop.f32.mrb[0].mxu0
    %v5302 = vadd.f32 %v4203, %v5301
    %5303 = vmatprep.mubr.bf16.mxu0 0
    %5304 = vmatmul.mubr.bf16.gmra.mrb[0].mxu0 %v4063
    %v5305 = vpop.f32.mrb[0].mxu0
    %v5306 = vadd.f32 %v4199, %v5305
    %v5307 = vpop.f32.mrb[0].mxu0
    %v5308 = vadd.f32 %v4203, %v5307
    %v5309 = vpop.f32.mrb[0].mxu0
    %v5310 = vadd.f32 %v4199, %v5309
    %v5311 = vpop.f32.mrb[0].mxu0
    %v5312 = vadd.f32 %v4203, %v5311
    %5313 = vmatprep.mubr.bf16.mxu0 0
    %5314 = vmatmul.mubr.bf16.gmra.mrb[0].mxu0 %v4064
    %v5315 = vpop.f32.mrb[0].mxu0
    %v5316 = vadd.f32 %v4199, %v5315
    %v5317 = vpop.f32.mrb[0].mxu0
    %v5318 = vadd.f32 %v4203, %v5317
    %v5319 = vpop.f32.mrb[0].mxu0
    %v5320 = vadd.f32 %v4199, %v5319
    %v5321 = vpop.f32.mrb[0].mxu0
    %v5322 = vadd.f32 %v4203, %v5321
    %5323 = vmatprep.mubr.bf16.mxu0 0
    %5324 = vmatmul.mubr.bf16.gmra.mrb[0].mxu0 %v4065
    %v5325 = vpop.f32.mrb[0].mxu0
    %v5326 = vadd.f32 %v4199, %v5325
    %v5327 = vpop.f32.mrb[0].mxu0
    %v5328 = vadd.f32 %v4203, %v5327
    %v5329 = vpop.f32.mrb[0].mxu0
    %v5330 = vadd.f32 %v4199, %v5329
    %v5331 = vpop.f32.mrb[0].mxu0
    %v5332 = vadd.f32 %v4203, %v5331
    %5333 = vmatprep.mubr.bf16.mxu0 0
    %5334 = vmatmul.mubr.bf16.gmra.mrb[0].mxu0 %v4066
    %v5335 = vpop.f32.mrb[0].mxu0
    %v5336 = vadd.f32 %v4199, %v5335
    %v5337 = vpop.f32.mrb[0].mxu0
    %v5338 = vadd.f32 %v4203, %v5337
    %v5339 = vpop.f32.mrb[0].mxu0
    %v5340 = vadd.f32 %v4199, %v5339
    %v5341 = vpop.f32.mrb[0].mxu0
    %v5342 = vadd.f32 %v4203, %v5341
    %5343 = vmatprep.mubr.bf16.mxu0 0
    %5344 = vmatmul.mubr.bf16.gmra.mrb[0].mxu0 %v4067
    %v5345 = vpop.f32.mrb[0].mxu0
    %v5346 = vadd.f32 %v4199, %v5345
    %v5347 = vpop.f32.mrb[0].mxu0
    %v5348 = vadd.f32 %v4203, %v5347
    %v5349 = vpop.f32.mrb[0].mxu0
    %v5350 = vadd.f32 %v4199, %v5349
    %v5351 = vpop.f32.mrb[0].mxu0
    %v5352 = vadd.f32 %v4203, %v5351
    %5353 = vmatprep.mubr.bf16.mxu0 0
    %5354 = vmatmul.mubr.bf16.gmra.mrb[0].mxu0 %v4068
    %v5355 = vpop.f32.mrb[0].mxu0
    %v5356 = vadd.f32 %v4199, %v5355
    %v5357 = vpop.f32.mrb[0].mxu0
    %v5358 = vadd.f32 %v4203, %v5357
    %v5359 = vpop.f32.mrb[0].mxu0
    %v5360 = vadd.f32 %v4199, %v5359
    %v5361 = vpop.f32.mrb[0].mxu0
    %v5362 = vadd.f32 %v4203, %v5361
    %5363 = vmatprep.mubr.bf16.mxu0 0
    %5364 = vmatmul.mubr.bf16.gmra.mrb[0].mxu0 %v4069
    %v5365 = vpop.f32.mrb[0].mxu0
    %v5366 = vadd.f32 %v4199, %v5365
    %v5367 = vpop.f32.mrb[0].mxu0
    %v5368 = vadd.f32 %v4203, %v5367
    %v5369 = vpop.f32.mrb[0].mxu0
    %v5370 = vadd.f32 %v4199, %v5369
    %v5371 = vpop.f32.mrb[0].mxu0
    %v5372 = vadd.f32 %v4203, %v5371
    %5373 = vmatprep.mubr.bf16.mxu0 0
    %5374 = vmatmul.mubr.bf16.gmra.mrb[0].mxu0 %v4070
    %v5375 = vpop.f32.mrb[0].mxu0
    %v5376 = vadd.f32 %v4199, %v5375
    %v5377 = vpop.f32.mrb[0].mxu0
    %v5378 = vadd.f32 %v4203, %v5377
    %v5379 = vpop.f32.mrb[0].mxu0
    %v5380 = vadd.f32 %v4199, %v5379
    %v5381 = vpop.f32.mrb[0].mxu0
    %v5382 = vadd.f32 %v4203, %v5381
    %5383 = vmatprep.mubr.bf16.mxu0 0
    %5384 = vmatmul.mubr.bf16.gmra.mrb[0].mxu0 %v4071
    %v5385 = vpop.f32.mrb[0].mxu0
    %v5386 = vadd.f32 %v4199, %v5385
    %v5387 = vpop.f32.mrb[0].mxu0
    %v5388 = vadd.f32 %v4203, %v5387
    %v5389 = vpop.f32.mrb[0].mxu0
    %v5390 = vadd.f32 %v4199, %v5389
    %v5391 = vpop.f32.mrb[0].mxu0
    %v5392 = vadd.f32 %v4203, %v5391
    %5393 = vmatprep.mubr.bf16.mxu0 0
    %5394 = vmatmul.mubr.bf16.gmra.mrb[0].mxu0 %v4072
    %v5395 = vpop.f32.mrb[0].mxu0
    %v5396 = vadd.f32 %v4199, %v5395
    %v5397 = vpop.f32.mrb[0].mxu0
    %v5398 = vadd.f32 %v4203, %v5397
    %v5399 = vpop.f32.mrb[0].mxu0
    %v5400 = vadd.f32 %v4199, %v5399
    %v5401 = vpop.f32.mrb[0].mxu0
    %v5402 = vadd.f32 %v4203, %v5401
    %5403 = vmatprep.mubr.bf16.mxu0 0
    %5404 = vmatmul.mubr.bf16.gmra.mrb[0].mxu0 %v4073
    %v5405 = vpop.f32.mrb[0].mxu0
    %v5406 = vadd.f32 %v4199, %v5405
    %v5407 = vpop.f32.mrb[0].mxu0
    %v5408 = vadd.f32 %v4203, %v5407
    %v5409 = vpop.f32.mrb[0].mxu0
    %v5410 = vadd.f32 %v4199, %v5409
    %v5411 = vpop.f32.mrb[0].mxu0
    %v5412 = vadd.f32 %v4203, %v5411
    %5413 = vmatprep.mubr.bf16.mxu0 0
    %5414 = vmatmul.mubr.bf16.gmra.mrb[0].mxu0 %v4074
    %v5415 = vpop.f32.mrb[0].mxu0
    %v5416 = vadd.f32 %v4199, %v5415
    %v5417 = vpop.f32.mrb[0].mxu0
    %v5418 = vadd.f32 %v4203, %v5417
    %v5419 = vpop.f32.mrb[0].mxu0
    %v5420 = vadd.f32 %v4199, %v5419
    %v5421 = vpop.f32.mrb[0].mxu0
    %v5422 = vadd.f32 %v4203, %v5421
    %5423 = vmatprep.mubr.bf16.mxu0 0
    %5424 = vmatmul.mubr.bf16.gmra.mrb[0].mxu0 %v4075
    %v5425 = vpop.f32.mrb[0].mxu0
    %v5426 = vadd.f32 %v4199, %v5425
    %v5427 = vpop.f32.mrb[0].mxu0
    %v5428 = vadd.f32 %v4203, %v5427
    %v5429 = vpop.f32.mrb[0].mxu0
    %v5430 = vadd.f32 %v4199, %v5429
    %v5431 = vpop.f32.mrb[0].mxu0
    %v5432 = vadd.f32 %v4203, %v5431
    %5433 = vmatprep.mubr.bf16.mxu0 0
    %5434 = vmatmul.mubr.bf16.gmra.mrb[0].mxu0 %v4076
    %v5435 = vpop.f32.mrb[0].mxu0
    %v5436 = vadd.f32 %v4199, %v5435
    %v5437 = vpop.f32.mrb[0].mxu0
    %v5438 = vadd.f32 %v4203, %v5437
    %v5439 = vpop.f32.mrb[0].mxu0
    %v5440 = vadd.f32 %v4199, %v5439
    %v5441 = vpop.f32.mrb[0].mxu0
    %v5442 = vadd.f32 %v4203, %v5441
    %5443 = vmatprep.mubr.bf16.mxu0 0
    %5444 = vmatmul.mubr.bf16.gmra.mrb[0].mxu0 %v4077
    %v5445 = vpop.f32.mrb[0].mxu0
    %v5446 = vadd.f32 %v4199, %v5445
    %v5447 = vpop.f32.mrb[0].mxu0
    %v5448 = vadd.f32 %v4203, %v5447
    %v5449 = vpop.f32.mrb[0].mxu0
    %v5450 = vadd.f32 %v4199, %v5449
    %v5451 = vpop.f32.mrb[0].mxu0
    %v5452 = vadd.f32 %v4203, %v5451
    %5453 = vmatprep.mubr.bf16.mxu0 0
    %5454 = vmatmul.mubr.bf16.gmra.mrb[0].mxu0 %v4078
    %v5455 = vpop.f32.mrb[0].mxu0
    %v5456 = vadd.f32 %v4199, %v5455
    %v5457 = vpop.f32.mrb[0].mxu0
    %v5458 = vadd.f32 %v4203, %v5457
    %v5459 = vpop.f32.mrb[0].mxu0
    %v5460 = vadd.f32 %v4199, %v5459
    %v5461 = vpop.f32.mrb[0].mxu0
    %v5462 = vadd.f32 %v4203, %v5461
    %5463 = vmatprep.mubr.bf16.mxu0 0
    %5464 = vmatmul.mubr.bf16.gmra.mrb[0].mxu0 %v4079
    %v5465 = vpop.f32.mrb[0].mxu0
    %v5466 = vadd.f32 %v4199, %v5465
    %v5467 = vpop.f32.mrb[0].mxu0
    %v5468 = vadd.f32 %v4203, %v5467
    %v5469 = vpop.f32.mrb[0].mxu0
    %v5470 = vadd.f32 %v4199, %v5469
    %v5471 = vpop.f32.mrb[0].mxu0
    %v5472 = vadd.f32 %v4203, %v5471
    %5473 = vmatprep.mubr.bf16.mxu0 0
    %5474 = vmatmul.mubr.bf16.gmra.mrb[0].mxu0 %v4080
    %v5475 = vpop.f32.mrb[0].mxu0
    %v5476 = vadd.f32 %v4199, %v5475
    %v5477 = vpop.f32.mrb[0].mxu0
    %v5478 = vadd.f32 %v4203, %v5477
    %v5479 = vpop.f32.mrb[0].mxu0
    %v5480 = vadd.f32 %v4199, %v5479
    %v5481 = vpop.f32.mrb[0].mxu0
    %v5482 = vadd.f32 %v4203, %v5481
    %5483 = vmatprep.mubr.bf16.mxu0 0
    %5484 = vmatmul.mubr.bf16.gmra.mrb[0].mxu0 %v4081
    %v5485 = vpop.f32.mrb[0].mxu0
    %v5486 = vadd.f32 %v4199, %v5485
    %v5487 = vpop.f32.mrb[0].mxu0
    %v5488 = vadd.f32 %v4203, %v5487
    %v5489 = vpop.f32.mrb[0].mxu0
    %v5490 = vadd.f32 %v4199, %v5489
    %v5491 = vpop.f32.mrb[0].mxu0
    %v5492 = vadd.f32 %v4203, %v5491
    %5493 = vmatprep.mubr.bf16.mxu0 0
    %5494 = vmatmul.mubr.bf16.gmra.mrb[0].mxu0 %v4082
    %v5495 = vpop.f32.mrb[0].mxu0
    %v5496 = vadd.f32 %v4199, %v5495
    %v5497 = vpop.f32.mrb[0].mxu0
    %v5498 = vadd.f32 %v4203, %v5497
    %v5499 = vpop.f32.mrb[0].mxu0
    %v5500 = vadd.f32 %v4199, %v5499
    %v5501 = vpop.f32.mrb[0].mxu0
    %v5502 = vadd.f32 %v4203, %v5501
    %5503 = vmatprep.mubr.bf16.mxu0 0
    %5504 = vmatmul.mubr.bf16.gmra.mrb[0].mxu0 %v4083
    %v5505 = vpop.f32.mrb[0].mxu0
    %v5506 = vadd.f32 %v4199, %v5505
    %v5507 = vpop.f32.mrb[0].mxu0
    %v5508 = vadd.f32 %v4203, %v5507
    %v5509 = vpop.f32.mrb[0].mxu0
    %v5510 = vadd.f32 %v4199, %v5509
    %v5511 = vpop.f32.mrb[0].mxu0
    %v5512 = vadd.f32 %v4203, %v5511
    %5513 = vmatprep.mubr.bf16.mxu0 0
    %5514 = vmatmul.mubr.bf16.gmra.mrb[0].mxu0 %v4084
    %v5515 = vpop.f32.mrb[0].mxu0
    %v5516 = vadd.f32 %v4199, %v5515
    %v5517 = vpop.f32.mrb[0].mxu0
    %v5518 = vadd.f32 %v4203, %v5517
    %v5519 = vpop.f32.mrb[0].mxu0
    %v5520 = vadd.f32 %v4199, %v5519
    %v5521 = vpop.f32.mrb[0].mxu0
    %v5522 = vadd.f32 %v4203, %v5521
    %5523 = vmatprep.mubr.bf16.mxu0 0
    %5524 = vmatmul.mubr.bf16.gmra.mrb[0].mxu0 %v4085
    %v5525 = vpop.f32.mrb[0].mxu0
    %v5526 = vadd.f32 %v4199, %v5525
    %v5527 = vpop.f32.mrb[0].mxu0
    %v5528 = vadd.f32 %v4203, %v5527
    %v5529 = vpop.f32.mrb[0].mxu0
    %v5530 = vadd.f32 %v4199, %v5529
    %v5531 = vpop.f32.mrb[0].mxu0
    %v5532 = vadd.f32 %v4203, %v5531
    %5533 = vmatprep.mubr.bf16.mxu0 0
    %5534 = vmatmul.mubr.bf16.gmra.mrb[0].mxu0 %v4086
    %v5535 = vpop.f32.mrb[0].mxu0
    %v5536 = vadd.f32 %v4199, %v5535
    %v5537 = vpop.f32.mrb[0].mxu0
    %v5538 = vadd.f32 %v4203, %v5537
    %v5539 = vpop.f32.mrb[0].mxu0
    %v5540 = vadd.f32 %v4199, %v5539
    %v5541 = vpop.f32.mrb[0].mxu0
    %v5542 = vadd.f32 %v4203, %v5541
    %5543 = vmatprep.mubr.bf16.mxu0 0
    %5544 = vmatmul.mubr.bf16.gmra.mrb[0].mxu0 %v4087
    %v5545 = vpop.f32.mrb[0].mxu0
    %v5546 = vadd.f32 %v4199, %v5545
    %v5547 = vpop.f32.mrb[0].mxu0
    %v5548 = vadd.f32 %v4203, %v5547
    %v5549 = vpop.f32.mrb[0].mxu0
    %v5550 = vadd.f32 %v4199, %v5549
    %v5551 = vpop.f32.mrb[0].mxu0
    %v5552 = vadd.f32 %v4203, %v5551
    %5553 = vmatprep.mubr.bf16.mxu0 0
    %5554 = vmatmul.mubr.bf16.gmra.mrb[0].mxu0 %v4088
    %v5555 = vpop.f32.mrb[0].mxu0
    %v5556 = vadd.f32 %v4199, %v5555
    %v5557 = vpop.f32.mrb[0].mxu0
    %v5558 = vadd.f32 %v4203, %v5557
    %v5559 = vpop.f32.mrb[0].mxu0
    %v5560 = vadd.f32 %v4199, %v5559
    %v5561 = vpop.f32.mrb[0].mxu0
    %v5562 = vadd.f32 %v4203, %v5561
    %5563 = vmatprep.mubr.bf16.mxu0 0
    %5564 = vmatmul.mubr.bf16.gmra.mrb[0].mxu0 %v4089
    %v5565 = vpop.f32.mrb[0].mxu0
    %v5566 = vadd.f32 %v4199, %v5565
    %v5567 = vpop.f32.mrb[0].mxu0
    %v5568 = vadd.f32 %v4203, %v5567
    %v5569 = vpop.f32.mrb[0].mxu0
    %v5570 = vadd.f32 %v4199, %v5569
    %v5571 = vpop.f32.mrb[0].mxu0
    %v5572 = vadd.f32 %v4203, %v5571
    %5573 = vmatprep.mubr.bf16.mxu0 0
    %5574 = vmatmul.mubr.bf16.gmra.mrb[0].mxu0 %v4090
    %v5575 = vpop.f32.mrb[0].mxu0
    %v5576 = vadd.f32 %v4199, %v5575
    %v5577 = vpop.f32.mrb[0].mxu0
    %v5578 = vadd.f32 %v4203, %v5577
    %v5579 = vpop.f32.mrb[0].mxu0
    %v5580 = vadd.f32 %v4199, %v5579
    %v5581 = vpop.f32.mrb[0].mxu0
    %v5582 = vadd.f32 %v4203, %v5581
    %5583 = vmatprep.mubr.bf16.mxu0 0
    %5584 = vmatmul.mubr.bf16.gmra.mrb[0].mxu0 %v4091
    %v5585 = vpop.f32.mrb[0].mxu0
    %v5586 = vadd.f32 %v4199, %v5585
    %v5587 = vpop.f32.mrb[0].mxu0
    %v5588 = vadd.f32 %v4203, %v5587
    %v5589 = vpop.f32.mrb[0].mxu0
    %v5590 = vadd.f32 %v4199, %v5589
    %v5591 = vpop.f32.mrb[0].mxu0
    %v5592 = vadd.f32 %v4203, %v5591
    %5593 = vmatprep.mubr.bf16.mxu0 0
    %5594 = vmatmul.mubr.bf16.gmra.mrb[0].mxu0 %v4092
    %v5595 = vpop.f32.mrb[0].mxu0
    %v5596 = vadd.f32 %v4199, %v5595
    %v5597 = vpop.f32.mrb[0].mxu0
    %v5598 = vadd.f32 %v4203, %v5597
    %v5599 = vpop.f32.mrb[0].mxu0
    %v5600 = vadd.f32 %v4199, %v5599
    %v5601 = vpop.f32.mrb[0].mxu0
    %v5602 = vadd.f32 %v4203, %v5601
    %5603 = vmatprep.mubr.bf16.mxu0 0
    %5604 = vmatmul.mubr.bf16.gmra.mrb[0].mxu0 %v4093
    %v5605 = vpop.f32.mrb[0].mxu0
    %v5606 = vadd.f32 %v4199, %v5605
    %v5607 = vpop.f32.mrb[0].mxu0
    %v5608 = vadd.f32 %v4203, %v5607
    %v5609 = vpop.f32.mrb[0].mxu0
    %v5610 = vadd.f32 %v4199, %v5609
    %v5611 = vpop.f32.mrb[0].mxu0
    %v5612 = vadd.f32 %v4203, %v5611
    %5613 = vmatprep.mubr.bf16.mxu0 0
    %5614 = vmatmul.mubr.bf16.gmra.mrb[0].mxu0 %v4094
    %v5615 = vpop.f32.mrb[0].mxu0
    %v5616 = vadd.f32 %v4199, %v5615
    %v5617 = vpop.f32.mrb[0].mxu0
    %v5618 = vadd.f32 %v4203, %v5617
    %v5619 = vpop.f32.mrb[0].mxu0
    %v5620 = vadd.f32 %v4199, %v5619
    %v5621 = vpop.f32.mrb[0].mxu0
    %v5622 = vadd.f32 %v4203, %v5621
    %5623 = vmatprep.mubr.bf16.mxu0 0
    %5624 = vmatmul.mubr.bf16.gmra.mrb[0].mxu0 %v4095
    %v5625 = vpop.f32.mrb[0].mxu0
    %v5626 = vadd.f32 %v4199, %v5625
    %v5627 = vpop.f32.mrb[0].mxu0
    %v5628 = vadd.f32 %v4203, %v5627
    %v5629 = vpop.f32.mrb[0].mxu0
    %v5630 = vadd.f32 %v4199, %v5629
    %v5631 = vpop.f32.mrb[0].mxu0
    %v5632 = vadd.f32 %v4203, %v5631
    %5633 = vmatprep.mubr.bf16.mxu0 0
    %5634 = vmatmul.mubr.bf16.gmra.mrb[0].mxu0 %v4096
    %v5635 = vpop.f32.mrb[0].mxu0
    %v5636 = vadd.f32 %v4199, %v5635
    %v5637 = vpop.f32.mrb[0].mxu0
    %v5638 = vadd.f32 %v4203, %v5637
    %v5639 = vpop.f32.mrb[0].mxu0
    %v5640 = vadd.f32 %v4199, %v5639
    %v5641 = vpop.f32.mrb[0].mxu0
    %v5642 = vadd.f32 %v4203, %v5641
    %5643 = vmatprep.mubr.bf16.mxu0 0
    %5644 = vmatmul.mubr.bf16.gmra.mrb[0].mxu0 %v4097
    %v5645 = vpop.f32.mrb[0].mxu0
    %v5646 = vadd.f32 %v4199, %v5645
    %v5647 = vpop.f32.mrb[0].mxu0
    %v5648 = vadd.f32 %v4203, %v5647
    %v5649 = vpop.f32.mrb[0].mxu0
    %v5650 = vadd.f32 %v4199, %v5649
    %v5651 = vpop.f32.mrb[0].mxu0
    %v5652 = vadd.f32 %v4203, %v5651
    %5653 = vmatprep.mubr.bf16.mxu0 0
    %5654 = vmatmul.mubr.bf16.gmra.mrb[0].mxu0 %v4098
    %v5655 = vpop.f32.mrb[0].mxu0
    %v5656 = vadd.f32 %v4199, %v5655
    %v5657 = vpop.f32.mrb[0].mxu0
    %v5658 = vadd.f32 %v4203, %v5657
    %v5659 = vpop.f32.mrb[0].mxu0
    %v5660 = vadd.f32 %v4199, %v5659
    %v5661 = vpop.f32.mrb[0].mxu0
    %v5662 = vadd.f32 %v4203, %v5661
    %5663 = vmatprep.mubr.bf16.mxu0 0
    %5664 = vmatmul.mubr.bf16.gmra.mrb[0].mxu0 %v4099
    %v5665 = vpop.f32.mrb[0].mxu0
    %v5666 = vadd.f32 %v4199, %v5665
    %v5667 = vpop.f32.mrb[0].mxu0
    %v5668 = vadd.f32 %v4203, %v5667
    %v5669 = vpop.f32.mrb[0].mxu0
    %v5670 = vadd.f32 %v4199, %v5669
    %v5671 = vpop.f32.mrb[0].mxu0
    %v5672 = vadd.f32 %v4203, %v5671
    %5673 = vmatprep.mubr.bf16.mxu0 0
    %5674 = vmatmul.mubr.bf16.gmra.mrb[0].mxu0 %v4100
    %v5675 = vpop.f32.mrb[0].mxu0
    %v5676 = vadd.f32 %v4199, %v5675
    %v5677 = vpop.f32.mrb[0].mxu0
    %v5678 = vadd.f32 %v4203, %v5677
    %v5679 = vpop.f32.mrb[0].mxu0
    %v5680 = vadd.f32 %v4199, %v5679
    %v5681 = vpop.f32.mrb[0].mxu0
    %v5682 = vadd.f32 %v4203, %v5681
    %5683 = vmatprep.mubr.bf16.mxu0 0
    %5684 = vmatmul.mubr.bf16.gmra.mrb[0].mxu0 %v4101
    %v5685 = vpop.f32.mrb[0].mxu0
    %v5686 = vadd.f32 %v4199, %v5685
    %v5687 = vpop.f32.mrb[0].mxu0
    %v5688 = vadd.f32 %v4203, %v5687
    %v5689 = vpop.f32.mrb[0].mxu0
    %v5690 = vadd.f32 %v4199, %v5689
    %v5691 = vpop.f32.mrb[0].mxu0
    %v5692 = vadd.f32 %v4203, %v5691
    %5693 = vmatprep.mubr.bf16.mxu0 0
    %5694 = vmatmul.mubr.bf16.gmra.mrb[0].mxu0 %v4102
    %v5695 = vpop.f32.mrb[0].mxu0
    %v5696 = vadd.f32 %v4199, %v5695
    %v5697 = vpop.f32.mrb[0].mxu0
    %v5698 = vadd.f32 %v4203, %v5697
    %v5699 = vpop.f32.mrb[0].mxu0
    %v5700 = vadd.f32 %v4199, %v5699
    %v5701 = vpop.f32.mrb[0].mxu0
    %v5702 = vadd.f32 %v4203, %v5701
    %5703 = vmatprep.mubr.bf16.mxu0 0
    %5704 = vmatmul.mubr.bf16.gmra.mrb[0].mxu0 %v4103
    %v5705 = vpop.f32.mrb[0].mxu0
    %v5706 = vadd.f32 %v4199, %v5705
    %v5707 = vpop.f32.mrb[0].mxu0
    %v5708 = vadd.f32 %v4203, %v5707
    %v5709 = vpop.f32.mrb[0].mxu0
    %v5710 = vadd.f32 %v4199, %v5709
    %v5711 = vpop.f32.mrb[0].mxu0
    %v5712 = vadd.f32 %v4203, %v5711
    %5713 = vmatprep.mubr.bf16.mxu0 0
    %5714 = vmatmul.mubr.bf16.gmra.mrb[0].mxu0 %v4104
    %v5715 = vpop.f32.mrb[0].mxu0
    %v5716 = vadd.f32 %v4199, %v5715
    %v5717 = vpop.f32.mrb[0].mxu0
    %v5718 = vadd.f32 %v4203, %v5717
    %v5719 = vpop.f32.mrb[0].mxu0
    %v5720 = vadd.f32 %v4199, %v5719
    %v5721 = vpop.f32.mrb[0].mxu0
    %v5722 = vadd.f32 %v4203, %v5721
    %5723 = vmatprep.mubr.bf16.mxu0 0
    %5724 = vmatmul.mubr.bf16.gmra.mrb[0].mxu0 %v4105
    %v5725 = vpop.f32.mrb[0].mxu0
    %v5726 = vadd.f32 %v4199, %v5725
    %v5727 = vpop.f32.mrb[0].mxu0
    %v5728 = vadd.f32 %v4203, %v5727
    %v5729 = vpop.f32.mrb[0].mxu0
    %v5730 = vadd.f32 %v4199, %v5729
    %v5731 = vpop.f32.mrb[0].mxu0
    %v5732 = vadd.f32 %v4203, %v5731
    %5733 = vmatprep.mubr.bf16.mxu0 0
    %5734 = vmatmul.mubr.bf16.gmra.mrb[0].mxu0 %v4106
    %v5735 = vpop.f32.mrb[0].mxu0
    %v5736 = vadd.f32 %v4199, %v5735
    %v5737 = vpop.f32.mrb[0].mxu0
    %v5738 = vadd.f32 %v4203, %v5737
    %v5739 = vpop.f32.mrb[0].mxu0
    %v5740 = vadd.f32 %v4199, %v5739
    %v5741 = vpop.f32.mrb[0].mxu0
    %v5742 = vadd.f32 %v4203, %v5741
    %5743 = vmatprep.mubr.bf16.mxu0 0
    %5744 = vmatmul.mubr.bf16.gmra.mrb[0].mxu0 %v4107
    %v5745 = vpop.f32.mrb[0].mxu0
    %v5746 = vadd.f32 %v4199, %v5745
    %v5747 = vpop.f32.mrb[0].mxu0
    %v5748 = vadd.f32 %v4203, %v5747
    %v5749 = vpop.f32.mrb[0].mxu0
    %v5750 = vadd.f32 %v4199, %v5749
    %v5751 = vpop.f32.mrb[0].mxu0
    %v5752 = vadd.f32 %v4203, %v5751
    %5753 = vmatprep.mubr.bf16.mxu0 0
    %5754 = vmatmul.mubr.bf16.gmra.mrb[0].mxu0 %v4108
    %v5755 = vpop.f32.mrb[0].mxu0
    %v5756 = vadd.f32 %v4199, %v5755
    %v5757 = vpop.f32.mrb[0].mxu0
    %v5758 = vadd.f32 %v4203, %v5757
    %v5759 = vpop.f32.mrb[0].mxu0
    %v5760 = vadd.f32 %v4199, %v5759
    %v5761 = vpop.f32.mrb[0].mxu0
    %v5762 = vadd.f32 %v4203, %v5761
    %5763 = vmatprep.mubr.bf16.mxu0 0
    %5764 = vmatmul.mubr.bf16.gmra.mrb[0].mxu0 %v4109
    %v5765 = vpop.f32.mrb[0].mxu0
    %v5766 = vadd.f32 %v4199, %v5765
    %v5767 = vpop.f32.mrb[0].mxu0
    %v5768 = vadd.f32 %v4203, %v5767
    %v5769 = vpop.f32.mrb[0].mxu0
    %v5770 = vadd.f32 %v4199, %v5769
    %v5771 = vpop.f32.mrb[0].mxu0
    %v5772 = vadd.f32 %v4203, %v5771
    %5773 = vmatprep.mubr.bf16.mxu0 0
    %5774 = vmatmul.mubr.bf16.gmra.mrb[0].mxu0 %v4110
    %v5775 = vpop.f32.mrb[0].mxu0
    %v5776 = vadd.f32 %v4199, %v5775
    %v5777 = vpop.f32.mrb[0].mxu0
    %v5778 = vadd.f32 %v4203, %v5777
    %v5779 = vpop.f32.mrb[0].mxu0
    %v5780 = vadd.f32 %v4199, %v5779
    %v5781 = vpop.f32.mrb[0].mxu0
    %v5782 = vadd.f32 %v4203, %v5781
    %5783 = vmatprep.mubr.bf16.mxu0 0
    %5784 = vmatmul.mubr.bf16.gmra.mrb[0].mxu0 %v4111
    %v5785 = vpop.f32.mrb[0].mxu0
    %v5786 = vadd.f32 %v4199, %v5785
    %v5787 = vpop.f32.mrb[0].mxu0
    %v5788 = vadd.f32 %v4203, %v5787
    %v5789 = vpop.f32.mrb[0].mxu0
    %v5790 = vadd.f32 %v4199, %v5789
    %v5791 = vpop.f32.mrb[0].mxu0
    %v5792 = vadd.f32 %v4203, %v5791
    %5793 = vmatprep.mubr.bf16.mxu0 0
    %5794 = vmatmul.mubr.bf16.gmra.mrb[0].mxu0 %v4112
    %v5795 = vpop.f32.mrb[0].mxu0
    %v5796 = vadd.f32 %v4199, %v5795
    %v5797 = vpop.f32.mrb[0].mxu0
    %v5798 = vadd.f32 %v4203, %v5797
    %v5799 = vpop.f32.mrb[0].mxu0
    %v5800 = vadd.f32 %v4199, %v5799
    %v5801 = vpop.f32.mrb[0].mxu0
    %v5802 = vadd.f32 %v4203, %v5801
    %5803 = vmatprep.mubr.bf16.mxu0 0
    %5804 = vmatmul.mubr.bf16.gmra.mrb[0].mxu0 %v4113
    %v5805 = vpop.f32.mrb[0].mxu0
    %v5806 = vadd.f32 %v4199, %v5805
    %v5807 = vpop.f32.mrb[0].mxu0
    %v5808 = vadd.f32 %v4203, %v5807
    %v5809 = vpop.f32.mrb[0].mxu0
    %v5810 = vadd.f32 %v4199, %v5809
    %v5811 = vpop.f32.mrb[0].mxu0
    %v5812 = vadd.f32 %v4203, %v5811
    %5813 = vmatprep.mubr.bf16.mxu0 0
    %5814 = vmatmul.mubr.bf16.gmra.mrb[0].mxu0 %v4114
    %v5815 = vpop.f32.mrb[0].mxu0
    %v5816 = vadd.f32 %v4199, %v5815
    %v5817 = vpop.f32.mrb[0].mxu0
    %v5818 = vadd.f32 %v4203, %v5817
    %v5819 = vpop.f32.mrb[0].mxu0
    %v5820 = vadd.f32 %v4199, %v5819
    %v5821 = vpop.f32.mrb[0].mxu0
    %v5822 = vadd.f32 %v4203, %v5821
    %5823 = vmatprep.mubr.bf16.mxu0 0
    %5824 = vmatmul.mubr.bf16.gmra.mrb[0].mxu0 %v4115
    %v5825 = vpop.f32.mrb[0].mxu0
    %v5826 = vadd.f32 %v4199, %v5825
    %v5827 = vpop.f32.mrb[0].mxu0
    %v5828 = vadd.f32 %v4203, %v5827
    %v5829 = vpop.f32.mrb[0].mxu0
    %v5830 = vadd.f32 %v4199, %v5829
    %v5831 = vpop.f32.mrb[0].mxu0
    %v5832 = vadd.f32 %v4203, %v5831
    %5833 = vmatprep.mubr.bf16.mxu0 0
    %5834 = vmatmul.mubr.bf16.gmra.mrb[0].mxu0 %v4116
    %v5835 = vpop.f32.mrb[0].mxu0
    %v5836 = vadd.f32 %v4199, %v5835
    %v5837 = vpop.f32.mrb[0].mxu0
    %v5838 = vadd.f32 %v4203, %v5837
    %v5839 = vpop.f32.mrb[0].mxu0
    %v5840 = vadd.f32 %v4199, %v5839
    %v5841 = vpop.f32.mrb[0].mxu0
    %v5842 = vadd.f32 %v4203, %v5841
    %5843 = vmatprep.mubr.bf16.mxu0 0
    %5844 = vmatmul.mubr.bf16.gmra.mrb[0].mxu0 %v4117
    %v5845 = vpop.f32.mrb[0].mxu0
    %v5846 = vadd.f32 %v4199, %v5845
    %v5847 = vpop.f32.mrb[0].mxu0
    %v5848 = vadd.f32 %v4203, %v5847
    %v5849 = vpop.f32.mrb[0].mxu0
    %v5850 = vadd.f32 %v4199, %v5849
    %v5851 = vpop.f32.mrb[0].mxu0
    %v5852 = vadd.f32 %v4203, %v5851
    %5853 = vmatprep.mubr.bf16.mxu0 0
    %5854 = vmatmul.mubr.bf16.gmra.mrb[0].mxu0 %v4118
    %v5855 = vpop.f32.mrb[0].mxu0
    %v5856 = vadd.f32 %v4199, %v5855
    %v5857 = vpop.f32.mrb[0].mxu0
    %v5858 = vadd.f32 %v4203, %v5857
    %v5859 = vpop.f32.mrb[0].mxu0
    %v5860 = vadd.f32 %v4199, %v5859
    %v5861 = vpop.f32.mrb[0].mxu0
    %v5862 = vadd.f32 %v4203, %v5861
    %5863 = vmatprep.mubr.bf16.mxu0 0
    %5864 = vmatmul.mubr.bf16.gmra.mrb[0].mxu0 %v4119
    %v5865 = vpop.f32.mrb[0].mxu0
    %v5866 = vadd.f32 %v4199, %v5865
    %v5867 = vpop.f32.mrb[0].mxu0
    %v5868 = vadd.f32 %v4203, %v5867
    %v5869 = vpop.f32.mrb[0].mxu0
    %v5870 = vadd.f32 %v4199, %v5869
    %v5871 = vpop.f32.mrb[0].mxu0
    %v5872 = vadd.f32 %v4203, %v5871
    %5873 = vmatprep.mubr.bf16.mxu0 0
    %5874 = vmatmul.mubr.bf16.gmra.mrb[0].mxu0 %v4120
    %v5875 = vpop.f32.mrb[0].mxu0
    %v5876 = vadd.f32 %v4199, %v5875
    %v5877 = vpop.f32.mrb[0].mxu0
    %v5878 = vadd.f32 %v4203, %v5877
    %v5879 = vpop.f32.mrb[0].mxu0
    %v5880 = vadd.f32 %v4199, %v5879
    %v5881 = vpop.f32.mrb[0].mxu0
    %v5882 = vadd.f32 %v4203, %v5881
    %5883 = vmatprep.mubr.bf16.mxu0 0
    %5884 = vmatmul.mubr.bf16.gmra.mrb[0].mxu0 %v4121
    %v5885 = vpop.f32.mrb[0].mxu0
    %v5886 = vadd.f32 %v4199, %v5885
    %v5887 = vpop.f32.mrb[0].mxu0
    %v5888 = vadd.f32 %v4203, %v5887
    %v5889 = vpop.f32.mrb[0].mxu0
    %v5890 = vadd.f32 %v4199, %v5889
    %v5891 = vpop.f32.mrb[0].mxu0
    %v5892 = vadd.f32 %v4203, %v5891
    %5893 = vdwg.mxu0
    %5894 = vmatprep.subr.bf16.mxu0 %v4425
    %5895 = vmatpush1.bf16.msra.mxu0 %v4424
    %5896 = vmatprep.subr.bf16.mxu0 %v4433
    %5897 = vmatpush1.bf16.msra.mxu0 %v4432
    %5898 = vmatprep.subr.bf16.mxu0 %v4441
    %5899 = vmatpush1.bf16.msra.mxu0 %v4440
    %5900 = vmatprep.subr.bf16.mxu0 %v4449
    %5901 = vmatpush1.bf16.msra.mxu0 %v4448
    %5902 = vmatprep.subr.bf16.mxu0 %v4457
    %5903 = vmatpush1.bf16.msra.mxu0 %v4456
    %5904 = vmatprep.subr.bf16.mxu0 %v4465
    %5905 = vmatpush1.bf16.msra.mxu0 %v4464
    %5906 = vmatprep.subr.bf16.mxu0 %v4473
    %5907 = vmatpush1.bf16.msra.mxu0 %v4472
    %5908 = vmatprep.subr.bf16.mxu0 %v4481
    %5909 = vmatpush1.bf16.msra.mxu0 %v4480
    %5910 = vmatprep.subr.bf16.mxu0 0
    %5911 = vmatpush1.bf16.msra.mxu0 0
    %5912 = vmatprep.subr.bf16.mxu0 0
    %5913 = vmatpush1.bf16.msra.mxu0 0
    %5914 = vmatprep.subr.bf16.mxu0 0
    %5915 = vmatpush1.bf16.msra.mxu0 0
    %5916 = vmatprep.subr.bf16.mxu0 0
    %5917 = vmatpush1.bf16.msra.mxu0 0
    %5918 = vmatprep.subr.bf16.mxu0 0
    %5919 = vmatpush1.bf16.msra.mxu0 0
    %5920 = vmatprep.subr.bf16.mxu0 0
    %5921 = vmatpush1.bf16.msra.mxu0 0
    %5922 = vmatprep.subr.bf16.mxu0 0
    %5923 = vmatpush1.bf16.msra.mxu0 0
    %5924 = vmatprep.subr.bf16.mxu0 0
    %5925 = vmatpush1.bf16.msra.mxu0 0
    %5926 = vmatprep.mubr.bf16.mxu0 0
    %5927 = vmatmul.mubr.bf16.gmra.mrb[0].mxu0 %v4058
    %v5928 = vpop.f32.mrb[0].mxu0
    %v5929 = vadd.f32 %v4207, %v5928
    %v5930 = vpop.f32.mrb[0].mxu0
    %v5931 = vadd.f32 %v4211, %v5930
    %v5932 = vpop.f32.mrb[0].mxu0
    %v5933 = vadd.f32 %v4207, %v5932
    %v5934 = vpop.f32.mrb[0].mxu0
    %v5935 = vadd.f32 %v4211, %v5934
    %5936 = vmatprep.mubr.bf16.mxu0 0
    %5937 = vmatmul.mubr.bf16.gmra.mrb[0].mxu0 %v4059
    %v5938 = vpop.f32.mrb[0].mxu0
    %v5939 = vadd.f32 %v4207, %v5938
    %v5940 = vpop.f32.mrb[0].mxu0
    %v5941 = vadd.f32 %v4211, %v5940
    %v5942 = vpop.f32.mrb[0].mxu0
    %v5943 = vadd.f32 %v4207, %v5942
    %v5944 = vpop.f32.mrb[0].mxu0
    %v5945 = vadd.f32 %v4211, %v5944
    %5946 = vmatprep.mubr.bf16.mxu0 0
    %5947 = vmatmul.mubr.bf16.gmra.mrb[0].mxu0 %v4060
    %v5948 = vpop.f32.mrb[0].mxu0
    %v5949 = vadd.f32 %v4207, %v5948
    %v5950 = vpop.f32.mrb[0].mxu0
    %v5951 = vadd.f32 %v4211, %v5950
    %v5952 = vpop.f32.mrb[0].mxu0
    %v5953 = vadd.f32 %v4207, %v5952
    %v5954 = vpop.f32.mrb[0].mxu0
    %v5955 = vadd.f32 %v4211, %v5954
    %5956 = vmatprep.mubr.bf16.mxu0 0
    %5957 = vmatmul.mubr.bf16.gmra.mrb[0].mxu0 %v4061
    %v5958 = vpop.f32.mrb[0].mxu0
    %v5959 = vadd.f32 %v4207, %v5958
    %v5960 = vpop.f32.mrb[0].mxu0
    %v5961 = vadd.f32 %v4211, %v5960
    %v5962 = vpop.f32.mrb[0].mxu0
    %v5963 = vadd.f32 %v4207, %v5962
    %v5964 = vpop.f32.mrb[0].mxu0
    %v5965 = vadd.f32 %v4211, %v5964
    %5966 = vmatprep.mubr.bf16.mxu0 0
    %5967 = vmatmul.mubr.bf16.gmra.mrb[0].mxu0 %v4062
    %v5968 = vpop.f32.mrb[0].mxu0
    %v5969 = vadd.f32 %v4207, %v5968
    %v5970 = vpop.f32.mrb[0].mxu0
    %v5971 = vadd.f32 %v4211, %v5970
    %v5972 = vpop.f32.mrb[0].mxu0
    %v5973 = vadd.f32 %v4207, %v5972
    %v5974 = vpop.f32.mrb[0].mxu0
    %v5975 = vadd.f32 %v4211, %v5974
    %5976 = vmatprep.mubr.bf16.mxu0 0
    %5977 = vmatmul.mubr.bf16.gmra.mrb[0].mxu0 %v4063
    %v5978 = vpop.f32.mrb[0].mxu0
    %v5979 = vadd.f32 %v4207, %v5978
    %v5980 = vpop.f32.mrb[0].mxu0
    %v5981 = vadd.f32 %v4211, %v5980
    %v5982 = vpop.f32.mrb[0].mxu0
    %v5983 = vadd.f32 %v4207, %v5982
    %v5984 = vpop.f32.mrb[0].mxu0
    %v5985 = vadd.f32 %v4211, %v5984
    %5986 = vmatprep.mubr.bf16.mxu0 0
    %5987 = vmatmul.mubr.bf16.gmra.mrb[0].mxu0 %v4064
    %v5988 = vpop.f32.mrb[0].mxu0
    %v5989 = vadd.f32 %v4207, %v5988
    %v5990 = vpop.f32.mrb[0].mxu0
    %v5991 = vadd.f32 %v4211, %v5990
    %v5992 = vpop.f32.mrb[0].mxu0
    %v5993 = vadd.f32 %v4207, %v5992
    %v5994 = vpop.f32.mrb[0].mxu0
    %v5995 = vadd.f32 %v4211, %v5994
    %5996 = vmatprep.mubr.bf16.mxu0 0
    %5997 = vmatmul.mubr.bf16.gmra.mrb[0].mxu0 %v4065
    %v5998 = vpop.f32.mrb[0].mxu0
    %v5999 = vadd.f32 %v4207, %v5998
    %v6000 = vpop.f32.mrb[0].mxu0
    %v6001 = vadd.f32 %v4211, %v6000
    %v6002 = vpop.f32.mrb[0].mxu0
    %v6003 = vadd.f32 %v4207, %v6002
    %v6004 = vpop.f32.mrb[0].mxu0
    %v6005 = vadd.f32 %v4211, %v6004
    %6006 = vmatprep.mubr.bf16.mxu0 0
    %6007 = vmatmul.mubr.bf16.gmra.mrb[0].mxu0 %v4066
    %v6008 = vpop.f32.mrb[0].mxu0
    %v6009 = vadd.f32 %v4207, %v6008
    %v6010 = vpop.f32.mrb[0].mxu0
    %v6011 = vadd.f32 %v4211, %v6010
    %v6012 = vpop.f32.mrb[0].mxu0
    %v6013 = vadd.f32 %v4207, %v6012
    %v6014 = vpop.f32.mrb[0].mxu0
    %v6015 = vadd.f32 %v4211, %v6014
    %6016 = vmatprep.mubr.bf16.mxu0 0
    %6017 = vmatmul.mubr.bf16.gmra.mrb[0].mxu0 %v4067
    %v6018 = vpop.f32.mrb[0].mxu0
    %v6019 = vadd.f32 %v4207, %v6018
    %v6020 = vpop.f32.mrb[0].mxu0
    %v6021 = vadd.f32 %v4211, %v6020
    %v6022 = vpop.f32.mrb[0].mxu0
    %v6023 = vadd.f32 %v4207, %v6022
    %v6024 = vpop.f32.mrb[0].mxu0
    %v6025 = vadd.f32 %v4211, %v6024
    %6026 = vmatprep.mubr.bf16.mxu0 0
    %6027 = vmatmul.mubr.bf16.gmra.mrb[0].mxu0 %v4068
    %v6028 = vpop.f32.mrb[0].mxu0
    %v6029 = vadd.f32 %v4207, %v6028
    %v6030 = vpop.f32.mrb[0].mxu0
    %v6031 = vadd.f32 %v4211, %v6030
    %v6032 = vpop.f32.mrb[0].mxu0
    %v6033 = vadd.f32 %v4207, %v6032
    %v6034 = vpop.f32.mrb[0].mxu0
    %v6035 = vadd.f32 %v4211, %v6034
    %6036 = vmatprep.mubr.bf16.mxu0 0
    %6037 = vmatmul.mubr.bf16.gmra.mrb[0].mxu0 %v4069
    %v6038 = vpop.f32.mrb[0].mxu0
    %v6039 = vadd.f32 %v4207, %v6038
    %v6040 = vpop.f32.mrb[0].mxu0
    %v6041 = vadd.f32 %v4211, %v6040
    %v6042 = vpop.f32.mrb[0].mxu0
    %v6043 = vadd.f32 %v4207, %v6042
    %v6044 = vpop.f32.mrb[0].mxu0
    %v6045 = vadd.f32 %v4211, %v6044
    %6046 = vmatprep.mubr.bf16.mxu0 0
    %6047 = vmatmul.mubr.bf16.gmra.mrb[0].mxu0 %v4070
    %v6048 = vpop.f32.mrb[0].mxu0
    %v6049 = vadd.f32 %v4207, %v6048
    %v6050 = vpop.f32.mrb[0].mxu0
    %v6051 = vadd.f32 %v4211, %v6050
    %v6052 = vpop.f32.mrb[0].mxu0
    %v6053 = vadd.f32 %v4207, %v6052
    %v6054 = vpop.f32.mrb[0].mxu0
    %v6055 = vadd.f32 %v4211, %v6054
    %6056 = vmatprep.mubr.bf16.mxu0 0
    %6057 = vmatmul.mubr.bf16.gmra.mrb[0].mxu0 %v4071
    %v6058 = vpop.f32.mrb[0].mxu0
    %v6059 = vadd.f32 %v4207, %v6058
    %v6060 = vpop.f32.mrb[0].mxu0
    %v6061 = vadd.f32 %v4211, %v6060
    %v6062 = vpop.f32.mrb[0].mxu0
    %v6063 = vadd.f32 %v4207, %v6062
    %v6064 = vpop.f32.mrb[0].mxu0
    %v6065 = vadd.f32 %v4211, %v6064
    %6066 = vmatprep.mubr.bf16.mxu0 0
    %6067 = vmatmul.mubr.bf16.gmra.mrb[0].mxu0 %v4072
    %v6068 = vpop.f32.mrb[0].mxu0
    %v6069 = vadd.f32 %v4207, %v6068
    %v6070 = vpop.f32.mrb[0].mxu0
    %v6071 = vadd.f32 %v4211, %v6070
    %v6072 = vpop.f32.mrb[0].mxu0
    %v6073 = vadd.f32 %v4207, %v6072
    %v6074 = vpop.f32.mrb[0].mxu0
    %v6075 = vadd.f32 %v4211, %v6074
    %6076 = vmatprep.mubr.bf16.mxu0 0
    %6077 = vmatmul.mubr.bf16.gmra.mrb[0].mxu0 %v4073
    %v6078 = vpop.f32.mrb[0].mxu0
    %v6079 = vadd.f32 %v4207, %v6078
    %v6080 = vpop.f32.mrb[0].mxu0
    %v6081 = vadd.f32 %v4211, %v6080
    %v6082 = vpop.f32.mrb[0].mxu0
    %v6083 = vadd.f32 %v4207, %v6082
    %v6084 = vpop.f32.mrb[0].mxu0
    %v6085 = vadd.f32 %v4211, %v6084
    %6086 = vmatprep.mubr.bf16.mxu0 0
    %6087 = vmatmul.mubr.bf16.gmra.mrb[0].mxu0 %v4074
    %v6088 = vpop.f32.mrb[0].mxu0
    %v6089 = vadd.f32 %v4207, %v6088
    %v6090 = vpop.f32.mrb[0].mxu0
    %v6091 = vadd.f32 %v4211, %v6090
    %v6092 = vpop.f32.mrb[0].mxu0
    %v6093 = vadd.f32 %v4207, %v6092
    %v6094 = vpop.f32.mrb[0].mxu0
    %v6095 = vadd.f32 %v4211, %v6094
    %6096 = vmatprep.mubr.bf16.mxu0 0
    %6097 = vmatmul.mubr.bf16.gmra.mrb[0].mxu0 %v4075
    %v6098 = vpop.f32.mrb[0].mxu0
    %v6099 = vadd.f32 %v4207, %v6098
    %v6100 = vpop.f32.mrb[0].mxu0
    %v6101 = vadd.f32 %v4211, %v6100
    %v6102 = vpop.f32.mrb[0].mxu0
    %v6103 = vadd.f32 %v4207, %v6102
    %v6104 = vpop.f32.mrb[0].mxu0
    %v6105 = vadd.f32 %v4211, %v6104
    %6106 = vmatprep.mubr.bf16.mxu0 0
    %6107 = vmatmul.mubr.bf16.gmra.mrb[0].mxu0 %v4076
    %v6108 = vpop.f32.mrb[0].mxu0
    %v6109 = vadd.f32 %v4207, %v6108
    %v6110 = vpop.f32.mrb[0].mxu0
    %v6111 = vadd.f32 %v4211, %v6110
    %v6112 = vpop.f32.mrb[0].mxu0
    %v6113 = vadd.f32 %v4207, %v6112
    %v6114 = vpop.f32.mrb[0].mxu0
    %v6115 = vadd.f32 %v4211, %v6114
    %6116 = vmatprep.mubr.bf16.mxu0 0
    %6117 = vmatmul.mubr.bf16.gmra.mrb[0].mxu0 %v4077
    %v6118 = vpop.f32.mrb[0].mxu0
    %v6119 = vadd.f32 %v4207, %v6118
    %v6120 = vpop.f32.mrb[0].mxu0
    %v6121 = vadd.f32 %v4211, %v6120
    %v6122 = vpop.f32.mrb[0].mxu0
    %v6123 = vadd.f32 %v4207, %v6122
    %v6124 = vpop.f32.mrb[0].mxu0
    %v6125 = vadd.f32 %v4211, %v6124
    %6126 = vmatprep.mubr.bf16.mxu0 0
    %6127 = vmatmul.mubr.bf16.gmra.mrb[0].mxu0 %v4078
    %v6128 = vpop.f32.mrb[0].mxu0
    %v6129 = vadd.f32 %v4207, %v6128
    %v6130 = vpop.f32.mrb[0].mxu0
    %v6131 = vadd.f32 %v4211, %v6130
    %v6132 = vpop.f32.mrb[0].mxu0
    %v6133 = vadd.f32 %v4207, %v6132
    %v6134 = vpop.f32.mrb[0].mxu0
    %v6135 = vadd.f32 %v4211, %v6134
    %6136 = vmatprep.mubr.bf16.mxu0 0
    %6137 = vmatmul.mubr.bf16.gmra.mrb[0].mxu0 %v4079
    %v6138 = vpop.f32.mrb[0].mxu0
    %v6139 = vadd.f32 %v4207, %v6138
    %v6140 = vpop.f32.mrb[0].mxu0
    %v6141 = vadd.f32 %v4211, %v6140
    %v6142 = vpop.f32.mrb[0].mxu0
    %v6143 = vadd.f32 %v4207, %v6142
    %v6144 = vpop.f32.mrb[0].mxu0
    %v6145 = vadd.f32 %v4211, %v6144
    %6146 = vmatprep.mubr.bf16.mxu0 0
    %6147 = vmatmul.mubr.bf16.gmra.mrb[0].mxu0 %v4080
    %v6148 = vpop.f32.mrb[0].mxu0
    %v6149 = vadd.f32 %v4207, %v6148
    %v6150 = vpop.f32.mrb[0].mxu0
    %v6151 = vadd.f32 %v4211, %v6150
    %v6152 = vpop.f32.mrb[0].mxu0
    %v6153 = vadd.f32 %v4207, %v6152
    %v6154 = vpop.f32.mrb[0].mxu0
    %v6155 = vadd.f32 %v4211, %v6154
    %6156 = vmatprep.mubr.bf16.mxu0 0
    %6157 = vmatmul.mubr.bf16.gmra.mrb[0].mxu0 %v4081
    %v6158 = vpop.f32.mrb[0].mxu0
    %v6159 = vadd.f32 %v4207, %v6158
    %v6160 = vpop.f32.mrb[0].mxu0
    %v6161 = vadd.f32 %v4211, %v6160
    %v6162 = vpop.f32.mrb[0].mxu0
    %v6163 = vadd.f32 %v4207, %v6162
    %v6164 = vpop.f32.mrb[0].mxu0
    %v6165 = vadd.f32 %v4211, %v6164
    %6166 = vmatprep.mubr.bf16.mxu0 0
    %6167 = vmatmul.mubr.bf16.gmra.mrb[0].mxu0 %v4082
    %v6168 = vpop.f32.mrb[0].mxu0
    %v6169 = vadd.f32 %v4207, %v6168
    %v6170 = vpop.f32.mrb[0].mxu0
    %v6171 = vadd.f32 %v4211, %v6170
    %v6172 = vpop.f32.mrb[0].mxu0
    %v6173 = vadd.f32 %v4207, %v6172
    %v6174 = vpop.f32.mrb[0].mxu0
    %v6175 = vadd.f32 %v4211, %v6174
    %6176 = vmatprep.mubr.bf16.mxu0 0
    %6177 = vmatmul.mubr.bf16.gmra.mrb[0].mxu0 %v4083
    %v6178 = vpop.f32.mrb[0].mxu0
    %v6179 = vadd.f32 %v4207, %v6178
    %v6180 = vpop.f32.mrb[0].mxu0
    %v6181 = vadd.f32 %v4211, %v6180
    %v6182 = vpop.f32.mrb[0].mxu0
    %v6183 = vadd.f32 %v4207, %v6182
    %v6184 = vpop.f32.mrb[0].mxu0
    %v6185 = vadd.f32 %v4211, %v6184
    %6186 = vmatprep.mubr.bf16.mxu0 0
    %6187 = vmatmul.mubr.bf16.gmra.mrb[0].mxu0 %v4084
    %v6188 = vpop.f32.mrb[0].mxu0
    %v6189 = vadd.f32 %v4207, %v6188
    %v6190 = vpop.f32.mrb[0].mxu0
    %v6191 = vadd.f32 %v4211, %v6190
    %v6192 = vpop.f32.mrb[0].mxu0
    %v6193 = vadd.f32 %v4207, %v6192
    %v6194 = vpop.f32.mrb[0].mxu0
    %v6195 = vadd.f32 %v4211, %v6194
    %6196 = vmatprep.mubr.bf16.mxu0 0
    %6197 = vmatmul.mubr.bf16.gmra.mrb[0].mxu0 %v4085
    %v6198 = vpop.f32.mrb[0].mxu0
    %v6199 = vadd.f32 %v4207, %v6198
    %v6200 = vpop.f32.mrb[0].mxu0
    %v6201 = vadd.f32 %v4211, %v6200
    %v6202 = vpop.f32.mrb[0].mxu0
    %v6203 = vadd.f32 %v4207, %v6202
    %v6204 = vpop.f32.mrb[0].mxu0
    %v6205 = vadd.f32 %v4211, %v6204
    %6206 = vmatprep.mubr.bf16.mxu0 0
    %6207 = vmatmul.mubr.bf16.gmra.mrb[0].mxu0 %v4086
    %v6208 = vpop.f32.mrb[0].mxu0
    %v6209 = vadd.f32 %v4207, %v6208
    %v6210 = vpop.f32.mrb[0].mxu0
    %v6211 = vadd.f32 %v4211, %v6210
    %v6212 = vpop.f32.mrb[0].mxu0
    %v6213 = vadd.f32 %v4207, %v6212
    %v6214 = vpop.f32.mrb[0].mxu0
    %v6215 = vadd.f32 %v4211, %v6214
    %6216 = vmatprep.mubr.bf16.mxu0 0
    %6217 = vmatmul.mubr.bf16.gmra.mrb[0].mxu0 %v4087
    %v6218 = vpop.f32.mrb[0].mxu0
    %v6219 = vadd.f32 %v4207, %v6218
    %v6220 = vpop.f32.mrb[0].mxu0
    %v6221 = vadd.f32 %v4211, %v6220
    %v6222 = vpop.f32.mrb[0].mxu0
    %v6223 = vadd.f32 %v4207, %v6222
    %v6224 = vpop.f32.mrb[0].mxu0
    %v6225 = vadd.f32 %v4211, %v6224
    %6226 = vmatprep.mubr.bf16.mxu0 0
    %6227 = vmatmul.mubr.bf16.gmra.mrb[0].mxu0 %v4088
    %v6228 = vpop.f32.mrb[0].mxu0
    %v6229 = vadd.f32 %v4207, %v6228
    %v6230 = vpop.f32.mrb[0].mxu0
    %v6231 = vadd.f32 %v4211, %v6230
    %v6232 = vpop.f32.mrb[0].mxu0
    %v6233 = vadd.f32 %v4207, %v6232
    %v6234 = vpop.f32.mrb[0].mxu0
    %v6235 = vadd.f32 %v4211, %v6234
    %6236 = vmatprep.mubr.bf16.mxu0 0
    %6237 = vmatmul.mubr.bf16.gmra.mrb[0].mxu0 %v4089
    %v6238 = vpop.f32.mrb[0].mxu0
    %v6239 = vadd.f32 %v4207, %v6238
    %v6240 = vpop.f32.mrb[0].mxu0
    %v6241 = vadd.f32 %v4211, %v6240
    %v6242 = vpop.f32.mrb[0].mxu0
    %v6243 = vadd.f32 %v4207, %v6242
    %v6244 = vpop.f32.mrb[0].mxu0
    %v6245 = vadd.f32 %v4211, %v6244
    %6246 = vmatprep.mubr.bf16.mxu0 0
    %6247 = vmatmul.mubr.bf16.gmra.mrb[0].mxu0 %v4090
    %v6248 = vpop.f32.mrb[0].mxu0
    %v6249 = vadd.f32 %v4207, %v6248
    %v6250 = vpop.f32.mrb[0].mxu0
    %v6251 = vadd.f32 %v4211, %v6250
    %v6252 = vpop.f32.mrb[0].mxu0
    %v6253 = vadd.f32 %v4207, %v6252
    %v6254 = vpop.f32.mrb[0].mxu0
    %v6255 = vadd.f32 %v4211, %v6254
    %6256 = vmatprep.mubr.bf16.mxu0 0
    %6257 = vmatmul.mubr.bf16.gmra.mrb[0].mxu0 %v4091
    %v6258 = vpop.f32.mrb[0].mxu0
    %v6259 = vadd.f32 %v4207, %v6258
    %v6260 = vpop.f32.mrb[0].mxu0
    %v6261 = vadd.f32 %v4211, %v6260
    %v6262 = vpop.f32.mrb[0].mxu0
    %v6263 = vadd.f32 %v4207, %v6262
    %v6264 = vpop.f32.mrb[0].mxu0
    %v6265 = vadd.f32 %v4211, %v6264
    %6266 = vmatprep.mubr.bf16.mxu0 0
    %6267 = vmatmul.mubr.bf16.gmra.mrb[0].mxu0 %v4092
    %v6268 = vpop.f32.mrb[0].mxu0
    %v6269 = vadd.f32 %v4207, %v6268
    %v6270 = vpop.f32.mrb[0].mxu0
    %v6271 = vadd.f32 %v4211, %v6270
    %v6272 = vpop.f32.mrb[0].mxu0
    %v6273 = vadd.f32 %v4207, %v6272
    %v6274 = vpop.f32.mrb[0].mxu0
    %v6275 = vadd.f32 %v4211, %v6274
    %6276 = vmatprep.mubr.bf16.mxu0 0
    %6277 = vmatmul.mubr.bf16.gmra.mrb[0].mxu0 %v4093
    %v6278 = vpop.f32.mrb[0].mxu0
    %v6279 = vadd.f32 %v4207, %v6278
    %v6280 = vpop.f32.mrb[0].mxu0
    %v6281 = vadd.f32 %v4211, %v6280
    %v6282 = vpop.f32.mrb[0].mxu0
    %v6283 = vadd.f32 %v4207, %v6282
    %v6284 = vpop.f32.mrb[0].mxu0
    %v6285 = vadd.f32 %v4211, %v6284
    %6286 = vmatprep.mubr.bf16.mxu0 0
    %6287 = vmatmul.mubr.bf16.gmra.mrb[0].mxu0 %v4094
    %v6288 = vpop.f32.mrb[0].mxu0
    %v6289 = vadd.f32 %v4207, %v6288
    %v6290 = vpop.f32.mrb[0].mxu0
    %v6291 = vadd.f32 %v4211, %v6290
    %v6292 = vpop.f32.mrb[0].mxu0
    %v6293 = vadd.f32 %v4207, %v6292
    %v6294 = vpop.f32.mrb[0].mxu0
    %v6295 = vadd.f32 %v4211, %v6294
    %6296 = vmatprep.mubr.bf16.mxu0 0
    %6297 = vmatmul.mubr.bf16.gmra.mrb[0].mxu0 %v4095
    %v6298 = vpop.f32.mrb[0].mxu0
    %v6299 = vadd.f32 %v4207, %v6298
    %v6300 = vpop.f32.mrb[0].mxu0
    %v6301 = vadd.f32 %v4211, %v6300
    %v6302 = vpop.f32.mrb[0].mxu0
    %v6303 = vadd.f32 %v4207, %v6302
    %v6304 = vpop.f32.mrb[0].mxu0
    %v6305 = vadd.f32 %v4211, %v6304
    %6306 = vmatprep.mubr.bf16.mxu0 0
    %6307 = vmatmul.mubr.bf16.gmra.mrb[0].mxu0 %v4096
    %v6308 = vpop.f32.mrb[0].mxu0
    %v6309 = vadd.f32 %v4207, %v6308
    %v6310 = vpop.f32.mrb[0].mxu0
    %v6311 = vadd.f32 %v4211, %v6310
    %v6312 = vpop.f32.mrb[0].mxu0
    %v6313 = vadd.f32 %v4207, %v6312
    %v6314 = vpop.f32.mrb[0].mxu0
    %v6315 = vadd.f32 %v4211, %v6314
    %6316 = vmatprep.mubr.bf16.mxu0 0
    %6317 = vmatmul.mubr.bf16.gmra.mrb[0].mxu0 %v4097
    %v6318 = vpop.f32.mrb[0].mxu0
    %v6319 = vadd.f32 %v4207, %v6318
    %v6320 = vpop.f32.mrb[0].mxu0
    %v6321 = vadd.f32 %v4211, %v6320
    %v6322 = vpop.f32.mrb[0].mxu0
    %v6323 = vadd.f32 %v4207, %v6322
    %v6324 = vpop.f32.mrb[0].mxu0
    %v6325 = vadd.f32 %v4211, %v6324
    %6326 = vmatprep.mubr.bf16.mxu0 0
    %6327 = vmatmul.mubr.bf16.gmra.mrb[0].mxu0 %v4098
    %v6328 = vpop.f32.mrb[0].mxu0
    %v6329 = vadd.f32 %v4207, %v6328
    %v6330 = vpop.f32.mrb[0].mxu0
    %v6331 = vadd.f32 %v4211, %v6330
    %v6332 = vpop.f32.mrb[0].mxu0
    %v6333 = vadd.f32 %v4207, %v6332
    %v6334 = vpop.f32.mrb[0].mxu0
    %v6335 = vadd.f32 %v4211, %v6334
    %6336 = vmatprep.mubr.bf16.mxu0 0
    %6337 = vmatmul.mubr.bf16.gmra.mrb[0].mxu0 %v4099
    %v6338 = vpop.f32.mrb[0].mxu0
    %v6339 = vadd.f32 %v4207, %v6338
    %v6340 = vpop.f32.mrb[0].mxu0
    %v6341 = vadd.f32 %v4211, %v6340
    %v6342 = vpop.f32.mrb[0].mxu0
    %v6343 = vadd.f32 %v4207, %v6342
    %v6344 = vpop.f32.mrb[0].mxu0
    %v6345 = vadd.f32 %v4211, %v6344
    %6346 = vmatprep.mubr.bf16.mxu0 0
    %6347 = vmatmul.mubr.bf16.gmra.mrb[0].mxu0 %v4100
    %v6348 = vpop.f32.mrb[0].mxu0
    %v6349 = vadd.f32 %v4207, %v6348
    %v6350 = vpop.f32.mrb[0].mxu0
    %v6351 = vadd.f32 %v4211, %v6350
    %v6352 = vpop.f32.mrb[0].mxu0
    %v6353 = vadd.f32 %v4207, %v6352
    %v6354 = vpop.f32.mrb[0].mxu0
    %v6355 = vadd.f32 %v4211, %v6354
    %6356 = vmatprep.mubr.bf16.mxu0 0
    %6357 = vmatmul.mubr.bf16.gmra.mrb[0].mxu0 %v4101
    %v6358 = vpop.f32.mrb[0].mxu0
    %v6359 = vadd.f32 %v4207, %v6358
    %v6360 = vpop.f32.mrb[0].mxu0
    %v6361 = vadd.f32 %v4211, %v6360
    %v6362 = vpop.f32.mrb[0].mxu0
    %v6363 = vadd.f32 %v4207, %v6362
    %v6364 = vpop.f32.mrb[0].mxu0
    %v6365 = vadd.f32 %v4211, %v6364
    %6366 = vmatprep.mubr.bf16.mxu0 0
    %6367 = vmatmul.mubr.bf16.gmra.mrb[0].mxu0 %v4102
    %v6368 = vpop.f32.mrb[0].mxu0
    %v6369 = vadd.f32 %v4207, %v6368
    %v6370 = vpop.f32.mrb[0].mxu0
    %v6371 = vadd.f32 %v4211, %v6370
    %v6372 = vpop.f32.mrb[0].mxu0
    %v6373 = vadd.f32 %v4207, %v6372
    %v6374 = vpop.f32.mrb[0].mxu0
    %v6375 = vadd.f32 %v4211, %v6374
    %6376 = vmatprep.mubr.bf16.mxu0 0
    %6377 = vmatmul.mubr.bf16.gmra.mrb[0].mxu0 %v4103
    %v6378 = vpop.f32.mrb[0].mxu0
    %v6379 = vadd.f32 %v4207, %v6378
    %v6380 = vpop.f32.mrb[0].mxu0
    %v6381 = vadd.f32 %v4211, %v6380
    %v6382 = vpop.f32.mrb[0].mxu0
    %v6383 = vadd.f32 %v4207, %v6382
    %v6384 = vpop.f32.mrb[0].mxu0
    %v6385 = vadd.f32 %v4211, %v6384
    %6386 = vmatprep.mubr.bf16.mxu0 0
    %6387 = vmatmul.mubr.bf16.gmra.mrb[0].mxu0 %v4104
    %v6388 = vpop.f32.mrb[0].mxu0
    %v6389 = vadd.f32 %v4207, %v6388
    %v6390 = vpop.f32.mrb[0].mxu0
    %v6391 = vadd.f32 %v4211, %v6390
    %v6392 = vpop.f32.mrb[0].mxu0
    %v6393 = vadd.f32 %v4207, %v6392
    %v6394 = vpop.f32.mrb[0].mxu0
    %v6395 = vadd.f32 %v4211, %v6394
    %6396 = vmatprep.mubr.bf16.mxu0 0
    %6397 = vmatmul.mubr.bf16.gmra.mrb[0].mxu0 %v4105
    %v6398 = vpop.f32.mrb[0].mxu0
    %v6399 = vadd.f32 %v4207, %v6398
    %v6400 = vpop.f32.mrb[0].mxu0
    %v6401 = vadd.f32 %v4211, %v6400
    %v6402 = vpop.f32.mrb[0].mxu0
    %v6403 = vadd.f32 %v4207, %v6402
    %v6404 = vpop.f32.mrb[0].mxu0
    %v6405 = vadd.f32 %v4211, %v6404
    %6406 = vmatprep.mubr.bf16.mxu0 0
    %6407 = vmatmul.mubr.bf16.gmra.mrb[0].mxu0 %v4106
    %v6408 = vpop.f32.mrb[0].mxu0
    %v6409 = vadd.f32 %v4207, %v6408
    %v6410 = vpop.f32.mrb[0].mxu0
    %v6411 = vadd.f32 %v4211, %v6410
    %v6412 = vpop.f32.mrb[0].mxu0
    %v6413 = vadd.f32 %v4207, %v6412
    %v6414 = vpop.f32.mrb[0].mxu0
    %v6415 = vadd.f32 %v4211, %v6414
    %6416 = vmatprep.mubr.bf16.mxu0 0
    %6417 = vmatmul.mubr.bf16.gmra.mrb[0].mxu0 %v4107
    %v6418 = vpop.f32.mrb[0].mxu0
    %v6419 = vadd.f32 %v4207, %v6418
    %v6420 = vpop.f32.mrb[0].mxu0
    %v6421 = vadd.f32 %v4211, %v6420
    %v6422 = vpop.f32.mrb[0].mxu0
    %v6423 = vadd.f32 %v4207, %v6422
    %v6424 = vpop.f32.mrb[0].mxu0
    %v6425 = vadd.f32 %v4211, %v6424
    %6426 = vmatprep.mubr.bf16.mxu0 0
    %6427 = vmatmul.mubr.bf16.gmra.mrb[0].mxu0 %v4108
    %v6428 = vpop.f32.mrb[0].mxu0
    %v6429 = vadd.f32 %v4207, %v6428
    %v6430 = vpop.f32.mrb[0].mxu0
    %v6431 = vadd.f32 %v4211, %v6430
    %v6432 = vpop.f32.mrb[0].mxu0
    %v6433 = vadd.f32 %v4207, %v6432
    %v6434 = vpop.f32.mrb[0].mxu0
    %v6435 = vadd.f32 %v4211, %v6434
    %6436 = vmatprep.mubr.bf16.mxu0 0
    %6437 = vmatmul.mubr.bf16.gmra.mrb[0].mxu0 %v4109
    %v6438 = vpop.f32.mrb[0].mxu0
    %v6439 = vadd.f32 %v4207, %v6438
    %v6440 = vpop.f32.mrb[0].mxu0
    %v6441 = vadd.f32 %v4211, %v6440
    %v6442 = vpop.f32.mrb[0].mxu0
    %v6443 = vadd.f32 %v4207, %v6442
    %v6444 = vpop.f32.mrb[0].mxu0
    %v6445 = vadd.f32 %v4211, %v6444
    %6446 = vmatprep.mubr.bf16.mxu0 0
    %6447 = vmatmul.mubr.bf16.gmra.mrb[0].mxu0 %v4110
    %v6448 = vpop.f32.mrb[0].mxu0
    %v6449 = vadd.f32 %v4207, %v6448
    %v6450 = vpop.f32.mrb[0].mxu0
    %v6451 = vadd.f32 %v4211, %v6450
    %v6452 = vpop.f32.mrb[0].mxu0
    %v6453 = vadd.f32 %v4207, %v6452
    %v6454 = vpop.f32.mrb[0].mxu0
    %v6455 = vadd.f32 %v4211, %v6454
    %6456 = vmatprep.mubr.bf16.mxu0 0
    %6457 = vmatmul.mubr.bf16.gmra.mrb[0].mxu0 %v4111
    %v6458 = vpop.f32.mrb[0].mxu0
    %v6459 = vadd.f32 %v4207, %v6458
    %v6460 = vpop.f32.mrb[0].mxu0
    %v6461 = vadd.f32 %v4211, %v6460
    %v6462 = vpop.f32.mrb[0].mxu0
    %v6463 = vadd.f32 %v4207, %v6462
    %v6464 = vpop.f32.mrb[0].mxu0
    %v6465 = vadd.f32 %v4211, %v6464
    %6466 = vmatprep.mubr.bf16.mxu0 0
    %6467 = vmatmul.mubr.bf16.gmra.mrb[0].mxu0 %v4112
    %v6468 = vpop.f32.mrb[0].mxu0
    %v6469 = vadd.f32 %v4207, %v6468
    %v6470 = vpop.f32.mrb[0].mxu0
    %v6471 = vadd.f32 %v4211, %v6470
    %v6472 = vpop.f32.mrb[0].mxu0
    %v6473 = vadd.f32 %v4207, %v6472
    %v6474 = vpop.f32.mrb[0].mxu0
    %v6475 = vadd.f32 %v4211, %v6474
    %6476 = vmatprep.mubr.bf16.mxu0 0
    %6477 = vmatmul.mubr.bf16.gmra.mrb[0].mxu0 %v4113
    %v6478 = vpop.f32.mrb[0].mxu0
    %v6479 = vadd.f32 %v4207, %v6478
    %v6480 = vpop.f32.mrb[0].mxu0
    %v6481 = vadd.f32 %v4211, %v6480
    %v6482 = vpop.f32.mrb[0].mxu0
    %v6483 = vadd.f32 %v4207, %v6482
    %v6484 = vpop.f32.mrb[0].mxu0
    %v6485 = vadd.f32 %v4211, %v6484
    %6486 = vmatprep.mubr.bf16.mxu0 0
    %6487 = vmatmul.mubr.bf16.gmra.mrb[0].mxu0 %v4114
    %v6488 = vpop.f32.mrb[0].mxu0
    %v6489 = vadd.f32 %v4207, %v6488
    %v6490 = vpop.f32.mrb[0].mxu0
    %v6491 = vadd.f32 %v4211, %v6490
    %v6492 = vpop.f32.mrb[0].mxu0
    %v6493 = vadd.f32 %v4207, %v6492
    %v6494 = vpop.f32.mrb[0].mxu0
    %v6495 = vadd.f32 %v4211, %v6494
    %6496 = vmatprep.mubr.bf16.mxu0 0
    %6497 = vmatmul.mubr.bf16.gmra.mrb[0].mxu0 %v4115
    %v6498 = vpop.f32.mrb[0].mxu0
    %v6499 = vadd.f32 %v4207, %v6498
    %v6500 = vpop.f32.mrb[0].mxu0
    %v6501 = vadd.f32 %v4211, %v6500
    %v6502 = vpop.f32.mrb[0].mxu0
    %v6503 = vadd.f32 %v4207, %v6502
    %v6504 = vpop.f32.mrb[0].mxu0
    %v6505 = vadd.f32 %v4211, %v6504
    %6506 = vmatprep.mubr.bf16.mxu0 0
    %6507 = vmatmul.mubr.bf16.gmra.mrb[0].mxu0 %v4116
    %v6508 = vpop.f32.mrb[0].mxu0
    %v6509 = vadd.f32 %v4207, %v6508
    %v6510 = vpop.f32.mrb[0].mxu0
    %v6511 = vadd.f32 %v4211, %v6510
    %v6512 = vpop.f32.mrb[0].mxu0
    %v6513 = vadd.f32 %v4207, %v6512
    %v6514 = vpop.f32.mrb[0].mxu0
    %v6515 = vadd.f32 %v4211, %v6514
    %6516 = vmatprep.mubr.bf16.mxu0 0
    %6517 = vmatmul.mubr.bf16.gmra.mrb[0].mxu0 %v4117
    %v6518 = vpop.f32.mrb[0].mxu0
    %v6519 = vadd.f32 %v4207, %v6518
    %v6520 = vpop.f32.mrb[0].mxu0
    %v6521 = vadd.f32 %v4211, %v6520
    %v6522 = vpop.f32.mrb[0].mxu0
    %v6523 = vadd.f32 %v4207, %v6522
    %v6524 = vpop.f32.mrb[0].mxu0
    %v6525 = vadd.f32 %v4211, %v6524
    %6526 = vmatprep.mubr.bf16.mxu0 0
    %6527 = vmatmul.mubr.bf16.gmra.mrb[0].mxu0 %v4118
    %v6528 = vpop.f32.mrb[0].mxu0
    %v6529 = vadd.f32 %v4207, %v6528
    %v6530 = vpop.f32.mrb[0].mxu0
    %v6531 = vadd.f32 %v4211, %v6530
    %v6532 = vpop.f32.mrb[0].mxu0
    %v6533 = vadd.f32 %v4207, %v6532
    %v6534 = vpop.f32.mrb[0].mxu0
    %v6535 = vadd.f32 %v4211, %v6534
    %6536 = vmatprep.mubr.bf16.mxu0 0
    %6537 = vmatmul.mubr.bf16.gmra.mrb[0].mxu0 %v4119
    %v6538 = vpop.f32.mrb[0].mxu0
    %v6539 = vadd.f32 %v4207, %v6538
    %v6540 = vpop.f32.mrb[0].mxu0
    %v6541 = vadd.f32 %v4211, %v6540
    %v6542 = vpop.f32.mrb[0].mxu0
    %v6543 = vadd.f32 %v4207, %v6542
    %v6544 = vpop.f32.mrb[0].mxu0
    %v6545 = vadd.f32 %v4211, %v6544
    %6546 = vmatprep.mubr.bf16.mxu0 0
    %6547 = vmatmul.mubr.bf16.gmra.mrb[0].mxu0 %v4120
    %v6548 = vpop.f32.mrb[0].mxu0
    %v6549 = vadd.f32 %v4207, %v6548
    %v6550 = vpop.f32.mrb[0].mxu0
    %v6551 = vadd.f32 %v4211, %v6550
    %v6552 = vpop.f32.mrb[0].mxu0
    %v6553 = vadd.f32 %v4207, %v6552
    %v6554 = vpop.f32.mrb[0].mxu0
    %v6555 = vadd.f32 %v4211, %v6554
    %6556 = vmatprep.mubr.bf16.mxu0 0
    %6557 = vmatmul.mubr.bf16.gmra.mrb[0].mxu0 %v4121
    %v6558 = vpop.f32.mrb[0].mxu0
    %v6559 = vadd.f32 %v4207, %v6558
    %v6560 = vpop.f32.mrb[0].mxu0
    %v6561 = vadd.f32 %v4211, %v6560
    %v6562 = vpop.f32.mrb[0].mxu0
    %v6563 = vadd.f32 %v4207, %v6562
    %v6564 = vpop.f32.mrb[0].mxu0
    %v6565 = vadd.f32 %v4211, %v6564
    %6566 = vdwg.mxu0
    %6567 = vmatprep.subr.bf16.mxu0 %v4427
    %6568 = vmatpush1.bf16.msra.mxu0 %v4426
    %6569 = vmatprep.subr.bf16.mxu0 %v4435
    %6570 = vmatpush1.bf16.msra.mxu0 %v4434
    %6571 = vmatprep.subr.bf16.mxu0 %v4443
    %6572 = vmatpush1.bf16.msra.mxu0 %v4442
    %6573 = vmatprep.subr.bf16.mxu0 %v4451
    %6574 = vmatpush1.bf16.msra.mxu0 %v4450
    %6575 = vmatprep.subr.bf16.mxu0 %v4459
    %6576 = vmatpush1.bf16.msra.mxu0 %v4458
    %6577 = vmatprep.subr.bf16.mxu0 %v4467
    %6578 = vmatpush1.bf16.msra.mxu0 %v4466
    %6579 = vmatprep.subr.bf16.mxu0 %v4475
    %6580 = vmatpush1.bf16.msra.mxu0 %v4474
    %6581 = vmatprep.subr.bf16.mxu0 %v4483
    %6582 = vmatpush1.bf16.msra.mxu0 %v4482
    %6583 = vmatprep.subr.bf16.mxu0 0
    %6584 = vmatpush1.bf16.msra.mxu0 0
    %6585 = vmatprep.subr.bf16.mxu0 0
    %6586 = vmatpush1.bf16.msra.mxu0 0
    %6587 = vmatprep.subr.bf16.mxu0 0
    %6588 = vmatpush1.bf16.msra.mxu0 0
    %6589 = vmatprep.subr.bf16.mxu0 0
    %6590 = vmatpush1.bf16.msra.mxu0 0
    %6591 = vmatprep.subr.bf16.mxu0 0
    %6592 = vmatpush1.bf16.msra.mxu0 0
    %6593 = vmatprep.subr.bf16.mxu0 0
    %6594 = vmatpush1.bf16.msra.mxu0 0
    %6595 = vmatprep.subr.bf16.mxu0 0
    %6596 = vmatpush1.bf16.msra.mxu0 0
    %6597 = vmatprep.subr.bf16.mxu0 0
    %6598 = vmatpush1.bf16.msra.mxu0 0
    %6599 = vmatprep.mubr.bf16.mxu0 0
    %6600 = vmatmul.mubr.bf16.gmra.mrb[0].mxu0 %v4058
    %v6601 = vpop.f32.mrb[0].mxu0
    %v6602 = vadd.f32 %v4215, %v6601
    %v6603 = vpop.f32.mrb[0].mxu0
    %v6604 = vadd.f32 %v4219, %v6603
    %v6605 = vpop.f32.mrb[0].mxu0
    %v6606 = vadd.f32 %v4215, %v6605
    %v6607 = vpop.f32.mrb[0].mxu0
    %v6608 = vadd.f32 %v4219, %v6607
    %6609 = vmatprep.mubr.bf16.mxu0 0
    %6610 = vmatmul.mubr.bf16.gmra.mrb[0].mxu0 %v4059
    %v6611 = vpop.f32.mrb[0].mxu0
    %v6612 = vadd.f32 %v4215, %v6611
    %v6613 = vpop.f32.mrb[0].mxu0
    %v6614 = vadd.f32 %v4219, %v6613
    %v6615 = vpop.f32.mrb[0].mxu0
    %v6616 = vadd.f32 %v4215, %v6615
    %v6617 = vpop.f32.mrb[0].mxu0
    %v6618 = vadd.f32 %v4219, %v6617
    %6619 = vmatprep.mubr.bf16.mxu0 0
    %6620 = vmatmul.mubr.bf16.gmra.mrb[0].mxu0 %v4060
    %v6621 = vpop.f32.mrb[0].mxu0
    %v6622 = vadd.f32 %v4215, %v6621
    %v6623 = vpop.f32.mrb[0].mxu0
    %v6624 = vadd.f32 %v4219, %v6623
    %v6625 = vpop.f32.mrb[0].mxu0
    %v6626 = vadd.f32 %v4215, %v6625
    %v6627 = vpop.f32.mrb[0].mxu0
    %v6628 = vadd.f32 %v4219, %v6627
    %6629 = vmatprep.mubr.bf16.mxu0 0
    %6630 = vmatmul.mubr.bf16.gmra.mrb[0].mxu0 %v4061
    %v6631 = vpop.f32.mrb[0].mxu0
    %v6632 = vadd.f32 %v4215, %v6631
    %v6633 = vpop.f32.mrb[0].mxu0
    %v6634 = vadd.f32 %v4219, %v6633
    %v6635 = vpop.f32.mrb[0].mxu0
    %v6636 = vadd.f32 %v4215, %v6635
    %v6637 = vpop.f32.mrb[0].mxu0
    %v6638 = vadd.f32 %v4219, %v6637
    %6639 = vmatprep.mubr.bf16.mxu0 0
    %6640 = vmatmul.mubr.bf16.gmra.mrb[0].mxu0 %v4062
    %v6641 = vpop.f32.mrb[0].mxu0
    %v6642 = vadd.f32 %v4215, %v6641
    %v6643 = vpop.f32.mrb[0].mxu0
    %v6644 = vadd.f32 %v4219, %v6643
    %v6645 = vpop.f32.mrb[0].mxu0
    %v6646 = vadd.f32 %v4215, %v6645
    %v6647 = vpop.f32.mrb[0].mxu0
    %v6648 = vadd.f32 %v4219, %v6647
    %6649 = vmatprep.mubr.bf16.mxu0 0
    %6650 = vmatmul.mubr.bf16.gmra.mrb[0].mxu0 %v4063
    %v6651 = vpop.f32.mrb[0].mxu0
    %v6652 = vadd.f32 %v4215, %v6651
    %v6653 = vpop.f32.mrb[0].mxu0
    %v6654 = vadd.f32 %v4219, %v6653
    %v6655 = vpop.f32.mrb[0].mxu0
    %v6656 = vadd.f32 %v4215, %v6655
    %v6657 = vpop.f32.mrb[0].mxu0
    %v6658 = vadd.f32 %v4219, %v6657
    %6659 = vmatprep.mubr.bf16.mxu0 0
    %6660 = vmatmul.mubr.bf16.gmra.mrb[0].mxu0 %v4064
    %v6661 = vpop.f32.mrb[0].mxu0
    %v6662 = vadd.f32 %v4215, %v6661
    %v6663 = vpop.f32.mrb[0].mxu0
    %v6664 = vadd.f32 %v4219, %v6663
    %v6665 = vpop.f32.mrb[0].mxu0
    %v6666 = vadd.f32 %v4215, %v6665
    %v6667 = vpop.f32.mrb[0].mxu0
    %v6668 = vadd.f32 %v4219, %v6667
    %6669 = vmatprep.mubr.bf16.mxu0 0
    %6670 = vmatmul.mubr.bf16.gmra.mrb[0].mxu0 %v4065
    %v6671 = vpop.f32.mrb[0].mxu0
    %v6672 = vadd.f32 %v4215, %v6671
    %v6673 = vpop.f32.mrb[0].mxu0
    %v6674 = vadd.f32 %v4219, %v6673
    %v6675 = vpop.f32.mrb[0].mxu0
    %v6676 = vadd.f32 %v4215, %v6675
    %v6677 = vpop.f32.mrb[0].mxu0
    %v6678 = vadd.f32 %v4219, %v6677
    %6679 = vmatprep.mubr.bf16.mxu0 0
    %6680 = vmatmul.mubr.bf16.gmra.mrb[0].mxu0 %v4066
    %v6681 = vpop.f32.mrb[0].mxu0
    %v6682 = vadd.f32 %v4215, %v6681
    %v6683 = vpop.f32.mrb[0].mxu0
    %v6684 = vadd.f32 %v4219, %v6683
    %v6685 = vpop.f32.mrb[0].mxu0
    %v6686 = vadd.f32 %v4215, %v6685
    %v6687 = vpop.f32.mrb[0].mxu0
    %v6688 = vadd.f32 %v4219, %v6687
    %6689 = vmatprep.mubr.bf16.mxu0 0
    %6690 = vmatmul.mubr.bf16.gmra.mrb[0].mxu0 %v4067
    %v6691 = vpop.f32.mrb[0].mxu0
    %v6692 = vadd.f32 %v4215, %v6691
    %v6693 = vpop.f32.mrb[0].mxu0
    %v6694 = vadd.f32 %v4219, %v6693
    %v6695 = vpop.f32.mrb[0].mxu0
    %v6696 = vadd.f32 %v4215, %v6695
    %v6697 = vpop.f32.mrb[0].mxu0
    %v6698 = vadd.f32 %v4219, %v6697
    %6699 = vmatprep.mubr.bf16.mxu0 0
    %6700 = vmatmul.mubr.bf16.gmra.mrb[0].mxu0 %v4068
    %v6701 = vpop.f32.mrb[0].mxu0
    %v6702 = vadd.f32 %v4215, %v6701
    %v6703 = vpop.f32.mrb[0].mxu0
    %v6704 = vadd.f32 %v4219, %v6703
    %v6705 = vpop.f32.mrb[0].mxu0
    %v6706 = vadd.f32 %v4215, %v6705
    %v6707 = vpop.f32.mrb[0].mxu0
    %v6708 = vadd.f32 %v4219, %v6707
    %6709 = vmatprep.mubr.bf16.mxu0 0
    %6710 = vmatmul.mubr.bf16.gmra.mrb[0].mxu0 %v4069
    %v6711 = vpop.f32.mrb[0].mxu0
    %v6712 = vadd.f32 %v4215, %v6711
    %v6713 = vpop.f32.mrb[0].mxu0
    %v6714 = vadd.f32 %v4219, %v6713
    %v6715 = vpop.f32.mrb[0].mxu0
    %v6716 = vadd.f32 %v4215, %v6715
    %v6717 = vpop.f32.mrb[0].mxu0
    %v6718 = vadd.f32 %v4219, %v6717
    %6719 = vmatprep.mubr.bf16.mxu0 0
    %6720 = vmatmul.mubr.bf16.gmra.mrb[0].mxu0 %v4070
    %v6721 = vpop.f32.mrb[0].mxu0
    %v6722 = vadd.f32 %v4215, %v6721
    %v6723 = vpop.f32.mrb[0].mxu0
    %v6724 = vadd.f32 %v4219, %v6723
    %v6725 = vpop.f32.mrb[0].mxu0
    %v6726 = vadd.f32 %v4215, %v6725
    %v6727 = vpop.f32.mrb[0].mxu0
    %v6728 = vadd.f32 %v4219, %v6727
    %6729 = vmatprep.mubr.bf16.mxu0 0
    %6730 = vmatmul.mubr.bf16.gmra.mrb[0].mxu0 %v4071
    %v6731 = vpop.f32.mrb[0].mxu0
    %v6732 = vadd.f32 %v4215, %v6731
    %v6733 = vpop.f32.mrb[0].mxu0
    %v6734 = vadd.f32 %v4219, %v6733
    %v6735 = vpop.f32.mrb[0].mxu0
    %v6736 = vadd.f32 %v4215, %v6735
    %v6737 = vpop.f32.mrb[0].mxu0
    %v6738 = vadd.f32 %v4219, %v6737
    %6739 = vmatprep.mubr.bf16.mxu0 0
    %6740 = vmatmul.mubr.bf16.gmra.mrb[0].mxu0 %v4072
    %v6741 = vpop.f32.mrb[0].mxu0
    %v6742 = vadd.f32 %v4215, %v6741
    %v6743 = vpop.f32.mrb[0].mxu0
    %v6744 = vadd.f32 %v4219, %v6743
    %v6745 = vpop.f32.mrb[0].mxu0
    %v6746 = vadd.f32 %v4215, %v6745
    %v6747 = vpop.f32.mrb[0].mxu0
    %v6748 = vadd.f32 %v4219, %v6747
    %6749 = vmatprep.mubr.bf16.mxu0 0
    %6750 = vmatmul.mubr.bf16.gmra.mrb[0].mxu0 %v4073
    %v6751 = vpop.f32.mrb[0].mxu0
    %v6752 = vadd.f32 %v4215, %v6751
    %v6753 = vpop.f32.mrb[0].mxu0
    %v6754 = vadd.f32 %v4219, %v6753
    %v6755 = vpop.f32.mrb[0].mxu0
    %v6756 = vadd.f32 %v4215, %v6755
    %v6757 = vpop.f32.mrb[0].mxu0
    %v6758 = vadd.f32 %v4219, %v6757
    %6759 = vmatprep.mubr.bf16.mxu0 0
    %6760 = vmatmul.mubr.bf16.gmra.mrb[0].mxu0 %v4074
    %v6761 = vpop.f32.mrb[0].mxu0
    %v6762 = vadd.f32 %v4215, %v6761
    %v6763 = vpop.f32.mrb[0].mxu0
    %v6764 = vadd.f32 %v4219, %v6763
    %v6765 = vpop.f32.mrb[0].mxu0
    %v6766 = vadd.f32 %v4215, %v6765
    %v6767 = vpop.f32.mrb[0].mxu0
    %v6768 = vadd.f32 %v4219, %v6767
    %6769 = vmatprep.mubr.bf16.mxu0 0
    %6770 = vmatmul.mubr.bf16.gmra.mrb[0].mxu0 %v4075
    %v6771 = vpop.f32.mrb[0].mxu0
    %v6772 = vadd.f32 %v4215, %v6771
    %v6773 = vpop.f32.mrb[0].mxu0
    %v6774 = vadd.f32 %v4219, %v6773
    %v6775 = vpop.f32.mrb[0].mxu0
    %v6776 = vadd.f32 %v4215, %v6775
    %v6777 = vpop.f32.mrb[0].mxu0
    %v6778 = vadd.f32 %v4219, %v6777
    %6779 = vmatprep.mubr.bf16.mxu0 0
    %6780 = vmatmul.mubr.bf16.gmra.mrb[0].mxu0 %v4076
    %v6781 = vpop.f32.mrb[0].mxu0
    %v6782 = vadd.f32 %v4215, %v6781
    %v6783 = vpop.f32.mrb[0].mxu0
    %v6784 = vadd.f32 %v4219, %v6783
    %v6785 = vpop.f32.mrb[0].mxu0
    %v6786 = vadd.f32 %v4215, %v6785
    %v6787 = vpop.f32.mrb[0].mxu0
    %v6788 = vadd.f32 %v4219, %v6787
    %6789 = vmatprep.mubr.bf16.mxu0 0
    %6790 = vmatmul.mubr.bf16.gmra.mrb[0].mxu0 %v4077
    %v6791 = vpop.f32.mrb[0].mxu0
    %v6792 = vadd.f32 %v4215, %v6791
    %v6793 = vpop.f32.mrb[0].mxu0
    %v6794 = vadd.f32 %v4219, %v6793
    %v6795 = vpop.f32.mrb[0].mxu0
    %v6796 = vadd.f32 %v4215, %v6795
    %v6797 = vpop.f32.mrb[0].mxu0
    %v6798 = vadd.f32 %v4219, %v6797
    %6799 = vmatprep.mubr.bf16.mxu0 0
    %6800 = vmatmul.mubr.bf16.gmra.mrb[0].mxu0 %v4078
    %v6801 = vpop.f32.mrb[0].mxu0
    %v6802 = vadd.f32 %v4215, %v6801
    %v6803 = vpop.f32.mrb[0].mxu0
    %v6804 = vadd.f32 %v4219, %v6803
    %v6805 = vpop.f32.mrb[0].mxu0
    %v6806 = vadd.f32 %v4215, %v6805
    %v6807 = vpop.f32.mrb[0].mxu0
    %v6808 = vadd.f32 %v4219, %v6807
    %6809 = vmatprep.mubr.bf16.mxu0 0
    %6810 = vmatmul.mubr.bf16.gmra.mrb[0].mxu0 %v4079
    %v6811 = vpop.f32.mrb[0].mxu0
    %v6812 = vadd.f32 %v4215, %v6811
    %v6813 = vpop.f32.mrb[0].mxu0
    %v6814 = vadd.f32 %v4219, %v6813
    %v6815 = vpop.f32.mrb[0].mxu0
    %v6816 = vadd.f32 %v4215, %v6815
    %v6817 = vpop.f32.mrb[0].mxu0
    %v6818 = vadd.f32 %v4219, %v6817
    %6819 = vmatprep.mubr.bf16.mxu0 0
    %6820 = vmatmul.mubr.bf16.gmra.mrb[0].mxu0 %v4080
    %v6821 = vpop.f32.mrb[0].mxu0
    %v6822 = vadd.f32 %v4215, %v6821
    %v6823 = vpop.f32.mrb[0].mxu0
    %v6824 = vadd.f32 %v4219, %v6823
    %v6825 = vpop.f32.mrb[0].mxu0
    %v6826 = vadd.f32 %v4215, %v6825
    %v6827 = vpop.f32.mrb[0].mxu0
    %v6828 = vadd.f32 %v4219, %v6827
    %6829 = vmatprep.mubr.bf16.mxu0 0
    %6830 = vmatmul.mubr.bf16.gmra.mrb[0].mxu0 %v4081
    %v6831 = vpop.f32.mrb[0].mxu0
    %v6832 = vadd.f32 %v4215, %v6831
    %v6833 = vpop.f32.mrb[0].mxu0
    %v6834 = vadd.f32 %v4219, %v6833
    %v6835 = vpop.f32.mrb[0].mxu0
    %v6836 = vadd.f32 %v4215, %v6835
    %v6837 = vpop.f32.mrb[0].mxu0
    %v6838 = vadd.f32 %v4219, %v6837
    %6839 = vmatprep.mubr.bf16.mxu0 0
    %6840 = vmatmul.mubr.bf16.gmra.mrb[0].mxu0 %v4082
    %v6841 = vpop.f32.mrb[0].mxu0
    %v6842 = vadd.f32 %v4215, %v6841
    %v6843 = vpop.f32.mrb[0].mxu0
    %v6844 = vadd.f32 %v4219, %v6843
    %v6845 = vpop.f32.mrb[0].mxu0
    %v6846 = vadd.f32 %v4215, %v6845
    %v6847 = vpop.f32.mrb[0].mxu0
    %v6848 = vadd.f32 %v4219, %v6847
    %6849 = vmatprep.mubr.bf16.mxu0 0
    %6850 = vmatmul.mubr.bf16.gmra.mrb[0].mxu0 %v4083
    %v6851 = vpop.f32.mrb[0].mxu0
    %v6852 = vadd.f32 %v4215, %v6851
    %v6853 = vpop.f32.mrb[0].mxu0
    %v6854 = vadd.f32 %v4219, %v6853
    %v6855 = vpop.f32.mrb[0].mxu0
    %v6856 = vadd.f32 %v4215, %v6855
    %v6857 = vpop.f32.mrb[0].mxu0
    %v6858 = vadd.f32 %v4219, %v6857
    %6859 = vmatprep.mubr.bf16.mxu0 0
    %6860 = vmatmul.mubr.bf16.gmra.mrb[0].mxu0 %v4084
    %v6861 = vpop.f32.mrb[0].mxu0
    %v6862 = vadd.f32 %v4215, %v6861
    %v6863 = vpop.f32.mrb[0].mxu0
    %v6864 = vadd.f32 %v4219, %v6863
    %v6865 = vpop.f32.mrb[0].mxu0
    %v6866 = vadd.f32 %v4215, %v6865
    %v6867 = vpop.f32.mrb[0].mxu0
    %v6868 = vadd.f32 %v4219, %v6867
    %6869 = vmatprep.mubr.bf16.mxu0 0
    %6870 = vmatmul.mubr.bf16.gmra.mrb[0].mxu0 %v4085
    %v6871 = vpop.f32.mrb[0].mxu0
    %v6872 = vadd.f32 %v4215, %v6871
    %v6873 = vpop.f32.mrb[0].mxu0
    %v6874 = vadd.f32 %v4219, %v6873
    %v6875 = vpop.f32.mrb[0].mxu0
    %v6876 = vadd.f32 %v4215, %v6875
    %v6877 = vpop.f32.mrb[0].mxu0
    %v6878 = vadd.f32 %v4219, %v6877
    %6879 = vmatprep.mubr.bf16.mxu0 0
    %6880 = vmatmul.mubr.bf16.gmra.mrb[0].mxu0 %v4086
    %v6881 = vpop.f32.mrb[0].mxu0
    %v6882 = vadd.f32 %v4215, %v6881
    %v6883 = vpop.f32.mrb[0].mxu0
    %v6884 = vadd.f32 %v4219, %v6883
    %v6885 = vpop.f32.mrb[0].mxu0
    %v6886 = vadd.f32 %v4215, %v6885
    %v6887 = vpop.f32.mrb[0].mxu0
    %v6888 = vadd.f32 %v4219, %v6887
    %6889 = vmatprep.mubr.bf16.mxu0 0
    %6890 = vmatmul.mubr.bf16.gmra.mrb[0].mxu0 %v4087
    %v6891 = vpop.f32.mrb[0].mxu0
    %v6892 = vadd.f32 %v4215, %v6891
    %v6893 = vpop.f32.mrb[0].mxu0
    %v6894 = vadd.f32 %v4219, %v6893
    %v6895 = vpop.f32.mrb[0].mxu0
    %v6896 = vadd.f32 %v4215, %v6895
    %v6897 = vpop.f32.mrb[0].mxu0
    %v6898 = vadd.f32 %v4219, %v6897
    %6899 = vmatprep.mubr.bf16.mxu0 0
    %6900 = vmatmul.mubr.bf16.gmra.mrb[0].mxu0 %v4088
    %v6901 = vpop.f32.mrb[0].mxu0
    %v6902 = vadd.f32 %v4215, %v6901
    %v6903 = vpop.f32.mrb[0].mxu0
    %v6904 = vadd.f32 %v4219, %v6903
    %v6905 = vpop.f32.mrb[0].mxu0
    %v6906 = vadd.f32 %v4215, %v6905
    %v6907 = vpop.f32.mrb[0].mxu0
    %v6908 = vadd.f32 %v4219, %v6907
    %6909 = vmatprep.mubr.bf16.mxu0 0
    %6910 = vmatmul.mubr.bf16.gmra.mrb[0].mxu0 %v4089
    %v6911 = vpop.f32.mrb[0].mxu0
    %v6912 = vadd.f32 %v4215, %v6911
    %v6913 = vpop.f32.mrb[0].mxu0
    %v6914 = vadd.f32 %v4219, %v6913
    %v6915 = vpop.f32.mrb[0].mxu0
    %v6916 = vadd.f32 %v4215, %v6915
    %v6917 = vpop.f32.mrb[0].mxu0
    %v6918 = vadd.f32 %v4219, %v6917
    %6919 = vmatprep.mubr.bf16.mxu0 0
    %6920 = vmatmul.mubr.bf16.gmra.mrb[0].mxu0 %v4090
    %v6921 = vpop.f32.mrb[0].mxu0
    %v6922 = vadd.f32 %v4215, %v6921
    %v6923 = vpop.f32.mrb[0].mxu0
    %v6924 = vadd.f32 %v4219, %v6923
    %v6925 = vpop.f32.mrb[0].mxu0
    %v6926 = vadd.f32 %v4215, %v6925
    %v6927 = vpop.f32.mrb[0].mxu0
    %v6928 = vadd.f32 %v4219, %v6927
    %6929 = vmatprep.mubr.bf16.mxu0 0
    %6930 = vmatmul.mubr.bf16.gmra.mrb[0].mxu0 %v4091
    %v6931 = vpop.f32.mrb[0].mxu0
    %v6932 = vadd.f32 %v4215, %v6931
    %v6933 = vpop.f32.mrb[0].mxu0
    %v6934 = vadd.f32 %v4219, %v6933
    %v6935 = vpop.f32.mrb[0].mxu0
    %v6936 = vadd.f32 %v4215, %v6935
    %v6937 = vpop.f32.mrb[0].mxu0
    %v6938 = vadd.f32 %v4219, %v6937
    %6939 = vmatprep.mubr.bf16.mxu0 0
    %6940 = vmatmul.mubr.bf16.gmra.mrb[0].mxu0 %v4092
    %v6941 = vpop.f32.mrb[0].mxu0
    %v6942 = vadd.f32 %v4215, %v6941
    %v6943 = vpop.f32.mrb[0].mxu0
    %v6944 = vadd.f32 %v4219, %v6943
    %v6945 = vpop.f32.mrb[0].mxu0
    %v6946 = vadd.f32 %v4215, %v6945
    %v6947 = vpop.f32.mrb[0].mxu0
    %v6948 = vadd.f32 %v4219, %v6947
    %6949 = vmatprep.mubr.bf16.mxu0 0
    %6950 = vmatmul.mubr.bf16.gmra.mrb[0].mxu0 %v4093
    %v6951 = vpop.f32.mrb[0].mxu0
    %v6952 = vadd.f32 %v4215, %v6951
    %v6953 = vpop.f32.mrb[0].mxu0
    %v6954 = vadd.f32 %v4219, %v6953
    %v6955 = vpop.f32.mrb[0].mxu0
    %v6956 = vadd.f32 %v4215, %v6955
    %v6957 = vpop.f32.mrb[0].mxu0
    %v6958 = vadd.f32 %v4219, %v6957
    %6959 = vmatprep.mubr.bf16.mxu0 0
    %6960 = vmatmul.mubr.bf16.gmra.mrb[0].mxu0 %v4094
    %v6961 = vpop.f32.mrb[0].mxu0
    %v6962 = vadd.f32 %v4215, %v6961
    %v6963 = vpop.f32.mrb[0].mxu0
    %v6964 = vadd.f32 %v4219, %v6963
    %v6965 = vpop.f32.mrb[0].mxu0
    %v6966 = vadd.f32 %v4215, %v6965
    %v6967 = vpop.f32.mrb[0].mxu0
    %v6968 = vadd.f32 %v4219, %v6967
    %6969 = vmatprep.mubr.bf16.mxu0 0
    %6970 = vmatmul.mubr.bf16.gmra.mrb[0].mxu0 %v4095
    %v6971 = vpop.f32.mrb[0].mxu0
    %v6972 = vadd.f32 %v4215, %v6971
    %v6973 = vpop.f32.mrb[0].mxu0
    %v6974 = vadd.f32 %v4219, %v6973
    %v6975 = vpop.f32.mrb[0].mxu0
    %v6976 = vadd.f32 %v4215, %v6975
    %v6977 = vpop.f32.mrb[0].mxu0
    %v6978 = vadd.f32 %v4219, %v6977
    %6979 = vmatprep.mubr.bf16.mxu0 0
    %6980 = vmatmul.mubr.bf16.gmra.mrb[0].mxu0 %v4096
    %v6981 = vpop.f32.mrb[0].mxu0
    %v6982 = vadd.f32 %v4215, %v6981
    %v6983 = vpop.f32.mrb[0].mxu0
    %v6984 = vadd.f32 %v4219, %v6983
    %v6985 = vpop.f32.mrb[0].mxu0
    %v6986 = vadd.f32 %v4215, %v6985
    %v6987 = vpop.f32.mrb[0].mxu0
    %v6988 = vadd.f32 %v4219, %v6987
    %6989 = vmatprep.mubr.bf16.mxu0 0
    %6990 = vmatmul.mubr.bf16.gmra.mrb[0].mxu0 %v4097
    %v6991 = vpop.f32.mrb[0].mxu0
    %v6992 = vadd.f32 %v4215, %v6991
    %v6993 = vpop.f32.mrb[0].mxu0
    %v6994 = vadd.f32 %v4219, %v6993
    %v6995 = vpop.f32.mrb[0].mxu0
    %v6996 = vadd.f32 %v4215, %v6995
    %v6997 = vpop.f32.mrb[0].mxu0
    %v6998 = vadd.f32 %v4219, %v6997
    %6999 = vmatprep.mubr.bf16.mxu0 0
    %7000 = vmatmul.mubr.bf16.gmra.mrb[0].mxu0 %v4098
    %v7001 = vpop.f32.mrb[0].mxu0
    %v7002 = vadd.f32 %v4215, %v7001
    %v7003 = vpop.f32.mrb[0].mxu0
    %v7004 = vadd.f32 %v4219, %v7003
    %v7005 = vpop.f32.mrb[0].mxu0
    %v7006 = vadd.f32 %v4215, %v7005
    %v7007 = vpop.f32.mrb[0].mxu0
    %v7008 = vadd.f32 %v4219, %v7007
    %7009 = vmatprep.mubr.bf16.mxu0 0
    %7010 = vmatmul.mubr.bf16.gmra.mrb[0].mxu0 %v4099
    %v7011 = vpop.f32.mrb[0].mxu0
    %v7012 = vadd.f32 %v4215, %v7011
    %v7013 = vpop.f32.mrb[0].mxu0
    %v7014 = vadd.f32 %v4219, %v7013
    %v7015 = vpop.f32.mrb[0].mxu0
    %v7016 = vadd.f32 %v4215, %v7015
    %v7017 = vpop.f32.mrb[0].mxu0
    %v7018 = vadd.f32 %v4219, %v7017
    %7019 = vmatprep.mubr.bf16.mxu0 0
    %7020 = vmatmul.mubr.bf16.gmra.mrb[0].mxu0 %v4100
    %v7021 = vpop.f32.mrb[0].mxu0
    %v7022 = vadd.f32 %v4215, %v7021
    %v7023 = vpop.f32.mrb[0].mxu0
    %v7024 = vadd.f32 %v4219, %v7023
    %v7025 = vpop.f32.mrb[0].mxu0
    %v7026 = vadd.f32 %v4215, %v7025
    %v7027 = vpop.f32.mrb[0].mxu0
    %v7028 = vadd.f32 %v4219, %v7027
    %7029 = vmatprep.mubr.bf16.mxu0 0
    %7030 = vmatmul.mubr.bf16.gmra.mrb[0].mxu0 %v4101
    %v7031 = vpop.f32.mrb[0].mxu0
    %v7032 = vadd.f32 %v4215, %v7031
    %v7033 = vpop.f32.mrb[0].mxu0
    %v7034 = vadd.f32 %v4219, %v7033
    %v7035 = vpop.f32.mrb[0].mxu0
    %v7036 = vadd.f32 %v4215, %v7035
    %v7037 = vpop.f32.mrb[0].mxu0
    %v7038 = vadd.f32 %v4219, %v7037
    %7039 = vmatprep.mubr.bf16.mxu0 0
    %7040 = vmatmul.mubr.bf16.gmra.mrb[0].mxu0 %v4102
    %v7041 = vpop.f32.mrb[0].mxu0
    %v7042 = vadd.f32 %v4215, %v7041
    %v7043 = vpop.f32.mrb[0].mxu0
    %v7044 = vadd.f32 %v4219, %v7043
    %v7045 = vpop.f32.mrb[0].mxu0
    %v7046 = vadd.f32 %v4215, %v7045
    %v7047 = vpop.f32.mrb[0].mxu0
    %v7048 = vadd.f32 %v4219, %v7047
    %7049 = vmatprep.mubr.bf16.mxu0 0
    %7050 = vmatmul.mubr.bf16.gmra.mrb[0].mxu0 %v4103
    %v7051 = vpop.f32.mrb[0].mxu0
    %v7052 = vadd.f32 %v4215, %v7051
    %v7053 = vpop.f32.mrb[0].mxu0
    %v7054 = vadd.f32 %v4219, %v7053
    %v7055 = vpop.f32.mrb[0].mxu0
    %v7056 = vadd.f32 %v4215, %v7055
    %v7057 = vpop.f32.mrb[0].mxu0
    %v7058 = vadd.f32 %v4219, %v7057
    %7059 = vmatprep.mubr.bf16.mxu0 0
    %7060 = vmatmul.mubr.bf16.gmra.mrb[0].mxu0 %v4104
    %v7061 = vpop.f32.mrb[0].mxu0
    %v7062 = vadd.f32 %v4215, %v7061
    %v7063 = vpop.f32.mrb[0].mxu0
    %v7064 = vadd.f32 %v4219, %v7063
    %v7065 = vpop.f32.mrb[0].mxu0
    %v7066 = vadd.f32 %v4215, %v7065
    %v7067 = vpop.f32.mrb[0].mxu0
    %v7068 = vadd.f32 %v4219, %v7067
    %7069 = vmatprep.mubr.bf16.mxu0 0
    %7070 = vmatmul.mubr.bf16.gmra.mrb[0].mxu0 %v4105
    %v7071 = vpop.f32.mrb[0].mxu0
    %v7072 = vadd.f32 %v4215, %v7071
    %v7073 = vpop.f32.mrb[0].mxu0
    %v7074 = vadd.f32 %v4219, %v7073
    %v7075 = vpop.f32.mrb[0].mxu0
    %v7076 = vadd.f32 %v4215, %v7075
    %v7077 = vpop.f32.mrb[0].mxu0
    %v7078 = vadd.f32 %v4219, %v7077
    %7079 = vmatprep.mubr.bf16.mxu0 0
    %7080 = vmatmul.mubr.bf16.gmra.mrb[0].mxu0 %v4106
    %v7081 = vpop.f32.mrb[0].mxu0
    %v7082 = vadd.f32 %v4215, %v7081
    %v7083 = vpop.f32.mrb[0].mxu0
    %v7084 = vadd.f32 %v4219, %v7083
    %v7085 = vpop.f32.mrb[0].mxu0
    %v7086 = vadd.f32 %v4215, %v7085
    %v7087 = vpop.f32.mrb[0].mxu0
    %v7088 = vadd.f32 %v4219, %v7087
    %7089 = vmatprep.mubr.bf16.mxu0 0
    %7090 = vmatmul.mubr.bf16.gmra.mrb[0].mxu0 %v4107
    %v7091 = vpop.f32.mrb[0].mxu0
    %v7092 = vadd.f32 %v4215, %v7091
    %v7093 = vpop.f32.mrb[0].mxu0
    %v7094 = vadd.f32 %v4219, %v7093
    %v7095 = vpop.f32.mrb[0].mxu0
    %v7096 = vadd.f32 %v4215, %v7095
    %v7097 = vpop.f32.mrb[0].mxu0
    %v7098 = vadd.f32 %v4219, %v7097
    %7099 = vmatprep.mubr.bf16.mxu0 0
    %7100 = vmatmul.mubr.bf16.gmra.mrb[0].mxu0 %v4108
    %v7101 = vpop.f32.mrb[0].mxu0
    %v7102 = vadd.f32 %v4215, %v7101
    %v7103 = vpop.f32.mrb[0].mxu0
    %v7104 = vadd.f32 %v4219, %v7103
    %v7105 = vpop.f32.mrb[0].mxu0
    %v7106 = vadd.f32 %v4215, %v7105
    %v7107 = vpop.f32.mrb[0].mxu0
    %v7108 = vadd.f32 %v4219, %v7107
    %7109 = vmatprep.mubr.bf16.mxu0 0
    %7110 = vmatmul.mubr.bf16.gmra.mrb[0].mxu0 %v4109
    %v7111 = vpop.f32.mrb[0].mxu0
    %v7112 = vadd.f32 %v4215, %v7111
    %v7113 = vpop.f32.mrb[0].mxu0
    %v7114 = vadd.f32 %v4219, %v7113
    %v7115 = vpop.f32.mrb[0].mxu0
    %v7116 = vadd.f32 %v4215, %v7115
    %v7117 = vpop.f32.mrb[0].mxu0
    %v7118 = vadd.f32 %v4219, %v7117
    %7119 = vmatprep.mubr.bf16.mxu0 0
    %7120 = vmatmul.mubr.bf16.gmra.mrb[0].mxu0 %v4110
    %v7121 = vpop.f32.mrb[0].mxu0
    %v7122 = vadd.f32 %v4215, %v7121
    %v7123 = vpop.f32.mrb[0].mxu0
    %v7124 = vadd.f32 %v4219, %v7123
    %v7125 = vpop.f32.mrb[0].mxu0
    %v7126 = vadd.f32 %v4215, %v7125
    %v7127 = vpop.f32.mrb[0].mxu0
    %v7128 = vadd.f32 %v4219, %v7127
    %7129 = vmatprep.mubr.bf16.mxu0 0
    %7130 = vmatmul.mubr.bf16.gmra.mrb[0].mxu0 %v4111
    %v7131 = vpop.f32.mrb[0].mxu0
    %v7132 = vadd.f32 %v4215, %v7131
    %v7133 = vpop.f32.mrb[0].mxu0
    %v7134 = vadd.f32 %v4219, %v7133
    %v7135 = vpop.f32.mrb[0].mxu0
    %v7136 = vadd.f32 %v4215, %v7135
    %v7137 = vpop.f32.mrb[0].mxu0
    %v7138 = vadd.f32 %v4219, %v7137
    %7139 = vmatprep.mubr.bf16.mxu0 0
    %7140 = vmatmul.mubr.bf16.gmra.mrb[0].mxu0 %v4112
    %v7141 = vpop.f32.mrb[0].mxu0
    %v7142 = vadd.f32 %v4215, %v7141
    %v7143 = vpop.f32.mrb[0].mxu0
    %v7144 = vadd.f32 %v4219, %v7143
    %v7145 = vpop.f32.mrb[0].mxu0
    %v7146 = vadd.f32 %v4215, %v7145
    %v7147 = vpop.f32.mrb[0].mxu0
    %v7148 = vadd.f32 %v4219, %v7147
    %7149 = vmatprep.mubr.bf16.mxu0 0
    %7150 = vmatmul.mubr.bf16.gmra.mrb[0].mxu0 %v4113
    %v7151 = vpop.f32.mrb[0].mxu0
    %v7152 = vadd.f32 %v4215, %v7151
    %v7153 = vpop.f32.mrb[0].mxu0
    %v7154 = vadd.f32 %v4219, %v7153
    %v7155 = vpop.f32.mrb[0].mxu0
    %v7156 = vadd.f32 %v4215, %v7155
    %v7157 = vpop.f32.mrb[0].mxu0
    %v7158 = vadd.f32 %v4219, %v7157
    %7159 = vmatprep.mubr.bf16.mxu0 0
    %7160 = vmatmul.mubr.bf16.gmra.mrb[0].mxu0 %v4114
    %v7161 = vpop.f32.mrb[0].mxu0
    %v7162 = vadd.f32 %v4215, %v7161
    %v7163 = vpop.f32.mrb[0].mxu0
    %v7164 = vadd.f32 %v4219, %v7163
    %v7165 = vpop.f32.mrb[0].mxu0
    %v7166 = vadd.f32 %v4215, %v7165
    %v7167 = vpop.f32.mrb[0].mxu0
    %v7168 = vadd.f32 %v4219, %v7167
    %7169 = vmatprep.mubr.bf16.mxu0 0
    %7170 = vmatmul.mubr.bf16.gmra.mrb[0].mxu0 %v4115
    %v7171 = vpop.f32.mrb[0].mxu0
    %v7172 = vadd.f32 %v4215, %v7171
    %v7173 = vpop.f32.mrb[0].mxu0
    %v7174 = vadd.f32 %v4219, %v7173
    %v7175 = vpop.f32.mrb[0].mxu0
    %v7176 = vadd.f32 %v4215, %v7175
    %v7177 = vpop.f32.mrb[0].mxu0
    %v7178 = vadd.f32 %v4219, %v7177
    %7179 = vmatprep.mubr.bf16.mxu0 0
    %7180 = vmatmul.mubr.bf16.gmra.mrb[0].mxu0 %v4116
    %v7181 = vpop.f32.mrb[0].mxu0
    %v7182 = vadd.f32 %v4215, %v7181
    %v7183 = vpop.f32.mrb[0].mxu0
    %v7184 = vadd.f32 %v4219, %v7183
    %v7185 = vpop.f32.mrb[0].mxu0
    %v7186 = vadd.f32 %v4215, %v7185
    %v7187 = vpop.f32.mrb[0].mxu0
    %v7188 = vadd.f32 %v4219, %v7187
    %7189 = vmatprep.mubr.bf16.mxu0 0
    %7190 = vmatmul.mubr.bf16.gmra.mrb[0].mxu0 %v4117
    %v7191 = vpop.f32.mrb[0].mxu0
    %v7192 = vadd.f32 %v4215, %v7191
    %v7193 = vpop.f32.mrb[0].mxu0
    %v7194 = vadd.f32 %v4219, %v7193
    %v7195 = vpop.f32.mrb[0].mxu0
    %v7196 = vadd.f32 %v4215, %v7195
    %v7197 = vpop.f32.mrb[0].mxu0
    %v7198 = vadd.f32 %v4219, %v7197
    %7199 = vmatprep.mubr.bf16.mxu0 0
    %7200 = vmatmul.mubr.bf16.gmra.mrb[0].mxu0 %v4118
    %v7201 = vpop.f32.mrb[0].mxu0
    %v7202 = vadd.f32 %v4215, %v7201
    %v7203 = vpop.f32.mrb[0].mxu0
    %v7204 = vadd.f32 %v4219, %v7203
    %v7205 = vpop.f32.mrb[0].mxu0
    %v7206 = vadd.f32 %v4215, %v7205
    %v7207 = vpop.f32.mrb[0].mxu0
    %v7208 = vadd.f32 %v4219, %v7207
    %7209 = vmatprep.mubr.bf16.mxu0 0
    %7210 = vmatmul.mubr.bf16.gmra.mrb[0].mxu0 %v4119
    %v7211 = vpop.f32.mrb[0].mxu0
    %v7212 = vadd.f32 %v4215, %v7211
    %v7213 = vpop.f32.mrb[0].mxu0
    %v7214 = vadd.f32 %v4219, %v7213
    %v7215 = vpop.f32.mrb[0].mxu0
    %v7216 = vadd.f32 %v4215, %v7215
    %v7217 = vpop.f32.mrb[0].mxu0
    %v7218 = vadd.f32 %v4219, %v7217
    %7219 = vmatprep.mubr.bf16.mxu0 0
    %7220 = vmatmul.mubr.bf16.gmra.mrb[0].mxu0 %v4120
    %v7221 = vpop.f32.mrb[0].mxu0
    %v7222 = vadd.f32 %v4215, %v7221
    %v7223 = vpop.f32.mrb[0].mxu0
    %v7224 = vadd.f32 %v4219, %v7223
    %v7225 = vpop.f32.mrb[0].mxu0
    %v7226 = vadd.f32 %v4215, %v7225
    %v7227 = vpop.f32.mrb[0].mxu0
    %v7228 = vadd.f32 %v4219, %v7227
    %7229 = vmatprep.mubr.bf16.mxu0 0
    %7230 = vmatmul.mubr.bf16.gmra.mrb[0].mxu0 %v4121
    %v7231 = vpop.f32.mrb[0].mxu0
    %v7232 = vadd.f32 %v4215, %v7231
    %v7233 = vpop.f32.mrb[0].mxu0
    %v7234 = vadd.f32 %v4219, %v7233
    %v7235 = vpop.f32.mrb[0].mxu0
    %v7236 = vadd.f32 %v4215, %v7235
    %v7237 = vpop.f32.mrb[0].mxu0
    %v7238 = vadd.f32 %v4219, %v7237
    %7239 = vdwg.mxu0
    %v7240 = vmax.f32 %v4583, 0.0
    %v7241 = vmax.f32 %v4585, 0.0
    %v7242 = vmax.f32 %v5256, 0.0
    %v7243 = vmax.f32 %v5258, 0.0
    %v7244 = vmax.f32 %v5929, 0.0
    %v7245 = vmax.f32 %v5931, 0.0
    %v7246 = vmax.f32 %v6602, 0.0
    %v7247 = vmax.f32 %v6604, 0.0
    %v7248 = vmax.f32 %v4587, 0.0
    %v7249 = vmax.f32 %v4589, 0.0
    %v7250 = vmax.f32 %v5260, 0.0
    %v7251 = vmax.f32 %v5262, 0.0
    %v7252 = vmax.f32 %v5933, 0.0
    %v7253 = vmax.f32 %v5935, 0.0
    %v7254 = vmax.f32 %v6606, 0.0
    %v7255 = vmax.f32 %v6608, 0.0
    %v7256 = vmax.f32 %v4593, 0.0
    %v7257 = vmax.f32 %v4595, 0.0
    %v7258 = vmax.f32 %v5266, 0.0
    %v7259 = vmax.f32 %v5268, 0.0
    %v7260 = vmax.f32 %v5939, 0.0
    %v7261 = vmax.f32 %v5941, 0.0
    %v7262 = vmax.f32 %v6612, 0.0
    %v7263 = vmax.f32 %v6614, 0.0
    %v7264 = vmax.f32 %v4597, 0.0
    %v7265 = vmax.f32 %v4599, 0.0
    %v7266 = vmax.f32 %v5270, 0.0
    %v7267 = vmax.f32 %v5272, 0.0
    %v7268 = vmax.f32 %v5943, 0.0
    %v7269 = vmax.f32 %v5945, 0.0
    %v7270 = vmax.f32 %v6616, 0.0
    %v7271 = vmax.f32 %v6618, 0.0
    %v7272 = vmax.f32 %v4603, 0.0
    %v7273 = vmax.f32 %v4605, 0.0
    %v7274 = vmax.f32 %v5276, 0.0
    %v7275 = vmax.f32 %v5278, 0.0
    %v7276 = vmax.f32 %v5949, 0.0
    %v7277 = vmax.f32 %v5951, 0.0
    %v7278 = vmax.f32 %v6622, 0.0
    %v7279 = vmax.f32 %v6624, 0.0
    %v7280 = vmax.f32 %v4607, 0.0
    %v7281 = vmax.f32 %v4609, 0.0
    %v7282 = vmax.f32 %v5280, 0.0
    %v7283 = vmax.f32 %v5282, 0.0
    %v7284 = vmax.f32 %v5953, 0.0
    %v7285 = vmax.f32 %v5955, 0.0
    %v7286 = vmax.f32 %v6626, 0.0
    %v7287 = vmax.f32 %v6628, 0.0
    %v7288 = vmax.f32 %v4613, 0.0
    %v7289 = vmax.f32 %v4615, 0.0
    %v7290 = vmax.f32 %v5286, 0.0
    %v7291 = vmax.f32 %v5288, 0.0
    %v7292 = vmax.f32 %v5959, 0.0
    %v7293 = vmax.f32 %v5961, 0.0
    %v7294 = vmax.f32 %v6632, 0.0
    %v7295 = vmax.f32 %v6634, 0.0
    %v7296 = vmax.f32 %v4617, 0.0
    %v7297 = vmax.f32 %v4619, 0.0
    %v7298 = vmax.f32 %v5290, 0.0
    %v7299 = vmax.f32 %v5292, 0.0
    %v7300 = vmax.f32 %v5963, 0.0
    %v7301 = vmax.f32 %v5965, 0.0
    %v7302 = vmax.f32 %v6636, 0.0
    %v7303 = vmax.f32 %v6638, 0.0
    %v7304 = vmax.f32 %v4623, 0.0
    %v7305 = vmax.f32 %v4625, 0.0
    %v7306 = vmax.f32 %v5296, 0.0
    %v7307 = vmax.f32 %v5298, 0.0
    %v7308 = vmax.f32 %v5969, 0.0
    %v7309 = vmax.f32 %v5971, 0.0
    %v7310 = vmax.f32 %v6642, 0.0
    %v7311 = vmax.f32 %v6644, 0.0
    %v7312 = vmax.f32 %v4627, 0.0
    %v7313 = vmax.f32 %v4629, 0.0
    %v7314 = vmax.f32 %v5300, 0.0
    %v7315 = vmax.f32 %v5302, 0.0
    %v7316 = vmax.f32 %v5973, 0.0
    %v7317 = vmax.f32 %v5975, 0.0
    %v7318 = vmax.f32 %v6646, 0.0
    %v7319 = vmax.f32 %v6648, 0.0
    %v7320 = vmax.f32 %v4633, 0.0
    %v7321 = vmax.f32 %v4635, 0.0
    %v7322 = vmax.f32 %v5306, 0.0
    %v7323 = vmax.f32 %v5308, 0.0
    %v7324 = vmax.f32 %v5979, 0.0
    %v7325 = vmax.f32 %v5981, 0.0
    %v7326 = vmax.f32 %v6652, 0.0
    %v7327 = vmax.f32 %v6654, 0.0
    %v7328 = vmax.f32 %v4637, 0.0
    %v7329 = vmax.f32 %v4639, 0.0
    %v7330 = vmax.f32 %v5310, 0.0
    %v7331 = vmax.f32 %v5312, 0.0
    %v7332 = vmax.f32 %v5983, 0.0
    %v7333 = vmax.f32 %v5985, 0.0
    %v7334 = vmax.f32 %v6656, 0.0
    %v7335 = vmax.f32 %v6658, 0.0
    %v7336 = vmax.f32 %v4643, 0.0
    %v7337 = vmax.f32 %v4645, 0.0
    %v7338 = vmax.f32 %v5316, 0.0
    %v7339 = vmax.f32 %v5318, 0.0
    %v7340 = vmax.f32 %v5989, 0.0
    %v7341 = vmax.f32 %v5991, 0.0
    %v7342 = vmax.f32 %v6662, 0.0
    %v7343 = vmax.f32 %v6664, 0.0
    %v7344 = vmax.f32 %v4647, 0.0
    %v7345 = vmax.f32 %v4649, 0.0
    %v7346 = vmax.f32 %v5320, 0.0
    %v7347 = vmax.f32 %v5322, 0.0
    %v7348 = vmax.f32 %v5993, 0.0
    %v7349 = vmax.f32 %v5995, 0.0
    %v7350 = vmax.f32 %v6666, 0.0
    %v7351 = vmax.f32 %v6668, 0.0
    %v7352 = vmax.f32 %v4653, 0.0
    %v7353 = vmax.f32 %v4655, 0.0
    %v7354 = vmax.f32 %v5326, 0.0
    %v7355 = vmax.f32 %v5328, 0.0
    %v7356 = vmax.f32 %v5999, 0.0
    %v7357 = vmax.f32 %v6001, 0.0
    %v7358 = vmax.f32 %v6672, 0.0
    %v7359 = vmax.f32 %v6674, 0.0
    %v7360 = vmax.f32 %v4657, 0.0
    %v7361 = vmax.f32 %v4659, 0.0
    %v7362 = vmax.f32 %v5330, 0.0
    %v7363 = vmax.f32 %v5332, 0.0
    %v7364 = vmax.f32 %v6003, 0.0
    %v7365 = vmax.f32 %v6005, 0.0
    %v7366 = vmax.f32 %v6676, 0.0
    %v7367 = vmax.f32 %v6678, 0.0
    %v7368 = vmax.f32 %v4663, 0.0
    %v7369 = vmax.f32 %v4665, 0.0
    %v7370 = vmax.f32 %v5336, 0.0
    %v7371 = vmax.f32 %v5338, 0.0
    %v7372 = vmax.f32 %v6009, 0.0
    %v7373 = vmax.f32 %v6011, 0.0
    %v7374 = vmax.f32 %v6682, 0.0
    %v7375 = vmax.f32 %v6684, 0.0
    %v7376 = vmax.f32 %v4667, 0.0
    %v7377 = vmax.f32 %v4669, 0.0
    %v7378 = vmax.f32 %v5340, 0.0
    %v7379 = vmax.f32 %v5342, 0.0
    %v7380 = vmax.f32 %v6013, 0.0
    %v7381 = vmax.f32 %v6015, 0.0
    %v7382 = vmax.f32 %v6686, 0.0
    %v7383 = vmax.f32 %v6688, 0.0
    %v7384 = vmax.f32 %v4673, 0.0
    %v7385 = vmax.f32 %v4675, 0.0
    %v7386 = vmax.f32 %v5346, 0.0
    %v7387 = vmax.f32 %v5348, 0.0
    %v7388 = vmax.f32 %v6019, 0.0
    %v7389 = vmax.f32 %v6021, 0.0
    %v7390 = vmax.f32 %v6692, 0.0
    %v7391 = vmax.f32 %v6694, 0.0
    %v7392 = vmax.f32 %v4677, 0.0
    %v7393 = vmax.f32 %v4679, 0.0
    %v7394 = vmax.f32 %v5350, 0.0
    %v7395 = vmax.f32 %v5352, 0.0
    %v7396 = vmax.f32 %v6023, 0.0
    %v7397 = vmax.f32 %v6025, 0.0
    %v7398 = vmax.f32 %v6696, 0.0
    %v7399 = vmax.f32 %v6698, 0.0
    %v7400 = vmax.f32 %v4683, 0.0
    %v7401 = vmax.f32 %v4685, 0.0
    %v7402 = vmax.f32 %v5356, 0.0
    %v7403 = vmax.f32 %v5358, 0.0
    %v7404 = vmax.f32 %v6029, 0.0
    %v7405 = vmax.f32 %v6031, 0.0
    %v7406 = vmax.f32 %v6702, 0.0
    %v7407 = vmax.f32 %v6704, 0.0
    %v7408 = vmax.f32 %v4687, 0.0
    %v7409 = vmax.f32 %v4689, 0.0
    %v7410 = vmax.f32 %v5360, 0.0
    %v7411 = vmax.f32 %v5362, 0.0
    %v7412 = vmax.f32 %v6033, 0.0
    %v7413 = vmax.f32 %v6035, 0.0
    %v7414 = vmax.f32 %v6706, 0.0
    %v7415 = vmax.f32 %v6708, 0.0
    %v7416 = vmax.f32 %v4693, 0.0
    %v7417 = vmax.f32 %v4695, 0.0
    %v7418 = vmax.f32 %v5366, 0.0
    %v7419 = vmax.f32 %v5368, 0.0
    %v7420 = vmax.f32 %v6039, 0.0
    %v7421 = vmax.f32 %v6041, 0.0
    %v7422 = vmax.f32 %v6712, 0.0
    %v7423 = vmax.f32 %v6714, 0.0
    %v7424 = vmax.f32 %v4697, 0.0
    %v7425 = vmax.f32 %v4699, 0.0
    %v7426 = vmax.f32 %v5370, 0.0
    %v7427 = vmax.f32 %v5372, 0.0
    %v7428 = vmax.f32 %v6043, 0.0
    %v7429 = vmax.f32 %v6045, 0.0
    %v7430 = vmax.f32 %v6716, 0.0
    %v7431 = vmax.f32 %v6718, 0.0
    %v7432 = vmax.f32 %v4703, 0.0
    %v7433 = vmax.f32 %v4705, 0.0
    %v7434 = vmax.f32 %v5376, 0.0
    %v7435 = vmax.f32 %v5378, 0.0
    %v7436 = vmax.f32 %v6049, 0.0
    %v7437 = vmax.f32 %v6051, 0.0
    %v7438 = vmax.f32 %v6722, 0.0
    %v7439 = vmax.f32 %v6724, 0.0
    %v7440 = vmax.f32 %v4707, 0.0
    %v7441 = vmax.f32 %v4709, 0.0
    %v7442 = vmax.f32 %v5380, 0.0
    %v7443 = vmax.f32 %v5382, 0.0
    %v7444 = vmax.f32 %v6053, 0.0
    %v7445 = vmax.f32 %v6055, 0.0
    %v7446 = vmax.f32 %v6726, 0.0
    %v7447 = vmax.f32 %v6728, 0.0
    %v7448 = vmax.f32 %v4713, 0.0
    %v7449 = vmax.f32 %v4715, 0.0
    %v7450 = vmax.f32 %v5386, 0.0
    %v7451 = vmax.f32 %v5388, 0.0
    %v7452 = vmax.f32 %v6059, 0.0
    %v7453 = vmax.f32 %v6061, 0.0
    %v7454 = vmax.f32 %v6732, 0.0
    %v7455 = vmax.f32 %v6734, 0.0
    %v7456 = vmax.f32 %v4717, 0.0
    %v7457 = vmax.f32 %v4719, 0.0
    %v7458 = vmax.f32 %v5390, 0.0
    %v7459 = vmax.f32 %v5392, 0.0
    %v7460 = vmax.f32 %v6063, 0.0
    %v7461 = vmax.f32 %v6065, 0.0
    %v7462 = vmax.f32 %v6736, 0.0
    %v7463 = vmax.f32 %v6738, 0.0
    %v7464 = vmax.f32 %v4723, 0.0
    %v7465 = vmax.f32 %v4725, 0.0
    %v7466 = vmax.f32 %v5396, 0.0
    %v7467 = vmax.f32 %v5398, 0.0
    %v7468 = vmax.f32 %v6069, 0.0
    %v7469 = vmax.f32 %v6071, 0.0
    %v7470 = vmax.f32 %v6742, 0.0
    %v7471 = vmax.f32 %v6744, 0.0
    %v7472 = vmax.f32 %v4727, 0.0
    %v7473 = vmax.f32 %v4729, 0.0
    %v7474 = vmax.f32 %v5400, 0.0
    %v7475 = vmax.f32 %v5402, 0.0
    %v7476 = vmax.f32 %v6073, 0.0
    %v7477 = vmax.f32 %v6075, 0.0
    %v7478 = vmax.f32 %v6746, 0.0
    %v7479 = vmax.f32 %v6748, 0.0
    %v7480 = vmax.f32 %v4733, 0.0
    %v7481 = vmax.f32 %v4735, 0.0
    %v7482 = vmax.f32 %v5406, 0.0
    %v7483 = vmax.f32 %v5408, 0.0
    %v7484 = vmax.f32 %v6079, 0.0
    %v7485 = vmax.f32 %v6081, 0.0
    %v7486 = vmax.f32 %v6752, 0.0
    %v7487 = vmax.f32 %v6754, 0.0
    %v7488 = vmax.f32 %v4737, 0.0
    %v7489 = vmax.f32 %v4739, 0.0
    %v7490 = vmax.f32 %v5410, 0.0
    %v7491 = vmax.f32 %v5412, 0.0
    %v7492 = vmax.f32 %v6083, 0.0
    %v7493 = vmax.f32 %v6085, 0.0
    %v7494 = vmax.f32 %v6756, 0.0
    %v7495 = vmax.f32 %v6758, 0.0
    %v7496 = vmax.f32 %v4743, 0.0
    %v7497 = vmax.f32 %v4745, 0.0
    %v7498 = vmax.f32 %v5416, 0.0
    %v7499 = vmax.f32 %v5418, 0.0
    %v7500 = vmax.f32 %v6089, 0.0
    %v7501 = vmax.f32 %v6091, 0.0
    %v7502 = vmax.f32 %v6762, 0.0
    %v7503 = vmax.f32 %v6764, 0.0
    %v7504 = vmax.f32 %v4747, 0.0
    %v7505 = vmax.f32 %v4749, 0.0
    %v7506 = vmax.f32 %v5420, 0.0
    %v7507 = vmax.f32 %v5422, 0.0
    %v7508 = vmax.f32 %v6093, 0.0
    %v7509 = vmax.f32 %v6095, 0.0
    %v7510 = vmax.f32 %v6766, 0.0
    %v7511 = vmax.f32 %v6768, 0.0
    %v7512 = vmax.f32 %v4753, 0.0
    %v7513 = vmax.f32 %v4755, 0.0
    %v7514 = vmax.f32 %v5426, 0.0
    %v7515 = vmax.f32 %v5428, 0.0
    %v7516 = vmax.f32 %v6099, 0.0
    %v7517 = vmax.f32 %v6101, 0.0
    %v7518 = vmax.f32 %v6772, 0.0
    %v7519 = vmax.f32 %v6774, 0.0
    %v7520 = vmax.f32 %v4757, 0.0
    %v7521 = vmax.f32 %v4759, 0.0
    %v7522 = vmax.f32 %v5430, 0.0
    %v7523 = vmax.f32 %v5432, 0.0
    %v7524 = vmax.f32 %v6103, 0.0
    %v7525 = vmax.f32 %v6105, 0.0
    %v7526 = vmax.f32 %v6776, 0.0
    %v7527 = vmax.f32 %v6778, 0.0
    %v7528 = vmax.f32 %v4763, 0.0
    %v7529 = vmax.f32 %v4765, 0.0
    %v7530 = vmax.f32 %v5436, 0.0
    %v7531 = vmax.f32 %v5438, 0.0
    %v7532 = vmax.f32 %v6109, 0.0
    %v7533 = vmax.f32 %v6111, 0.0
    %v7534 = vmax.f32 %v6782, 0.0
    %v7535 = vmax.f32 %v6784, 0.0
    %v7536 = vmax.f32 %v4767, 0.0
    %v7537 = vmax.f32 %v4769, 0.0
    %v7538 = vmax.f32 %v5440, 0.0
    %v7539 = vmax.f32 %v5442, 0.0
    %v7540 = vmax.f32 %v6113, 0.0
    %v7541 = vmax.f32 %v6115, 0.0
    %v7542 = vmax.f32 %v6786, 0.0
    %v7543 = vmax.f32 %v6788, 0.0
    %v7544 = vmax.f32 %v4773, 0.0
    %v7545 = vmax.f32 %v4775, 0.0
    %v7546 = vmax.f32 %v5446, 0.0
    %v7547 = vmax.f32 %v5448, 0.0
    %v7548 = vmax.f32 %v6119, 0.0
    %v7549 = vmax.f32 %v6121, 0.0
    %v7550 = vmax.f32 %v6792, 0.0
    %v7551 = vmax.f32 %v6794, 0.0
    %v7552 = vmax.f32 %v4777, 0.0
    %v7553 = vmax.f32 %v4779, 0.0
    %v7554 = vmax.f32 %v5450, 0.0
    %v7555 = vmax.f32 %v5452, 0.0
    %v7556 = vmax.f32 %v6123, 0.0
    %v7557 = vmax.f32 %v6125, 0.0
    %v7558 = vmax.f32 %v6796, 0.0
    %v7559 = vmax.f32 %v6798, 0.0
    %v7560 = vmax.f32 %v4783, 0.0
    %v7561 = vmax.f32 %v4785, 0.0
    %v7562 = vmax.f32 %v5456, 0.0
    %v7563 = vmax.f32 %v5458, 0.0
    %v7564 = vmax.f32 %v6129, 0.0
    %v7565 = vmax.f32 %v6131, 0.0
    %v7566 = vmax.f32 %v6802, 0.0
    %v7567 = vmax.f32 %v6804, 0.0
    %v7568 = vmax.f32 %v4787, 0.0
    %v7569 = vmax.f32 %v4789, 0.0
    %v7570 = vmax.f32 %v5460, 0.0
    %v7571 = vmax.f32 %v5462, 0.0
    %v7572 = vmax.f32 %v6133, 0.0
    %v7573 = vmax.f32 %v6135, 0.0
    %v7574 = vmax.f32 %v6806, 0.0
    %v7575 = vmax.f32 %v6808, 0.0
    %v7576 = vmax.f32 %v4793, 0.0
    %v7577 = vmax.f32 %v4795, 0.0
    %v7578 = vmax.f32 %v5466, 0.0
    %v7579 = vmax.f32 %v5468, 0.0
    %v7580 = vmax.f32 %v6139, 0.0
    %v7581 = vmax.f32 %v6141, 0.0
    %v7582 = vmax.f32 %v6812, 0.0
    %v7583 = vmax.f32 %v6814, 0.0
    %v7584 = vmax.f32 %v4797, 0.0
    %v7585 = vmax.f32 %v4799, 0.0
    %v7586 = vmax.f32 %v5470, 0.0
    %v7587 = vmax.f32 %v5472, 0.0
    %v7588 = vmax.f32 %v6143, 0.0
    %v7589 = vmax.f32 %v6145, 0.0
    %v7590 = vmax.f32 %v6816, 0.0
    %v7591 = vmax.f32 %v6818, 0.0
    %v7592 = vmax.f32 %v4803, 0.0
    %v7593 = vmax.f32 %v4805, 0.0
    %v7594 = vmax.f32 %v5476, 0.0
    %v7595 = vmax.f32 %v5478, 0.0
    %v7596 = vmax.f32 %v6149, 0.0
    %v7597 = vmax.f32 %v6151, 0.0
    %v7598 = vmax.f32 %v6822, 0.0
    %v7599 = vmax.f32 %v6824, 0.0
    %v7600 = vmax.f32 %v4807, 0.0
    %v7601 = vmax.f32 %v4809, 0.0
    %v7602 = vmax.f32 %v5480, 0.0
    %v7603 = vmax.f32 %v5482, 0.0
    %v7604 = vmax.f32 %v6153, 0.0
    %v7605 = vmax.f32 %v6155, 0.0
    %v7606 = vmax.f32 %v6826, 0.0
    %v7607 = vmax.f32 %v6828, 0.0
    %v7608 = vmax.f32 %v4813, 0.0
    %v7609 = vmax.f32 %v4815, 0.0
    %v7610 = vmax.f32 %v5486, 0.0
    %v7611 = vmax.f32 %v5488, 0.0
    %v7612 = vmax.f32 %v6159, 0.0
    %v7613 = vmax.f32 %v6161, 0.0
    %v7614 = vmax.f32 %v6832, 0.0
    %v7615 = vmax.f32 %v6834, 0.0
    %v7616 = vmax.f32 %v4817, 0.0
    %v7617 = vmax.f32 %v4819, 0.0
    %v7618 = vmax.f32 %v5490, 0.0
    %v7619 = vmax.f32 %v5492, 0.0
    %v7620 = vmax.f32 %v6163, 0.0
    %v7621 = vmax.f32 %v6165, 0.0
    %v7622 = vmax.f32 %v6836, 0.0
    %v7623 = vmax.f32 %v6838, 0.0
    %v7624 = vmax.f32 %v4823, 0.0
    %v7625 = vmax.f32 %v4825, 0.0
    %v7626 = vmax.f32 %v5496, 0.0
    %v7627 = vmax.f32 %v5498, 0.0
    %v7628 = vmax.f32 %v6169, 0.0
    %v7629 = vmax.f32 %v6171, 0.0
    %v7630 = vmax.f32 %v6842, 0.0
    %v7631 = vmax.f32 %v6844, 0.0
    %v7632 = vmax.f32 %v4827, 0.0
    %v7633 = vmax.f32 %v4829, 0.0
    %v7634 = vmax.f32 %v5500, 0.0
    %v7635 = vmax.f32 %v5502, 0.0
    %v7636 = vmax.f32 %v6173, 0.0
    %v7637 = vmax.f32 %v6175, 0.0
    %v7638 = vmax.f32 %v6846, 0.0
    %v7639 = vmax.f32 %v6848, 0.0
    %v7640 = vmax.f32 %v4833, 0.0
    %v7641 = vmax.f32 %v4835, 0.0
    %v7642 = vmax.f32 %v5506, 0.0
    %v7643 = vmax.f32 %v5508, 0.0
    %v7644 = vmax.f32 %v6179, 0.0
    %v7645 = vmax.f32 %v6181, 0.0
    %v7646 = vmax.f32 %v6852, 0.0
    %v7647 = vmax.f32 %v6854, 0.0
    %v7648 = vmax.f32 %v4837, 0.0
    %v7649 = vmax.f32 %v4839, 0.0
    %v7650 = vmax.f32 %v5510, 0.0
    %v7651 = vmax.f32 %v5512, 0.0
    %v7652 = vmax.f32 %v6183, 0.0
    %v7653 = vmax.f32 %v6185, 0.0
    %v7654 = vmax.f32 %v6856, 0.0
    %v7655 = vmax.f32 %v6858, 0.0
    %v7656 = vmax.f32 %v4843, 0.0
    %v7657 = vmax.f32 %v4845, 0.0
    %v7658 = vmax.f32 %v5516, 0.0
    %v7659 = vmax.f32 %v5518, 0.0
    %v7660 = vmax.f32 %v6189, 0.0
    %v7661 = vmax.f32 %v6191, 0.0
    %v7662 = vmax.f32 %v6862, 0.0
    %v7663 = vmax.f32 %v6864, 0.0
    %v7664 = vmax.f32 %v4847, 0.0
    %v7665 = vmax.f32 %v4849, 0.0
    %v7666 = vmax.f32 %v5520, 0.0
    %v7667 = vmax.f32 %v5522, 0.0
    %v7668 = vmax.f32 %v6193, 0.0
    %v7669 = vmax.f32 %v6195, 0.0
    %v7670 = vmax.f32 %v6866, 0.0
    %v7671 = vmax.f32 %v6868, 0.0
    %v7672 = vmax.f32 %v4853, 0.0
    %v7673 = vmax.f32 %v4855, 0.0
    %v7674 = vmax.f32 %v5526, 0.0
    %v7675 = vmax.f32 %v5528, 0.0
    %v7676 = vmax.f32 %v6199, 0.0
    %v7677 = vmax.f32 %v6201, 0.0
    %v7678 = vmax.f32 %v6872, 0.0
    %v7679 = vmax.f32 %v6874, 0.0
    %v7680 = vmax.f32 %v4857, 0.0
    %v7681 = vmax.f32 %v4859, 0.0
    %v7682 = vmax.f32 %v5530, 0.0
    %v7683 = vmax.f32 %v5532, 0.0
    %v7684 = vmax.f32 %v6203, 0.0
    %v7685 = vmax.f32 %v6205, 0.0
    %v7686 = vmax.f32 %v6876, 0.0
    %v7687 = vmax.f32 %v6878, 0.0
    %v7688 = vmax.f32 %v4863, 0.0
    %v7689 = vmax.f32 %v4865, 0.0
    %v7690 = vmax.f32 %v5536, 0.0
    %v7691 = vmax.f32 %v5538, 0.0
    %v7692 = vmax.f32 %v6209, 0.0
    %v7693 = vmax.f32 %v6211, 0.0
    %v7694 = vmax.f32 %v6882, 0.0
    %v7695 = vmax.f32 %v6884, 0.0
    %v7696 = vmax.f32 %v4867, 0.0
    %v7697 = vmax.f32 %v4869, 0.0
    %v7698 = vmax.f32 %v5540, 0.0
    %v7699 = vmax.f32 %v5542, 0.0
    %v7700 = vmax.f32 %v6213, 0.0
    %v7701 = vmax.f32 %v6215, 0.0
    %v7702 = vmax.f32 %v6886, 0.0
    %v7703 = vmax.f32 %v6888, 0.0
    %v7704 = vmax.f32 %v4873, 0.0
    %v7705 = vmax.f32 %v4875, 0.0
    %v7706 = vmax.f32 %v5546, 0.0
    %v7707 = vmax.f32 %v5548, 0.0
    %v7708 = vmax.f32 %v6219, 0.0
    %v7709 = vmax.f32 %v6221, 0.0
    %v7710 = vmax.f32 %v6892, 0.0
    %v7711 = vmax.f32 %v6894, 0.0
    %v7712 = vmax.f32 %v4877, 0.0
    %v7713 = vmax.f32 %v4879, 0.0
    %v7714 = vmax.f32 %v5550, 0.0
    %v7715 = vmax.f32 %v5552, 0.0
    %v7716 = vmax.f32 %v6223, 0.0
    %v7717 = vmax.f32 %v6225, 0.0
    %v7718 = vmax.f32 %v6896, 0.0
    %v7719 = vmax.f32 %v6898, 0.0
    %v7720 = vmax.f32 %v4883, 0.0
    %v7721 = vmax.f32 %v4885, 0.0
    %v7722 = vmax.f32 %v5556, 0.0
    %v7723 = vmax.f32 %v5558, 0.0
    %v7724 = vmax.f32 %v6229, 0.0
    %v7725 = vmax.f32 %v6231, 0.0
    %v7726 = vmax.f32 %v6902, 0.0
    %v7727 = vmax.f32 %v6904, 0.0
    %v7728 = vmax.f32 %v4887, 0.0
    %v7729 = vmax.f32 %v4889, 0.0
    %v7730 = vmax.f32 %v5560, 0.0
    %v7731 = vmax.f32 %v5562, 0.0
    %v7732 = vmax.f32 %v6233, 0.0
    %v7733 = vmax.f32 %v6235, 0.0
    %v7734 = vmax.f32 %v6906, 0.0
    %v7735 = vmax.f32 %v6908, 0.0
    %v7736 = vmax.f32 %v4893, 0.0
    %v7737 = vmax.f32 %v4895, 0.0
    %v7738 = vmax.f32 %v5566, 0.0
    %v7739 = vmax.f32 %v5568, 0.0
    %v7740 = vmax.f32 %v6239, 0.0
    %v7741 = vmax.f32 %v6241, 0.0
    %v7742 = vmax.f32 %v6912, 0.0
    %v7743 = vmax.f32 %v6914, 0.0
    %v7744 = vmax.f32 %v4897, 0.0
    %v7745 = vmax.f32 %v4899, 0.0
    %v7746 = vmax.f32 %v5570, 0.0
    %v7747 = vmax.f32 %v5572, 0.0
    %v7748 = vmax.f32 %v6243, 0.0
    %v7749 = vmax.f32 %v6245, 0.0
    %v7750 = vmax.f32 %v6916, 0.0
    %v7751 = vmax.f32 %v6918, 0.0
    %v7752 = vmax.f32 %v4903, 0.0
    %v7753 = vmax.f32 %v4905, 0.0
    %v7754 = vmax.f32 %v5576, 0.0
    %v7755 = vmax.f32 %v5578, 0.0
    %v7756 = vmax.f32 %v6249, 0.0
    %v7757 = vmax.f32 %v6251, 0.0
    %v7758 = vmax.f32 %v6922, 0.0
    %v7759 = vmax.f32 %v6924, 0.0
    %v7760 = vmax.f32 %v4907, 0.0
    %v7761 = vmax.f32 %v4909, 0.0
    %v7762 = vmax.f32 %v5580, 0.0
    %v7763 = vmax.f32 %v5582, 0.0
    %v7764 = vmax.f32 %v6253, 0.0
    %v7765 = vmax.f32 %v6255, 0.0
    %v7766 = vmax.f32 %v6926, 0.0
    %v7767 = vmax.f32 %v6928, 0.0
    %v7768 = vmax.f32 %v4913, 0.0
    %v7769 = vmax.f32 %v4915, 0.0
    %v7770 = vmax.f32 %v5586, 0.0
    %v7771 = vmax.f32 %v5588, 0.0
    %v7772 = vmax.f32 %v6259, 0.0
    %v7773 = vmax.f32 %v6261, 0.0
    %v7774 = vmax.f32 %v6932, 0.0
    %v7775 = vmax.f32 %v6934, 0.0
    %v7776 = vmax.f32 %v4917, 0.0
    %v7777 = vmax.f32 %v4919, 0.0
    %v7778 = vmax.f32 %v5590, 0.0
    %v7779 = vmax.f32 %v5592, 0.0
    %v7780 = vmax.f32 %v6263, 0.0
    %v7781 = vmax.f32 %v6265, 0.0
    %v7782 = vmax.f32 %v6936, 0.0
    %v7783 = vmax.f32 %v6938, 0.0
    %v7784 = vmax.f32 %v4923, 0.0
    %v7785 = vmax.f32 %v4925, 0.0
    %v7786 = vmax.f32 %v5596, 0.0
    %v7787 = vmax.f32 %v5598, 0.0
    %v7788 = vmax.f32 %v6269, 0.0
    %v7789 = vmax.f32 %v6271, 0.0
    %v7790 = vmax.f32 %v6942, 0.0
    %v7791 = vmax.f32 %v6944, 0.0
    %v7792 = vmax.f32 %v4927, 0.0
    %v7793 = vmax.f32 %v4929, 0.0
    %v7794 = vmax.f32 %v5600, 0.0
    %v7795 = vmax.f32 %v5602, 0.0
    %v7796 = vmax.f32 %v6273, 0.0
    %v7797 = vmax.f32 %v6275, 0.0
    %v7798 = vmax.f32 %v6946, 0.0
    %v7799 = vmax.f32 %v6948, 0.0
    %v7800 = vmax.f32 %v4933, 0.0
    %v7801 = vmax.f32 %v4935, 0.0
    %v7802 = vmax.f32 %v5606, 0.0
    %v7803 = vmax.f32 %v5608, 0.0
    %v7804 = vmax.f32 %v6279, 0.0
    %v7805 = vmax.f32 %v6281, 0.0
    %v7806 = vmax.f32 %v6952, 0.0
    %v7807 = vmax.f32 %v6954, 0.0
    %v7808 = vmax.f32 %v4937, 0.0
    %v7809 = vmax.f32 %v4939, 0.0
    %v7810 = vmax.f32 %v5610, 0.0
    %v7811 = vmax.f32 %v5612, 0.0
    %v7812 = vmax.f32 %v6283, 0.0
    %v7813 = vmax.f32 %v6285, 0.0
    %v7814 = vmax.f32 %v6956, 0.0
    %v7815 = vmax.f32 %v6958, 0.0
    %v7816 = vmax.f32 %v4943, 0.0
    %v7817 = vmax.f32 %v4945, 0.0
    %v7818 = vmax.f32 %v5616, 0.0
    %v7819 = vmax.f32 %v5618, 0.0
    %v7820 = vmax.f32 %v6289, 0.0
    %v7821 = vmax.f32 %v6291, 0.0
    %v7822 = vmax.f32 %v6962, 0.0
    %v7823 = vmax.f32 %v6964, 0.0
    %v7824 = vmax.f32 %v4947, 0.0
    %v7825 = vmax.f32 %v4949, 0.0
    %v7826 = vmax.f32 %v5620, 0.0
    %v7827 = vmax.f32 %v5622, 0.0
    %v7828 = vmax.f32 %v6293, 0.0
    %v7829 = vmax.f32 %v6295, 0.0
    %v7830 = vmax.f32 %v6966, 0.0
    %v7831 = vmax.f32 %v6968, 0.0
    %v7832 = vmax.f32 %v4953, 0.0
    %v7833 = vmax.f32 %v4955, 0.0
    %v7834 = vmax.f32 %v5626, 0.0
    %v7835 = vmax.f32 %v5628, 0.0
    %v7836 = vmax.f32 %v6299, 0.0
    %v7837 = vmax.f32 %v6301, 0.0
    %v7838 = vmax.f32 %v6972, 0.0
    %v7839 = vmax.f32 %v6974, 0.0
    %v7840 = vmax.f32 %v4957, 0.0
    %v7841 = vmax.f32 %v4959, 0.0
    %v7842 = vmax.f32 %v5630, 0.0
    %v7843 = vmax.f32 %v5632, 0.0
    %v7844 = vmax.f32 %v6303, 0.0
    %v7845 = vmax.f32 %v6305, 0.0
    %v7846 = vmax.f32 %v6976, 0.0
    %v7847 = vmax.f32 %v6978, 0.0
    %v7848 = vmax.f32 %v4963, 0.0
    %v7849 = vmax.f32 %v4965, 0.0
    %v7850 = vmax.f32 %v5636, 0.0
    %v7851 = vmax.f32 %v5638, 0.0
    %v7852 = vmax.f32 %v6309, 0.0
    %v7853 = vmax.f32 %v6311, 0.0
    %v7854 = vmax.f32 %v6982, 0.0
    %v7855 = vmax.f32 %v6984, 0.0
    %v7856 = vmax.f32 %v4967, 0.0
    %v7857 = vmax.f32 %v4969, 0.0
    %v7858 = vmax.f32 %v5640, 0.0
    %v7859 = vmax.f32 %v5642, 0.0
    %v7860 = vmax.f32 %v6313, 0.0
    %v7861 = vmax.f32 %v6315, 0.0
    %v7862 = vmax.f32 %v6986, 0.0
    %v7863 = vmax.f32 %v6988, 0.0
    %v7864 = vmax.f32 %v4973, 0.0
    %v7865 = vmax.f32 %v4975, 0.0
    %v7866 = vmax.f32 %v5646, 0.0
    %v7867 = vmax.f32 %v5648, 0.0
    %v7868 = vmax.f32 %v6319, 0.0
    %v7869 = vmax.f32 %v6321, 0.0
    %v7870 = vmax.f32 %v6992, 0.0
    %v7871 = vmax.f32 %v6994, 0.0
    %v7872 = vmax.f32 %v4977, 0.0
    %v7873 = vmax.f32 %v4979, 0.0
    %v7874 = vmax.f32 %v5650, 0.0
    %v7875 = vmax.f32 %v5652, 0.0
    %v7876 = vmax.f32 %v6323, 0.0
    %v7877 = vmax.f32 %v6325, 0.0
    %v7878 = vmax.f32 %v6996, 0.0
    %v7879 = vmax.f32 %v6998, 0.0
    %v7880 = vmax.f32 %v4983, 0.0
    %v7881 = vmax.f32 %v4985, 0.0
    %v7882 = vmax.f32 %v5656, 0.0
    %v7883 = vmax.f32 %v5658, 0.0
    %v7884 = vmax.f32 %v6329, 0.0
    %v7885 = vmax.f32 %v6331, 0.0
    %v7886 = vmax.f32 %v7002, 0.0
    %v7887 = vmax.f32 %v7004, 0.0
    %v7888 = vmax.f32 %v4987, 0.0
    %v7889 = vmax.f32 %v4989, 0.0
    %v7890 = vmax.f32 %v5660, 0.0
    %v7891 = vmax.f32 %v5662, 0.0
    %v7892 = vmax.f32 %v6333, 0.0
    %v7893 = vmax.f32 %v6335, 0.0
    %v7894 = vmax.f32 %v7006, 0.0
    %v7895 = vmax.f32 %v7008, 0.0
    %v7896 = vmax.f32 %v4993, 0.0
    %v7897 = vmax.f32 %v4995, 0.0
    %v7898 = vmax.f32 %v5666, 0.0
    %v7899 = vmax.f32 %v5668, 0.0
    %v7900 = vmax.f32 %v6339, 0.0
    %v7901 = vmax.f32 %v6341, 0.0
    %v7902 = vmax.f32 %v7012, 0.0
    %v7903 = vmax.f32 %v7014, 0.0
    %v7904 = vmax.f32 %v4997, 0.0
    %v7905 = vmax.f32 %v4999, 0.0
    %v7906 = vmax.f32 %v5670, 0.0
    %v7907 = vmax.f32 %v5672, 0.0
    %v7908 = vmax.f32 %v6343, 0.0
    %v7909 = vmax.f32 %v6345, 0.0
    %v7910 = vmax.f32 %v7016, 0.0
    %v7911 = vmax.f32 %v7018, 0.0
    %v7912 = vmax.f32 %v5003, 0.0
    %v7913 = vmax.f32 %v5005, 0.0
    %v7914 = vmax.f32 %v5676, 0.0
    %v7915 = vmax.f32 %v5678, 0.0
    %v7916 = vmax.f32 %v6349, 0.0
    %v7917 = vmax.f32 %v6351, 0.0
    %v7918 = vmax.f32 %v7022, 0.0
    %v7919 = vmax.f32 %v7024, 0.0
    %v7920 = vmax.f32 %v5007, 0.0
    %v7921 = vmax.f32 %v5009, 0.0
    %v7922 = vmax.f32 %v5680, 0.0
    %v7923 = vmax.f32 %v5682, 0.0
    %v7924 = vmax.f32 %v6353, 0.0
    %v7925 = vmax.f32 %v6355, 0.0
    %v7926 = vmax.f32 %v7026, 0.0
    %v7927 = vmax.f32 %v7028, 0.0
    %v7928 = vmax.f32 %v5013, 0.0
    %v7929 = vmax.f32 %v5015, 0.0
    %v7930 = vmax.f32 %v5686, 0.0
    %v7931 = vmax.f32 %v5688, 0.0
    %v7932 = vmax.f32 %v6359, 0.0
    %v7933 = vmax.f32 %v6361, 0.0
    %v7934 = vmax.f32 %v7032, 0.0
    %v7935 = vmax.f32 %v7034, 0.0
    %v7936 = vmax.f32 %v5017, 0.0
    %v7937 = vmax.f32 %v5019, 0.0
    %v7938 = vmax.f32 %v5690, 0.0
    %v7939 = vmax.f32 %v5692, 0.0
    %v7940 = vmax.f32 %v6363, 0.0
    %v7941 = vmax.f32 %v6365, 0.0
    %v7942 = vmax.f32 %v7036, 0.0
    %v7943 = vmax.f32 %v7038, 0.0
    %v7944 = vmax.f32 %v5023, 0.0
    %v7945 = vmax.f32 %v5025, 0.0
    %v7946 = vmax.f32 %v5696, 0.0
    %v7947 = vmax.f32 %v5698, 0.0
    %v7948 = vmax.f32 %v6369, 0.0
    %v7949 = vmax.f32 %v6371, 0.0
    %v7950 = vmax.f32 %v7042, 0.0
    %v7951 = vmax.f32 %v7044, 0.0
    %v7952 = vmax.f32 %v5027, 0.0
    %v7953 = vmax.f32 %v5029, 0.0
    %v7954 = vmax.f32 %v5700, 0.0
    %v7955 = vmax.f32 %v5702, 0.0
    %v7956 = vmax.f32 %v6373, 0.0
    %v7957 = vmax.f32 %v6375, 0.0
    %v7958 = vmax.f32 %v7046, 0.0
    %v7959 = vmax.f32 %v7048, 0.0
    %v7960 = vmax.f32 %v5033, 0.0
    %v7961 = vmax.f32 %v5035, 0.0
    %v7962 = vmax.f32 %v5706, 0.0
    %v7963 = vmax.f32 %v5708, 0.0
    %v7964 = vmax.f32 %v6379, 0.0
    %v7965 = vmax.f32 %v6381, 0.0
    %v7966 = vmax.f32 %v7052, 0.0
    %v7967 = vmax.f32 %v7054, 0.0
    %v7968 = vmax.f32 %v5037, 0.0
    %v7969 = vmax.f32 %v5039, 0.0
    %v7970 = vmax.f32 %v5710, 0.0
    %v7971 = vmax.f32 %v5712, 0.0
    %v7972 = vmax.f32 %v6383, 0.0
    %v7973 = vmax.f32 %v6385, 0.0
    %v7974 = vmax.f32 %v7056, 0.0
    %v7975 = vmax.f32 %v7058, 0.0
    %v7976 = vmax.f32 %v5043, 0.0
    %v7977 = vmax.f32 %v5045, 0.0
    %v7978 = vmax.f32 %v5716, 0.0
    %v7979 = vmax.f32 %v5718, 0.0
    %v7980 = vmax.f32 %v6389, 0.0
    %v7981 = vmax.f32 %v6391, 0.0
    %v7982 = vmax.f32 %v7062, 0.0
    %v7983 = vmax.f32 %v7064, 0.0
    %v7984 = vmax.f32 %v5047, 0.0
    %v7985 = vmax.f32 %v5049, 0.0
    %v7986 = vmax.f32 %v5720, 0.0
    %v7987 = vmax.f32 %v5722, 0.0
    %v7988 = vmax.f32 %v6393, 0.0
    %v7989 = vmax.f32 %v6395, 0.0
    %v7990 = vmax.f32 %v7066, 0.0
    %v7991 = vmax.f32 %v7068, 0.0
    %v7992 = vmax.f32 %v5053, 0.0
    %v7993 = vmax.f32 %v5055, 0.0
    %v7994 = vmax.f32 %v5726, 0.0
    %v7995 = vmax.f32 %v5728, 0.0
    %v7996 = vmax.f32 %v6399, 0.0
    %v7997 = vmax.f32 %v6401, 0.0
    %v7998 = vmax.f32 %v7072, 0.0
    %v7999 = vmax.f32 %v7074, 0.0
    %v8000 = vmax.f32 %v5057, 0.0
    %v8001 = vmax.f32 %v5059, 0.0
    %v8002 = vmax.f32 %v5730, 0.0
    %v8003 = vmax.f32 %v5732, 0.0
    %v8004 = vmax.f32 %v6403, 0.0
    %v8005 = vmax.f32 %v6405, 0.0
    %v8006 = vmax.f32 %v7076, 0.0
    %v8007 = vmax.f32 %v7078, 0.0
    %v8008 = vmax.f32 %v5063, 0.0
    %v8009 = vmax.f32 %v5065, 0.0
    %v8010 = vmax.f32 %v5736, 0.0
    %v8011 = vmax.f32 %v5738, 0.0
    %v8012 = vmax.f32 %v6409, 0.0
    %v8013 = vmax.f32 %v6411, 0.0
    %v8014 = vmax.f32 %v7082, 0.0
    %v8015 = vmax.f32 %v7084, 0.0
    %v8016 = vmax.f32 %v5067, 0.0
    %v8017 = vmax.f32 %v5069, 0.0
    %v8018 = vmax.f32 %v5740, 0.0
    %v8019 = vmax.f32 %v5742, 0.0
    %v8020 = vmax.f32 %v6413, 0.0
    %v8021 = vmax.f32 %v6415, 0.0
    %v8022 = vmax.f32 %v7086, 0.0
    %v8023 = vmax.f32 %v7088, 0.0
    %v8024 = vmax.f32 %v5073, 0.0
    %v8025 = vmax.f32 %v5075, 0.0
    %v8026 = vmax.f32 %v5746, 0.0
    %v8027 = vmax.f32 %v5748, 0.0
    %v8028 = vmax.f32 %v6419, 0.0
    %v8029 = vmax.f32 %v6421, 0.0
    %v8030 = vmax.f32 %v7092, 0.0
    %v8031 = vmax.f32 %v7094, 0.0
    %v8032 = vmax.f32 %v5077, 0.0
    %v8033 = vmax.f32 %v5079, 0.0
    %v8034 = vmax.f32 %v5750, 0.0
    %v8035 = vmax.f32 %v5752, 0.0
    %v8036 = vmax.f32 %v6423, 0.0
    %v8037 = vmax.f32 %v6425, 0.0
    %v8038 = vmax.f32 %v7096, 0.0
    %v8039 = vmax.f32 %v7098, 0.0
    %v8040 = vmax.f32 %v5083, 0.0
    %v8041 = vmax.f32 %v5085, 0.0
    %v8042 = vmax.f32 %v5756, 0.0
    %v8043 = vmax.f32 %v5758, 0.0
    %v8044 = vmax.f32 %v6429, 0.0
    %v8045 = vmax.f32 %v6431, 0.0
    %v8046 = vmax.f32 %v7102, 0.0
    %v8047 = vmax.f32 %v7104, 0.0
    %v8048 = vmax.f32 %v5087, 0.0
    %v8049 = vmax.f32 %v5089, 0.0
    %v8050 = vmax.f32 %v5760, 0.0
    %v8051 = vmax.f32 %v5762, 0.0
    %v8052 = vmax.f32 %v6433, 0.0
    %v8053 = vmax.f32 %v6435, 0.0
    %v8054 = vmax.f32 %v7106, 0.0
    %v8055 = vmax.f32 %v7108, 0.0
    %v8056 = vmax.f32 %v5093, 0.0
    %v8057 = vmax.f32 %v5095, 0.0
    %v8058 = vmax.f32 %v5766, 0.0
    %v8059 = vmax.f32 %v5768, 0.0
    %v8060 = vmax.f32 %v6439, 0.0
    %v8061 = vmax.f32 %v6441, 0.0
    %v8062 = vmax.f32 %v7112, 0.0
    %v8063 = vmax.f32 %v7114, 0.0
    %v8064 = vmax.f32 %v5097, 0.0
    %v8065 = vmax.f32 %v5099, 0.0
    %v8066 = vmax.f32 %v5770, 0.0
    %v8067 = vmax.f32 %v5772, 0.0
    %v8068 = vmax.f32 %v6443, 0.0
    %v8069 = vmax.f32 %v6445, 0.0
    %v8070 = vmax.f32 %v7116, 0.0
    %v8071 = vmax.f32 %v7118, 0.0
    %v8072 = vmax.f32 %v5103, 0.0
    %v8073 = vmax.f32 %v5105, 0.0
    %v8074 = vmax.f32 %v5776, 0.0
    %v8075 = vmax.f32 %v5778, 0.0
    %v8076 = vmax.f32 %v6449, 0.0
    %v8077 = vmax.f32 %v6451, 0.0
    %v8078 = vmax.f32 %v7122, 0.0
    %v8079 = vmax.f32 %v7124, 0.0
    %v8080 = vmax.f32 %v5107, 0.0
    %v8081 = vmax.f32 %v5109, 0.0
    %v8082 = vmax.f32 %v5780, 0.0
    %v8083 = vmax.f32 %v5782, 0.0
    %v8084 = vmax.f32 %v6453, 0.0
    %v8085 = vmax.f32 %v6455, 0.0
    %v8086 = vmax.f32 %v7126, 0.0
    %v8087 = vmax.f32 %v7128, 0.0
    %v8088 = vmax.f32 %v5113, 0.0
    %v8089 = vmax.f32 %v5115, 0.0
    %v8090 = vmax.f32 %v5786, 0.0
    %v8091 = vmax.f32 %v5788, 0.0
    %v8092 = vmax.f32 %v6459, 0.0
    %v8093 = vmax.f32 %v6461, 0.0
    %v8094 = vmax.f32 %v7132, 0.0
    %v8095 = vmax.f32 %v7134, 0.0
    %v8096 = vmax.f32 %v5117, 0.0
    %v8097 = vmax.f32 %v5119, 0.0
    %v8098 = vmax.f32 %v5790, 0.0
    %v8099 = vmax.f32 %v5792, 0.0
    %v8100 = vmax.f32 %v6463, 0.0
    %v8101 = vmax.f32 %v6465, 0.0
    %v8102 = vmax.f32 %v7136, 0.0
    %v8103 = vmax.f32 %v7138, 0.0
    %v8104 = vmax.f32 %v5123, 0.0
    %v8105 = vmax.f32 %v5125, 0.0
    %v8106 = vmax.f32 %v5796, 0.0
    %v8107 = vmax.f32 %v5798, 0.0
    %v8108 = vmax.f32 %v6469, 0.0
    %v8109 = vmax.f32 %v6471, 0.0
    %v8110 = vmax.f32 %v7142, 0.0
    %v8111 = vmax.f32 %v7144, 0.0
    %v8112 = vmax.f32 %v5127, 0.0
    %v8113 = vmax.f32 %v5129, 0.0
    %v8114 = vmax.f32 %v5800, 0.0
    %v8115 = vmax.f32 %v5802, 0.0
    %v8116 = vmax.f32 %v6473, 0.0
    %v8117 = vmax.f32 %v6475, 0.0
    %v8118 = vmax.f32 %v7146, 0.0
    %v8119 = vmax.f32 %v7148, 0.0
    %v8120 = vmax.f32 %v5133, 0.0
    %v8121 = vmax.f32 %v5135, 0.0
    %v8122 = vmax.f32 %v5806, 0.0
    %v8123 = vmax.f32 %v5808, 0.0
    %v8124 = vmax.f32 %v6479, 0.0
    %v8125 = vmax.f32 %v6481, 0.0
    %v8126 = vmax.f32 %v7152, 0.0
    %v8127 = vmax.f32 %v7154, 0.0
    %v8128 = vmax.f32 %v5137, 0.0
    %v8129 = vmax.f32 %v5139, 0.0
    %v8130 = vmax.f32 %v5810, 0.0
    %v8131 = vmax.f32 %v5812, 0.0
    %v8132 = vmax.f32 %v6483, 0.0
    %v8133 = vmax.f32 %v6485, 0.0
    %v8134 = vmax.f32 %v7156, 0.0
    %v8135 = vmax.f32 %v7158, 0.0
    %v8136 = vmax.f32 %v5143, 0.0
    %v8137 = vmax.f32 %v5145, 0.0
    %v8138 = vmax.f32 %v5816, 0.0
    %v8139 = vmax.f32 %v5818, 0.0
    %v8140 = vmax.f32 %v6489, 0.0
    %v8141 = vmax.f32 %v6491, 0.0
    %v8142 = vmax.f32 %v7162, 0.0
    %v8143 = vmax.f32 %v7164, 0.0
    %v8144 = vmax.f32 %v5147, 0.0
    %v8145 = vmax.f32 %v5149, 0.0
    %v8146 = vmax.f32 %v5820, 0.0
    %v8147 = vmax.f32 %v5822, 0.0
    %v8148 = vmax.f32 %v6493, 0.0
    %v8149 = vmax.f32 %v6495, 0.0
    %v8150 = vmax.f32 %v7166, 0.0
    %v8151 = vmax.f32 %v7168, 0.0
    %v8152 = vmax.f32 %v5153, 0.0
    %v8153 = vmax.f32 %v5155, 0.0
    %v8154 = vmax.f32 %v5826, 0.0
    %v8155 = vmax.f32 %v5828, 0.0
    %v8156 = vmax.f32 %v6499, 0.0
    %v8157 = vmax.f32 %v6501, 0.0
    %v8158 = vmax.f32 %v7172, 0.0
    %v8159 = vmax.f32 %v7174, 0.0
    %v8160 = vmax.f32 %v5157, 0.0
    %v8161 = vmax.f32 %v5159, 0.0
    %v8162 = vmax.f32 %v5830, 0.0
    %v8163 = vmax.f32 %v5832, 0.0
    %v8164 = vmax.f32 %v6503, 0.0
    %v8165 = vmax.f32 %v6505, 0.0
    %v8166 = vmax.f32 %v7176, 0.0
    %v8167 = vmax.f32 %v7178, 0.0
    %v8168 = vmax.f32 %v5163, 0.0
    %v8169 = vmax.f32 %v5165, 0.0
    %v8170 = vmax.f32 %v5836, 0.0
    %v8171 = vmax.f32 %v5838, 0.0
    %v8172 = vmax.f32 %v6509, 0.0
    %v8173 = vmax.f32 %v6511, 0.0
    %v8174 = vmax.f32 %v7182, 0.0
    %v8175 = vmax.f32 %v7184, 0.0
    %v8176 = vmax.f32 %v5167, 0.0
    %v8177 = vmax.f32 %v5169, 0.0
    %v8178 = vmax.f32 %v5840, 0.0
    %v8179 = vmax.f32 %v5842, 0.0
    %v8180 = vmax.f32 %v6513, 0.0
    %v8181 = vmax.f32 %v6515, 0.0
    %v8182 = vmax.f32 %v7186, 0.0
    %v8183 = vmax.f32 %v7188, 0.0
    %v8184 = vmax.f32 %v5173, 0.0
    %v8185 = vmax.f32 %v5175, 0.0
    %v8186 = vmax.f32 %v5846, 0.0
    %v8187 = vmax.f32 %v5848, 0.0
    %v8188 = vmax.f32 %v6519, 0.0
    %v8189 = vmax.f32 %v6521, 0.0
    %v8190 = vmax.f32 %v7192, 0.0
    %v8191 = vmax.f32 %v7194, 0.0
    %v8192 = vmax.f32 %v5177, 0.0
    %v8193 = vmax.f32 %v5179, 0.0
    %v8194 = vmax.f32 %v5850, 0.0
    %v8195 = vmax.f32 %v5852, 0.0
    %v8196 = vmax.f32 %v6523, 0.0
    %v8197 = vmax.f32 %v6525, 0.0
    %v8198 = vmax.f32 %v7196, 0.0
    %v8199 = vmax.f32 %v7198, 0.0
    %v8200 = vmax.f32 %v5183, 0.0
    %v8201 = vmax.f32 %v5185, 0.0
    %v8202 = vmax.f32 %v5856, 0.0
    %v8203 = vmax.f32 %v5858, 0.0
    %v8204 = vmax.f32 %v6529, 0.0
    %v8205 = vmax.f32 %v6531, 0.0
    %v8206 = vmax.f32 %v7202, 0.0
    %v8207 = vmax.f32 %v7204, 0.0
    %v8208 = vmax.f32 %v5187, 0.0
    %v8209 = vmax.f32 %v5189, 0.0
    %v8210 = vmax.f32 %v5860, 0.0
    %v8211 = vmax.f32 %v5862, 0.0
    %v8212 = vmax.f32 %v6533, 0.0
    %v8213 = vmax.f32 %v6535, 0.0
    %v8214 = vmax.f32 %v7206, 0.0
    %v8215 = vmax.f32 %v7208, 0.0
    %v8216 = vmax.f32 %v5193, 0.0
    %v8217 = vmax.f32 %v5195, 0.0
    %v8218 = vmax.f32 %v5866, 0.0
    %v8219 = vmax.f32 %v5868, 0.0
    %v8220 = vmax.f32 %v6539, 0.0
    %v8221 = vmax.f32 %v6541, 0.0
    %v8222 = vmax.f32 %v7212, 0.0
    %v8223 = vmax.f32 %v7214, 0.0
    %v8224 = vmax.f32 %v5197, 0.0
    %v8225 = vmax.f32 %v5199, 0.0
    %v8226 = vmax.f32 %v5870, 0.0
    %v8227 = vmax.f32 %v5872, 0.0
    %v8228 = vmax.f32 %v6543, 0.0
    %v8229 = vmax.f32 %v6545, 0.0
    %v8230 = vmax.f32 %v7216, 0.0
    %v8231 = vmax.f32 %v7218, 0.0
    %v8232 = vmax.f32 %v5203, 0.0
    %v8233 = vmax.f32 %v5205, 0.0
    %v8234 = vmax.f32 %v5876, 0.0
    %v8235 = vmax.f32 %v5878, 0.0
    %v8236 = vmax.f32 %v6549, 0.0
    %v8237 = vmax.f32 %v6551, 0.0
    %v8238 = vmax.f32 %v7222, 0.0
    %v8239 = vmax.f32 %v7224, 0.0
    %v8240 = vmax.f32 %v5207, 0.0
    %v8241 = vmax.f32 %v5209, 0.0
    %v8242 = vmax.f32 %v5880, 0.0
    %v8243 = vmax.f32 %v5882, 0.0
    %v8244 = vmax.f32 %v6553, 0.0
    %v8245 = vmax.f32 %v6555, 0.0
    %v8246 = vmax.f32 %v7226, 0.0
    %v8247 = vmax.f32 %v7228, 0.0
    %v8248 = vmax.f32 %v5213, 0.0
    %v8249 = vmax.f32 %v5215, 0.0
    %v8250 = vmax.f32 %v5886, 0.0
    %v8251 = vmax.f32 %v5888, 0.0
    %v8252 = vmax.f32 %v6559, 0.0
    %v8253 = vmax.f32 %v6561, 0.0
    %v8254 = vmax.f32 %v7232, 0.0
    %v8255 = vmax.f32 %v7234, 0.0
    %v8256 = vmax.f32 %v5217, 0.0
    %v8257 = vmax.f32 %v5219, 0.0
    %v8258 = vmax.f32 %v5890, 0.0
    %v8259 = vmax.f32 %v5892, 0.0
    %v8260 = vmax.f32 %v6563, 0.0
    %v8261 = vmax.f32 %v6565, 0.0
    %v8262 = vmax.f32 %v7236, 0.0
    %v8263 = vmax.f32 %v7238, 0.0
    %v8264 = vmax.f32 %v7240, %v7248
    %v8265 = vmax.f32 %v8264, %v7256
    %v8266 = vmax.f32 %v8265, %v7264
    %v8267 = vmax.f32 %v8266, %v7272
    %v8268 = vmax.f32 %v8267, %v7280
    %v8269 = vmax.f32 %v8268, %v7288
    %v8270 = vmax.f32 %v8269, %v7296
    %v8271 = vmax.f32 %v8270, %v7304
    %v8272 = vmax.f32 %v8271, %v7312
    %v8273 = vmax.f32 %v8272, %v7320
    %v8274 = vmax.f32 %v8273, %v7328
    %v8275 = vmax.f32 %v8274, %v7336
    %v8276 = vmax.f32 %v8275, %v7344
    %v8277 = vmax.f32 %v8276, %v7352
    %v8278 = vmax.f32 %v8277, %v7360
    %v8279 = vmax.f32 %v8278, %v7368
    %v8280 = vmax.f32 %v8279, %v7376
    %v8281 = vmax.f32 %v8280, %v7384
    %v8282 = vmax.f32 %v8281, %v7392
    %v8283 = vmax.f32 %v8282, %v7400
    %v8284 = vmax.f32 %v8283, %v7408
    %v8285 = vmax.f32 %v8284, %v7416
    %v8286 = vmax.f32 %v8285, %v7424
    %v8287 = vmax.f32 %v8286, %v7432
    %v8288 = vmax.f32 %v8287, %v7440
    %v8289 = vmax.f32 %v8288, %v7448
    %v8290 = vmax.f32 %v8289, %v7456
    %v8291 = vmax.f32 %v8290, %v7464
    %v8292 = vmax.f32 %v8291, %v7472
    %v8293 = vmax.f32 %v8292, %v7480
    %v8294 = vmax.f32 %v8293, %v7488
    %v8295 = vrot.slane %v8294, 4
    %v8296 = vmax.f32 %v8294, %v8295
    %v8297 = vrot.slane %v8296, 2
    %v8298 = vmax.f32 %v8296, %v8297
    %v8299 = vrot.slane %v8298, 1
    %v8300 = vmax.f32 %v8298, %v8299
    %v8301 = vmax.f32 %v7241, %v7249
    %v8302 = vmax.f32 %v8301, %v7257
    %v8303 = vmax.f32 %v8302, %v7265
    %v8304 = vmax.f32 %v8303, %v7273
    %v8305 = vmax.f32 %v8304, %v7281
    %v8306 = vmax.f32 %v8305, %v7289
    %v8307 = vmax.f32 %v8306, %v7297
    %v8308 = vmax.f32 %v8307, %v7305
    %v8309 = vmax.f32 %v8308, %v7313
    %v8310 = vmax.f32 %v8309, %v7321
    %v8311 = vmax.f32 %v8310, %v7329
    %v8312 = vmax.f32 %v8311, %v7337
    %v8313 = vmax.f32 %v8312, %v7345
    %v8314 = vmax.f32 %v8313, %v7353
    %v8315 = vmax.f32 %v8314, %v7361
    %v8316 = vmax.f32 %v8315, %v7369
    %v8317 = vmax.f32 %v8316, %v7377
    %v8318 = vmax.f32 %v8317, %v7385
    %v8319 = vmax.f32 %v8318, %v7393
    %v8320 = vmax.f32 %v8319, %v7401
    %v8321 = vmax.f32 %v8320, %v7409
    %v8322 = vmax.f32 %v8321, %v7417
    %v8323 = vmax.f32 %v8322, %v7425
    %v8324 = vmax.f32 %v8323, %v7433
    %v8325 = vmax.f32 %v8324, %v7441
    %v8326 = vmax.f32 %v8325, %v7449
    %v8327 = vmax.f32 %v8326, %v7457
    %v8328 = vmax.f32 %v8327, %v7465
    %v8329 = vmax.f32 %v8328, %v7473
    %v8330 = vmax.f32 %v8329, %v7481
    %v8331 = vmax.f32 %v8330, %v7489
    %v8332 = vrot.slane %v8331, 4
    %v8333 = vmax.f32 %v8331, %v8332
    %v8334 = vrot.slane %v8333, 2
    %v8335 = vmax.f32 %v8333, %v8334
    %v8336 = vrot.slane %v8335, 1
    %v8337 = vmax.f32 %v8335, %v8336
    %v8338 = vmax.f32 %v7242, %v7250
    %v8339 = vmax.f32 %v8338, %v7258
    %v8340 = vmax.f32 %v8339, %v7266
    %v8341 = vmax.f32 %v8340, %v7274
    %v8342 = vmax.f32 %v8341, %v7282
    %v8343 = vmax.f32 %v8342, %v7290
    %v8344 = vmax.f32 %v8343, %v7298
    %v8345 = vmax.f32 %v8344, %v7306
    %v8346 = vmax.f32 %v8345, %v7314
    %v8347 = vmax.f32 %v8346, %v7322
    %v8348 = vmax.f32 %v8347, %v7330
    %v8349 = vmax.f32 %v8348, %v7338
    %v8350 = vmax.f32 %v8349, %v7346
    %v8351 = vmax.f32 %v8350, %v7354
    %v8352 = vmax.f32 %v8351, %v7362
    %v8353 = vmax.f32 %v8352, %v7370
    %v8354 = vmax.f32 %v8353, %v7378
    %v8355 = vmax.f32 %v8354, %v7386
    %v8356 = vmax.f32 %v8355, %v7394
    %v8357 = vmax.f32 %v8356, %v7402
    %v8358 = vmax.f32 %v8357, %v7410
    %v8359 = vmax.f32 %v8358, %v7418
    %v8360 = vmax.f32 %v8359, %v7426
    %v8361 = vmax.f32 %v8360, %v7434
    %v8362 = vmax.f32 %v8361, %v7442
    %v8363 = vmax.f32 %v8362, %v7450
    %v8364 = vmax.f32 %v8363, %v7458
    %v8365 = vmax.f32 %v8364, %v7466
    %v8366 = vmax.f32 %v8365, %v7474
    %v8367 = vmax.f32 %v8366, %v7482
    %v8368 = vmax.f32 %v8367, %v7490
    %v8369 = vrot.slane %v8368, 4
    %v8370 = vmax.f32 %v8368, %v8369
    %v8371 = vrot.slane %v8370, 2
    %v8372 = vmax.f32 %v8370, %v8371
    %v8373 = vrot.slane %v8372, 1
    %v8374 = vmax.f32 %v8372, %v8373
    %v8375 = vmax.f32 %v7243, %v7251
    %v8376 = vmax.f32 %v8375, %v7259
    %v8377 = vmax.f32 %v8376, %v7267
    %v8378 = vmax.f32 %v8377, %v7275
    %v8379 = vmax.f32 %v8378, %v7283
    %v8380 = vmax.f32 %v8379, %v7291
    %v8381 = vmax.f32 %v8380, %v7299
    %v8382 = vmax.f32 %v8381, %v7307
    %v8383 = vmax.f32 %v8382, %v7315
    %v8384 = vmax.f32 %v8383, %v7323
    %v8385 = vmax.f32 %v8384, %v7331
    %v8386 = vmax.f32 %v8385, %v7339
    %v8387 = vmax.f32 %v8386, %v7347
    %v8388 = vmax.f32 %v8387, %v7355
    %v8389 = vmax.f32 %v8388, %v7363
    %v8390 = vmax.f32 %v8389, %v7371
    %v8391 = vmax.f32 %v8390, %v7379
    %v8392 = vmax.f32 %v8391, %v7387
    %v8393 = vmax.f32 %v8392, %v7395
    %v8394 = vmax.f32 %v8393, %v7403
    %v8395 = vmax.f32 %v8394, %v7411
    %v8396 = vmax.f32 %v8395, %v7419
    %v8397 = vmax.f32 %v8396, %v7427
    %v8398 = vmax.f32 %v8397, %v7435
    %v8399 = vmax.f32 %v8398, %v7443
    %v8400 = vmax.f32 %v8399, %v7451
    %v8401 = vmax.f32 %v8400, %v7459
    %v8402 = vmax.f32 %v8401, %v7467
    %v8403 = vmax.f32 %v8402, %v7475
    %v8404 = vmax.f32 %v8403, %v7483
    %v8405 = vmax.f32 %v8404, %v7491
    %v8406 = vrot.slane %v8405, 4
    %v8407 = vmax.f32 %v8405, %v8406
    %v8408 = vrot.slane %v8407, 2
    %v8409 = vmax.f32 %v8407, %v8408
    %v8410 = vrot.slane %v8409, 1
    %v8411 = vmax.f32 %v8409, %v8410
    %v8412 = vmax.f32 %v7244, %v7252
    %v8413 = vmax.f32 %v8412, %v7260
    %v8414 = vmax.f32 %v8413, %v7268
    %v8415 = vmax.f32 %v8414, %v7276
    %v8416 = vmax.f32 %v8415, %v7284
    %v8417 = vmax.f32 %v8416, %v7292
    %v8418 = vmax.f32 %v8417, %v7300
    %v8419 = vmax.f32 %v8418, %v7308
    %v8420 = vmax.f32 %v8419, %v7316
    %v8421 = vmax.f32 %v8420, %v7324
    %v8422 = vmax.f32 %v8421, %v7332
    %v8423 = vmax.f32 %v8422, %v7340
    %v8424 = vmax.f32 %v8423, %v7348
    %v8425 = vmax.f32 %v8424, %v7356
    %v8426 = vmax.f32 %v8425, %v7364
    %v8427 = vmax.f32 %v8426, %v7372
    %v8428 = vmax.f32 %v8427, %v7380
    %v8429 = vmax.f32 %v8428, %v7388
    %v8430 = vmax.f32 %v8429, %v7396
    %v8431 = vmax.f32 %v8430, %v7404
    %v8432 = vmax.f32 %v8431, %v7412
    %v8433 = vmax.f32 %v8432, %v7420
    %v8434 = vmax.f32 %v8433, %v7428
    %v8435 = vmax.f32 %v8434, %v7436
    %v8436 = vmax.f32 %v8435, %v7444
    %v8437 = vmax.f32 %v8436, %v7452
    %v8438 = vmax.f32 %v8437, %v7460
    %v8439 = vmax.f32 %v8438, %v7468
    %v8440 = vmax.f32 %v8439, %v7476
    %v8441 = vmax.f32 %v8440, %v7484
    %v8442 = vmax.f32 %v8441, %v7492
    %v8443 = vrot.slane %v8442, 4
    %v8444 = vmax.f32 %v8442, %v8443
    %v8445 = vrot.slane %v8444, 2
    %v8446 = vmax.f32 %v8444, %v8445
    %v8447 = vrot.slane %v8446, 1
    %v8448 = vmax.f32 %v8446, %v8447
    %v8449 = vmax.f32 %v7245, %v7253
    %v8450 = vmax.f32 %v8449, %v7261
    %v8451 = vmax.f32 %v8450, %v7269
    %v8452 = vmax.f32 %v8451, %v7277
    %v8453 = vmax.f32 %v8452, %v7285
    %v8454 = vmax.f32 %v8453, %v7293
    %v8455 = vmax.f32 %v8454, %v7301
    %v8456 = vmax.f32 %v8455, %v7309
    %v8457 = vmax.f32 %v8456, %v7317
    %v8458 = vmax.f32 %v8457, %v7325
    %v8459 = vmax.f32 %v8458, %v7333
    %v8460 = vmax.f32 %v8459, %v7341
    %v8461 = vmax.f32 %v8460, %v7349
    %v8462 = vmax.f32 %v8461, %v7357
    %v8463 = vmax.f32 %v8462, %v7365
    %v8464 = vmax.f32 %v8463, %v7373
    %v8465 = vmax.f32 %v8464, %v7381
    %v8466 = vmax.f32 %v8465, %v7389
    %v8467 = vmax.f32 %v8466, %v7397
    %v8468 = vmax.f32 %v8467, %v7405
    %v8469 = vmax.f32 %v8468, %v7413
    %v8470 = vmax.f32 %v8469, %v7421
    %v8471 = vmax.f32 %v8470, %v7429
    %v8472 = vmax.f32 %v8471, %v7437
    %v8473 = vmax.f32 %v8472, %v7445
    %v8474 = vmax.f32 %v8473, %v7453
    %v8475 = vmax.f32 %v8474, %v7461
    %v8476 = vmax.f32 %v8475, %v7469
    %v8477 = vmax.f32 %v8476, %v7477
    %v8478 = vmax.f32 %v8477, %v7485
    %v8479 = vmax.f32 %v8478, %v7493
    %v8480 = vrot.slane %v8479, 4
    %v8481 = vmax.f32 %v8479, %v8480
    %v8482 = vrot.slane %v8481, 2
    %v8483 = vmax.f32 %v8481, %v8482
    %v8484 = vrot.slane %v8483, 1
    %v8485 = vmax.f32 %v8483, %v8484
    %v8486 = vmax.f32 %v7246, %v7254
    %v8487 = vmax.f32 %v8486, %v7262
    %v8488 = vmax.f32 %v8487, %v7270
    %v8489 = vmax.f32 %v8488, %v7278
    %v8490 = vmax.f32 %v8489, %v7286
    %v8491 = vmax.f32 %v8490, %v7294
    %v8492 = vmax.f32 %v8491, %v7302
    %v8493 = vmax.f32 %v8492, %v7310
    %v8494 = vmax.f32 %v8493, %v7318
    %v8495 = vmax.f32 %v8494, %v7326
    %v8496 = vmax.f32 %v8495, %v7334
    %v8497 = vmax.f32 %v8496, %v7342
    %v8498 = vmax.f32 %v8497, %v7350
    %v8499 = vmax.f32 %v8498, %v7358
    %v8500 = vmax.f32 %v8499, %v7366
    %v8501 = vmax.f32 %v8500, %v7374
    %v8502 = vmax.f32 %v8501, %v7382
    %v8503 = vmax.f32 %v8502, %v7390
    %v8504 = vmax.f32 %v8503, %v7398
    %v8505 = vmax.f32 %v8504, %v7406
    %v8506 = vmax.f32 %v8505, %v7414
    %v8507 = vmax.f32 %v8506, %v7422
    %v8508 = vmax.f32 %v8507, %v7430
    %v8509 = vmax.f32 %v8508, %v7438
    %v8510 = vmax.f32 %v8509, %v7446
    %v8511 = vmax.f32 %v8510, %v7454
    %v8512 = vmax.f32 %v8511, %v7462
    %v8513 = vmax.f32 %v8512, %v7470
    %v8514 = vmax.f32 %v8513, %v7478
    %v8515 = vmax.f32 %v8514, %v7486
    %v8516 = vmax.f32 %v8515, %v7494
    %v8517 = vrot.slane %v8516, 4
    %v8518 = vmax.f32 %v8516, %v8517
    %v8519 = vrot.slane %v8518, 2
    %v8520 = vmax.f32 %v8518, %v8519
    %v8521 = vrot.slane %v8520, 1
    %v8522 = vmax.f32 %v8520, %v8521
    %v8523 = vmax.f32 %v7247, %v7255
    %v8524 = vmax.f32 %v8523, %v7263
    %v8525 = vmax.f32 %v8524, %v7271
    %v8526 = vmax.f32 %v8525, %v7279
    %v8527 = vmax.f32 %v8526, %v7287
    %v8528 = vmax.f32 %v8527, %v7295
    %v8529 = vmax.f32 %v8528, %v7303
    %v8530 = vmax.f32 %v8529, %v7311
    %v8531 = vmax.f32 %v8530, %v7319
    %v8532 = vmax.f32 %v8531, %v7327
    %v8533 = vmax.f32 %v8532, %v7335
    %v8534 = vmax.f32 %v8533, %v7343
    %v8535 = vmax.f32 %v8534, %v7351
    %v8536 = vmax.f32 %v8535, %v7359
    %v8537 = vmax.f32 %v8536, %v7367
    %v8538 = vmax.f32 %v8537, %v7375
    %v8539 = vmax.f32 %v8538, %v7383
    %v8540 = vmax.f32 %v8539, %v7391
    %v8541 = vmax.f32 %v8540, %v7399
    %v8542 = vmax.f32 %v8541, %v7407
    %v8543 = vmax.f32 %v8542, %v7415
    %v8544 = vmax.f32 %v8543, %v7423
    %v8545 = vmax.f32 %v8544, %v7431
    %v8546 = vmax.f32 %v8545, %v7439
    %v8547 = vmax.f32 %v8546, %v7447
    %v8548 = vmax.f32 %v8547, %v7455
    %v8549 = vmax.f32 %v8548, %v7463
    %v8550 = vmax.f32 %v8549, %v7471
    %v8551 = vmax.f32 %v8550, %v7479
    %v8552 = vmax.f32 %v8551, %v7487
    %v8553 = vmax.f32 %v8552, %v7495
    %v8554 = vrot.slane %v8553, 4
    %v8555 = vmax.f32 %v8553, %v8554
    %v8556 = vrot.slane %v8555, 2
    %v8557 = vmax.f32 %v8555, %v8556
    %v8558 = vrot.slane %v8557, 1
    %v8559 = vmax.f32 %v8557, %v8558
    %v8560 = vmax.f32 %v7496, %v7504
    %v8561 = vmax.f32 %v8560, %v7512
    %v8562 = vmax.f32 %v8561, %v7520
    %v8563 = vmax.f32 %v8562, %v7528
    %v8564 = vmax.f32 %v8563, %v7536
    %v8565 = vmax.f32 %v8564, %v7544
    %v8566 = vmax.f32 %v8565, %v7552
    %v8567 = vmax.f32 %v8566, %v7560
    %v8568 = vmax.f32 %v8567, %v7568
    %v8569 = vmax.f32 %v8568, %v7576
    %v8570 = vmax.f32 %v8569, %v7584
    %v8571 = vmax.f32 %v8570, %v7592
    %v8572 = vmax.f32 %v8571, %v7600
    %v8573 = vmax.f32 %v8572, %v7608
    %v8574 = vmax.f32 %v8573, %v7616
    %v8575 = vmax.f32 %v8574, %v7624
    %v8576 = vmax.f32 %v8575, %v7632
    %v8577 = vmax.f32 %v8576, %v7640
    %v8578 = vmax.f32 %v8577, %v7648
    %v8579 = vmax.f32 %v8578, %v7656
    %v8580 = vmax.f32 %v8579, %v7664
    %v8581 = vmax.f32 %v8580, %v7672
    %v8582 = vmax.f32 %v8581, %v7680
    %v8583 = vmax.f32 %v8582, %v7688
    %v8584 = vmax.f32 %v8583, %v7696
    %v8585 = vmax.f32 %v8584, %v7704
    %v8586 = vmax.f32 %v8585, %v7712
    %v8587 = vmax.f32 %v8586, %v7720
    %v8588 = vmax.f32 %v8587, %v7728
    %v8589 = vmax.f32 %v8588, %v7736
    %v8590 = vmax.f32 %v8589, %v7744
    %v8591 = vrot.slane %v8590, 4
    %v8592 = vmax.f32 %v8590, %v8591
    %v8593 = vrot.slane %v8592, 2
    %v8594 = vmax.f32 %v8592, %v8593
    %v8595 = vrot.slane %v8594, 1
    %v8596 = vmax.f32 %v8594, %v8595
    %v8597 = vmax.f32 %v7497, %v7505
    %v8598 = vmax.f32 %v8597, %v7513
    %v8599 = vmax.f32 %v8598, %v7521
    %v8600 = vmax.f32 %v8599, %v7529
    %v8601 = vmax.f32 %v8600, %v7537
    %v8602 = vmax.f32 %v8601, %v7545
    %v8603 = vmax.f32 %v8602, %v7553
    %v8604 = vmax.f32 %v8603, %v7561
    %v8605 = vmax.f32 %v8604, %v7569
    %v8606 = vmax.f32 %v8605, %v7577
    %v8607 = vmax.f32 %v8606, %v7585
    %v8608 = vmax.f32 %v8607, %v7593
    %v8609 = vmax.f32 %v8608, %v7601
    %v8610 = vmax.f32 %v8609, %v7609
    %v8611 = vmax.f32 %v8610, %v7617
    %v8612 = vmax.f32 %v8611, %v7625
    %v8613 = vmax.f32 %v8612, %v7633
    %v8614 = vmax.f32 %v8613, %v7641
    %v8615 = vmax.f32 %v8614, %v7649
    %v8616 = vmax.f32 %v8615, %v7657
    %v8617 = vmax.f32 %v8616, %v7665
    %v8618 = vmax.f32 %v8617, %v7673
    %v8619 = vmax.f32 %v8618, %v7681
    %v8620 = vmax.f32 %v8619, %v7689
    %v8621 = vmax.f32 %v8620, %v7697
    %v8622 = vmax.f32 %v8621, %v7705
    %v8623 = vmax.f32 %v8622, %v7713
    %v8624 = vmax.f32 %v8623, %v7721
    %v8625 = vmax.f32 %v8624, %v7729
    %v8626 = vmax.f32 %v8625, %v7737
    %v8627 = vmax.f32 %v8626, %v7745
    %v8628 = vrot.slane %v8627, 4
    %v8629 = vmax.f32 %v8627, %v8628
    %v8630 = vrot.slane %v8629, 2
    %v8631 = vmax.f32 %v8629, %v8630
    %v8632 = vrot.slane %v8631, 1
    %v8633 = vmax.f32 %v8631, %v8632
    %v8634 = vmax.f32 %v7498, %v7506
    %v8635 = vmax.f32 %v8634, %v7514
    %v8636 = vmax.f32 %v8635, %v7522
    %v8637 = vmax.f32 %v8636, %v7530
    %v8638 = vmax.f32 %v8637, %v7538
    %v8639 = vmax.f32 %v8638, %v7546
    %v8640 = vmax.f32 %v8639, %v7554
    %v8641 = vmax.f32 %v8640, %v7562
    %v8642 = vmax.f32 %v8641, %v7570
    %v8643 = vmax.f32 %v8642, %v7578
    %v8644 = vmax.f32 %v8643, %v7586
    %v8645 = vmax.f32 %v8644, %v7594
    %v8646 = vmax.f32 %v8645, %v7602
    %v8647 = vmax.f32 %v8646, %v7610
    %v8648 = vmax.f32 %v8647, %v7618
    %v8649 = vmax.f32 %v8648, %v7626
    %v8650 = vmax.f32 %v8649, %v7634
    %v8651 = vmax.f32 %v8650, %v7642
    %v8652 = vmax.f32 %v8651, %v7650
    %v8653 = vmax.f32 %v8652, %v7658
    %v8654 = vmax.f32 %v8653, %v7666
    %v8655 = vmax.f32 %v8654, %v7674
    %v8656 = vmax.f32 %v8655, %v7682
    %v8657 = vmax.f32 %v8656, %v7690
    %v8658 = vmax.f32 %v8657, %v7698
    %v8659 = vmax.f32 %v8658, %v7706
    %v8660 = vmax.f32 %v8659, %v7714
    %v8661 = vmax.f32 %v8660, %v7722
    %v8662 = vmax.f32 %v8661, %v7730
    %v8663 = vmax.f32 %v8662, %v7738
    %v8664 = vmax.f32 %v8663, %v7746
    %v8665 = vrot.slane %v8664, 4
    %v8666 = vmax.f32 %v8664, %v8665
    %v8667 = vrot.slane %v8666, 2
    %v8668 = vmax.f32 %v8666, %v8667
    %v8669 = vrot.slane %v8668, 1
    %v8670 = vmax.f32 %v8668, %v8669
    %v8671 = vmax.f32 %v7499, %v7507
    %v8672 = vmax.f32 %v8671, %v7515
    %v8673 = vmax.f32 %v8672, %v7523
    %v8674 = vmax.f32 %v8673, %v7531
    %v8675 = vmax.f32 %v8674, %v7539
    %v8676 = vmax.f32 %v8675, %v7547
    %v8677 = vmax.f32 %v8676, %v7555
    %v8678 = vmax.f32 %v8677, %v7563
    %v8679 = vmax.f32 %v8678, %v7571
    %v8680 = vmax.f32 %v8679, %v7579
    %v8681 = vmax.f32 %v8680, %v7587
    %v8682 = vmax.f32 %v8681, %v7595
    %v8683 = vmax.f32 %v8682, %v7603
    %v8684 = vmax.f32 %v8683, %v7611
    %v8685 = vmax.f32 %v8684, %v7619
    %v8686 = vmax.f32 %v8685, %v7627
    %v8687 = vmax.f32 %v8686, %v7635
    %v8688 = vmax.f32 %v8687, %v7643
    %v8689 = vmax.f32 %v8688, %v7651
    %v8690 = vmax.f32 %v8689, %v7659
    %v8691 = vmax.f32 %v8690, %v7667
    %v8692 = vmax.f32 %v8691, %v7675
    %v8693 = vmax.f32 %v8692, %v7683
    %v8694 = vmax.f32 %v8693, %v7691
    %v8695 = vmax.f32 %v8694, %v7699
    %v8696 = vmax.f32 %v8695, %v7707
    %v8697 = vmax.f32 %v8696, %v7715
    %v8698 = vmax.f32 %v8697, %v7723
    %v8699 = vmax.f32 %v8698, %v7731
    %v8700 = vmax.f32 %v8699, %v7739
    %v8701 = vmax.f32 %v8700, %v7747
    %v8702 = vrot.slane %v8701, 4
    %v8703 = vmax.f32 %v8701, %v8702
    %v8704 = vrot.slane %v8703, 2
    %v8705 = vmax.f32 %v8703, %v8704
    %v8706 = vrot.slane %v8705, 1
    %v8707 = vmax.f32 %v8705, %v8706
    %v8708 = vmax.f32 %v7500, %v7508
    %v8709 = vmax.f32 %v8708, %v7516
    %v8710 = vmax.f32 %v8709, %v7524
    %v8711 = vmax.f32 %v8710, %v7532
    %v8712 = vmax.f32 %v8711, %v7540
    %v8713 = vmax.f32 %v8712, %v7548
    %v8714 = vmax.f32 %v8713, %v7556
    %v8715 = vmax.f32 %v8714, %v7564
    %v8716 = vmax.f32 %v8715, %v7572
    %v8717 = vmax.f32 %v8716, %v7580
    %v8718 = vmax.f32 %v8717, %v7588
    %v8719 = vmax.f32 %v8718, %v7596
    %v8720 = vmax.f32 %v8719, %v7604
    %v8721 = vmax.f32 %v8720, %v7612
    %v8722 = vmax.f32 %v8721, %v7620
    %v8723 = vmax.f32 %v8722, %v7628
    %v8724 = vmax.f32 %v8723, %v7636
    %v8725 = vmax.f32 %v8724, %v7644
    %v8726 = vmax.f32 %v8725, %v7652
    %v8727 = vmax.f32 %v8726, %v7660
    %v8728 = vmax.f32 %v8727, %v7668
    %v8729 = vmax.f32 %v8728, %v7676
    %v8730 = vmax.f32 %v8729, %v7684
    %v8731 = vmax.f32 %v8730, %v7692
    %v8732 = vmax.f32 %v8731, %v7700
    %v8733 = vmax.f32 %v8732, %v7708
    %v8734 = vmax.f32 %v8733, %v7716
    %v8735 = vmax.f32 %v8734, %v7724
    %v8736 = vmax.f32 %v8735, %v7732
    %v8737 = vmax.f32 %v8736, %v7740
    %v8738 = vmax.f32 %v8737, %v7748
    %v8739 = vrot.slane %v8738, 4
    %v8740 = vmax.f32 %v8738, %v8739
    %v8741 = vrot.slane %v8740, 2
    %v8742 = vmax.f32 %v8740, %v8741
    %v8743 = vrot.slane %v8742, 1
    %v8744 = vmax.f32 %v8742, %v8743
    %v8745 = vmax.f32 %v7501, %v7509
    %v8746 = vmax.f32 %v8745, %v7517
    %v8747 = vmax.f32 %v8746, %v7525
    %v8748 = vmax.f32 %v8747, %v7533
    %v8749 = vmax.f32 %v8748, %v7541
    %v8750 = vmax.f32 %v8749, %v7549
    %v8751 = vmax.f32 %v8750, %v7557
    %v8752 = vmax.f32 %v8751, %v7565
    %v8753 = vmax.f32 %v8752, %v7573
    %v8754 = vmax.f32 %v8753, %v7581
    %v8755 = vmax.f32 %v8754, %v7589
    %v8756 = vmax.f32 %v8755, %v7597
    %v8757 = vmax.f32 %v8756, %v7605
    %v8758 = vmax.f32 %v8757, %v7613
    %v8759 = vmax.f32 %v8758, %v7621
    %v8760 = vmax.f32 %v8759, %v7629
    %v8761 = vmax.f32 %v8760, %v7637
    %v8762 = vmax.f32 %v8761, %v7645
    %v8763 = vmax.f32 %v8762, %v7653
    %v8764 = vmax.f32 %v8763, %v7661
    %v8765 = vmax.f32 %v8764, %v7669
    %v8766 = vmax.f32 %v8765, %v7677
    %v8767 = vmax.f32 %v8766, %v7685
    %v8768 = vmax.f32 %v8767, %v7693
    %v8769 = vmax.f32 %v8768, %v7701
    %v8770 = vmax.f32 %v8769, %v7709
    %v8771 = vmax.f32 %v8770, %v7717
    %v8772 = vmax.f32 %v8771, %v7725
    %v8773 = vmax.f32 %v8772, %v7733
    %v8774 = vmax.f32 %v8773, %v7741
    %v8775 = vmax.f32 %v8774, %v7749
    %v8776 = vrot.slane %v8775, 4
    %v8777 = vmax.f32 %v8775, %v8776
    %v8778 = vrot.slane %v8777, 2
    %v8779 = vmax.f32 %v8777, %v8778
    %v8780 = vrot.slane %v8779, 1
    %v8781 = vmax.f32 %v8779, %v8780
    %v8782 = vmax.f32 %v7502, %v7510
    %v8783 = vmax.f32 %v8782, %v7518
    %v8784 = vmax.f32 %v8783, %v7526
    %v8785 = vmax.f32 %v8784, %v7534
    %v8786 = vmax.f32 %v8785, %v7542
    %v8787 = vmax.f32 %v8786, %v7550
    %v8788 = vmax.f32 %v8787, %v7558
    %v8789 = vmax.f32 %v8788, %v7566
    %v8790 = vmax.f32 %v8789, %v7574
    %v8791 = vmax.f32 %v8790, %v7582
    %v8792 = vmax.f32 %v8791, %v7590
    %v8793 = vmax.f32 %v8792, %v7598
    %v8794 = vmax.f32 %v8793, %v7606
    %v8795 = vmax.f32 %v8794, %v7614
    %v8796 = vmax.f32 %v8795, %v7622
    %v8797 = vmax.f32 %v8796, %v7630
    %v8798 = vmax.f32 %v8797, %v7638
    %v8799 = vmax.f32 %v8798, %v7646
    %v8800 = vmax.f32 %v8799, %v7654
    %v8801 = vmax.f32 %v8800, %v7662
    %v8802 = vmax.f32 %v8801, %v7670
    %v8803 = vmax.f32 %v8802, %v7678
    %v8804 = vmax.f32 %v8803, %v7686
    %v8805 = vmax.f32 %v8804, %v7694
    %v8806 = vmax.f32 %v8805, %v7702
    %v8807 = vmax.f32 %v8806, %v7710
    %v8808 = vmax.f32 %v8807, %v7718
    %v8809 = vmax.f32 %v8808, %v7726
    %v8810 = vmax.f32 %v8809, %v7734
    %v8811 = vmax.f32 %v8810, %v7742
    %v8812 = vmax.f32 %v8811, %v7750
    %v8813 = vrot.slane %v8812, 4
    %v8814 = vmax.f32 %v8812, %v8813
    %v8815 = vrot.slane %v8814, 2
    %v8816 = vmax.f32 %v8814, %v8815
    %v8817 = vrot.slane %v8816, 1
    %v8818 = vmax.f32 %v8816, %v8817
    %v8819 = vmax.f32 %v7503, %v7511
    %v8820 = vmax.f32 %v8819, %v7519
    %v8821 = vmax.f32 %v8820, %v7527
    %v8822 = vmax.f32 %v8821, %v7535
    %v8823 = vmax.f32 %v8822, %v7543
    %v8824 = vmax.f32 %v8823, %v7551
    %v8825 = vmax.f32 %v8824, %v7559
    %v8826 = vmax.f32 %v8825, %v7567
    %v8827 = vmax.f32 %v8826, %v7575
    %v8828 = vmax.f32 %v8827, %v7583
    %v8829 = vmax.f32 %v8828, %v7591
    %v8830 = vmax.f32 %v8829, %v7599
    %v8831 = vmax.f32 %v8830, %v7607
    %v8832 = vmax.f32 %v8831, %v7615
    %v8833 = vmax.f32 %v8832, %v7623
    %v8834 = vmax.f32 %v8833, %v7631
    %v8835 = vmax.f32 %v8834, %v7639
    %v8836 = vmax.f32 %v8835, %v7647
    %v8837 = vmax.f32 %v8836, %v7655
    %v8838 = vmax.f32 %v8837, %v7663
    %v8839 = vmax.f32 %v8838, %v7671
    %v8840 = vmax.f32 %v8839, %v7679
    %v8841 = vmax.f32 %v8840, %v7687
    %v8842 = vmax.f32 %v8841, %v7695
    %v8843 = vmax.f32 %v8842, %v7703
    %v8844 = vmax.f32 %v8843, %v7711
    %v8845 = vmax.f32 %v8844, %v7719
    %v8846 = vmax.f32 %v8845, %v7727
    %v8847 = vmax.f32 %v8846, %v7735
    %v8848 = vmax.f32 %v8847, %v7743
    %v8849 = vmax.f32 %v8848, %v7751
    %v8850 = vrot.slane %v8849, 4
    %v8851 = vmax.f32 %v8849, %v8850
    %v8852 = vrot.slane %v8851, 2
    %v8853 = vmax.f32 %v8851, %v8852
    %v8854 = vrot.slane %v8853, 1
    %v8855 = vmax.f32 %v8853, %v8854
    %v8856 = vmax.f32 %v7752, %v7760
    %v8857 = vmax.f32 %v8856, %v7768
    %v8858 = vmax.f32 %v8857, %v7776
    %v8859 = vmax.f32 %v8858, %v7784
    %v8860 = vmax.f32 %v8859, %v7792
    %v8861 = vmax.f32 %v8860, %v7800
    %v8862 = vmax.f32 %v8861, %v7808
    %v8863 = vmax.f32 %v8862, %v7816
    %v8864 = vmax.f32 %v8863, %v7824
    %v8865 = vmax.f32 %v8864, %v7832
    %v8866 = vmax.f32 %v8865, %v7840
    %v8867 = vmax.f32 %v8866, %v7848
    %v8868 = vmax.f32 %v8867, %v7856
    %v8869 = vmax.f32 %v8868, %v7864
    %v8870 = vmax.f32 %v8869, %v7872
    %v8871 = vmax.f32 %v8870, %v7880
    %v8872 = vmax.f32 %v8871, %v7888
    %v8873 = vmax.f32 %v8872, %v7896
    %v8874 = vmax.f32 %v8873, %v7904
    %v8875 = vmax.f32 %v8874, %v7912
    %v8876 = vmax.f32 %v8875, %v7920
    %v8877 = vmax.f32 %v8876, %v7928
    %v8878 = vmax.f32 %v8877, %v7936
    %v8879 = vmax.f32 %v8878, %v7944
    %v8880 = vmax.f32 %v8879, %v7952
    %v8881 = vmax.f32 %v8880, %v7960
    %v8882 = vmax.f32 %v8881, %v7968
    %v8883 = vmax.f32 %v8882, %v7976
    %v8884 = vmax.f32 %v8883, %v7984
    %v8885 = vmax.f32 %v8884, %v7992
    %v8886 = vmax.f32 %v8885, %v8000
    %v8887 = vrot.slane %v8886, 4
    %v8888 = vmax.f32 %v8886, %v8887
    %v8889 = vrot.slane %v8888, 2
    %v8890 = vmax.f32 %v8888, %v8889
    %v8891 = vrot.slane %v8890, 1
    %v8892 = vmax.f32 %v8890, %v8891
    %v8893 = vmax.f32 %v7753, %v7761
    %v8894 = vmax.f32 %v8893, %v7769
    %v8895 = vmax.f32 %v8894, %v7777
    %v8896 = vmax.f32 %v8895, %v7785
    %v8897 = vmax.f32 %v8896, %v7793
    %v8898 = vmax.f32 %v8897, %v7801
    %v8899 = vmax.f32 %v8898, %v7809
    %v8900 = vmax.f32 %v8899, %v7817
    %v8901 = vmax.f32 %v8900, %v7825
    %v8902 = vmax.f32 %v8901, %v7833
    %v8903 = vmax.f32 %v8902, %v7841
    %v8904 = vmax.f32 %v8903, %v7849
    %v8905 = vmax.f32 %v8904, %v7857
    %v8906 = vmax.f32 %v8905, %v7865
    %v8907 = vmax.f32 %v8906, %v7873
    %v8908 = vmax.f32 %v8907, %v7881
    %v8909 = vmax.f32 %v8908, %v7889
    %v8910 = vmax.f32 %v8909, %v7897
    %v8911 = vmax.f32 %v8910, %v7905
    %v8912 = vmax.f32 %v8911, %v7913
    %v8913 = vmax.f32 %v8912, %v7921
    %v8914 = vmax.f32 %v8913, %v7929
    %v8915 = vmax.f32 %v8914, %v7937
    %v8916 = vmax.f32 %v8915, %v7945
    %v8917 = vmax.f32 %v8916, %v7953
    %v8918 = vmax.f32 %v8917, %v7961
    %v8919 = vmax.f32 %v8918, %v7969
    %v8920 = vmax.f32 %v8919, %v7977
    %v8921 = vmax.f32 %v8920, %v7985
    %v8922 = vmax.f32 %v8921, %v7993
    %v8923 = vmax.f32 %v8922, %v8001
    %v8924 = vrot.slane %v8923, 4
    %v8925 = vmax.f32 %v8923, %v8924
    %v8926 = vrot.slane %v8925, 2
    %v8927 = vmax.f32 %v8925, %v8926
    %v8928 = vrot.slane %v8927, 1
    %v8929 = vmax.f32 %v8927, %v8928
    %v8930 = vmax.f32 %v7754, %v7762
    %v8931 = vmax.f32 %v8930, %v7770
    %v8932 = vmax.f32 %v8931, %v7778
    %v8933 = vmax.f32 %v8932, %v7786
    %v8934 = vmax.f32 %v8933, %v7794
    %v8935 = vmax.f32 %v8934, %v7802
    %v8936 = vmax.f32 %v8935, %v7810
    %v8937 = vmax.f32 %v8936, %v7818
    %v8938 = vmax.f32 %v8937, %v7826
    %v8939 = vmax.f32 %v8938, %v7834
    %v8940 = vmax.f32 %v8939, %v7842
    %v8941 = vmax.f32 %v8940, %v7850
    %v8942 = vmax.f32 %v8941, %v7858
    %v8943 = vmax.f32 %v8942, %v7866
    %v8944 = vmax.f32 %v8943, %v7874
    %v8945 = vmax.f32 %v8944, %v7882
    %v8946 = vmax.f32 %v8945, %v7890
    %v8947 = vmax.f32 %v8946, %v7898
    %v8948 = vmax.f32 %v8947, %v7906
    %v8949 = vmax.f32 %v8948, %v7914
    %v8950 = vmax.f32 %v8949, %v7922
    %v8951 = vmax.f32 %v8950, %v7930
    %v8952 = vmax.f32 %v8951, %v7938
    %v8953 = vmax.f32 %v8952, %v7946
    %v8954 = vmax.f32 %v8953, %v7954
    %v8955 = vmax.f32 %v8954, %v7962
    %v8956 = vmax.f32 %v8955, %v7970
    %v8957 = vmax.f32 %v8956, %v7978
    %v8958 = vmax.f32 %v8957, %v7986
    %v8959 = vmax.f32 %v8958, %v7994
    %v8960 = vmax.f32 %v8959, %v8002
    %v8961 = vrot.slane %v8960, 4
    %v8962 = vmax.f32 %v8960, %v8961
    %v8963 = vrot.slane %v8962, 2
    %v8964 = vmax.f32 %v8962, %v8963
    %v8965 = vrot.slane %v8964, 1
    %v8966 = vmax.f32 %v8964, %v8965
    %v8967 = vmax.f32 %v7755, %v7763
    %v8968 = vmax.f32 %v8967, %v7771
    %v8969 = vmax.f32 %v8968, %v7779
    %v8970 = vmax.f32 %v8969, %v7787
    %v8971 = vmax.f32 %v8970, %v7795
    %v8972 = vmax.f32 %v8971, %v7803
    %v8973 = vmax.f32 %v8972, %v7811
    %v8974 = vmax.f32 %v8973, %v7819
    %v8975 = vmax.f32 %v8974, %v7827
    %v8976 = vmax.f32 %v8975, %v7835
    %v8977 = vmax.f32 %v8976, %v7843
    %v8978 = vmax.f32 %v8977, %v7851
    %v8979 = vmax.f32 %v8978, %v7859
    %v8980 = vmax.f32 %v8979, %v7867
    %v8981 = vmax.f32 %v8980, %v7875
    %v8982 = vmax.f32 %v8981, %v7883
    %v8983 = vmax.f32 %v8982, %v7891
    %v8984 = vmax.f32 %v8983, %v7899
    %v8985 = vmax.f32 %v8984, %v7907
    %v8986 = vmax.f32 %v8985, %v7915
    %v8987 = vmax.f32 %v8986, %v7923
    %v8988 = vmax.f32 %v8987, %v7931
    %v8989 = vmax.f32 %v8988, %v7939
    %v8990 = vmax.f32 %v8989, %v7947
    %v8991 = vmax.f32 %v8990, %v7955
    %v8992 = vmax.f32 %v8991, %v7963
    %v8993 = vmax.f32 %v8992, %v7971
    %v8994 = vmax.f32 %v8993, %v7979
    %v8995 = vmax.f32 %v8994, %v7987
    %v8996 = vmax.f32 %v8995, %v7995
    %v8997 = vmax.f32 %v8996, %v8003
    %v8998 = vrot.slane %v8997, 4
    %v8999 = vmax.f32 %v8997, %v8998
    %v9000 = vrot.slane %v8999, 2
    %v9001 = vmax.f32 %v8999, %v9000
    %v9002 = vrot.slane %v9001, 1
    %v9003 = vmax.f32 %v9001, %v9002
    %v9004 = vmax.f32 %v7756, %v7764
    %v9005 = vmax.f32 %v9004, %v7772
    %v9006 = vmax.f32 %v9005, %v7780
    %v9007 = vmax.f32 %v9006, %v7788
    %v9008 = vmax.f32 %v9007, %v7796
    %v9009 = vmax.f32 %v9008, %v7804
    %v9010 = vmax.f32 %v9009, %v7812
    %v9011 = vmax.f32 %v9010, %v7820
    %v9012 = vmax.f32 %v9011, %v7828
    %v9013 = vmax.f32 %v9012, %v7836
    %v9014 = vmax.f32 %v9013, %v7844
    %v9015 = vmax.f32 %v9014, %v7852
    %v9016 = vmax.f32 %v9015, %v7860
    %v9017 = vmax.f32 %v9016, %v7868
    %v9018 = vmax.f32 %v9017, %v7876
    %v9019 = vmax.f32 %v9018, %v7884
    %v9020 = vmax.f32 %v9019, %v7892
    %v9021 = vmax.f32 %v9020, %v7900
    %v9022 = vmax.f32 %v9021, %v7908
    %v9023 = vmax.f32 %v9022, %v7916
    %v9024 = vmax.f32 %v9023, %v7924
    %v9025 = vmax.f32 %v9024, %v7932
    %v9026 = vmax.f32 %v9025, %v7940
    %v9027 = vmax.f32 %v9026, %v7948
    %v9028 = vmax.f32 %v9027, %v7956
    %v9029 = vmax.f32 %v9028, %v7964
    %v9030 = vmax.f32 %v9029, %v7972
    %v9031 = vmax.f32 %v9030, %v7980
    %v9032 = vmax.f32 %v9031, %v7988
    %v9033 = vmax.f32 %v9032, %v7996
    %v9034 = vmax.f32 %v9033, %v8004
    %v9035 = vrot.slane %v9034, 4
    %v9036 = vmax.f32 %v9034, %v9035
    %v9037 = vrot.slane %v9036, 2
    %v9038 = vmax.f32 %v9036, %v9037
    %v9039 = vrot.slane %v9038, 1
    %v9040 = vmax.f32 %v9038, %v9039
    %v9041 = vmax.f32 %v7757, %v7765
    %v9042 = vmax.f32 %v9041, %v7773
    %v9043 = vmax.f32 %v9042, %v7781
    %v9044 = vmax.f32 %v9043, %v7789
    %v9045 = vmax.f32 %v9044, %v7797
    %v9046 = vmax.f32 %v9045, %v7805
    %v9047 = vmax.f32 %v9046, %v7813
    %v9048 = vmax.f32 %v9047, %v7821
    %v9049 = vmax.f32 %v9048, %v7829
    %v9050 = vmax.f32 %v9049, %v7837
    %v9051 = vmax.f32 %v9050, %v7845
    %v9052 = vmax.f32 %v9051, %v7853
    %v9053 = vmax.f32 %v9052, %v7861
    %v9054 = vmax.f32 %v9053, %v7869
    %v9055 = vmax.f32 %v9054, %v7877
    %v9056 = vmax.f32 %v9055, %v7885
    %v9057 = vmax.f32 %v9056, %v7893
    %v9058 = vmax.f32 %v9057, %v7901
    %v9059 = vmax.f32 %v9058, %v7909
    %v9060 = vmax.f32 %v9059, %v7917
    %v9061 = vmax.f32 %v9060, %v7925
    %v9062 = vmax.f32 %v9061, %v7933
    %v9063 = vmax.f32 %v9062, %v7941
    %v9064 = vmax.f32 %v9063, %v7949
    %v9065 = vmax.f32 %v9064, %v7957
    %v9066 = vmax.f32 %v9065, %v7965
    %v9067 = vmax.f32 %v9066, %v7973
    %v9068 = vmax.f32 %v9067, %v7981
    %v9069 = vmax.f32 %v9068, %v7989
    %v9070 = vmax.f32 %v9069, %v7997
    %v9071 = vmax.f32 %v9070, %v8005
    %v9072 = vrot.slane %v9071, 4
    %v9073 = vmax.f32 %v9071, %v9072
    %v9074 = vrot.slane %v9073, 2
    %v9075 = vmax.f32 %v9073, %v9074
    %v9076 = vrot.slane %v9075, 1
    %v9077 = vmax.f32 %v9075, %v9076
    %v9078 = vmax.f32 %v7758, %v7766
    %v9079 = vmax.f32 %v9078, %v7774
    %v9080 = vmax.f32 %v9079, %v7782
    %v9081 = vmax.f32 %v9080, %v7790
    %v9082 = vmax.f32 %v9081, %v7798
    %v9083 = vmax.f32 %v9082, %v7806
    %v9084 = vmax.f32 %v9083, %v7814
    %v9085 = vmax.f32 %v9084, %v7822
    %v9086 = vmax.f32 %v9085, %v7830
    %v9087 = vmax.f32 %v9086, %v7838
    %v9088 = vmax.f32 %v9087, %v7846
    %v9089 = vmax.f32 %v9088, %v7854
    %v9090 = vmax.f32 %v9089, %v7862
    %v9091 = vmax.f32 %v9090, %v7870
    %v9092 = vmax.f32 %v9091, %v7878
    %v9093 = vmax.f32 %v9092, %v7886
    %v9094 = vmax.f32 %v9093, %v7894
    %v9095 = vmax.f32 %v9094, %v7902
    %v9096 = vmax.f32 %v9095, %v7910
    %v9097 = vmax.f32 %v9096, %v7918
    %v9098 = vmax.f32 %v9097, %v7926
    %v9099 = vmax.f32 %v9098, %v7934
    %v9100 = vmax.f32 %v9099, %v7942
    %v9101 = vmax.f32 %v9100, %v7950
    %v9102 = vmax.f32 %v9101, %v7958
    %v9103 = vmax.f32 %v9102, %v7966
    %v9104 = vmax.f32 %v9103, %v7974
    %v9105 = vmax.f32 %v9104, %v7982
    %v9106 = vmax.f32 %v9105, %v7990
    %v9107 = vmax.f32 %v9106, %v7998
    %v9108 = vmax.f32 %v9107, %v8006
    %v9109 = vrot.slane %v9108, 4
    %v9110 = vmax.f32 %v9108, %v9109
    %v9111 = vrot.slane %v9110, 2
    %v9112 = vmax.f32 %v9110, %v9111
    %v9113 = vrot.slane %v9112, 1
    %v9114 = vmax.f32 %v9112, %v9113
    %v9115 = vmax.f32 %v7759, %v7767
    %v9116 = vmax.f32 %v9115, %v7775
    %v9117 = vmax.f32 %v9116, %v7783
    %v9118 = vmax.f32 %v9117, %v7791
    %v9119 = vmax.f32 %v9118, %v7799
    %v9120 = vmax.f32 %v9119, %v7807
    %v9121 = vmax.f32 %v9120, %v7815
    %v9122 = vmax.f32 %v9121, %v7823
    %v9123 = vmax.f32 %v9122, %v7831
    %v9124 = vmax.f32 %v9123, %v7839
    %v9125 = vmax.f32 %v9124, %v7847
    %v9126 = vmax.f32 %v9125, %v7855
    %v9127 = vmax.f32 %v9126, %v7863
    %v9128 = vmax.f32 %v9127, %v7871
    %v9129 = vmax.f32 %v9128, %v7879
    %v9130 = vmax.f32 %v9129, %v7887
    %v9131 = vmax.f32 %v9130, %v7895
    %v9132 = vmax.f32 %v9131, %v7903
    %v9133 = vmax.f32 %v9132, %v7911
    %v9134 = vmax.f32 %v9133, %v7919
    %v9135 = vmax.f32 %v9134, %v7927
    %v9136 = vmax.f32 %v9135, %v7935
    %v9137 = vmax.f32 %v9136, %v7943
    %v9138 = vmax.f32 %v9137, %v7951
    %v9139 = vmax.f32 %v9138, %v7959
    %v9140 = vmax.f32 %v9139, %v7967
    %v9141 = vmax.f32 %v9140, %v7975
    %v9142 = vmax.f32 %v9141, %v7983
    %v9143 = vmax.f32 %v9142, %v7991
    %v9144 = vmax.f32 %v9143, %v7999
    %v9145 = vmax.f32 %v9144, %v8007
    %v9146 = vrot.slane %v9145, 4
    %v9147 = vmax.f32 %v9145, %v9146
    %v9148 = vrot.slane %v9147, 2
    %v9149 = vmax.f32 %v9147, %v9148
    %v9150 = vrot.slane %v9149, 1
    %v9151 = vmax.f32 %v9149, %v9150
    %v9152 = vmax.f32 %v8008, %v8016
    %v9153 = vmax.f32 %v9152, %v8024
    %v9154 = vmax.f32 %v9153, %v8032
    %v9155 = vmax.f32 %v9154, %v8040
    %v9156 = vmax.f32 %v9155, %v8048
    %v9157 = vmax.f32 %v9156, %v8056
    %v9158 = vmax.f32 %v9157, %v8064
    %v9159 = vmax.f32 %v9158, %v8072
    %v9160 = vmax.f32 %v9159, %v8080
    %v9161 = vmax.f32 %v9160, %v8088
    %v9162 = vmax.f32 %v9161, %v8096
    %v9163 = vmax.f32 %v9162, %v8104
    %v9164 = vmax.f32 %v9163, %v8112
    %v9165 = vmax.f32 %v9164, %v8120
    %v9166 = vmax.f32 %v9165, %v8128
    %v9167 = vmax.f32 %v9166, %v8136
    %v9168 = vmax.f32 %v9167, %v8144
    %v9169 = vmax.f32 %v9168, %v8152
    %v9170 = vmax.f32 %v9169, %v8160
    %v9171 = vmax.f32 %v9170, %v8168
    %v9172 = vmax.f32 %v9171, %v8176
    %v9173 = vmax.f32 %v9172, %v8184
    %v9174 = vmax.f32 %v9173, %v8192
    %v9175 = vmax.f32 %v9174, %v8200
    %v9176 = vmax.f32 %v9175, %v8208
    %v9177 = vmax.f32 %v9176, %v8216
    %v9178 = vmax.f32 %v9177, %v8224
    %v9179 = vmax.f32 %v9178, %v8232
    %v9180 = vmax.f32 %v9179, %v8240
    %v9181 = vmax.f32 %v9180, %v8248
    %v9182 = vmax.f32 %v9181, %v8256
    %v9183 = vrot.slane %v9182, 4
    %v9184 = vmax.f32 %v9182, %v9183
    %v9185 = vrot.slane %v9184, 2
    %v9186 = vmax.f32 %v9184, %v9185
    %v9187 = vrot.slane %v9186, 1
    %v9188 = vmax.f32 %v9186, %v9187
    %v9189 = vmax.f32 %v8009, %v8017
    %v9190 = vmax.f32 %v9189, %v8025
    %v9191 = vmax.f32 %v9190, %v8033
    %v9192 = vmax.f32 %v9191, %v8041
    %v9193 = vmax.f32 %v9192, %v8049
    %v9194 = vmax.f32 %v9193, %v8057
    %v9195 = vmax.f32 %v9194, %v8065
    %v9196 = vmax.f32 %v9195, %v8073
    %v9197 = vmax.f32 %v9196, %v8081
    %v9198 = vmax.f32 %v9197, %v8089
    %v9199 = vmax.f32 %v9198, %v8097
    %v9200 = vmax.f32 %v9199, %v8105
    %v9201 = vmax.f32 %v9200, %v8113
    %v9202 = vmax.f32 %v9201, %v8121
    %v9203 = vmax.f32 %v9202, %v8129
    %v9204 = vmax.f32 %v9203, %v8137
    %v9205 = vmax.f32 %v9204, %v8145
    %v9206 = vmax.f32 %v9205, %v8153
    %v9207 = vmax.f32 %v9206, %v8161
    %v9208 = vmax.f32 %v9207, %v8169
    %v9209 = vmax.f32 %v9208, %v8177
    %v9210 = vmax.f32 %v9209, %v8185
    %v9211 = vmax.f32 %v9210, %v8193
    %v9212 = vmax.f32 %v9211, %v8201
    %v9213 = vmax.f32 %v9212, %v8209
    %v9214 = vmax.f32 %v9213, %v8217
    %v9215 = vmax.f32 %v9214, %v8225
    %v9216 = vmax.f32 %v9215, %v8233
    %v9217 = vmax.f32 %v9216, %v8241
    %v9218 = vmax.f32 %v9217, %v8249
    %v9219 = vmax.f32 %v9218, %v8257
    %v9220 = vrot.slane %v9219, 4
    %v9221 = vmax.f32 %v9219, %v9220
    %v9222 = vrot.slane %v9221, 2
    %v9223 = vmax.f32 %v9221, %v9222
    %v9224 = vrot.slane %v9223, 1
    %v9225 = vmax.f32 %v9223, %v9224
    %v9226 = vmax.f32 %v8010, %v8018
    %v9227 = vmax.f32 %v9226, %v8026
    %v9228 = vmax.f32 %v9227, %v8034
    %v9229 = vmax.f32 %v9228, %v8042
    %v9230 = vmax.f32 %v9229, %v8050
    %v9231 = vmax.f32 %v9230, %v8058
    %v9232 = vmax.f32 %v9231, %v8066
    %v9233 = vmax.f32 %v9232, %v8074
    %v9234 = vmax.f32 %v9233, %v8082
    %v9235 = vmax.f32 %v9234, %v8090
    %v9236 = vmax.f32 %v9235, %v8098
    %v9237 = vmax.f32 %v9236, %v8106
    %v9238 = vmax.f32 %v9237, %v8114
    %v9239 = vmax.f32 %v9238, %v8122
    %v9240 = vmax.f32 %v9239, %v8130
    %v9241 = vmax.f32 %v9240, %v8138
    %v9242 = vmax.f32 %v9241, %v8146
    %v9243 = vmax.f32 %v9242, %v8154
    %v9244 = vmax.f32 %v9243, %v8162
    %v9245 = vmax.f32 %v9244, %v8170
    %v9246 = vmax.f32 %v9245, %v8178
    %v9247 = vmax.f32 %v9246, %v8186
    %v9248 = vmax.f32 %v9247, %v8194
    %v9249 = vmax.f32 %v9248, %v8202
    %v9250 = vmax.f32 %v9249, %v8210
    %v9251 = vmax.f32 %v9250, %v8218
    %v9252 = vmax.f32 %v9251, %v8226
    %v9253 = vmax.f32 %v9252, %v8234
    %v9254 = vmax.f32 %v9253, %v8242
    %v9255 = vmax.f32 %v9254, %v8250
    %v9256 = vmax.f32 %v9255, %v8258
    %v9257 = vrot.slane %v9256, 4
    %v9258 = vmax.f32 %v9256, %v9257
    %v9259 = vrot.slane %v9258, 2
    %v9260 = vmax.f32 %v9258, %v9259
    %v9261 = vrot.slane %v9260, 1
    %v9262 = vmax.f32 %v9260, %v9261
    %v9263 = vmax.f32 %v8011, %v8019
    %v9264 = vmax.f32 %v9263, %v8027
    %v9265 = vmax.f32 %v9264, %v8035
    %v9266 = vmax.f32 %v9265, %v8043
    %v9267 = vmax.f32 %v9266, %v8051
    %v9268 = vmax.f32 %v9267, %v8059
    %v9269 = vmax.f32 %v9268, %v8067
    %v9270 = vmax.f32 %v9269, %v8075
    %v9271 = vmax.f32 %v9270, %v8083
    %v9272 = vmax.f32 %v9271, %v8091
    %v9273 = vmax.f32 %v9272, %v8099
    %v9274 = vmax.f32 %v9273, %v8107
    %v9275 = vmax.f32 %v9274, %v8115
    %v9276 = vmax.f32 %v9275, %v8123
    %v9277 = vmax.f32 %v9276, %v8131
    %v9278 = vmax.f32 %v9277, %v8139
    %v9279 = vmax.f32 %v9278, %v8147
    %v9280 = vmax.f32 %v9279, %v8155
    %v9281 = vmax.f32 %v9280, %v8163
    %v9282 = vmax.f32 %v9281, %v8171
    %v9283 = vmax.f32 %v9282, %v8179
    %v9284 = vmax.f32 %v9283, %v8187
    %v9285 = vmax.f32 %v9284, %v8195
    %v9286 = vmax.f32 %v9285, %v8203
    %v9287 = vmax.f32 %v9286, %v8211
    %v9288 = vmax.f32 %v9287, %v8219
    %v9289 = vmax.f32 %v9288, %v8227
    %v9290 = vmax.f32 %v9289, %v8235
    %v9291 = vmax.f32 %v9290, %v8243
    %v9292 = vmax.f32 %v9291, %v8251
    %v9293 = vmax.f32 %v9292, %v8259
    %v9294 = vrot.slane %v9293, 4
    %v9295 = vmax.f32 %v9293, %v9294
    %v9296 = vrot.slane %v9295, 2
    %v9297 = vmax.f32 %v9295, %v9296
    %v9298 = vrot.slane %v9297, 1
    %v9299 = vmax.f32 %v9297, %v9298
    %v9300 = vmax.f32 %v8012, %v8020
    %v9301 = vmax.f32 %v9300, %v8028
    %v9302 = vmax.f32 %v9301, %v8036
    %v9303 = vmax.f32 %v9302, %v8044
    %v9304 = vmax.f32 %v9303, %v8052
    %v9305 = vmax.f32 %v9304, %v8060
    %v9306 = vmax.f32 %v9305, %v8068
    %v9307 = vmax.f32 %v9306, %v8076
    %v9308 = vmax.f32 %v9307, %v8084
    %v9309 = vmax.f32 %v9308, %v8092
    %v9310 = vmax.f32 %v9309, %v8100
    %v9311 = vmax.f32 %v9310, %v8108
    %v9312 = vmax.f32 %v9311, %v8116
    %v9313 = vmax.f32 %v9312, %v8124
    %v9314 = vmax.f32 %v9313, %v8132
    %v9315 = vmax.f32 %v9314, %v8140
    %v9316 = vmax.f32 %v9315, %v8148
    %v9317 = vmax.f32 %v9316, %v8156
    %v9318 = vmax.f32 %v9317, %v8164
    %v9319 = vmax.f32 %v9318, %v8172
    %v9320 = vmax.f32 %v9319, %v8180
    %v9321 = vmax.f32 %v9320, %v8188
    %v9322 = vmax.f32 %v9321, %v8196
    %v9323 = vmax.f32 %v9322, %v8204
    %v9324 = vmax.f32 %v9323, %v8212
    %v9325 = vmax.f32 %v9324, %v8220
    %v9326 = vmax.f32 %v9325, %v8228
    %v9327 = vmax.f32 %v9326, %v8236
    %v9328 = vmax.f32 %v9327, %v8244
    %v9329 = vmax.f32 %v9328, %v8252
    %v9330 = vmax.f32 %v9329, %v8260
    %v9331 = vrot.slane %v9330, 4
    %v9332 = vmax.f32 %v9330, %v9331
    %v9333 = vrot.slane %v9332, 2
    %v9334 = vmax.f32 %v9332, %v9333
    %v9335 = vrot.slane %v9334, 1
    %v9336 = vmax.f32 %v9334, %v9335
    %v9337 = vmax.f32 %v8013, %v8021
    %v9338 = vmax.f32 %v9337, %v8029
    %v9339 = vmax.f32 %v9338, %v8037
    %v9340 = vmax.f32 %v9339, %v8045
    %v9341 = vmax.f32 %v9340, %v8053
    %v9342 = vmax.f32 %v9341, %v8061
    %v9343 = vmax.f32 %v9342, %v8069
    %v9344 = vmax.f32 %v9343, %v8077
    %v9345 = vmax.f32 %v9344, %v8085
    %v9346 = vmax.f32 %v9345, %v8093
    %v9347 = vmax.f32 %v9346, %v8101
    %v9348 = vmax.f32 %v9347, %v8109
    %v9349 = vmax.f32 %v9348, %v8117
    %v9350 = vmax.f32 %v9349, %v8125
    %v9351 = vmax.f32 %v9350, %v8133
    %v9352 = vmax.f32 %v9351, %v8141
    %v9353 = vmax.f32 %v9352, %v8149
    %v9354 = vmax.f32 %v9353, %v8157
    %v9355 = vmax.f32 %v9354, %v8165
    %v9356 = vmax.f32 %v9355, %v8173
    %v9357 = vmax.f32 %v9356, %v8181
    %v9358 = vmax.f32 %v9357, %v8189
    %v9359 = vmax.f32 %v9358, %v8197
    %v9360 = vmax.f32 %v9359, %v8205
    %v9361 = vmax.f32 %v9360, %v8213
    %v9362 = vmax.f32 %v9361, %v8221
    %v9363 = vmax.f32 %v9362, %v8229
    %v9364 = vmax.f32 %v9363, %v8237
    %v9365 = vmax.f32 %v9364, %v8245
    %v9366 = vmax.f32 %v9365, %v8253
    %v9367 = vmax.f32 %v9366, %v8261
    %v9368 = vrot.slane %v9367, 4
    %v9369 = vmax.f32 %v9367, %v9368
    %v9370 = vrot.slane %v9369, 2
    %v9371 = vmax.f32 %v9369, %v9370
    %v9372 = vrot.slane %v9371, 1
    %v9373 = vmax.f32 %v9371, %v9372
    %v9374 = vmax.f32 %v8014, %v8022
    %v9375 = vmax.f32 %v9374, %v8030
    %v9376 = vmax.f32 %v9375, %v8038
    %v9377 = vmax.f32 %v9376, %v8046
    %v9378 = vmax.f32 %v9377, %v8054
    %v9379 = vmax.f32 %v9378, %v8062
    %v9380 = vmax.f32 %v9379, %v8070
    %v9381 = vmax.f32 %v9380, %v8078
    %v9382 = vmax.f32 %v9381, %v8086
    %v9383 = vmax.f32 %v9382, %v8094
    %v9384 = vmax.f32 %v9383, %v8102
    %v9385 = vmax.f32 %v9384, %v8110
    %v9386 = vmax.f32 %v9385, %v8118
    %v9387 = vmax.f32 %v9386, %v8126
    %v9388 = vmax.f32 %v9387, %v8134
    %v9389 = vmax.f32 %v9388, %v8142
    %v9390 = vmax.f32 %v9389, %v8150
    %v9391 = vmax.f32 %v9390, %v8158
    %v9392 = vmax.f32 %v9391, %v8166
    %v9393 = vmax.f32 %v9392, %v8174
    %v9394 = vmax.f32 %v9393, %v8182
    %v9395 = vmax.f32 %v9394, %v8190
    %v9396 = vmax.f32 %v9395, %v8198
    %v9397 = vmax.f32 %v9396, %v8206
    %v9398 = vmax.f32 %v9397, %v8214
    %v9399 = vmax.f32 %v9398, %v8222
    %v9400 = vmax.f32 %v9399, %v8230
    %v9401 = vmax.f32 %v9400, %v8238
    %v9402 = vmax.f32 %v9401, %v8246
    %v9403 = vmax.f32 %v9402, %v8254
    %v9404 = vmax.f32 %v9403, %v8262
    %v9405 = vrot.slane %v9404, 4
    %v9406 = vmax.f32 %v9404, %v9405
    %v9407 = vrot.slane %v9406, 2
    %v9408 = vmax.f32 %v9406, %v9407
    %v9409 = vrot.slane %v9408, 1
    %v9410 = vmax.f32 %v9408, %v9409
    %v9411 = vmax.f32 %v8015, %v8023
    %v9412 = vmax.f32 %v9411, %v8031
    %v9413 = vmax.f32 %v9412, %v8039
    %v9414 = vmax.f32 %v9413, %v8047
    %v9415 = vmax.f32 %v9414, %v8055
    %v9416 = vmax.f32 %v9415, %v8063
    %v9417 = vmax.f32 %v9416, %v8071
    %v9418 = vmax.f32 %v9417, %v8079
    %v9419 = vmax.f32 %v9418, %v8087
    %v9420 = vmax.f32 %v9419, %v8095
    %v9421 = vmax.f32 %v9420, %v8103
    %v9422 = vmax.f32 %v9421, %v8111
    %v9423 = vmax.f32 %v9422, %v8119
    %v9424 = vmax.f32 %v9423, %v8127
    %v9425 = vmax.f32 %v9424, %v8135
    %v9426 = vmax.f32 %v9425, %v8143
    %v9427 = vmax.f32 %v9426, %v8151
    %v9428 = vmax.f32 %v9427, %v8159
    %v9429 = vmax.f32 %v9428, %v8167
    %v9430 = vmax.f32 %v9429, %v8175
    %v9431 = vmax.f32 %v9430, %v8183
    %v9432 = vmax.f32 %v9431, %v8191
    %v9433 = vmax.f32 %v9432, %v8199
    %v9434 = vmax.f32 %v9433, %v8207
    %v9435 = vmax.f32 %v9434, %v8215
    %v9436 = vmax.f32 %v9435, %v8223
    %v9437 = vmax.f32 %v9436, %v8231
    %v9438 = vmax.f32 %v9437, %v8239
    %v9439 = vmax.f32 %v9438, %v8247
    %v9440 = vmax.f32 %v9439, %v8255
    %v9441 = vmax.f32 %v9440, %v8263
    %v9442 = vrot.slane %v9441, 4
    %v9443 = vmax.f32 %v9441, %v9442
    %v9444 = vrot.slane %v9443, 2
    %v9445 = vmax.f32 %v9443, %v9444
    %v9446 = vrot.slane %v9445, 1
    %v9447 = vmax.f32 %v9445, %v9446
    %p9448 = scmp.eq.s32.totalorder 0, 0
    // Predicated region
    $region66: #{tpu_custom_call.1} parent=1 // pred_check
      %p9449 = pneg %p9448
    $region67: #{tpu_custom_call.1} parent=1 // pred_check_branch
      %9451 = sbr.rel (%p9449) target = $region69
    $region68: #{tpu_custom_call.1} parent=1 // pred_region
      %9452 = vst [vmem:[#allocation2] sm:$0xff] 0
      %9453 = vst [vmem:[#allocation2 + $0x8] sm:$0xff] 0
    $region69: #{tpu_custom_call.1} parent=1 // pred_fallthru
      _
    %v9454 = vld [vmem:[#allocation2] sm:$0xff]
    %v9455 = vld [vmem:[#allocation2 + $0x8] sm:$0xff]
    %v9456 = vpack.c.bf16 %v8300, %v8300
    %v9457 = vpack.c.bf16 %v8337, %v8337
    %v9458 = vpack.c.bf16 %v8374, %v8374
    %v9459 = vpack.c.bf16 %v8411, %v8411
    %v9460 = vpack.c.bf16 %v8448, %v8448
    %v9461 = vpack.c.bf16 %v8485, %v8485
    %v9462 = vpack.c.bf16 %v8522, %v8522
    %v9463 = vpack.c.bf16 %v8559, %v8559
    %v9464 = vpack.c.bf16 %v8596, %v8596
    %v9465 = vpack.c.bf16 %v8633, %v8633
    %v9466 = vpack.c.bf16 %v8670, %v8670
    %v9467 = vpack.c.bf16 %v8707, %v8707
    %v9468 = vpack.c.bf16 %v8744, %v8744
    %v9469 = vpack.c.bf16 %v8781, %v8781
    %v9470 = vpack.c.bf16 %v8818, %v8818
    %v9471 = vpack.c.bf16 %v8855, %v8855
    %v9472 = vpack.c.bf16 %v8892, %v8892
    %v9473 = vpack.c.bf16 %v8929, %v8929
    %v9474 = vpack.c.bf16 %v8966, %v8966
    %v9475 = vpack.c.bf16 %v9003, %v9003
    %v9476 = vpack.c.bf16 %v9040, %v9040
    %v9477 = vpack.c.bf16 %v9077, %v9077
    %v9478 = vpack.c.bf16 %v9114, %v9114
    %v9479 = vpack.c.bf16 %v9151, %v9151
    %v9480 = vpack.c.bf16 %v9188, %v9188
    %v9481 = vpack.c.bf16 %v9225, %v9225
    %v9482 = vpack.c.bf16 %v9262, %v9262
    %v9483 = vpack.c.bf16 %v9299, %v9299
    %v9484 = vpack.c.bf16 %v9336, %v9336
    %v9485 = vpack.c.bf16 %v9373, %v9373
    %v9486 = vpack.c.bf16 %v9410, %v9410
    %v9487 = vpack.c.bf16 %v9447, %v9447
    %v9520 = vcombine.low %v9456, %v9457
    %v9521 = vcombine.low %v9458, %v9459
    %v9523 = vunpack.c.l.s4 1983009808
    %v9524 = vunpack.c.0.s8 %v9523
    %v9525 = vlaneseq
    %v9526 = vshrl.u32 %v9525, 7
    %v9527 = vsub.s32 %v9524, %v9526
    %v9528 = vrot.slane %v9520, %v9527
    %v9530 = vunpack.c.l.s4 1983009808
    %v9531 = vunpack.c.0.s8 %v9530
    %v9532 = vlaneseq
    %v9533 = vshrl.u32 %v9532, 7
    %v9534 = vsub.s32 %v9531, %v9533
    %v9535 = vrot.slane %v9521, %v9534
    %v9536 = vcombine.low %v9528, %v9535
    %v9537 = vcombine.low %v9460, %v9461
    %v9538 = vcombine.low %v9462, %v9463
    %v9540 = vunpack.c.l.s4 1983009808
    %v9541 = vunpack.c.0.s8 %v9540
    %v9542 = vlaneseq
    %v9543 = vshrl.u32 %v9542, 7
    %v9544 = vsub.s32 %v9541, %v9543
    %v9545 = vrot.slane %v9537, %v9544
    %v9547 = vunpack.c.l.s4 1983009808
    %v9548 = vunpack.c.0.s8 %v9547
    %v9549 = vlaneseq
    %v9550 = vshrl.u32 %v9549, 7
    %v9551 = vsub.s32 %v9548, %v9550
    %v9552 = vrot.slane %v9538, %v9551
    %v9553 = vcombine.low %v9545, %v9552
    %v9554 = vcombine.low %v9464, %v9465
    %v9555 = vcombine.low %v9466, %v9467
    %v9557 = vunpack.c.l.s4 1983009808
    %v9558 = vunpack.c.0.s8 %v9557
    %v9559 = vlaneseq
    %v9560 = vshrl.u32 %v9559, 7
    %v9561 = vsub.s32 %v9558, %v9560
    %v9562 = vrot.slane %v9554, %v9561
    %v9564 = vunpack.c.l.s4 1983009808
    %v9565 = vunpack.c.0.s8 %v9564
    %v9566 = vlaneseq
    %v9567 = vshrl.u32 %v9566, 7
    %v9568 = vsub.s32 %v9565, %v9567
    %v9569 = vrot.slane %v9555, %v9568
    %v9570 = vcombine.low %v9562, %v9569
    %v9571 = vcombine.low %v9468, %v9469
    %v9572 = vcombine.low %v9470, %v9471
    %v9574 = vunpack.c.l.s4 1983009808
    %v9575 = vunpack.c.0.s8 %v9574
    %v9576 = vlaneseq
    %v9577 = vshrl.u32 %v9576, 7
    %v9578 = vsub.s32 %v9575, %v9577
    %v9579 = vrot.slane %v9571, %v9578
    %v9581 = vunpack.c.l.s4 1983009808
    %v9582 = vunpack.c.0.s8 %v9581
    %v9583 = vlaneseq
    %v9584 = vshrl.u32 %v9583, 7
    %v9585 = vsub.s32 %v9582, %v9584
    %v9586 = vrot.slane %v9572, %v9585
    %v9587 = vcombine.low %v9579, %v9586
    %v9588 = vcombine.low %v9472, %v9473
    %v9589 = vcombine.low %v9474, %v9475
    %v9591 = vunpack.c.l.s4 1983009808
    %v9592 = vunpack.c.0.s8 %v9591
    %v9593 = vlaneseq
    %v9594 = vshrl.u32 %v9593, 7
    %v9595 = vsub.s32 %v9592, %v9594
    %v9596 = vrot.slane %v9588, %v9595
    %v9598 = vunpack.c.l.s4 1983009808
    %v9599 = vunpack.c.0.s8 %v9598
    %v9600 = vlaneseq
    %v9601 = vshrl.u32 %v9600, 7
    %v9602 = vsub.s32 %v9599, %v9601
    %v9603 = vrot.slane %v9589, %v9602
    %v9604 = vcombine.low %v9596, %v9603
    %v9605 = vcombine.low %v9476, %v9477
    %v9606 = vcombine.low %v9478, %v9479
    %v9608 = vunpack.c.l.s4 1983009808
    %v9609 = vunpack.c.0.s8 %v9608
    %v9610 = vlaneseq
    %v9611 = vshrl.u32 %v9610, 7
    %v9612 = vsub.s32 %v9609, %v9611
    %v9613 = vrot.slane %v9605, %v9612
    %v9615 = vunpack.c.l.s4 1983009808
    %v9616 = vunpack.c.0.s8 %v9615
    %v9617 = vlaneseq
    %v9618 = vshrl.u32 %v9617, 7
    %v9619 = vsub.s32 %v9616, %v9618
    %v9620 = vrot.slane %v9606, %v9619
    %v9621 = vcombine.low %v9613, %v9620
    %v9622 = vcombine.low %v9480, %v9481
    %v9623 = vcombine.low %v9482, %v9483
    %v9625 = vunpack.c.l.s4 1983009808
    %v9626 = vunpack.c.0.s8 %v9625
    %v9627 = vlaneseq
    %v9628 = vshrl.u32 %v9627, 7
    %v9629 = vsub.s32 %v9626, %v9628
    %v9630 = vrot.slane %v9622, %v9629
    %v9632 = vunpack.c.l.s4 1983009808
    %v9633 = vunpack.c.0.s8 %v9632
    %v9634 = vlaneseq
    %v9635 = vshrl.u32 %v9634, 7
    %v9636 = vsub.s32 %v9633, %v9635
    %v9637 = vrot.slane %v9623, %v9636
    %v9638 = vcombine.low %v9630, %v9637
    %v9639 = vcombine.low %v9484, %v9485
    %v9640 = vcombine.low %v9486, %v9487
    %v9642 = vunpack.c.l.s4 1983009808
    %v9643 = vunpack.c.0.s8 %v9642
    %v9644 = vlaneseq
    %v9645 = vshrl.u32 %v9644, 7
    %v9646 = vsub.s32 %v9643, %v9645
    %v9647 = vrot.slane %v9639, %v9646
    %v9649 = vunpack.c.l.s4 1983009808
    %v9650 = vunpack.c.0.s8 %v9649
    %v9651 = vlaneseq
    %v9652 = vshrl.u32 %v9651, 7
    %v9653 = vsub.s32 %v9650, %v9652
    %v9654 = vrot.slane %v9640, %v9653
    %v9655 = vcombine.low %v9647, %v9654
    %v9656 = vcombine.high %v9536, %v9536
    %v9658 = vunpack.c.l.s4 1983009808
    %v9659 = vunpack.c.0.s8 %v9658
    %v9660 = vlaneseq
    %v9661 = vshrl.u32 %v9660, 7
    %v9662 = vsub.s32 %v9659, %v9661
    %v9663 = vrot.slane %v9536, %v9662
    %v9665 = vunpack.c.l.s4 1983009808
    %v9666 = vunpack.c.0.s8 %v9665
    %v9667 = vlaneseq
    %v9668 = vshrl.u32 %v9667, 7
    %v9669 = vsub.s32 %v9666, %v9668
    %v9670 = vrot.slane %v9656, %v9669
    %v9671 = vcombine.high %v9553, %v9553
    %v9673 = vunpack.c.l.s4 1983009808
    %v9674 = vunpack.c.0.s8 %v9673
    %v9675 = vlaneseq
    %v9676 = vshrl.u32 %v9675, 7
    %v9677 = vsub.s32 %v9674, %v9676
    %v9678 = vrot.slane %v9553, %v9677
    %v9680 = vunpack.c.l.s4 1983009808
    %v9681 = vunpack.c.0.s8 %v9680
    %v9682 = vlaneseq
    %v9683 = vshrl.u32 %v9682, 7
    %v9684 = vsub.s32 %v9681, %v9683
    %v9685 = vrot.slane %v9671, %v9684
    %v9686 = vcombine.high %v9570, %v9570
    %v9688 = vunpack.c.l.s4 1983009808
    %v9689 = vunpack.c.0.s8 %v9688
    %v9690 = vlaneseq
    %v9691 = vshrl.u32 %v9690, 7
    %v9692 = vsub.s32 %v9689, %v9691
    %v9693 = vrot.slane %v9570, %v9692
    %v9695 = vunpack.c.l.s4 1983009808
    %v9696 = vunpack.c.0.s8 %v9695
    %v9697 = vlaneseq
    %v9698 = vshrl.u32 %v9697, 7
    %v9699 = vsub.s32 %v9696, %v9698
    %v9700 = vrot.slane %v9686, %v9699
    %v9701 = vcombine.high %v9587, %v9587
    %v9703 = vunpack.c.l.s4 1983009808
    %v9704 = vunpack.c.0.s8 %v9703
    %v9705 = vlaneseq
    %v9706 = vshrl.u32 %v9705, 7
    %v9707 = vsub.s32 %v9704, %v9706
    %v9708 = vrot.slane %v9587, %v9707
    %v9710 = vunpack.c.l.s4 1983009808
    %v9711 = vunpack.c.0.s8 %v9710
    %v9712 = vlaneseq
    %v9713 = vshrl.u32 %v9712, 7
    %v9714 = vsub.s32 %v9711, %v9713
    %v9715 = vrot.slane %v9701, %v9714
    %v9716 = vcombine.high %v9604, %v9604
    %v9718 = vunpack.c.l.s4 1983009808
    %v9719 = vunpack.c.0.s8 %v9718
    %v9720 = vlaneseq
    %v9721 = vshrl.u32 %v9720, 7
    %v9722 = vsub.s32 %v9719, %v9721
    %v9723 = vrot.slane %v9604, %v9722
    %v9725 = vunpack.c.l.s4 1983009808
    %v9726 = vunpack.c.0.s8 %v9725
    %v9727 = vlaneseq
    %v9728 = vshrl.u32 %v9727, 7
    %v9729 = vsub.s32 %v9726, %v9728
    %v9730 = vrot.slane %v9716, %v9729
    %v9731 = vcombine.high %v9621, %v9621
    %v9733 = vunpack.c.l.s4 1983009808
    %v9734 = vunpack.c.0.s8 %v9733
    %v9735 = vlaneseq
    %v9736 = vshrl.u32 %v9735, 7
    %v9737 = vsub.s32 %v9734, %v9736
    %v9738 = vrot.slane %v9621, %v9737
    %v9740 = vunpack.c.l.s4 1983009808
    %v9741 = vunpack.c.0.s8 %v9740
    %v9742 = vlaneseq
    %v9743 = vshrl.u32 %v9742, 7
    %v9744 = vsub.s32 %v9741, %v9743
    %v9745 = vrot.slane %v9731, %v9744
    %v9746 = vcombine.high %v9638, %v9638
    %v9748 = vunpack.c.l.s4 1983009808
    %v9749 = vunpack.c.0.s8 %v9748
    %v9750 = vlaneseq
    %v9751 = vshrl.u32 %v9750, 7
    %v9752 = vsub.s32 %v9749, %v9751
    %v9753 = vrot.slane %v9638, %v9752
    %v9755 = vunpack.c.l.s4 1983009808
    %v9756 = vunpack.c.0.s8 %v9755
    %v9757 = vlaneseq
    %v9758 = vshrl.u32 %v9757, 7
    %v9759 = vsub.s32 %v9756, %v9758
    %v9760 = vrot.slane %v9746, %v9759
    %v9761 = vcombine.high %v9655, %v9655
    %v9763 = vunpack.c.l.s4 1983009808
    %v9764 = vunpack.c.0.s8 %v9763
    %v9765 = vlaneseq
    %v9766 = vshrl.u32 %v9765, 7
    %v9767 = vsub.s32 %v9764, %v9766
    %v9768 = vrot.slane %v9655, %v9767
    %v9770 = vunpack.c.l.s4 1983009808
    %v9771 = vunpack.c.0.s8 %v9770
    %v9772 = vlaneseq
    %v9773 = vshrl.u32 %v9772, 7
    %v9774 = vsub.s32 %v9771, %v9773
    %v9775 = vrot.slane %v9761, %v9774
    %v9776 = vunpack.c.l.b16 %v9663
    %v9777 = vunpack.c.h.b16 %v9663
    %v9778 = vunpack.c.l.b16 %v9670
    %v9779 = vunpack.c.h.b16 %v9670
    %v9780 = vunpack.c.l.b16 %v9678
    %v9781 = vunpack.c.h.b16 %v9678
    %v9782 = vunpack.c.l.b16 %v9685
    %v9783 = vunpack.c.h.b16 %v9685
    %v9784 = vunpack.c.l.b16 %v9693
    %v9785 = vunpack.c.h.b16 %v9693
    %v9786 = vunpack.c.l.b16 %v9700
    %v9787 = vunpack.c.h.b16 %v9700
    %v9788 = vunpack.c.l.b16 %v9708
    %v9789 = vunpack.c.h.b16 %v9708
    %v9790 = vunpack.c.l.b16 %v9715
    %v9791 = vunpack.c.h.b16 %v9715
    %v9792 = vunpack.c.l.b16 %v9723
    %v9793 = vunpack.c.h.b16 %v9723
    %v9794 = vunpack.c.l.b16 %v9730
    %v9795 = vunpack.c.h.b16 %v9730
    %v9796 = vunpack.c.l.b16 %v9738
    %v9797 = vunpack.c.h.b16 %v9738
    %v9798 = vunpack.c.l.b16 %v9745
    %v9799 = vunpack.c.h.b16 %v9745
    %v9800 = vunpack.c.l.b16 %v9753
    %v9801 = vunpack.c.h.b16 %v9753
    %v9802 = vunpack.c.l.b16 %v9760
    %v9803 = vunpack.c.h.b16 %v9760
    %v9804 = vunpack.c.l.b16 %v9768
    %v9805 = vunpack.c.h.b16 %v9768
    %v9806 = vunpack.c.l.b16 %v9775
    %v9807 = vunpack.c.h.b16 %v9775
    %v9808 = vrot.slane %v9784, 7
    %vm9809 = vcmask 1041409
    %v9810 = vsel %vm9809, %v9808, %v9776
    %v9811 = vrot.slane %v9792, 6
    %vm9812 = vcmask 1042434
    %v9813 = vsel %vm9812, %v9811, %v9810
    %v9814 = vrot.slane %v9800, 5
    %vm9815 = vcmask 1043459
    %v9816 = vsel %vm9815, %v9814, %v9813
    %v9817 = vrot.slane %v9785, 7
    %v9818 = vsel %vm9809, %v9817, %v9777
    %v9819 = vrot.slane %v9793, 6
    %v9820 = vsel %vm9812, %v9819, %v9818
    %v9821 = vrot.slane %v9801, 5
    %v9822 = vsel %vm9815, %v9821, %v9820
    %v9823 = vrot.slane %v9786, 7
    %v9824 = vsel %vm9809, %v9823, %v9778
    %v9825 = vrot.slane %v9794, 6
    %v9826 = vsel %vm9812, %v9825, %v9824
    %v9827 = vrot.slane %v9802, 5
    %v9828 = vsel %vm9815, %v9827, %v9826
    %v9829 = vrot.slane %v9787, 7
    %v9830 = vsel %vm9809, %v9829, %v9779
    %v9831 = vrot.slane %v9795, 6
    %v9832 = vsel %vm9812, %v9831, %v9830
    %v9833 = vrot.slane %v9803, 5
    %v9834 = vsel %vm9815, %v9833, %v9832
    %v9835 = vrot.slane %v9788, 7
    %v9836 = vsel %vm9809, %v9835, %v9780
    %v9837 = vrot.slane %v9796, 6
    %v9838 = vsel %vm9812, %v9837, %v9836
    %v9839 = vrot.slane %v9804, 5
    %v9840 = vsel %vm9815, %v9839, %v9838
    %v9841 = vrot.slane %v9789, 7
    %v9842 = vsel %vm9809, %v9841, %v9781
    %v9843 = vrot.slane %v9797, 6
    %v9844 = vsel %vm9812, %v9843, %v9842
    %v9845 = vrot.slane %v9805, 5
    %v9846 = vsel %vm9815, %v9845, %v9844
    %v9847 = vrot.slane %v9790, 7
    %v9848 = vsel %vm9809, %v9847, %v9782
    %v9849 = vrot.slane %v9798, 6
    %v9850 = vsel %vm9812, %v9849, %v9848
    %v9851 = vrot.slane %v9806, 5
    %v9852 = vsel %vm9815, %v9851, %v9850
    %v9853 = vrot.slane %v9791, 7
    %v9854 = vsel %vm9809, %v9853, %v9783
    %v9855 = vrot.slane %v9799, 6
    %v9856 = vsel %vm9812, %v9855, %v9854
    %v9857 = vrot.slane %v9807, 5
    %v9858 = vsel %vm9815, %v9857, %v9856
    %v9859 = vpack.c.b16 %v9822, %v9816
    %v9860 = vpack.c.b16 %v9834, %v9828
    %v9861 = vpack.c.b16 %v9846, %v9840
    %v9862 = vpack.c.b16 %v9858, %v9852
    %v9864 = vunpack.c.l.s4 1983009808
    %v9865 = vunpack.c.0.s8 %v9864
    %v9866 = vlaneseq
    %v9867 = vshrl.u32 %v9866, 7
    %v9868 = vsub.s32 %v9865, %v9867
    %v9869 = vrot.slane %v9859, %v9868
    %v9871 = vunpack.c.l.s4 1983009808
    %v9872 = vunpack.c.0.s8 %v9871
    %v9873 = vlaneseq
    %v9874 = vshrl.u32 %v9873, 7
    %v9875 = vsub.s32 %v9872, %v9874
    %v9876 = vrot.slane %v9860, %v9875
    %v9877 = vcombine.low %v9869, %v9876
    %v9879 = vunpack.c.l.s4 1983009808
    %v9880 = vunpack.c.0.s8 %v9879
    %v9881 = vlaneseq
    %v9882 = vshrl.u32 %v9881, 7
    %v9883 = vsub.s32 %v9880, %v9882
    %v9884 = vrot.slane %v9861, %v9883
    %v9886 = vunpack.c.l.s4 1983009808
    %v9887 = vunpack.c.0.s8 %v9886
    %v9888 = vlaneseq
    %v9889 = vshrl.u32 %v9888, 7
    %v9890 = vsub.s32 %v9887, %v9889
    %v9891 = vrot.slane %v9862, %v9890
    %v9892 = vcombine.low %v9884, %v9891
    %v9895 = vmax.bf16 %v9454, %v9877
    %v9896 = vmax.bf16 %v9455, %v9892
    %9897 = vst [vmem:[#allocation2] sm:$0xff] %v9895
    %9898 = vst [vmem:[#allocation2 + $0x8] sm:$0xff] %v9896
    // Predicated region
    $region70: #{tpu_custom_call.1} parent=1 // pred_check
      %p9899 = pneg %p9448
    $region71: #{tpu_custom_call.1} parent=1 // pred_check_branch
      %9901 = sbr.rel (%p9899) target = $region73
    $region72: #{tpu_custom_call.1} parent=1 // pred_region
      %v9902 = vld [vmem:[#allocation2] sm:$0xff]
      %v9903 = vld [vmem:[#allocation2 + $0x8] sm:$0xff]
      %v9904 = vld [vmem:[%s11] sm:$0xf]
      %v9905 = vld [vmem:[%s11 + $0x4] sm:$0xf]
      %v9906 = vld [vmem:[%s11 + $0x8] sm:$0xf]
      %v9907 = vld [vmem:[%s11 + $0xc] sm:$0xf]
      %v9908 = vld [vmem:[%s11 + $0x10] sm:$0xf]
      %v9909 = vld [vmem:[%s11 + $0x14] sm:$0xf]
      %v9910 = vld [vmem:[%s11 + $0x18] sm:$0xf]
      %v9911 = vld [vmem:[%s11 + $0x1c] sm:$0xf]
      %v9912 = vld [vmem:[%s11 + $0x20] sm:$0xf]
      %v9913 = vld [vmem:[%s11 + $0x24] sm:$0xf]
      %v9914 = vld [vmem:[%s11 + $0x28] sm:$0xf]
      %v9915 = vld [vmem:[%s11 + $0x2c] sm:$0xf]
      %v9916 = vld [vmem:[%s11 + $0x30] sm:$0xf]
      %v9917 = vld [vmem:[%s11 + $0x34] sm:$0xf]
      %v9918 = vld [vmem:[%s11 + $0x38] sm:$0xf]
      %v9919 = vld [vmem:[%s11 + $0x3c] sm:$0xf]
      %v9920 = vld [vmem:[%s11 + $0x40] sm:$0xf]
      %v9921 = vld [vmem:[%s11 + $0x44] sm:$0xf]
      %v9922 = vld [vmem:[%s11 + $0x48] sm:$0xf]
      %v9923 = vld [vmem:[%s11 + $0x4c] sm:$0xf]
      %v9924 = vld [vmem:[%s11 + $0x50] sm:$0xf]
      %v9925 = vld [vmem:[%s11 + $0x54] sm:$0xf]
      %v9926 = vld [vmem:[%s11 + $0x58] sm:$0xf]
      %v9927 = vld [vmem:[%s11 + $0x5c] sm:$0xf]
      %v9928 = vld [vmem:[%s11 + $0x60] sm:$0xf]
      %v9929 = vld [vmem:[%s11 + $0x64] sm:$0xf]
      %v9930 = vld [vmem:[%s11 + $0x68] sm:$0xf]
      %v9931 = vld [vmem:[%s11 + $0x6c] sm:$0xf]
      %v9932 = vld [vmem:[%s11 + $0x70] sm:$0xf]
      %v9933 = vld [vmem:[%s11 + $0x74] sm:$0xf]
      %v9934 = vld [vmem:[%s11 + $0x78] sm:$0xf]
      %v9935 = vld [vmem:[%s11 + $0x7c] sm:$0xf]
      %v9936 = vld [vmem:[%s11 + $0x80] sm:$0xf]
      %v9937 = vld [vmem:[%s11 + $0x84] sm:$0xf]
      %v9938 = vld [vmem:[%s11 + $0x88] sm:$0xf]
      %v9939 = vld [vmem:[%s11 + $0x8c] sm:$0xf]
      %v9940 = vld [vmem:[%s11 + $0x90] sm:$0xf]
      %v9941 = vld [vmem:[%s11 + $0x94] sm:$0xf]
      %v9942 = vld [vmem:[%s11 + $0x98] sm:$0xf]
      %v9943 = vld [vmem:[%s11 + $0x9c] sm:$0xf]
      %v9944 = vld [vmem:[%s11 + $0xa0] sm:$0xf]
      %v9945 = vld [vmem:[%s11 + $0xa4] sm:$0xf]
      %v9946 = vld [vmem:[%s11 + $0xa8] sm:$0xf]
      %v9947 = vld [vmem:[%s11 + $0xac] sm:$0xf]
      %v9948 = vld [vmem:[%s11 + $0xb0] sm:$0xf]
      %v9949 = vld [vmem:[%s11 + $0xb4] sm:$0xf]
      %v9950 = vld [vmem:[%s11 + $0xb8] sm:$0xf]
      %v9951 = vld [vmem:[%s11 + $0xbc] sm:$0xf]
      %v9952 = vld [vmem:[%s11 + $0xc0] sm:$0xf]
      %v9953 = vld [vmem:[%s11 + $0xc4] sm:$0xf]
      %v9954 = vld [vmem:[%s11 + $0xc8] sm:$0xf]
      %v9955 = vld [vmem:[%s11 + $0xcc] sm:$0xf]
      %v9956 = vld [vmem:[%s11 + $0xd0] sm:$0xf]
      %v9957 = vld [vmem:[%s11 + $0xd4] sm:$0xf]
      %v9958 = vld [vmem:[%s11 + $0xd8] sm:$0xf]
      %v9959 = vld [vmem:[%s11 + $0xdc] sm:$0xf]
      %v9960 = vld [vmem:[%s11 + $0xe0] sm:$0xf]
      %v9961 = vld [vmem:[%s11 + $0xe4] sm:$0xf]
      %v9962 = vld [vmem:[%s11 + $0xe8] sm:$0xf]
      %v9963 = vld [vmem:[%s11 + $0xec] sm:$0xf]
      %v9964 = vld [vmem:[%s11 + $0xf0] sm:$0xf]
      %v9965 = vld [vmem:[%s11 + $0xf4] sm:$0xf]
      %v9966 = vld [vmem:[%s11 + $0xf8] sm:$0xf]
      %v9967 = vld [vmem:[%s11 + $0xfc] sm:$0xf]
      %v9968 = vld [vmem:[%s11 + $0x100] sm:$0xf]
      %v9969 = vld [vmem:[%s11 + $0x104] sm:$0xf]
      %v9970 = vld [vmem:[%s11 + $0x108] sm:$0xf]
      %v9971 = vld [vmem:[%s11 + $0x10c] sm:$0xf]
      %v9972 = vld [vmem:[%s11 + $0x110] sm:$0xf]
      %v9973 = vld [vmem:[%s11 + $0x114] sm:$0xf]
      %v9974 = vld [vmem:[%s11 + $0x118] sm:$0xf]
      %v9975 = vld [vmem:[%s11 + $0x11c] sm:$0xf]
      %v9976 = vld [vmem:[%s11 + $0x120] sm:$0xf]
      %v9977 = vld [vmem:[%s11 + $0x124] sm:$0xf]
      %v9978 = vld [vmem:[%s11 + $0x128] sm:$0xf]
      %v9979 = vld [vmem:[%s11 + $0x12c] sm:$0xf]
      %v9980 = vld [vmem:[%s11 + $0x130] sm:$0xf]
      %v9981 = vld [vmem:[%s11 + $0x134] sm:$0xf]
      %v9982 = vld [vmem:[%s11 + $0x138] sm:$0xf]
      %v9983 = vld [vmem:[%s11 + $0x13c] sm:$0xf]
      %v9984 = vld [vmem:[%s11 + $0x140] sm:$0xf]
      %v9985 = vld [vmem:[%s11 + $0x144] sm:$0xf]
      %v9986 = vld [vmem:[%s11 + $0x148] sm:$0xf]
      %v9987 = vld [vmem:[%s11 + $0x14c] sm:$0xf]
      %v9988 = vld [vmem:[%s11 + $0x150] sm:$0xf]
      %v9989 = vld [vmem:[%s11 + $0x154] sm:$0xf]
      %v9990 = vld [vmem:[%s11 + $0x158] sm:$0xf]
      %v9991 = vld [vmem:[%s11 + $0x15c] sm:$0xf]
      %v9992 = vld [vmem:[%s11 + $0x160] sm:$0xf]
      %v9993 = vld [vmem:[%s11 + $0x164] sm:$0xf]
      %v9994 = vld [vmem:[%s11 + $0x168] sm:$0xf]
      %v9995 = vld [vmem:[%s11 + $0x16c] sm:$0xf]
      %v9996 = vld [vmem:[%s11 + $0x170] sm:$0xf]
      %v9997 = vld [vmem:[%s11 + $0x174] sm:$0xf]
      %v9998 = vld [vmem:[%s11 + $0x178] sm:$0xf]
      %v9999 = vld [vmem:[%s11 + $0x17c] sm:$0xf]
      %v10000 = vld [vmem:[%s11 + $0x180] sm:$0xf]
      %v10001 = vld [vmem:[%s11 + $0x184] sm:$0xf]
      %v10002 = vld [vmem:[%s11 + $0x188] sm:$0xf]
      %v10003 = vld [vmem:[%s11 + $0x18c] sm:$0xf]
      %v10004 = vld [vmem:[%s11 + $0x190] sm:$0xf]
      %v10005 = vld [vmem:[%s11 + $0x194] sm:$0xf]
      %v10006 = vld [vmem:[%s11 + $0x198] sm:$0xf]
      %v10007 = vld [vmem:[%s11 + $0x19c] sm:$0xf]
      %v10008 = vld [vmem:[%s11 + $0x1a0] sm:$0xf]
      %v10009 = vld [vmem:[%s11 + $0x1a4] sm:$0xf]
      %v10010 = vld [vmem:[%s11 + $0x1a8] sm:$0xf]
      %v10011 = vld [vmem:[%s11 + $0x1ac] sm:$0xf]
      %v10012 = vld [vmem:[%s11 + $0x1b0] sm:$0xf]
      %v10013 = vld [vmem:[%s11 + $0x1b4] sm:$0xf]
      %v10014 = vld [vmem:[%s11 + $0x1b8] sm:$0xf]
      %v10015 = vld [vmem:[%s11 + $0x1bc] sm:$0xf]
      %v10016 = vld [vmem:[%s11 + $0x1c0] sm:$0xf]
      %v10017 = vld [vmem:[%s11 + $0x1c4] sm:$0xf]
      %v10018 = vld [vmem:[%s11 + $0x1c8] sm:$0xf]
      %v10019 = vld [vmem:[%s11 + $0x1cc] sm:$0xf]
      %v10020 = vld [vmem:[%s11 + $0x1d0] sm:$0xf]
      %v10021 = vld [vmem:[%s11 + $0x1d4] sm:$0xf]
      %v10022 = vld [vmem:[%s11 + $0x1d8] sm:$0xf]
      %v10023 = vld [vmem:[%s11 + $0x1dc] sm:$0xf]
      %v10024 = vld [vmem:[%s11 + $0x1e0] sm:$0xf]
      %v10025 = vld [vmem:[%s11 + $0x1e4] sm:$0xf]
      %v10026 = vld [vmem:[%s11 + $0x1e8] sm:$0xf]
      %v10027 = vld [vmem:[%s11 + $0x1ec] sm:$0xf]
      %v10028 = vld [vmem:[%s11 + $0x1f0] sm:$0xf]
      %v10029 = vld [vmem:[%s11 + $0x1f4] sm:$0xf]
      %v10030 = vld [vmem:[%s11 + $0x1f8] sm:$0xf]
      %v10031 = vld [vmem:[%s11 + $0x1fc] sm:$0xf]
      %v10032 = vld [vmem:[%s12] sm:$0x1]
      %v10034 = vlaneseq
      %v10035 = vshrl.u32 %v10034, 7
      %v10036 = vsub.s32 0, %v10035
      %v10037 = vrot.slane %v10032, %v10036
      %v10041 = vcombine.high %v9902, %v9902
      %v10043 = vunpack.c.l.s4 1983009808
      %v10044 = vunpack.c.0.s8 %v10043
      %v10045 = vlaneseq
      %v10046 = vshrl.u32 %v10045, 7
      %v10047 = vsub.s32 %v10044, %v10046
      %v10048 = vrot.slane %v9902, %v10047
      %v10050 = vunpack.c.l.s4 1983009808
      %v10051 = vunpack.c.0.s8 %v10050
      %v10052 = vlaneseq
      %v10053 = vshrl.u32 %v10052, 7
      %v10054 = vsub.s32 %v10051, %v10053
      %v10055 = vrot.slane %v10041, %v10054
      %v10056 = vcombine.high %v10048, %v10048
      %v10057 = vcombine.high %v10055, %v10055
      %v10058 = vcombine.high %v9903, %v9903
      %v10060 = vunpack.c.l.s4 1983009808
      %v10061 = vunpack.c.0.s8 %v10060
      %v10062 = vlaneseq
      %v10063 = vshrl.u32 %v10062, 7
      %v10064 = vsub.s32 %v10061, %v10063
      %v10065 = vrot.slane %v9903, %v10064
      %v10067 = vunpack.c.l.s4 1983009808
      %v10068 = vunpack.c.0.s8 %v10067
      %v10069 = vlaneseq
      %v10070 = vshrl.u32 %v10069, 7
      %v10071 = vsub.s32 %v10068, %v10070
      %v10072 = vrot.slane %v10058, %v10071
      %v10073 = vcombine.high %v10065, %v10065
      %v10074 = vcombine.high %v10072, %v10072
      %v10211 = vunpack.c.l.b16 %v9904
      %v10212 = vunpack.c.l.b16 %v9905
      %v10213 = vunpack.c.l.b16 %v9906
      %v10214 = vunpack.c.l.b16 %v9907
      %v10215 = vunpack.c.l.b16 %v9908
      %v10216 = vunpack.c.l.b16 %v9909
      %v10217 = vunpack.c.l.b16 %v9910
      %v10218 = vunpack.c.l.b16 %v9911
      %v10219 = vunpack.c.l.b16 %v9912
      %v10220 = vunpack.c.l.b16 %v9913
      %v10221 = vunpack.c.l.b16 %v9914
      %v10222 = vunpack.c.l.b16 %v9915
      %v10223 = vunpack.c.l.b16 %v9916
      %v10224 = vunpack.c.l.b16 %v9917
      %v10225 = vunpack.c.l.b16 %v9918
      %v10226 = vunpack.c.l.b16 %v9919
      %v10227 = vunpack.c.l.b16 %v9920
      %v10228 = vunpack.c.l.b16 %v9921
      %v10229 = vunpack.c.l.b16 %v9922
      %v10230 = vunpack.c.l.b16 %v9923
      %v10231 = vunpack.c.l.b16 %v9924
      %v10232 = vunpack.c.l.b16 %v9925
      %v10233 = vunpack.c.l.b16 %v9926
      %v10234 = vunpack.c.l.b16 %v9927
      %v10235 = vunpack.c.l.b16 %v9928
      %v10236 = vunpack.c.l.b16 %v9929
      %v10237 = vunpack.c.l.b16 %v9930
      %v10238 = vunpack.c.l.b16 %v9931
      %v10239 = vunpack.c.l.b16 %v9932
      %v10240 = vunpack.c.l.b16 %v9933
      %v10241 = vunpack.c.l.b16 %v9934
      %v10242 = vunpack.c.l.b16 %v9935
      %v10243 = vunpack.c.l.b16 %v9936
      %v10244 = vunpack.c.l.b16 %v9937
      %v10245 = vunpack.c.l.b16 %v9938
      %v10246 = vunpack.c.l.b16 %v9939
      %v10247 = vunpack.c.l.b16 %v9940
      %v10248 = vunpack.c.l.b16 %v9941
      %v10249 = vunpack.c.l.b16 %v9942
      %v10250 = vunpack.c.l.b16 %v9943
      %v10251 = vunpack.c.l.b16 %v9944
      %v10252 = vunpack.c.l.b16 %v9945
      %v10253 = vunpack.c.l.b16 %v9946
      %v10254 = vunpack.c.l.b16 %v9947
      %v10255 = vunpack.c.l.b16 %v9948
      %v10256 = vunpack.c.l.b16 %v9949
      %v10257 = vunpack.c.l.b16 %v9950
      %v10258 = vunpack.c.l.b16 %v9951
      %v10259 = vunpack.c.l.b16 %v9952
      %v10260 = vunpack.c.l.b16 %v9953
      %v10261 = vunpack.c.l.b16 %v9954
      %v10262 = vunpack.c.l.b16 %v9955
      %v10263 = vunpack.c.l.b16 %v9956
      %v10264 = vunpack.c.l.b16 %v9957
      %v10265 = vunpack.c.l.b16 %v9958
      %v10266 = vunpack.c.l.b16 %v9959
      %v10267 = vunpack.c.l.b16 %v9960
      %v10268 = vunpack.c.l.b16 %v9961
      %v10269 = vunpack.c.l.b16 %v9962
      %v10270 = vunpack.c.l.b16 %v9963
      %v10271 = vunpack.c.l.b16 %v9964
      %v10272 = vunpack.c.l.b16 %v9965
      %v10273 = vunpack.c.l.b16 %v9966
      %v10274 = vunpack.c.l.b16 %v9967
      %v10275 = vunpack.c.l.b16 %v9968
      %v10276 = vunpack.c.l.b16 %v9969
      %v10277 = vunpack.c.l.b16 %v9970
      %v10278 = vunpack.c.l.b16 %v9971
      %v10279 = vunpack.c.l.b16 %v9972
      %v10280 = vunpack.c.l.b16 %v9973
      %v10281 = vunpack.c.l.b16 %v9974
      %v10282 = vunpack.c.l.b16 %v9975
      %v10283 = vunpack.c.l.b16 %v9976
      %v10284 = vunpack.c.l.b16 %v9977
      %v10285 = vunpack.c.l.b16 %v9978
      %v10286 = vunpack.c.l.b16 %v9979
      %v10287 = vunpack.c.l.b16 %v9980
      %v10288 = vunpack.c.l.b16 %v9981
      %v10289 = vunpack.c.l.b16 %v9982
      %v10290 = vunpack.c.l.b16 %v9983
      %v10291 = vunpack.c.l.b16 %v9984
      %v10292 = vunpack.c.l.b16 %v9985
      %v10293 = vunpack.c.l.b16 %v9986
      %v10294 = vunpack.c.l.b16 %v9987
      %v10295 = vunpack.c.l.b16 %v9988
      %v10296 = vunpack.c.l.b16 %v9989
      %v10297 = vunpack.c.l.b16 %v9990
      %v10298 = vunpack.c.l.b16 %v9991
      %v10299 = vunpack.c.l.b16 %v9992
      %v10300 = vunpack.c.l.b16 %v9993
      %v10301 = vunpack.c.l.b16 %v9994
      %v10302 = vunpack.c.l.b16 %v9995
      %v10303 = vunpack.c.l.b16 %v9996
      %v10304 = vunpack.c.l.b16 %v9997
      %v10305 = vunpack.c.l.b16 %v9998
      %v10306 = vunpack.c.l.b16 %v9999
      %v10307 = vunpack.c.l.b16 %v10000
      %v10308 = vunpack.c.l.b16 %v10001
      %v10309 = vunpack.c.l.b16 %v10002
      %v10310 = vunpack.c.l.b16 %v10003
      %v10311 = vunpack.c.l.b16 %v10004
      %v10312 = vunpack.c.l.b16 %v10005
      %v10313 = vunpack.c.l.b16 %v10006
      %v10314 = vunpack.c.l.b16 %v10007
      %v10315 = vunpack.c.l.b16 %v10008
      %v10316 = vunpack.c.l.b16 %v10009
      %v10317 = vunpack.c.l.b16 %v10010
      %v10318 = vunpack.c.l.b16 %v10011
      %v10319 = vunpack.c.l.b16 %v10012
      %v10320 = vunpack.c.l.b16 %v10013
      %v10321 = vunpack.c.l.b16 %v10014
      %v10322 = vunpack.c.l.b16 %v10015
      %v10323 = vunpack.c.l.b16 %v10016
      %v10324 = vunpack.c.l.b16 %v10017
      %v10325 = vunpack.c.l.b16 %v10018
      %v10326 = vunpack.c.l.b16 %v10019
      %v10327 = vunpack.c.l.b16 %v10020
      %v10328 = vunpack.c.l.b16 %v10021
      %v10329 = vunpack.c.l.b16 %v10022
      %v10330 = vunpack.c.l.b16 %v10023
      %v10331 = vunpack.c.l.b16 %v10024
      %v10332 = vunpack.c.l.b16 %v10025
      %v10333 = vunpack.c.l.b16 %v10026
      %v10334 = vunpack.c.l.b16 %v10027
      %v10335 = vunpack.c.l.b16 %v10028
      %v10336 = vunpack.c.l.b16 %v10029
      %v10337 = vunpack.c.l.b16 %v10030
      %v10338 = vunpack.c.l.b16 %v10031
      %v10339 = vpack.c.b16 %v10212, %v10211
      %v10340 = vpack.c.b16 %v10214, %v10213
      %v10341 = vpack.c.b16 %v10216, %v10215
      %v10342 = vpack.c.b16 %v10218, %v10217
      %v10343 = vpack.c.b16 %v10220, %v10219
      %v10344 = vpack.c.b16 %v10222, %v10221
      %v10345 = vpack.c.b16 %v10224, %v10223
      %v10346 = vpack.c.b16 %v10226, %v10225
      %v10347 = vpack.c.b16 %v10228, %v10227
      %v10348 = vpack.c.b16 %v10230, %v10229
      %v10349 = vpack.c.b16 %v10232, %v10231
      %v10350 = vpack.c.b16 %v10234, %v10233
      %v10351 = vpack.c.b16 %v10236, %v10235
      %v10352 = vpack.c.b16 %v10238, %v10237
      %v10353 = vpack.c.b16 %v10240, %v10239
      %v10354 = vpack.c.b16 %v10242, %v10241
      %v10355 = vpack.c.b16 %v10244, %v10243
      %v10356 = vpack.c.b16 %v10246, %v10245
      %v10357 = vpack.c.b16 %v10248, %v10247
      %v10358 = vpack.c.b16 %v10250, %v10249
      %v10359 = vpack.c.b16 %v10252, %v10251
      %v10360 = vpack.c.b16 %v10254, %v10253
      %v10361 = vpack.c.b16 %v10256, %v10255
      %v10362 = vpack.c.b16 %v10258, %v10257
      %v10363 = vpack.c.b16 %v10260, %v10259
      %v10364 = vpack.c.b16 %v10262, %v10261
      %v10365 = vpack.c.b16 %v10264, %v10263
      %v10366 = vpack.c.b16 %v10266, %v10265
      %v10367 = vpack.c.b16 %v10268, %v10267
      %v10368 = vpack.c.b16 %v10270, %v10269
      %v10369 = vpack.c.b16 %v10272, %v10271
      %v10370 = vpack.c.b16 %v10274, %v10273
      %v10371 = vpack.c.b16 %v10276, %v10275
      %v10372 = vpack.c.b16 %v10278, %v10277
      %v10373 = vpack.c.b16 %v10280, %v10279
      %v10374 = vpack.c.b16 %v10282, %v10281
      %v10375 = vpack.c.b16 %v10284, %v10283
      %v10376 = vpack.c.b16 %v10286, %v10285
      %v10377 = vpack.c.b16 %v10288, %v10287
      %v10378 = vpack.c.b16 %v10290, %v10289
      %v10379 = vpack.c.b16 %v10292, %v10291
      %v10380 = vpack.c.b16 %v10294, %v10293
      %v10381 = vpack.c.b16 %v10296, %v10295
      %v10382 = vpack.c.b16 %v10298, %v10297
      %v10383 = vpack.c.b16 %v10300, %v10299
      %v10384 = vpack.c.b16 %v10302, %v10301
      %v10385 = vpack.c.b16 %v10304, %v10303
      %v10386 = vpack.c.b16 %v10306, %v10305
      %v10387 = vpack.c.b16 %v10308, %v10307
      %v10388 = vpack.c.b16 %v10310, %v10309
      %v10389 = vpack.c.b16 %v10312, %v10311
      %v10390 = vpack.c.b16 %v10314, %v10313
      %v10391 = vpack.c.b16 %v10316, %v10315
      %v10392 = vpack.c.b16 %v10318, %v10317
      %v10393 = vpack.c.b16 %v10320, %v10319
      %v10394 = vpack.c.b16 %v10322, %v10321
      %v10395 = vpack.c.b16 %v10324, %v10323
      %v10396 = vpack.c.b16 %v10326, %v10325
      %v10397 = vpack.c.b16 %v10328, %v10327
      %v10398 = vpack.c.b16 %v10330, %v10329
      %v10399 = vpack.c.b16 %v10332, %v10331
      %v10400 = vpack.c.b16 %v10334, %v10333
      %v10401 = vpack.c.b16 %v10336, %v10335
      %v10402 = vpack.c.b16 %v10338, %v10337
      %10467 = vmatprep.subr.bf16.mxu0 0
      %10468 = vmatpush1.bf16.msra.mxu0 %v10339
      %10469 = vmatprep.subr.bf16.mxu0 0
      %10470 = vmatpush1.bf16.msra.mxu0 %v10340
      %10471 = vmatprep.subr.bf16.mxu0 0
      %10472 = vmatpush1.bf16.msra.mxu0 %v10341
      %10473 = vmatprep.subr.bf16.mxu0 0
      %10474 = vmatpush1.bf16.msra.mxu0 %v10342
      %10475 = vmatprep.subr.bf16.mxu0 0
      %10476 = vmatpush1.bf16.msra.mxu0 %v10343
      %10477 = vmatprep.subr.bf16.mxu0 0
      %10478 = vmatpush1.bf16.msra.mxu0 %v10344
      %10479 = vmatprep.subr.bf16.mxu0 0
      %10480 = vmatpush1.bf16.msra.mxu0 %v10345
      %10481 = vmatprep.subr.bf16.mxu0 0
      %10482 = vmatpush1.bf16.msra.mxu0 %v10346
      %10483 = vmatprep.subr.bf16.mxu0 0
      %10484 = vmatpush1.bf16.msra.mxu0 %v10347
      %10485 = vmatprep.subr.bf16.mxu0 0
      %10486 = vmatpush1.bf16.msra.mxu0 %v10348
      %10487 = vmatprep.subr.bf16.mxu0 0
      %10488 = vmatpush1.bf16.msra.mxu0 %v10349
      %10489 = vmatprep.subr.bf16.mxu0 0
      %10490 = vmatpush1.bf16.msra.mxu0 %v10350
      %10491 = vmatprep.subr.bf16.mxu0 0
      %10492 = vmatpush1.bf16.msra.mxu0 %v10351
      %10493 = vmatprep.subr.bf16.mxu0 0
      %10494 = vmatpush1.bf16.msra.mxu0 %v10352
      %10495 = vmatprep.subr.bf16.mxu0 0
      %10496 = vmatpush1.bf16.msra.mxu0 %v10353
      %10497 = vmatprep.subr.bf16.mxu0 0
      %10498 = vmatpush1.bf16.msra.mxu0 %v10354
      %10499 = vmatprep.mubr.bf16.mxu0 %v10056
      %10500 = vmatmul.mubr.bf16.gmra.mrb[0].mxu0 %v10048
      %v10501 = vpop.f32.mrb[0].mxu0
      %v10502 = vadd.f32 %v10037, %v10501
      %v10503 = vpop.f32.mrb[0].mxu0
      %v10504 = vpop.f32.mrb[0].mxu0
      %v10505 = vpop.f32.mrb[0].mxu0
      %10506 = vdwg.mxu0
      %10507 = vmatprep.subr.bf16.mxu0 0
      %10508 = vmatpush1.bf16.msra.mxu0 %v10355
      %10509 = vmatprep.subr.bf16.mxu0 0
      %10510 = vmatpush1.bf16.msra.mxu0 %v10356
      %10511 = vmatprep.subr.bf16.mxu0 0
      %10512 = vmatpush1.bf16.msra.mxu0 %v10357
      %10513 = vmatprep.subr.bf16.mxu0 0
      %10514 = vmatpush1.bf16.msra.mxu0 %v10358
      %10515 = vmatprep.subr.bf16.mxu0 0
      %10516 = vmatpush1.bf16.msra.mxu0 %v10359
      %10517 = vmatprep.subr.bf16.mxu0 0
      %10518 = vmatpush1.bf16.msra.mxu0 %v10360
      %10519 = vmatprep.subr.bf16.mxu0 0
      %10520 = vmatpush1.bf16.msra.mxu0 %v10361
      %10521 = vmatprep.subr.bf16.mxu0 0
      %10522 = vmatpush1.bf16.msra.mxu0 %v10362
      %10523 = vmatprep.subr.bf16.mxu0 0
      %10524 = vmatpush1.bf16.msra.mxu0 %v10363
      %10525 = vmatprep.subr.bf16.mxu0 0
      %10526 = vmatpush1.bf16.msra.mxu0 %v10364
      %10527 = vmatprep.subr.bf16.mxu0 0
      %10528 = vmatpush1.bf16.msra.mxu0 %v10365
      %10529 = vmatprep.subr.bf16.mxu0 0
      %10530 = vmatpush1.bf16.msra.mxu0 %v10366
      %10531 = vmatprep.subr.bf16.mxu0 0
      %10532 = vmatpush1.bf16.msra.mxu0 %v10367
      %10533 = vmatprep.subr.bf16.mxu0 0
      %10534 = vmatpush1.bf16.msra.mxu0 %v10368
      %10535 = vmatprep.subr.bf16.mxu0 0
      %10536 = vmatpush1.bf16.msra.mxu0 %v10369
      %10537 = vmatprep.subr.bf16.mxu0 0
      %10538 = vmatpush1.bf16.msra.mxu0 %v10370
      %10539 = vmatprep.mubr.bf16.mxu0 %v10057
      %10540 = vmatmul.mubr.bf16.gmra.mrb[0].mxu0 %v10055
      %v10541 = vpop.f32.mrb[0].mxu0
      %v10542 = vadd.f32 %v10502, %v10541
      %v10543 = vpop.f32.mrb[0].mxu0
      %v10544 = vpop.f32.mrb[0].mxu0
      %v10545 = vpop.f32.mrb[0].mxu0
      %10546 = vdwg.mxu0
      %10547 = vmatprep.subr.bf16.mxu0 0
      %10548 = vmatpush1.bf16.msra.mxu0 %v10371
      %10549 = vmatprep.subr.bf16.mxu0 0
      %10550 = vmatpush1.bf16.msra.mxu0 %v10372
      %10551 = vmatprep.subr.bf16.mxu0 0
      %10552 = vmatpush1.bf16.msra.mxu0 %v10373
      %10553 = vmatprep.subr.bf16.mxu0 0
      %10554 = vmatpush1.bf16.msra.mxu0 %v10374
      %10555 = vmatprep.subr.bf16.mxu0 0
      %10556 = vmatpush1.bf16.msra.mxu0 %v10375
      %10557 = vmatprep.subr.bf16.mxu0 0
      %10558 = vmatpush1.bf16.msra.mxu0 %v10376
      %10559 = vmatprep.subr.bf16.mxu0 0
      %10560 = vmatpush1.bf16.msra.mxu0 %v10377
      %10561 = vmatprep.subr.bf16.mxu0 0
      %10562 = vmatpush1.bf16.msra.mxu0 %v10378
      %10563 = vmatprep.subr.bf16.mxu0 0
      %10564 = vmatpush1.bf16.msra.mxu0 %v10379
      %10565 = vmatprep.subr.bf16.mxu0 0
      %10566 = vmatpush1.bf16.msra.mxu0 %v10380
      %10567 = vmatprep.subr.bf16.mxu0 0
      %10568 = vmatpush1.bf16.msra.mxu0 %v10381
      %10569 = vmatprep.subr.bf16.mxu0 0
      %10570 = vmatpush1.bf16.msra.mxu0 %v10382
      %10571 = vmatprep.subr.bf16.mxu0 0
      %10572 = vmatpush1.bf16.msra.mxu0 %v10383
      %10573 = vmatprep.subr.bf16.mxu0 0
      %10574 = vmatpush1.bf16.msra.mxu0 %v10384
      %10575 = vmatprep.subr.bf16.mxu0 0
      %10576 = vmatpush1.bf16.msra.mxu0 %v10385
      %10577 = vmatprep.subr.bf16.mxu0 0
      %10578 = vmatpush1.bf16.msra.mxu0 %v10386
      %10579 = vmatprep.mubr.bf16.mxu0 %v10073
      %10580 = vmatmul.mubr.bf16.gmra.mrb[0].mxu0 %v10065
      %v10581 = vpop.f32.mrb[0].mxu0
      %v10582 = vadd.f32 %v10542, %v10581
      %v10583 = vpop.f32.mrb[0].mxu0
      %v10584 = vpop.f32.mrb[0].mxu0
      %v10585 = vpop.f32.mrb[0].mxu0
      %10586 = vdwg.mxu0
      %10587 = vmatprep.subr.bf16.mxu0 0
      %10588 = vmatpush1.bf16.msra.mxu0 %v10387
      %10589 = vmatprep.subr.bf16.mxu0 0
      %10590 = vmatpush1.bf16.msra.mxu0 %v10388
      %10591 = vmatprep.subr.bf16.mxu0 0
      %10592 = vmatpush1.bf16.msra.mxu0 %v10389
      %10593 = vmatprep.subr.bf16.mxu0 0
      %10594 = vmatpush1.bf16.msra.mxu0 %v10390
      %10595 = vmatprep.subr.bf16.mxu0 0
      %10596 = vmatpush1.bf16.msra.mxu0 %v10391
      %10597 = vmatprep.subr.bf16.mxu0 0
      %10598 = vmatpush1.bf16.msra.mxu0 %v10392
      %10599 = vmatprep.subr.bf16.mxu0 0
      %10600 = vmatpush1.bf16.msra.mxu0 %v10393
      %10601 = vmatprep.subr.bf16.mxu0 0
      %10602 = vmatpush1.bf16.msra.mxu0 %v10394
      %10603 = vmatprep.subr.bf16.mxu0 0
      %10604 = vmatpush1.bf16.msra.mxu0 %v10395
      %10605 = vmatprep.subr.bf16.mxu0 0
      %10606 = vmatpush1.bf16.msra.mxu0 %v10396
      %10607 = vmatprep.subr.bf16.mxu0 0
      %10608 = vmatpush1.bf16.msra.mxu0 %v10397
      %10609 = vmatprep.subr.bf16.mxu0 0
      %10610 = vmatpush1.bf16.msra.mxu0 %v10398
      %10611 = vmatprep.subr.bf16.mxu0 0
      %10612 = vmatpush1.bf16.msra.mxu0 %v10399
      %10613 = vmatprep.subr.bf16.mxu0 0
      %10614 = vmatpush1.bf16.msra.mxu0 %v10400
      %10615 = vmatprep.subr.bf16.mxu0 0
      %10616 = vmatpush1.bf16.msra.mxu0 %v10401
      %10617 = vmatprep.subr.bf16.mxu0 0
      %10618 = vmatpush1.bf16.msra.mxu0 %v10402
      %10619 = vmatprep.mubr.bf16.mxu0 %v10074
      %10620 = vmatmul.mubr.bf16.gmra.mrb[0].mxu0 %v10072
      %v10621 = vpop.f32.mrb[0].mxu0
      %v10622 = vadd.f32 %v10582, %v10621
      %v10623 = vpop.f32.mrb[0].mxu0
      %v10624 = vpop.f32.mrb[0].mxu0
      %v10625 = vpop.f32.mrb[0].mxu0
      %10626 = vdwg.mxu0
      %v10627 = vmax.f32 %v10622, 0.0
      %10628 = vst [vmem:[#allocation9] sm:$0xf] %v10627
    $region73: #{tpu_custom_call.1} parent=1 // pred_fallthru
      _
    // Predicated region
    $region74: #{tpu_custom_call.1} parent=1 // pred_check
      _
    $region75: #{tpu_custom_call.1} parent=1 // pred_check_branch
      %10630 = sbr.rel (0) target = $region77
    $region76: #{tpu_custom_call.1} parent=1 // pred_region
      %s10632 = ssub.s32 64, 64
      %10633 = vsyncadd [#allocation5], %s10632
      %s10635 = sshll.u32 [#allocation9], 4
      %s10636 = int_to_ptr.vmem [resolvable:$true] %s10635
      %10638 = dma.vmem_to_hbm [thread:$0]  %s10636, 64, %s13, [#allocation5]
    $region77: #{tpu_custom_call.1} parent=1 // pred_fallthru
      _
    // Predicated region
    $region78: #{tpu_custom_call.1} parent=1 // pred_check
      _
    $region79: #{tpu_custom_call.1} parent=1 // pred_check_branch
      %10640 = sbr.rel (0) target = $region81
    $region80: #{tpu_custom_call.1} parent=1 // pred_region
      %10641 = dma.done [#allocation5], 64
    $region81: #{tpu_custom_call.1} parent=1 // pred_fallthru
      _
    %10642 = vsyncpa [#allocation4], 1
    %10643 = vsyncpa [#allocation7], 1
    %10644 = vsyncpa [#allocation5], 1

</llo_original>
